<compile_context>
chip_gen: v7x
topology: tpu7x:2x2x1
jax: 0.10.0
libtpu: 0.0.40
codegen_flags: <defaults>
</compile_context>

<pallas_src>
import functools

import jax
import jax.numpy as jnp
from jax.experimental import pallas as pl
from jax.experimental.pallas import tpu as pltpu

_HEAD_PAD = 128  # pad fused head outputs to a full lane width


def _round_up(x, m):
    return (x + m - 1) // m * m


def _pick_row_tile(m):
    # Single step when the whole problem fits VMEM comfortably (per-step grid
    # overhead ~0.35us dominates at small M); tile rows for larger M so the
    # "parallel" axis can be split across v7x's two TensorCores.
    if m <= 512:
        return m
    for t in (512, 256, 128, 64, 8):
        if m % t == 0:
            return t
    return m


# ----------------------------------------------------------------------------
# Pallas kernels
# ----------------------------------------------------------------------------
def _conv3x3_kernel(x_ref, w_ref, b_ref, o_ref, *, n_rows, wp, relu):
    """3x3 SAME conv as 9 row-shifted matmuls accumulated on-chip.

    x_ref : (n_rows_padded, Cin)  flattened, zero-padded (N, H+2, W+2, Cin)
    w_ref : (9, Cin, Cout)        taps ordered t = dy*3 + dx
    b_ref : (1, Cout)
    o_ref : (n_rows, Cout)        flattened (N, H+2, W+2, Cout); caller crops
    """
    acc = jnp.zeros(o_ref.shape, jnp.float32)
    for t in range(9):
        dy, dx = t // 3, t % 3
        shift = dy * wp + dx                               # static row shift
        a = x_ref[pl.ds(shift, n_rows), :]                 # shifted VMEM view
        acc = acc + jnp.dot(a, w_ref[t], preferred_element_type=jnp.float32)
    acc = acc + b_ref[...]
    if relu:
        acc = jnp.maximum(acc, 0.0)
    o_ref[...] = acc.astype(o_ref.dtype)


def _fused_head_kernel(a_ref, w1_ref, b1_ref, w2_ref, b2_ref, raw_ref, sig_ref):
    """ct_hm + wh heads fused: (K,64) matmul + ReLU, then (64,128) matmul.

    Layer-2 weights are block-diagonal and zero-padded to 128 output lanes so
    every store is a full unmasked vst; sigmoid runs on the (idle) EUP slot.
    """
    h = jnp.dot(a_ref[...], w1_ref[...], preferred_element_type=jnp.float32)
    h = jnp.maximum(h + b1_ref[...], 0.0)
    raw = jnp.dot(h, w2_ref[...], preferred_element_type=jnp.float32) + b2_ref[...]
    raw_ref[...] = raw.astype(raw_ref.dtype)
    sig_ref[...] = jax.nn.sigmoid(raw).astype(sig_ref.dtype)


def _minmax_norm_kernel(x_ref, o_ref):
    """255*(x-min)/(max-min) over the whole tensor (ReLU already fused upstream)."""
    x = x_ref[...]
    mn = jnp.min(x)
    mx = jnp.max(x)
    denom = jnp.maximum(mx - mn, 1e-12)   # guard: constant tensor -> 0, not NaN
    o_ref[...] = (255.0 * (x - mn) / denom).astype(o_ref.dtype)


# ----------------------------------------------------------------------------
# Pallas wrappers
# ----------------------------------------------------------------------------
def conv3x3_same(x, w, b, *, relu):
    """x: (N,H,W,Cin) f32, w: (3,3,Cin,Cout), b: (Cout,).  Stride 1, SAME pad.

    Computed inside ONE Pallas kernel as 9 row-shifted matmuls over the
    flattened zero-padded image: no 9x im2col tensor is materialized in HBM.
    """
    N, H, W, Cin = x.shape
    Cout = w.shape[-1]
    Hp, Wp = H + 2, W + 2
    xp = jnp.pad(x, ((0, 0), (1, 1), (1, 1), (0, 0)))
    R = N * Hp * Wp                       # rows of the padded-grid output slab
    max_shift = 2 * Wp + 2
    Rin = _round_up(R + max_shift, 8)
    xflat = jnp.pad(xp.reshape(R, Cin), ((0, Rin - R), (0, 0)))
    wk = w.reshape(9, Cin, Cout)
    bk = b.reshape(1, Cout)

    kernel = functools.partial(_conv3x3_kernel, n_rows=R, wp=Wp, relu=relu)
    out = pl.pallas_call(
        kernel,
        out_shape=jax.ShapeDtypeStruct((R, Cout), jnp.float32),
    )(xflat, wk, bk)
    # TODO(synk): at real resolutions, tile R over a parallel grid (overlapping
    # row windows via manual DMA) and cast A/W tiles to bf16 on v6e/v7x.
    return out.reshape(N, Hp, Wp, Cout)[:, :H, :W, :]


def fused_detection_heads(cnn_feature, params):
    """Both 1x1-conv heads (ct_hm, wh) + sigmoid(ct_hm) in one Pallas call."""
    N, H, W, C = cnn_feature.shape
    M = N * H * W
    a = cnn_feature.reshape(M, C)

    hm1_w = params['hm_c1_w'].reshape(C, 32)
    wh1_w = params['wh_c1_w'].reshape(C, 32)
    hm2_w = params['hm_c2_w'].reshape(32, 1)
    wh2_w = params['wh_c2_w'].reshape(32, 2)

    w1 = jnp.concatenate([hm1_w, wh1_w], axis=1)                         # (C, 64)
    b1 = jnp.concatenate([params['hm_c1_b'], params['wh_c1_b']]).reshape(1, 64)
    # block-diagonal layer-2 weights, zero-padded to a full 128-lane output slab
    w2 = jnp.zeros((64, _HEAD_PAD), jnp.float32)
    w2 = w2.at[0:32, 0:1].set(hm2_w).at[32:64, 1:3].set(wh2_w)
    b2 = jnp.zeros((1, _HEAD_PAD), jnp.float32)
    b2 = b2.at[0, 0:1].set(params['hm_c2_b']).at[0, 1:3].set(params['wh_c2_b'])

    tm = _pick_row_tile(M)
    raw, sig = pl.pallas_call(
        _fused_head_kernel,
        out_shape=(jax.ShapeDtypeStruct((M, _HEAD_PAD), jnp.float32),
                   jax.ShapeDtypeStruct((M, _HEAD_PAD), jnp.float32)),
        grid=(M // tm,),
        in_specs=[
            pl.BlockSpec((tm, C), lambda i: (i, 0)),
            pl.BlockSpec((C, 64), lambda i: (0, 0)),
            pl.BlockSpec((1, 64), lambda i: (0, 0)),
            pl.BlockSpec((64, _HEAD_PAD), lambda i: (0, 0)),
            pl.BlockSpec((1, _HEAD_PAD), lambda i: (0, 0)),
        ],
        out_specs=(pl.BlockSpec((tm, _HEAD_PAD), lambda i: (i, 0)),
                   pl.BlockSpec((tm, _HEAD_PAD), lambda i: (i, 0))),
        compiler_params=pltpu.CompilerParams(dimension_semantics=("parallel",)),
    )(a, w1, b1, w2, b2)

    ct_hm = raw[:, 0:1].reshape(N, H, W, 1)
    wh = raw[:, 1:3].reshape(N, H, W, 2)
    ct_hm_sig = sig[:, 0:1].reshape(N, H, W, 1)
    return ct_hm, wh, ct_hm_sig


def minmax_norm_255(x_nhwc):
    """Pallas: global 255*(x-min)/(max-min) on a lane-dense view."""
    n, h, w, c = x_nhwc.shape
    total = n * h * w * c
    if total % 128 == 0:
        shape2 = (total // 128, 128)      # lane-dense: full 128-lane loads/stores
    else:
        shape2 = (n * h * w, c)
    x2 = x_nhwc.reshape(shape2)
    out = pl.pallas_call(
        _minmax_norm_kernel,
        out_shape=jax.ShapeDtypeStruct(shape2, jnp.float32),
    )(x2)
    # TODO(synk): at real feature-map sizes, tile with a grid and carry min/max
    # through SMEM scalars (two-pass reduction) instead of one whole-tensor block.
    return out.reshape(n, h, w, c)


# ----------------------------------------------------------------------------
# Parameters (deterministic, in-script)
# ----------------------------------------------------------------------------
def init_params(key):
    ks = jax.random.split(key, 16)
    s = 0.1

    def conv_p(k, kh, kw, cin, cout):
        return (s * jax.random.normal(k, (kh, kw, cin, cout), jnp.float32),
                jnp.zeros((cout,), jnp.float32))

    p = {}
    # simplified DLA backbone (down_ratio = 4)
    p['dla_c1_w'], p['dla_c1_b'] = conv_p(ks[0], 3, 3, 3, 32)
    p['dla_c2_w'], p['dla_c2_b'] = conv_p(ks[1], 3, 3, 32, 64)
    # ct_hm head (head_conv -> 1 class)
    p['hm_c1_w'], p['hm_c1_b'] = conv_p(ks[2], 1, 1, 64, 32)
    p['hm_c2_w'], p['hm_c2_b'] = conv_p(ks[3], 1, 1, 32, 1)
    # wh head (head_conv -> 2)
    p['wh_c1_w'], p['wh_c1_b'] = conv_p(ks[4], 1, 1, 64, 32)
    p['wh_c2_w'], p['wh_c2_b'] = conv_p(ks[5], 1, 1, 32, 2)
    # simplified UNet
    p['un_c1_w'], p['un_c1_b'] = conv_p(ks[6], 3, 3, 3, 16)
    p['un_c2_w'], p['un_c2_b'] = conv_p(ks[7], 3, 3, 16, 2)
    return p


# ----------------------------------------------------------------------------
# Network forward (mirrors Network.forward)
# ----------------------------------------------------------------------------
def to_nchw(x):
    return jnp.transpose(x, (0, 3, 1, 2))


def network_forward(x_nchw, unet_input_nhwc, params):
    # ---- unet_input: .float(); torch transposes NHWC->NCHW, we stay NHWC.
    ui = unet_input_nhwc.astype(jnp.float32)
    ui_ds = ui[:, ::4, ::4, :]                   # F.interpolate nearest, scale 0.25

    # ---- simplified DLA backbone (down_ratio = 4) -> cnn_feature at H/4
    # TODO(synk): full DLA-34 + DLAUp backbone is not reproducible from the given source.
    x = jnp.transpose(x_nchw, (0, 2, 3, 1))       # NCHW -> NHWC
    xb = x[:, ::4, ::4, :]
    f = conv3x3_same(xb, params['dla_c1_w'], params['dla_c1_b'], relu=True)
    cnn_feature = conv3x3_same(f, params['dla_c2_w'], params['dla_c2_b'], relu=True)

    # ---- detection heads: ct_hm + wh fused into one lane-dense Pallas call;
    #      sigmoid(ct_hm) used by decode_detection comes out of the same kernel.
    ct_hm, wh, ct_hm_sigmoid = fused_detection_heads(cnn_feature, params)
    # TODO(synk): snake_decode.decode_ct_hm (maxpool-NMS + topk) and clip_to_image omitted.

    # ---- UNet map feature (simplified); torch.where(x<0,0,x) clamp is fused
    #      into un_c2's ReLU epilogue, 255*min-max norm is one Pallas call.
    u = conv3x3_same(ui_ds, params['un_c1_w'], params['un_c1_b'], relu=True)
    um = conv3x3_same(u, params['un_c2_w'], params['un_c2_b'], relu=True)
    unet_mapfeature = minmax_norm_255(um)

    # ---- concat along channel dim (torch dim=1 == last dim in NHWC)
    cnn_feature_cat = jnp.concatenate([cnn_feature, unet_mapfeature], axis=-1)

    # TODO(synk): Evolution() snake-GCN head has no provided definition; return fused features.
    return {
        'ct_hm': to_nchw(ct_hm),
        'wh': to_nchw(wh),
        'ct_hm_sigmoid': to_nchw(ct_hm_sigmoid),
        'cnn_feature': to_nchw(cnn_feature_cat),
    }


# ----------------------------------------------------------------------------
if __name__ == "__main__":
    key = jax.random.PRNGKey(0)
    kx, ku, kp = jax.random.split(key, 3)

    # x: NCHW image; unet_input: NHWC (torch forward transposes it to NCHW)
    x = jax.random.normal(kx, (2, 3, 32, 32), jnp.float32)
    unet_input = jax.random.normal(ku, (2, 32, 32, 3), jnp.float32)

    params = init_params(kp)

    out = jax.jit(network_forward)(x, unet_input, params)
    jax.block_until_ready(out)

    assert out['ct_hm'].shape == (2, 1, 8, 8)
    assert out['wh'].shape == (2, 2, 8, 8)
    assert out['ct_hm_sigmoid'].shape == (2, 1, 8, 8)
    assert out['cnn_feature'].shape == (2, 66, 8, 8)
    print("KERNEL_OK")
</pallas_src>

<mosaic_0001>
module attributes {stable_mosaic.version = 11 : i64} {
  func.func @_conv3x3_kernel(%arg0: memref<224x3xf32, #tpu.memory_space<vmem>>, %arg1: memref<9x3x16xf32, #tpu.memory_space<vmem>>, %arg2: memref<1x16xf32, #tpu.memory_space<vmem>>, %arg3: memref<200x16xf32, #tpu.memory_space<vmem>>) attributes {dimension_semantics = [], scalar_prefetch = 0 : i64, scratch_operands = 0 : i64, tpu.core_type = #tpu.core_type<tc>} {
    %cst = arith.constant 0.000000e+00 : f32
    %0 = vector.broadcast %cst : f32 to vector<200x16xf32>
    %c0 = arith.constant 0 : index
    %c0_0 = arith.constant 0 : index
    %1 = vector.load %arg0[%c0, %c0_0] : memref<224x3xf32, #tpu.memory_space<vmem>>, vector<200x3xf32>
    %c0_1 = arith.constant 0 : index
    %c0_2 = arith.constant 0 : index
    %c0_3 = arith.constant 0 : index
    %2 = vector.load %arg1[%c0_1, %c0_2, %c0_3] : memref<9x3x16xf32, #tpu.memory_space<vmem>>, vector<1x3x16xf32>
    %3 = vector.shape_cast %2 : vector<1x3x16xf32> to vector<3x16xf32>
    %cst_4 = arith.constant dense<0.000000e+00> : vector<200x16xf32>
    %4 = tpu.matmul %1, %3, %cst_4 {dimension_numbers = #tpu.dot_dimension_numbers<[1], [0], [0], [1], [0, 0, 1, 1], [], []>} : vector<200x3xf32>, vector<3x16xf32>, vector<200x16xf32> -> vector<200x16xf32>
    %5 = arith.addf %0, %4 : vector<200x16xf32>
    %c1 = arith.constant 1 : index
    %c0_5 = arith.constant 0 : index
    %6 = vector.load %arg0[%c1, %c0_5] : memref<224x3xf32, #tpu.memory_space<vmem>>, vector<200x3xf32>
    %c1_6 = arith.constant 1 : index
    %c0_7 = arith.constant 0 : index
    %c0_8 = arith.constant 0 : index
    %7 = vector.load %arg1[%c1_6, %c0_7, %c0_8] : memref<9x3x16xf32, #tpu.memory_space<vmem>>, vector<1x3x16xf32>
    %8 = vector.shape_cast %7 : vector<1x3x16xf32> to vector<3x16xf32>
    %cst_9 = arith.constant dense<0.000000e+00> : vector<200x16xf32>
    %9 = tpu.matmul %6, %8, %cst_9 {dimension_numbers = #tpu.dot_dimension_numbers<[1], [0], [0], [1], [0, 0, 1, 1], [], []>} : vector<200x3xf32>, vector<3x16xf32>, vector<200x16xf32> -> vector<200x16xf32>
    %10 = arith.addf %5, %9 : vector<200x16xf32>
    %c2 = arith.constant 2 : index
    %c0_10 = arith.constant 0 : index
    %11 = vector.load %arg0[%c2, %c0_10] : memref<224x3xf32, #tpu.memory_space<vmem>>, vector<200x3xf32>
    %c2_11 = arith.constant 2 : index
    %c0_12 = arith.constant 0 : index
    %c0_13 = arith.constant 0 : index
    %12 = vector.load %arg1[%c2_11, %c0_12, %c0_13] : memref<9x3x16xf32, #tpu.memory_space<vmem>>, vector<1x3x16xf32>
    %13 = vector.shape_cast %12 : vector<1x3x16xf32> to vector<3x16xf32>
    %cst_14 = arith.constant dense<0.000000e+00> : vector<200x16xf32>
    %14 = tpu.matmul %11, %13, %cst_14 {dimension_numbers = #tpu.dot_dimension_numbers<[1], [0], [0], [1], [0, 0, 1, 1], [], []>} : vector<200x3xf32>, vector<3x16xf32>, vector<200x16xf32> -> vector<200x16xf32>
    %15 = arith.addf %10, %14 : vector<200x16xf32>
    %c10 = arith.constant 10 : index
    %c0_15 = arith.constant 0 : index
    %16 = vector.load %arg0[%c10, %c0_15] : memref<224x3xf32, #tpu.memory_space<vmem>>, vector<200x3xf32>
    %c3 = arith.constant 3 : index
    %c0_16 = arith.constant 0 : index
    %c0_17 = arith.constant 0 : index
    %17 = vector.load %arg1[%c3, %c0_16, %c0_17] : memref<9x3x16xf32, #tpu.memory_space<vmem>>, vector<1x3x16xf32>
    %18 = vector.shape_cast %17 : vector<1x3x16xf32> to vector<3x16xf32>
    %cst_18 = arith.constant dense<0.000000e+00> : vector<200x16xf32>
    %19 = tpu.matmul %16, %18, %cst_18 {dimension_numbers = #tpu.dot_dimension_numbers<[1], [0], [0], [1], [0, 0, 1, 1], [], []>} : vector<200x3xf32>, vector<3x16xf32>, vector<200x16xf32> -> vector<200x16xf32>
    %20 = arith.addf %15, %19 : vector<200x16xf32>
    %c11 = arith.constant 11 : index
    %c0_19 = arith.constant 0 : index
    %21 = vector.load %arg0[%c11, %c0_19] : memref<224x3xf32, #tpu.memory_space<vmem>>, vector<200x3xf32>
    %c4 = arith.constant 4 : index
    %c0_20 = arith.constant 0 : index
    %c0_21 = arith.constant 0 : index
    %22 = vector.load %arg1[%c4, %c0_20, %c0_21] : memref<9x3x16xf32, #tpu.memory_space<vmem>>, vector<1x3x16xf32>
    %23 = vector.shape_cast %22 : vector<1x3x16xf32> to vector<3x16xf32>
    %cst_22 = arith.constant dense<0.000000e+00> : vector<200x16xf32>
    %24 = tpu.matmul %21, %23, %cst_22 {dimension_numbers = #tpu.dot_dimension_numbers<[1], [0], [0], [1], [0, 0, 1, 1], [], []>} : vector<200x3xf32>, vector<3x16xf32>, vector<200x16xf32> -> vector<200x16xf32>
    %25 = arith.addf %20, %24 : vector<200x16xf32>
    %c12 = arith.constant 12 : index
    %c0_23 = arith.constant 0 : index
    %26 = vector.load %arg0[%c12, %c0_23] : memref<224x3xf32, #tpu.memory_space<vmem>>, vector<200x3xf32>
    %c5 = arith.constant 5 : index
    %c0_24 = arith.constant 0 : index
    %c0_25 = arith.constant 0 : index
    %27 = vector.load %arg1[%c5, %c0_24, %c0_25] : memref<9x3x16xf32, #tpu.memory_space<vmem>>, vector<1x3x16xf32>
    %28 = vector.shape_cast %27 : vector<1x3x16xf32> to vector<3x16xf32>
    %cst_26 = arith.constant dense<0.000000e+00> : vector<200x16xf32>
    %29 = tpu.matmul %26, %28, %cst_26 {dimension_numbers = #tpu.dot_dimension_numbers<[1], [0], [0], [1], [0, 0, 1, 1], [], []>} : vector<200x3xf32>, vector<3x16xf32>, vector<200x16xf32> -> vector<200x16xf32>
    %30 = arith.addf %25, %29 : vector<200x16xf32>
    %c20 = arith.constant 20 : index
    %c0_27 = arith.constant 0 : index
    %31 = vector.load %arg0[%c20, %c0_27] : memref<224x3xf32, #tpu.memory_space<vmem>>, vector<200x3xf32>
    %c6 = arith.constant 6 : index
    %c0_28 = arith.constant 0 : index
    %c0_29 = arith.constant 0 : index
    %32 = vector.load %arg1[%c6, %c0_28, %c0_29] : memref<9x3x16xf32, #tpu.memory_space<vmem>>, vector<1x3x16xf32>
    %33 = vector.shape_cast %32 : vector<1x3x16xf32> to vector<3x16xf32>
    %cst_30 = arith.constant dense<0.000000e+00> : vector<200x16xf32>
    %34 = tpu.matmul %31, %33, %cst_30 {dimension_numbers = #tpu.dot_dimension_numbers<[1], [0], [0], [1], [0, 0, 1, 1], [], []>} : vector<200x3xf32>, vector<3x16xf32>, vector<200x16xf32> -> vector<200x16xf32>
    %35 = arith.addf %30, %34 : vector<200x16xf32>
    %c21 = arith.constant 21 : index
    %c0_31 = arith.constant 0 : index
    %36 = vector.load %arg0[%c21, %c0_31] : memref<224x3xf32, #tpu.memory_space<vmem>>, vector<200x3xf32>
    %c7 = arith.constant 7 : index
    %c0_32 = arith.constant 0 : index
    %c0_33 = arith.constant 0 : index
    %37 = vector.load %arg1[%c7, %c0_32, %c0_33] : memref<9x3x16xf32, #tpu.memory_space<vmem>>, vector<1x3x16xf32>
    %38 = vector.shape_cast %37 : vector<1x3x16xf32> to vector<3x16xf32>
    %cst_34 = arith.constant dense<0.000000e+00> : vector<200x16xf32>
    %39 = tpu.matmul %36, %38, %cst_34 {dimension_numbers = #tpu.dot_dimension_numbers<[1], [0], [0], [1], [0, 0, 1, 1], [], []>} : vector<200x3xf32>, vector<3x16xf32>, vector<200x16xf32> -> vector<200x16xf32>
    %40 = arith.addf %35, %39 : vector<200x16xf32>
    %c22 = arith.constant 22 : index
    %c0_35 = arith.constant 0 : index
    %41 = vector.load %arg0[%c22, %c0_35] : memref<224x3xf32, #tpu.memory_space<vmem>>, vector<200x3xf32>
    %c8 = arith.constant 8 : index
    %c0_36 = arith.constant 0 : index
    %c0_37 = arith.constant 0 : index
    %42 = vector.load %arg1[%c8, %c0_36, %c0_37] : memref<9x3x16xf32, #tpu.memory_space<vmem>>, vector<1x3x16xf32>
    %43 = vector.shape_cast %42 : vector<1x3x16xf32> to vector<3x16xf32>
    %cst_38 = arith.constant dense<0.000000e+00> : vector<200x16xf32>
    %44 = tpu.matmul %41, %43, %cst_38 {dimension_numbers = #tpu.dot_dimension_numbers<[1], [0], [0], [1], [0, 0, 1, 1], [], []>} : vector<200x3xf32>, vector<3x16xf32>, vector<200x16xf32> -> vector<200x16xf32>
    %45 = arith.addf %40, %44 : vector<200x16xf32>
    %c0_39 = arith.constant 0 : index
    %c0_40 = arith.constant 0 : index
    %46 = vector.load %arg2[%c0_39, %c0_40] : memref<1x16xf32, #tpu.memory_space<vmem>>, vector<1x16xf32>
    %47 = vector.broadcast %46 : vector<1x16xf32> to vector<200x16xf32>
    %48 = arith.addf %45, %47 : vector<200x16xf32>
    %cst_41 = arith.constant 0.000000e+00 : f32
    %49 = vector.broadcast %cst_41 : f32 to vector<200x16xf32>
    %50 = arith.maximumf %48, %49 : vector<200x16xf32>
    %c0_42 = arith.constant 0 : index
    %c0_43 = arith.constant 0 : index
    %51 = vector.load %arg3[%c0_42, %c0_43] : memref<200x16xf32, #tpu.memory_space<vmem>>, vector<200x16xf32>
    tpu.vector_store %arg3[%c0_42, %c0_43], %50 {strides = array<i32>} : memref<200x16xf32, #tpu.memory_space<vmem>>, vector<200x16xf32>,
    return
  }
}

module attributes {stable_mosaic.version = 11 : i64} {
  func.func @_conv3x3_kernel(%arg0: memref<224x16xf32, #tpu.memory_space<vmem>>, %arg1: memref<9x16x2xf32, #tpu.memory_space<vmem>>, %arg2: memref<1x2xf32, #tpu.memory_space<vmem>>, %arg3: memref<200x2xf32, #tpu.memory_space<vmem>>) attributes {dimension_semantics = [], scalar_prefetch = 0 : i64, scratch_operands = 0 : i64, tpu.core_type = #tpu.core_type<tc>} {
    %cst = arith.constant 0.000000e+00 : f32
    %0 = vector.broadcast %cst : f32 to vector<200x2xf32>
    %c0 = arith.constant 0 : index
    %c0_0 = arith.constant 0 : index
    %1 = vector.load %arg0[%c0, %c0_0] : memref<224x16xf32, #tpu.memory_space<vmem>>, vector<200x16xf32>
    %c0_1 = arith.constant 0 : index
    %c0_2 = arith.constant 0 : index
    %c0_3 = arith.constant 0 : index
    %2 = vector.load %arg1[%c0_1, %c0_2, %c0_3] : memref<9x16x2xf32, #tpu.memory_space<vmem>>, vector<1x16x2xf32>
    %3 = vector.shape_cast %2 : vector<1x16x2xf32> to vector<16x2xf32>
    %cst_4 = arith.constant dense<0.000000e+00> : vector<200x2xf32>
    %4 = tpu.matmul %1, %3, %cst_4 {dimension_numbers = #tpu.dot_dimension_numbers<[1], [0], [0], [1], [0, 0, 1, 1], [], []>} : vector<200x16xf32>, vector<16x2xf32>, vector<200x2xf32> -> vector<200x2xf32>
    %5 = arith.addf %0, %4 : vector<200x2xf32>
    %c1 = arith.constant 1 : index
    %c0_5 = arith.constant 0 : index
    %6 = vector.load %arg0[%c1, %c0_5] : memref<224x16xf32, #tpu.memory_space<vmem>>, vector<200x16xf32>
    %c1_6 = arith.constant 1 : index
    %c0_7 = arith.constant 0 : index
    %c0_8 = arith.constant 0 : index
    %7 = vector.load %arg1[%c1_6, %c0_7, %c0_8] : memref<9x16x2xf32, #tpu.memory_space<vmem>>, vector<1x16x2xf32>
    %8 = vector.shape_cast %7 : vector<1x16x2xf32> to vector<16x2xf32>
    %cst_9 = arith.constant dense<0.000000e+00> : vector<200x2xf32>
    %9 = tpu.matmul %6, %8, %cst_9 {dimension_numbers = #tpu.dot_dimension_numbers<[1], [0], [0], [1], [0, 0, 1, 1], [], []>} : vector<200x16xf32>, vector<16x2xf32>, vector<200x2xf32> -> vector<200x2xf32>
    %10 = arith.addf %5, %9 : vector<200x2xf32>
    %c2 = arith.constant 2 : index
    %c0_10 = arith.constant 0 : index
    %11 = vector.load %arg0[%c2, %c0_10] : memref<224x16xf32, #tpu.memory_space<vmem>>, vector<200x16xf32>
    %c2_11 = arith.constant 2 : index
    %c0_12 = arith.constant 0 : index
    %c0_13 = arith.constant 0 : index
    %12 = vector.load %arg1[%c2_11, %c0_12, %c0_13] : memref<9x16x2xf32, #tpu.memory_space<vmem>>, vector<1x16x2xf32>
    %13 = vector.shape_cast %12 : vector<1x16x2xf32> to vector<16x2xf32>
    %cst_14 = arith.constant dense<0.000000e+00> : vector<200x2xf32>
    %14 = tpu.matmul %11, %13, %cst_14 {dimension_numbers = #tpu.dot_dimension_numbers<[1], [0], [0], [1], [0, 0, 1, 1], [], []>} : vector<200x16xf32>, vector<16x2xf32>, vector<200x2xf32> -> vector<200x2xf32>
    %15 = arith.addf %10, %14 : vector<200x2xf32>
    %c10 = arith.constant 10 : index
    %c0_15 = arith.constant 0 : index
    %16 = vector.load %arg0[%c10, %c0_15] : memref<224x16xf32, #tpu.memory_space<vmem>>, vector<200x16xf32>
    %c3 = arith.constant 3 : index
    %c0_16 = arith.constant 0 : index
    %c0_17 = arith.constant 0 : index
    %17 = vector.load %arg1[%c3, %c0_16, %c0_17] : memref<9x16x2xf32, #tpu.memory_space<vmem>>, vector<1x16x2xf32>
    %18 = vector.shape_cast %17 : vector<1x16x2xf32> to vector<16x2xf32>
    %cst_18 = arith.constant dense<0.000000e+00> : vector<200x2xf32>
    %19 = tpu.matmul %16, %18, %cst_18 {dimension_numbers = #tpu.dot_dimension_numbers<[1], [0], [0], [1], [0, 0, 1, 1], [], []>} : vector<200x16xf32>, vector<16x2xf32>, vector<200x2xf32> -> vector<200x2xf32>
    %20 = arith.addf %15, %19 : vector<200x2xf32>
    %c11 = arith.constant 11 : index
    %c0_19 = arith.constant 0 : index
    %21 = vector.load %arg0[%c11, %c0_19] : memref<224x16xf32, #tpu.memory_space<vmem>>, vector<200x16xf32>
    %c4 = arith.constant 4 : index
    %c0_20 = arith.constant 0 : index
    %c0_21 = arith.constant 0 : index
    %22 = vector.load %arg1[%c4, %c0_20, %c0_21] : memref<9x16x2xf32, #tpu.memory_space<vmem>>, vector<1x16x2xf32>
    %23 = vector.shape_cast %22 : vector<1x16x2xf32> to vector<16x2xf32>
    %cst_22 = arith.constant dense<0.000000e+00> : vector<200x2xf32>
    %24 = tpu.matmul %21, %23, %cst_22 {dimension_numbers = #tpu.dot_dimension_numbers<[1], [0], [0], [1], [0, 0, 1, 1], [], []>} : vector<200x16xf32>, vector<16x2xf32>, vector<200x2xf32> -> vector<200x2xf32>
    %25 = arith.addf %20, %24 : vector<200x2xf32>
    %c12 = arith.constant 12 : index
    %c0_23 = arith.constant 0 : index
    %26 = vector.load %arg0[%c12, %c0_23] : memref<224x16xf32, #tpu.memory_space<vmem>>, vector<200x16xf32>
    %c5 = arith.constant 5 : index
    %c0_24 = arith.constant 0 : index
    %c0_25 = arith.constant 0 : index
    %27 = vector.load %arg1[%c5, %c0_24, %c0_25] : memref<9x16x2xf32, #tpu.memory_space<vmem>>, vector<1x16x2xf32>
    %28 = vector.shape_cast %27 : vector<1x16x2xf32> to vector<16x2xf32>
    %cst_26 = arith.constant dense<0.000000e+00> : vector<200x2xf32>
    %29 = tpu.matmul %26, %28, %cst_26 {dimension_numbers = #tpu.dot_dimension_numbers<[1], [0], [0], [1], [0, 0, 1, 1], [], []>} : vector<200x16xf32>, vector<16x2xf32>, vector<200x2xf32> -> vector<200x2xf32>
    %30 = arith.addf %25, %29 : vector<200x2xf32>
    %c20 = arith.constant 20 : index
    %c0_27 = arith.constant 0 : index
    %31 = vector.load %arg0[%c20, %c0_27] : memref<224x16xf32, #tpu.memory_space<vmem>>, vector<200x16xf32>
    %c6 = arith.constant 6 : index
    %c0_28 = arith.constant 0 : index
    %c0_29 = arith.constant 0 : index
    %32 = vector.load %arg1[%c6, %c0_28, %c0_29] : memref<9x16x2xf32, #tpu.memory_space<vmem>>, vector<1x16x2xf32>
    %33 = vector.shape_cast %32 : vector<1x16x2xf32> to vector<16x2xf32>
    %cst_30 = arith.constant dense<0.000000e+00> : vector<200x2xf32>
    %34 = tpu.matmul %31, %33, %cst_30 {dimension_numbers = #tpu.dot_dimension_numbers<[1], [0], [0], [1], [0, 0, 1, 1], [], []>} : vector<200x16xf32>, vector<16x2xf32>, vector<200x2xf32> -> vector<200x2xf32>
    %35 = arith.addf %30, %34 : vector<200x2xf32>
    %c21 = arith.constant 21 : index
    %c0_31 = arith.constant 0 : index
    %36 = vector.load %arg0[%c21, %c0_31] : memref<224x16xf32, #tpu.memory_space<vmem>>, vector<200x16xf32>
    %c7 = arith.constant 7 : index
    %c0_32 = arith.constant 0 : index
    %c0_33 = arith.constant 0 : index
    %37 = vector.load %arg1[%c7, %c0_32, %c0_33] : memref<9x16x2xf32, #tpu.memory_space<vmem>>, vector<1x16x2xf32>
    %38 = vector.shape_cast %37 : vector<1x16x2xf32> to vector<16x2xf32>
    %cst_34 = arith.constant dense<0.000000e+00> : vector<200x2xf32>
    %39 = tpu.matmul %36, %38, %cst_34 {dimension_numbers = #tpu.dot_dimension_numbers<[1], [0], [0], [1], [0, 0, 1, 1], [], []>} : vector<200x16xf32>, vector<16x2xf32>, vector<200x2xf32> -> vector<200x2xf32>
    %40 = arith.addf %35, %39 : vector<200x2xf32>
    %c22 = arith.constant 22 : index
    %c0_35 = arith.constant 0 : index
    %41 = vector.load %arg0[%c22, %c0_35] : memref<224x16xf32, #tpu.memory_space<vmem>>, vector<200x16xf32>
    %c8 = arith.constant 8 : index
    %c0_36 = arith.constant 0 : index
    %c0_37 = arith.constant 0 : index
    %42 = vector.load %arg1[%c8, %c0_36, %c0_37] : memref<9x16x2xf32, #tpu.memory_space<vmem>>, vector<1x16x2xf32>
    %43 = vector.shape_cast %42 : vector<1x16x2xf32> to vector<16x2xf32>
    %cst_38 = arith.constant dense<0.000000e+00> : vector<200x2xf32>
    %44 = tpu.matmul %41, %43, %cst_38 {dimension_numbers = #tpu.dot_dimension_numbers<[1], [0], [0], [1], [0, 0, 1, 1], [], []>} : vector<200x16xf32>, vector<16x2xf32>, vector<200x2xf32> -> vector<200x2xf32>
    %45 = arith.addf %40, %44 : vector<200x2xf32>
    %c0_39 = arith.constant 0 : index
    %c0_40 = arith.constant 0 : index
    %46 = vector.load %arg2[%c0_39, %c0_40] : memref<1x2xf32, #tpu.memory_space<vmem>>, vector<1x2xf32>
    %47 = vector.broadcast %46 : vector<1x2xf32> to vector<200x2xf32>
    %48 = arith.addf %45, %47 : vector<200x2xf32>
    %cst_41 = arith.constant 0.000000e+00 : f32
    %49 = vector.broadcast %cst_41 : f32 to vector<200x2xf32>
    %50 = arith.maximumf %48, %49 : vector<200x2xf32>
    %c0_42 = arith.constant 0 : index
    %c0_43 = arith.constant 0 : index
    %51 = vector.load %arg3[%c0_42, %c0_43] : memref<200x2xf32, #tpu.memory_space<vmem>>, vector<200x2xf32>
    tpu.vector_store %arg3[%c0_42, %c0_43], %50 {strides = array<i32>} : memref<200x2xf32, #tpu.memory_space<vmem>>, vector<200x2xf32>,
    return
  }
}

module attributes {stable_mosaic.version = 11 : i64} {
  func.func @_minmax_norm_kernel(%arg0: memref<2x128xf32, #tpu.memory_space<vmem>>, %arg1: memref<2x128xf32, #tpu.memory_space<vmem>>) attributes {dimension_semantics = [], scalar_prefetch = 0 : i64, scratch_operands = 0 : i64, tpu.core_type = #tpu.core_type<tc>} {
    %c0 = arith.constant 0 : index
    %c0_0 = arith.constant 0 : index
    %0 = vector.load %arg0[%c0, %c0_0] : memref<2x128xf32, #tpu.memory_space<vmem>>, vector<2x128xf32>
    %1 = vector.shape_cast %0 : vector<2x128xf32> to vector<1x2x128xf32>
    %cst = arith.constant dense<0x7F800000> : vector<1xf32>
    %2 = vector.multi_reduction <minimumf>, %1, %cst [1, 2] : vector<1x2x128xf32> to vector<1xf32>
    %3 = vector.shape_cast %2 : vector<1xf32> to vector<1x1x1xf32>
    %4 = vector.extract %3[0, 0, 0] : f32 from vector<1x1x1xf32>
    %5 = vector.shape_cast %0 : vector<2x128xf32> to vector<1x2x128xf32>
    %cst_1 = arith.constant dense<0xFF800000> : vector<1xf32>
    %6 = vector.multi_reduction <maximumf>, %5, %cst_1 [1, 2] : vector<1x2x128xf32> to vector<1xf32>
    %7 = vector.shape_cast %6 : vector<1xf32> to vector<1x1x1xf32>
    %8 = vector.extract %7[0, 0, 0] : f32 from vector<1x1x1xf32>
    %9 = arith.subf %8, %4 : f32
    %cst_2 = arith.constant 9.99999996E-13 : f32
    %10 = arith.maximumf %9, %cst_2 : f32
    %11 = vector.broadcast %4 : f32 to vector<2x128xf32>
    %12 = arith.subf %0, %11 : vector<2x128xf32>
    %cst_3 = arith.constant 2.550000e+02 : f32
    %13 = vector.broadcast %cst_3 : f32 to vector<2x128xf32>
    %14 = arith.mulf %13, %12 : vector<2x128xf32>
    %15 = vector.broadcast %10 : f32 to vector<2x128xf32>
    %16 = arith.divf %14, %15 : vector<2x128xf32>
    %c0_4 = arith.constant 0 : index
    %c0_5 = arith.constant 0 : index
    %17 = vector.load %arg1[%c0_4, %c0_5] : memref<2x128xf32, #tpu.memory_space<vmem>>, vector<2x128xf32>
    tpu.vector_store %arg1[%c0_4, %c0_5], %16 {strides = array<i32>} : memref<2x128xf32, #tpu.memory_space<vmem>>, vector<2x128xf32>,
    return
  }
}

module attributes {stable_mosaic.version = 11 : i64} {
  func.func @_conv3x3_kernel(%arg0: memref<224x3xf32, #tpu.memory_space<vmem>>, %arg1: memref<9x3x32xf32, #tpu.memory_space<vmem>>, %arg2: memref<1x32xf32, #tpu.memory_space<vmem>>, %arg3: memref<200x32xf32, #tpu.memory_space<vmem>>) attributes {dimension_semantics = [], scalar_prefetch = 0 : i64, scratch_operands = 0 : i64, tpu.core_type = #tpu.core_type<tc>} {
    %cst = arith.constant 0.000000e+00 : f32
    %0 = vector.broadcast %cst : f32 to vector<200x32xf32>
    %c0 = arith.constant 0 : index
    %c0_0 = arith.constant 0 : index
    %1 = vector.load %arg0[%c0, %c0_0] : memref<224x3xf32, #tpu.memory_space<vmem>>, vector<200x3xf32>
    %c0_1 = arith.constant 0 : index
    %c0_2 = arith.constant 0 : index
    %c0_3 = arith.constant 0 : index
    %2 = vector.load %arg1[%c0_1, %c0_2, %c0_3] : memref<9x3x32xf32, #tpu.memory_space<vmem>>, vector<1x3x32xf32>
    %3 = vector.shape_cast %2 : vector<1x3x32xf32> to vector<3x32xf32>
    %cst_4 = arith.constant dense<0.000000e+00> : vector<200x32xf32>
    %4 = tpu.matmul %1, %3, %cst_4 {dimension_numbers = #tpu.dot_dimension_numbers<[1], [0], [0], [1], [0, 0, 1, 1], [], []>} : vector<200x3xf32>, vector<3x32xf32>, vector<200x32xf32> -> vector<200x32xf32>
    %5 = arith.addf %0, %4 : vector<200x32xf32>
    %c1 = arith.constant 1 : index
    %c0_5 = arith.constant 0 : index
    %6 = vector.load %arg0[%c1, %c0_5] : memref<224x3xf32, #tpu.memory_space<vmem>>, vector<200x3xf32>
    %c1_6 = arith.constant 1 : index
    %c0_7 = arith.constant 0 : index
    %c0_8 = arith.constant 0 : index
    %7 = vector.load %arg1[%c1_6, %c0_7, %c0_8] : memref<9x3x32xf32, #tpu.memory_space<vmem>>, vector<1x3x32xf32>
    %8 = vector.shape_cast %7 : vector<1x3x32xf32> to vector<3x32xf32>
    %cst_9 = arith.constant dense<0.000000e+00> : vector<200x32xf32>
    %9 = tpu.matmul %6, %8, %cst_9 {dimension_numbers = #tpu.dot_dimension_numbers<[1], [0], [0], [1], [0, 0, 1, 1], [], []>} : vector<200x3xf32>, vector<3x32xf32>, vector<200x32xf32> -> vector<200x32xf32>
    %10 = arith.addf %5, %9 : vector<200x32xf32>
    %c2 = arith.constant 2 : index
    %c0_10 = arith.constant 0 : index
    %11 = vector.load %arg0[%c2, %c0_10] : memref<224x3xf32, #tpu.memory_space<vmem>>, vector<200x3xf32>
    %c2_11 = arith.constant 2 : index
    %c0_12 = arith.constant 0 : index
    %c0_13 = arith.constant 0 : index
    %12 = vector.load %arg1[%c2_11, %c0_12, %c0_13] : memref<9x3x32xf32, #tpu.memory_space<vmem>>, vector<1x3x32xf32>
    %13 = vector.shape_cast %12 : vector<1x3x32xf32> to vector<3x32xf32>
    %cst_14 = arith.constant dense<0.000000e+00> : vector<200x32xf32>
    %14 = tpu.matmul %11, %13, %cst_14 {dimension_numbers = #tpu.dot_dimension_numbers<[1], [0], [0], [1], [0, 0, 1, 1], [], []>} : vector<200x3xf32>, vector<3x32xf32>, vector<200x32xf32> -> vector<200x32xf32>
    %15 = arith.addf %10, %14 : vector<200x32xf32>
    %c10 = arith.constant 10 : index
    %c0_15 = arith.constant 0 : index
    %16 = vector.load %arg0[%c10, %c0_15] : memref<224x3xf32, #tpu.memory_space<vmem>>, vector<200x3xf32>
    %c3 = arith.constant 3 : index
    %c0_16 = arith.constant 0 : index
    %c0_17 = arith.constant 0 : index
    %17 = vector.load %arg1[%c3, %c0_16, %c0_17] : memref<9x3x32xf32, #tpu.memory_space<vmem>>, vector<1x3x32xf32>
    %18 = vector.shape_cast %17 : vector<1x3x32xf32> to vector<3x32xf32>
    %cst_18 = arith.constant dense<0.000000e+00> : vector<200x32xf32>
    %19 = tpu.matmul %16, %18, %cst_18 {dimension_numbers = #tpu.dot_dimension_numbers<[1], [0], [0], [1], [0, 0, 1, 1], [], []>} : vector<200x3xf32>, vector<3x32xf32>, vector<200x32xf32> -> vector<200x32xf32>
    %20 = arith.addf %15, %19 : vector<200x32xf32>
    %c11 = arith.constant 11 : index
    %c0_19 = arith.constant 0 : index
    %21 = vector.load %arg0[%c11, %c0_19] : memref<224x3xf32, #tpu.memory_space<vmem>>, vector<200x3xf32>
    %c4 = arith.constant 4 : index
    %c0_20 = arith.constant 0 : index
    %c0_21 = arith.constant 0 : index
    %22 = vector.load %arg1[%c4, %c0_20, %c0_21] : memref<9x3x32xf32, #tpu.memory_space<vmem>>, vector<1x3x32xf32>
    %23 = vector.shape_cast %22 : vector<1x3x32xf32> to vector<3x32xf32>
    %cst_22 = arith.constant dense<0.000000e+00> : vector<200x32xf32>
    %24 = tpu.matmul %21, %23, %cst_22 {dimension_numbers = #tpu.dot_dimension_numbers<[1], [0], [0], [1], [0, 0, 1, 1], [], []>} : vector<200x3xf32>, vector<3x32xf32>, vector<200x32xf32> -> vector<200x32xf32>
    %25 = arith.addf %20, %24 : vector<200x32xf32>
    %c12 = arith.constant 12 : index
    %c0_23 = arith.constant 0 : index
    %26 = vector.load %arg0[%c12, %c0_23] : memref<224x3xf32, #tpu.memory_space<vmem>>, vector<200x3xf32>
    %c5 = arith.constant 5 : index
    %c0_24 = arith.constant 0 : index
    %c0_25 = arith.constant 0 : index
    %27 = vector.load %arg1[%c5, %c0_24, %c0_25] : memref<9x3x32xf32, #tpu.memory_space<vmem>>, vector<1x3x32xf32>
    %28 = vector.shape_cast %27 : vector<1x3x32xf32> to vector<3x32xf32>
    %cst_26 = arith.constant dense<0.000000e+00> : vector<200x32xf32>
    %29 = tpu.matmul %26, %28, %cst_26 {dimension_numbers = #tpu.dot_dimension_numbers<[1], [0], [0], [1], [0, 0, 1, 1], [], []>} : vector<200x3xf32>, vector<3x32xf32>, vector<200x32xf32> -> vector<200x32xf32>
    %30 = arith.addf %25, %29 : vector<200x32xf32>
    %c20 = arith.constant 20 : index
    %c0_27 = arith.constant 0 : index
    %31 = vector.load %arg0[%c20, %c0_27] : memref<224x3xf32, #tpu.memory_space<vmem>>, vector<200x3xf32>
    %c6 = arith.constant 6 : index
    %c0_28 = arith.constant 0 : index
    %c0_29 = arith.constant 0 : index
    %32 = vector.load %arg1[%c6, %c0_28, %c0_29] : memref<9x3x32xf32, #tpu.memory_space<vmem>>, vector<1x3x32xf32>
    %33 = vector.shape_cast %32 : vector<1x3x32xf32> to vector<3x32xf32>
    %cst_30 = arith.constant dense<0.000000e+00> : vector<200x32xf32>
    %34 = tpu.matmul %31, %33, %cst_30 {dimension_numbers = #tpu.dot_dimension_numbers<[1], [0], [0], [1], [0, 0, 1, 1], [], []>} : vector<200x3xf32>, vector<3x32xf32>, vector<200x32xf32> -> vector<200x32xf32>
    %35 = arith.addf %30, %34 : vector<200x32xf32>
    %c21 = arith.constant 21 : index
    %c0_31 = arith.constant 0 : index
    %36 = vector.load %arg0[%c21, %c0_31] : memref<224x3xf32, #tpu.memory_space<vmem>>, vector<200x3xf32>
    %c7 = arith.constant 7 : index
    %c0_32 = arith.constant 0 : index
    %c0_33 = arith.constant 0 : index
    %37 = vector.load %arg1[%c7, %c0_32, %c0_33] : memref<9x3x32xf32, #tpu.memory_space<vmem>>, vector<1x3x32xf32>
    %38 = vector.shape_cast %37 : vector<1x3x32xf32> to vector<3x32xf32>
    %cst_34 = arith.constant dense<0.000000e+00> : vector<200x32xf32>
    %39 = tpu.matmul %36, %38, %cst_34 {dimension_numbers = #tpu.dot_dimension_numbers<[1], [0], [0], [1], [0, 0, 1, 1], [], []>} : vector<200x3xf32>, vector<3x32xf32>, vector<200x32xf32> -> vector<200x32xf32>
    %40 = arith.addf %35, %39 : vector<200x32xf32>
    %c22 = arith.constant 22 : index
    %c0_35 = arith.constant 0 : index
    %41 = vector.load %arg0[%c22, %c0_35] : memref<224x3xf32, #tpu.memory_space<vmem>>, vector<200x3xf32>
    %c8 = arith.constant 8 : index
    %c0_36 = arith.constant 0 : index
    %c0_37 = arith.constant 0 : index
    %42 = vector.load %arg1[%c8, %c0_36, %c0_37] : memref<9x3x32xf32, #tpu.memory_space<vmem>>, vector<1x3x32xf32>
    %43 = vector.shape_cast %42 : vector<1x3x32xf32> to vector<3x32xf32>
    %cst_38 = arith.constant dense<0.000000e+00> : vector<200x32xf32>
    %44 = tpu.matmul %41, %43, %cst_38 {dimension_numbers = #tpu.dot_dimension_numbers<[1], [0], [0], [1], [0, 0, 1, 1], [], []>} : vector<200x3xf32>, vector<3x32xf32>, vector<200x32xf32> -> vector<200x32xf32>
    %45 = arith.addf %40, %44 : vector<200x32xf32>
    %c0_39 = arith.constant 0 : index
    %c0_40 = arith.constant 0 : index
    %46 = vector.load %arg2[%c0_39, %c0_40] : memref<1x32xf32, #tpu.memory_space<vmem>>, vector<1x32xf32>
    %47 = vector.broadcast %46 : vector<1x32xf32> to vector<200x32xf32>
    %48 = arith.addf %45, %47 : vector<200x32xf32>
    %cst_41 = arith.constant 0.000000e+00 : f32
    %49 = vector.broadcast %cst_41 : f32 to vector<200x32xf32>
    %50 = arith.maximumf %48, %49 : vector<200x32xf32>
    %c0_42 = arith.constant 0 : index
    %c0_43 = arith.constant 0 : index
    %51 = vector.load %arg3[%c0_42, %c0_43] : memref<200x32xf32, #tpu.memory_space<vmem>>, vector<200x32xf32>
    tpu.vector_store %arg3[%c0_42, %c0_43], %50 {strides = array<i32>} : memref<200x32xf32, #tpu.memory_space<vmem>>, vector<200x32xf32>,
    return
  }
}

module attributes {stable_mosaic.version = 11 : i64} {
  func.func @_conv3x3_kernel(%arg0: memref<224x32xf32, #tpu.memory_space<vmem>>, %arg1: memref<9x32x64xf32, #tpu.memory_space<vmem>>, %arg2: memref<1x64xf32, #tpu.memory_space<vmem>>, %arg3: memref<200x64xf32, #tpu.memory_space<vmem>>) attributes {dimension_semantics = [], scalar_prefetch = 0 : i64, scratch_operands = 0 : i64, tpu.core_type = #tpu.core_type<tc>} {
    %cst = arith.constant 0.000000e+00 : f32
    %0 = vector.broadcast %cst : f32 to vector<200x64xf32>
    %c0 = arith.constant 0 : index
    %c0_0 = arith.constant 0 : index
    %1 = vector.load %arg0[%c0, %c0_0] : memref<224x32xf32, #tpu.memory_space<vmem>>, vector<200x32xf32>
    %c0_1 = arith.constant 0 : index
    %c0_2 = arith.constant 0 : index
    %c0_3 = arith.constant 0 : index
    %2 = vector.load %arg1[%c0_1, %c0_2, %c0_3] : memref<9x32x64xf32, #tpu.memory_space<vmem>>, vector<1x32x64xf32>
    %3 = vector.shape_cast %2 : vector<1x32x64xf32> to vector<32x64xf32>
    %cst_4 = arith.constant dense<0.000000e+00> : vector<200x64xf32>
    %4 = tpu.matmul %1, %3, %cst_4 {dimension_numbers = #tpu.dot_dimension_numbers<[1], [0], [0], [1], [0, 0, 1, 1], [], []>} : vector<200x32xf32>, vector<32x64xf32>, vector<200x64xf32> -> vector<200x64xf32>
    %5 = arith.addf %0, %4 : vector<200x64xf32>
    %c1 = arith.constant 1 : index
    %c0_5 = arith.constant 0 : index
    %6 = vector.load %arg0[%c1, %c0_5] : memref<224x32xf32, #tpu.memory_space<vmem>>, vector<200x32xf32>
    %c1_6 = arith.constant 1 : index
    %c0_7 = arith.constant 0 : index
    %c0_8 = arith.constant 0 : index
    %7 = vector.load %arg1[%c1_6, %c0_7, %c0_8] : memref<9x32x64xf32, #tpu.memory_space<vmem>>, vector<1x32x64xf32>
    %8 = vector.shape_cast %7 : vector<1x32x64xf32> to vector<32x64xf32>
    %cst_9 = arith.constant dense<0.000000e+00> : vector<200x64xf32>
    %9 = tpu.matmul %6, %8, %cst_9 {dimension_numbers = #tpu.dot_dimension_numbers<[1], [0], [0], [1], [0, 0, 1, 1], [], []>} : vector<200x32xf32>, vector<32x64xf32>, vector<200x64xf32> -> vector<200x64xf32>
    %10 = arith.addf %5, %9 : vector<200x64xf32>
    %c2 = arith.constant 2 : index
    %c0_10 = arith.constant 0 : index
    %11 = vector.load %arg0[%c2, %c0_10] : memref<224x32xf32, #tpu.memory_space<vmem>>, vector<200x32xf32>
    %c2_11 = arith.constant 2 : index
    %c0_12 = arith.constant 0 : index
    %c0_13 = arith.constant 0 : index
    %12 = vector.load %arg1[%c2_11, %c0_12, %c0_13] : memref<9x32x64xf32, #tpu.memory_space<vmem>>, vector<1x32x64xf32>
    %13 = vector.shape_cast %12 : vector<1x32x64xf32> to vector<32x64xf32>
    %cst_14 = arith.constant dense<0.000000e+00> : vector<200x64xf32>
    %14 = tpu.matmul %11, %13, %cst_14 {dimension_numbers = #tpu.dot_dimension_numbers<[1], [0], [0], [1], [0, 0, 1, 1], [], []>} : vector<200x32xf32>, vector<32x64xf32>, vector<200x64xf32> -> vector<200x64xf32>
    %15 = arith.addf %10, %14 : vector<200x64xf32>
    %c10 = arith.constant 10 : index
    %c0_15 = arith.constant 0 : index
    %16 = vector.load %arg0[%c10, %c0_15] : memref<224x32xf32, #tpu.memory_space<vmem>>, vector<200x32xf32>
    %c3 = arith.constant 3 : index
    %c0_16 = arith.constant 0 : index
    %c0_17 = arith.constant 0 : index
    %17 = vector.load %arg1[%c3, %c0_16, %c0_17] : memref<9x32x64xf32, #tpu.memory_space<vmem>>, vector<1x32x64xf32>
    %18 = vector.shape_cast %17 : vector<1x32x64xf32> to vector<32x64xf32>
    %cst_18 = arith.constant dense<0.000000e+00> : vector<200x64xf32>
    %19 = tpu.matmul %16, %18, %cst_18 {dimension_numbers = #tpu.dot_dimension_numbers<[1], [0], [0], [1], [0, 0, 1, 1], [], []>} : vector<200x32xf32>, vector<32x64xf32>, vector<200x64xf32> -> vector<200x64xf32>
    %20 = arith.addf %15, %19 : vector<200x64xf32>
    %c11 = arith.constant 11 : index
    %c0_19 = arith.constant 0 : index
    %21 = vector.load %arg0[%c11, %c0_19] : memref<224x32xf32, #tpu.memory_space<vmem>>, vector<200x32xf32>
    %c4 = arith.constant 4 : index
    %c0_20 = arith.constant 0 : index
    %c0_21 = arith.constant 0 : index
    %22 = vector.load %arg1[%c4, %c0_20, %c0_21] : memref<9x32x64xf32, #tpu.memory_space<vmem>>, vector<1x32x64xf32>
    %23 = vector.shape_cast %22 : vector<1x32x64xf32> to vector<32x64xf32>
    %cst_22 = arith.constant dense<0.000000e+00> : vector<200x64xf32>
    %24 = tpu.matmul %21, %23, %cst_22 {dimension_numbers = #tpu.dot_dimension_numbers<[1], [0], [0], [1], [0, 0, 1, 1], [], []>} : vector<200x32xf32>, vector<32x64xf32>, vector<200x64xf32> -> vector<200x64xf32>
    %25 = arith.addf %20, %24 : vector<200x64xf32>
    %c12 = arith.constant 12 : index
    %c0_23 = arith.constant 0 : index
    %26 = vector.load %arg0[%c12, %c0_23] : memref<224x32xf32, #tpu.memory_space<vmem>>, vector<200x32xf32>
    %c5 = arith.constant 5 : index
    %c0_24 = arith.constant 0 : index
    %c0_25 = arith.constant 0 : index
    %27 = vector.load %arg1[%c5, %c0_24, %c0_25] : memref<9x32x64xf32, #tpu.memory_space<vmem>>, vector<1x32x64xf32>
    %28 = vector.shape_cast %27 : vector<1x32x64xf32> to vector<32x64xf32>
    %cst_26 = arith.constant dense<0.000000e+00> : vector<200x64xf32>
    %29 = tpu.matmul %26, %28, %cst_26 {dimension_numbers = #tpu.dot_dimension_numbers<[1], [0], [0], [1], [0, 0, 1, 1], [], []>} : vector<200x32xf32>, vector<32x64xf32>, vector<200x64xf32> -> vector<200x64xf32>
    %30 = arith.addf %25, %29 : vector<200x64xf32>
    %c20 = arith.constant 20 : index
    %c0_27 = arith.constant 0 : index
    %31 = vector.load %arg0[%c20, %c0_27] : memref<224x32xf32, #tpu.memory_space<vmem>>, vector<200x32xf32>
    %c6 = arith.constant 6 : index
    %c0_28 = arith.constant 0 : index
    %c0_29 = arith.constant 0 : index
    %32 = vector.load %arg1[%c6, %c0_28, %c0_29] : memref<9x32x64xf32, #tpu.memory_space<vmem>>, vector<1x32x64xf32>
    %33 = vector.shape_cast %32 : vector<1x32x64xf32> to vector<32x64xf32>
    %cst_30 = arith.constant dense<0.000000e+00> : vector<200x64xf32>
    %34 = tpu.matmul %31, %33, %cst_30 {dimension_numbers = #tpu.dot_dimension_numbers<[1], [0], [0], [1], [0, 0, 1, 1], [], []>} : vector<200x32xf32>, vector<32x64xf32>, vector<200x64xf32> -> vector<200x64xf32>
    %35 = arith.addf %30, %34 : vector<200x64xf32>
    %c21 = arith.constant 21 : index
    %c0_31 = arith.constant 0 : index
    %36 = vector.load %arg0[%c21, %c0_31] : memref<224x32xf32, #tpu.memory_space<vmem>>, vector<200x32xf32>
    %c7 = arith.constant 7 : index
    %c0_32 = arith.constant 0 : index
    %c0_33 = arith.constant 0 : index
    %37 = vector.load %arg1[%c7, %c0_32, %c0_33] : memref<9x32x64xf32, #tpu.memory_space<vmem>>, vector<1x32x64xf32>
    %38 = vector.shape_cast %37 : vector<1x32x64xf32> to vector<32x64xf32>
    %cst_34 = arith.constant dense<0.000000e+00> : vector<200x64xf32>
    %39 = tpu.matmul %36, %38, %cst_34 {dimension_numbers = #tpu.dot_dimension_numbers<[1], [0], [0], [1], [0, 0, 1, 1], [], []>} : vector<200x32xf32>, vector<32x64xf32>, vector<200x64xf32> -> vector<200x64xf32>
    %40 = arith.addf %35, %39 : vector<200x64xf32>
    %c22 = arith.constant 22 : index
    %c0_35 = arith.constant 0 : index
    %41 = vector.load %arg0[%c22, %c0_35] : memref<224x32xf32, #tpu.memory_space<vmem>>, vector<200x32xf32>
    %c8 = arith.constant 8 : index
    %c0_36 = arith.constant 0 : index
    %c0_37 = arith.constant 0 : index
    %42 = vector.load %arg1[%c8, %c0_36, %c0_37] : memref<9x32x64xf32, #tpu.memory_space<vmem>>, vector<1x32x64xf32>
    %43 = vector.shape_cast %42 : vector<1x32x64xf32> to vector<32x64xf32>
    %cst_38 = arith.constant dense<0.000000e+00> : vector<200x64xf32>
    %44 = tpu.matmul %41, %43, %cst_38 {dimension_numbers = #tpu.dot_dimension_numbers<[1], [0], [0], [1], [0, 0, 1, 1], [], []>} : vector<200x32xf32>, vector<32x64xf32>, vector<200x64xf32> -> vector<200x64xf32>
    %45 = arith.addf %40, %44 : vector<200x64xf32>
    %c0_39 = arith.constant 0 : index
    %c0_40 = arith.constant 0 : index
    %46 = vector.load %arg2[%c0_39, %c0_40] : memref<1x64xf32, #tpu.memory_space<vmem>>, vector<1x64xf32>
    %47 = vector.broadcast %46 : vector<1x64xf32> to vector<200x64xf32>
    %48 = arith.addf %45, %47 : vector<200x64xf32>
    %cst_41 = arith.constant 0.000000e+00 : f32
    %49 = vector.broadcast %cst_41 : f32 to vector<200x64xf32>
    %50 = arith.maximumf %48, %49 : vector<200x64xf32>
    %c0_42 = arith.constant 0 : index
    %c0_43 = arith.constant 0 : index
    %51 = vector.load %arg3[%c0_42, %c0_43] : memref<200x64xf32, #tpu.memory_space<vmem>>, vector<200x64xf32>
    tpu.vector_store %arg3[%c0_42, %c0_43], %50 {strides = array<i32>} : memref<200x64xf32, #tpu.memory_space<vmem>>, vector<200x64xf32>,
    return
  }
}

module attributes {stable_mosaic.version = 11 : i64} {
  func.func @_fused_head_kernel(%arg0: i32, %arg1: memref<128x64xf32, #tpu.memory_space<vmem>>, %arg2: memref<64x64xf32, #tpu.memory_space<vmem>>, %arg3: memref<1x64xf32, #tpu.memory_space<vmem>>, %arg4: memref<64x128xf32, #tpu.memory_space<vmem>>, %arg5: memref<1x128xf32, #tpu.memory_space<vmem>>, %arg6: memref<128x128xf32, #tpu.memory_space<vmem>>, %arg7: memref<128x128xf32, #tpu.memory_space<vmem>>) attributes {dimension_semantics = [#tpu.dimension_semantics<parallel>], iteration_bounds = array<i64: 1>, scalar_prefetch = 0 : i64, scratch_operands = 0 : i64, tpu.core_type = #tpu.core_type<tc>, window_params = [{transform_indices = @transform_0, window_bounds = array<i64: 128, 64>}, {pipeline_mode = #tpu.pipeline_mode<synchronous>, transform_indices = @transform_1, window_bounds = array<i64: 64, 64>}, {pipeline_mode = #tpu.pipeline_mode<synchronous>, transform_indices = @transform_2, window_bounds = array<i64: 1, 64>}, {pipeline_mode = #tpu.pipeline_mode<synchronous>, transform_indices = @transform_3, window_bounds = array<i64: 64, 128>}, {pipeline_mode = #tpu.pipeline_mode<synchronous>, transform_indices = @transform_4, window_bounds = array<i64: 1, 128>}, {transform_indices = @transform_5, window_bounds = array<i64: 128, 128>}, {transform_indices = @transform_6, window_bounds = array<i64: 128, 128>}]} {
    %c0 = arith.constant 0 : index
    %c0_0 = arith.constant 0 : index
    %0 = vector.load %arg1[%c0, %c0_0] : memref<128x64xf32, #tpu.memory_space<vmem>>, vector<128x64xf32>
    %c0_1 = arith.constant 0 : index
    %c0_2 = arith.constant 0 : index
    %1 = vector.load %arg2[%c0_1, %c0_2] : memref<64x64xf32, #tpu.memory_space<vmem>>, vector<64x64xf32>
    %cst = arith.constant dense<0.000000e+00> : vector<128x64xf32>
    %2 = tpu.matmul %0, %1, %cst {dimension_numbers = #tpu.dot_dimension_numbers<[1], [0], [0], [1], [0, 0, 1, 1], [], []>} : vector<128x64xf32>, vector<64x64xf32>, vector<128x64xf32> -> vector<128x64xf32>
    %c0_3 = arith.constant 0 : index
    %c0_4 = arith.constant 0 : index
    %3 = vector.load %arg3[%c0_3, %c0_4] : memref<1x64xf32, #tpu.memory_space<vmem>>, vector<1x64xf32>
    %4 = vector.broadcast %3 : vector<1x64xf32> to vector<128x64xf32>
    %5 = arith.addf %2, %4 : vector<128x64xf32>
    %cst_5 = arith.constant 0.000000e+00 : f32
    %6 = vector.broadcast %cst_5 : f32 to vector<128x64xf32>
    %7 = arith.maximumf %5, %6 : vector<128x64xf32>
    %c0_6 = arith.constant 0 : index
    %c0_7 = arith.constant 0 : index
    %8 = vector.load %arg4[%c0_6, %c0_7] : memref<64x128xf32, #tpu.memory_space<vmem>>, vector<64x128xf32>
    %cst_8 = arith.constant dense<0.000000e+00> : vector<128x128xf32>
    %9 = tpu.matmul %7, %8, %cst_8 {dimension_numbers = #tpu.dot_dimension_numbers<[1], [0], [0], [1], [0, 0, 1, 1], [], []>} : vector<128x64xf32>, vector<64x128xf32>, vector<128x128xf32> -> vector<128x128xf32>
    %c0_9 = arith.constant 0 : index
    %c0_10 = arith.constant 0 : index
    %10 = vector.load %arg5[%c0_9, %c0_10] : memref<1x128xf32, #tpu.memory_space<vmem>>, vector<1x128xf32>
    %11 = vector.broadcast %10 : vector<1x128xf32> to vector<128x128xf32>
    %12 = arith.addf %9, %11 : vector<128x128xf32>
    %c0_11 = arith.constant 0 : index
    %c0_12 = arith.constant 0 : index
    %13 = vector.load %arg6[%c0_11, %c0_12] : memref<128x128xf32, #tpu.memory_space<vmem>>, vector<128x128xf32>
    tpu.vector_store %arg6[%c0_11, %c0_12], %12 {strides = array<i32>} : memref<128x128xf32, #tpu.memory_space<vmem>>, vector<128x128xf32>,
    %14 = arith.negf %12 : vector<128x128xf32>
    %15 = math.exp %14 : vector<128x128xf32>
    %cst_13 = arith.constant 1.000000e+00 : f32
    %16 = vector.broadcast %cst_13 : f32 to vector<128x128xf32>
    %17 = arith.addf %16, %15 : vector<128x128xf32>
    %18 = arith.divf %16, %17 : vector<128x128xf32>
    %c0_14 = arith.constant 0 : index
    %c0_15 = arith.constant 0 : index
    %19 = vector.load %arg7[%c0_14, %c0_15] : memref<128x128xf32, #tpu.memory_space<vmem>>, vector<128x128xf32>
    tpu.vector_store %arg7[%c0_14, %c0_15], %18 {strides = array<i32>} : memref<128x128xf32, #tpu.memory_space<vmem>>, vector<128x128xf32>,
    return
  }
  func.func @transform_0(%arg0: i32) -> (i32, i32) {
    %c0_i32 = arith.constant 0 : i32
    %c0_i32_0 = arith.constant 0 : i32
    return %arg0, %c0_i32 : i32, i32
  }
  func.func @transform_1(%arg0: i32) -> (i32, i32) {
    %c0_i32 = arith.constant 0 : i32
    %c0_i32_0 = arith.constant 0 : i32
    %c0_i32_1 = arith.constant 0 : i32
    return %c0_i32, %c0_i32_0 : i32, i32
  }
  func.func @transform_2(%arg0: i32) -> (i32, i32) {
    %c0_i32 = arith.constant 0 : i32
    %c0_i32_0 = arith.constant 0 : i32
    %c0_i32_1 = arith.constant 0 : i32
    return %c0_i32, %c0_i32_0 : i32, i32
  }
  func.func @transform_3(%arg0: i32) -> (i32, i32) {
    %c0_i32 = arith.constant 0 : i32
    %c0_i32_0 = arith.constant 0 : i32
    %c0_i32_1 = arith.constant 0 : i32
    return %c0_i32, %c0_i32_0 : i32, i32
  }
  func.func @transform_4(%arg0: i32) -> (i32, i32) {
    %c0_i32 = arith.constant 0 : i32
    %c0_i32_0 = arith.constant 0 : i32
    %c0_i32_1 = arith.constant 0 : i32
    return %c0_i32, %c0_i32_0 : i32, i32
  }
  func.func @transform_5(%arg0: i32) -> (i32, i32) {
    %c0_i32 = arith.constant 0 : i32
    %c0_i32_0 = arith.constant 0 : i32
    return %arg0, %c0_i32 : i32, i32
  }
  func.func @transform_6(%arg0: i32) -> (i32, i32) {
    %c0_i32 = arith.constant 0 : i32
    %c0_i32_0 = arith.constant 0 : i32
    return %arg0, %c0_i32 : i32, i32
  }
}

</mosaic_0001>

<llo_original>
// kernel: network_forward.11
$region0: #{network_forward.11}
  #allocation0 [shape = 'u32[]', space=smem, size = 0x4, offset = 0x4, fixed_abs, tag = 'smem constant byte address 0x4 - core index']
  #allocation1 [shape = 'u32[144,128]{1,0:T(1,128)}', space=vmem, size = 0x12000, scoped, tag = 'internal scratch']
  %s0 = inlined_call_operand.vmem [shape: f32[2,128], index: 0, kind: input, shape index: {}]
  %s1 = inlined_call_operand.vmem [shape: f32[2,128], index: 1, kind: output, shape index: {}]
  %s2 = sld [smem:[#allocation0]]
  $region14: #{network_forward.11} parent=0
    _
  %s4 = ssub.s32 1, %s2
  %s5 = scalar_select 0, %s4, %s2
  // Predicated region
  $region2: #{network_forward.11} parent=0 // pred_check
    _
  $region3: #{network_forward.11} parent=0 // pred_check_branch
    %7 = sbr.rel (0) target = $region5
  $region4: #{network_forward.11} parent=0 // pred_region
    _
  $region5: #{network_forward.11} parent=0 // pred_fallthru
    _
  %v8 = vld [vmem:[%s0] sm:$0x3]
  %vm9 = vcmask 1041408
  %v10 = vsel %vm9, %v8, inf
  %11 = vmin.xlane.f32.xlu0 %v10
  %v12 = vpop.xlane.xlu0 %11
  %v13 = vrot.slane %v12, 4
  %v14 = vmin.f32 %v12, %v13
  %v15 = vrot.slane %v14, 2
  %v16 = vmin.f32 %v14, %v15
  %v17 = vrot.slane %v16, 1
  %v18 = vmin.f32 %v16, %v17
  %s19 = vtos %v18
  %v20 = vsel %vm9, %v8, -inf
  %21 = vmax.xlane.f32.xlu0 %v20
  %v22 = vpop.xlane.xlu0 %21
  %v23 = vrot.slane %v22, 4
  %v24 = vmax.f32 %v22, %v23
  %v25 = vrot.slane %v24, 2
  %v26 = vmax.f32 %v24, %v25
  %v27 = vrot.slane %v26, 1
  %v28 = vmax.f32 %v26, %v27
  %s29 = vtos %v28
  %s30 = ssub.f32 %s29, %s19
  %s31 = smax.f32 %s30, 1e-12
  %v32 = vstv %s19
  %v33 = vsub.f32 %v8, %v32
  %v34 = vmul.f32 %v33, 255.0
  %v35 = vstv %s31
  %v36 = vrcp.pop %v35
  %v37 = vmul.f32 %v34, %v36
  %38 = vst [vmem:[%s1] sm:$0x3] %v37
  // Predicated region
  $region6: #{network_forward.11} parent=0 // pred_check
    _
  $region7: #{network_forward.11} parent=0 // pred_check_branch
    %40 = sbr.rel (0) target = $region9
  $region8: #{network_forward.11} parent=0 // pred_region
    _
  $region9: #{network_forward.11} parent=0 // pred_fallthru
    _
  // Predicated region
  $region10: #{network_forward.11} parent=0 // pred_check
    _
  $region11: #{network_forward.11} parent=0 // pred_check_branch
    %42 = sbr.rel (0) target = $region13
  $region12: #{network_forward.11} parent=0 // pred_region
    _
  $region13: #{network_forward.11} parent=0 // pred_fallthru
    _

// kernel: network_forward.10
$region0: #{network_forward.10}
  #allocation0 [shape = 'u32[]', space=smem, size = 0x4, offset = 0x4, fixed_abs, tag = 'smem constant byte address 0x4 - core index']
  #allocation1 [shape = 'u32[144,128]{1,0:T(1,128)}', space=vmem, size = 0x12000, scoped, tag = 'internal scratch']
  %s0 = inlined_call_operand.vmem [shape: f32[224,16], index: 0, kind: input, shape index: {}]
  %s1 = inlined_call_operand.vmem [shape: f32[9,16,2], index: 1, kind: input, shape index: {}]
  %s2 = inlined_call_operand.vmem [shape: f32[1,2], index: 2, kind: input, shape index: {}]
  %s3 = inlined_call_operand.vmem [shape: f32[200,2], index: 3, kind: output, shape index: {}]
  %s4 = sld [smem:[#allocation0]]
  $region22: #{network_forward.10} parent=0
    _
  %s6 = ssub.s32 1, %s4
  %s7 = scalar_select 0, %s6, %s4
  // Predicated region
  $region2: #{network_forward.10} parent=0 // pred_check
    _
  $region3: #{network_forward.10} parent=0 // pred_check_branch
    %9 = sbr.rel (0) target = $region5
  $region4: #{network_forward.10} parent=0 // pred_region
    _
  $region5: #{network_forward.10} parent=0 // pred_fallthru
    _
  // Predicated region
  $region6: #{network_forward.10} parent=0 // pred_check
    _
  $region7: #{network_forward.10} parent=0 // pred_check_branch
    %11 = sbr.rel (0) target = $region9
  $region8: #{network_forward.10} parent=0 // pred_region
    _
  $region9: #{network_forward.10} parent=0 // pred_fallthru
    _
  // Predicated region
  $region10: #{network_forward.10} parent=0 // pred_check
    _
  $region11: #{network_forward.10} parent=0 // pred_check_branch
    %13 = sbr.rel (0) target = $region13
  $region12: #{network_forward.10} parent=0 // pred_region
    _
  $region13: #{network_forward.10} parent=0 // pred_fallthru
    _
  %v14 = vld [vmem:[%s0] sm:$0xff]
  %v15 = vld [vmem:[%s0 + $0x8] sm:$0xff]
  %v16 = vld [vmem:[%s0 + $0x10] sm:$0xff]
  %v17 = vld [vmem:[%s0 + $0x18] sm:$0xff]
  %v18 = vld [vmem:[%s0 + $0x20] sm:$0xff]
  %v19 = vld [vmem:[%s0 + $0x28] sm:$0xff]
  %v20 = vld [vmem:[%s0 + $0x30] sm:$0xff]
  %v21 = vld [vmem:[%s0 + $0x38] sm:$0xff]
  %v22 = vld [vmem:[%s0 + $0x40] sm:$0xff]
  %v23 = vld [vmem:[%s0 + $0x48] sm:$0xff]
  %v24 = vld [vmem:[%s0 + $0x50] sm:$0xff]
  %v25 = vld [vmem:[%s0 + $0x58] sm:$0xff]
  %v26 = vld [vmem:[%s0 + $0x60] sm:$0xff]
  %v27 = vld [vmem:[%s0 + $0x68] sm:$0xff]
  %v28 = vld [vmem:[%s0 + $0x70] sm:$0xff]
  %v29 = vld [vmem:[%s0 + $0x78] sm:$0xff]
  %v30 = vld [vmem:[%s0 + $0x80] sm:$0xff]
  %v31 = vld [vmem:[%s0 + $0x88] sm:$0xff]
  %v32 = vld [vmem:[%s0 + $0x90] sm:$0xff]
  %v33 = vld [vmem:[%s0 + $0x98] sm:$0xff]
  %v34 = vld [vmem:[%s0 + $0xa0] sm:$0xff]
  %v35 = vld [vmem:[%s0 + $0xa8] sm:$0xff]
  %v36 = vld [vmem:[%s0 + $0xb0] sm:$0xff]
  %v37 = vld [vmem:[%s0 + $0xb8] sm:$0xff]
  %v38 = vld [vmem:[%s0 + $0xc0] sm:$0xff]
  %v39 = vld [vmem:[%s1] sm:$0xff]
  %v40 = vld [vmem:[%s1 + $0x8] sm:$0xff]
  %v41 = vld [vmem:[%s0 + $0x1] sm:$0xff]
  %v42 = vld [vmem:[%s0 + $0x9] sm:$0xff]
  %v43 = vld [vmem:[%s0 + $0x11] sm:$0xff]
  %v44 = vld [vmem:[%s0 + $0x19] sm:$0xff]
  %v45 = vld [vmem:[%s0 + $0x21] sm:$0xff]
  %v46 = vld [vmem:[%s0 + $0x29] sm:$0xff]
  %v47 = vld [vmem:[%s0 + $0x31] sm:$0xff]
  %v48 = vld [vmem:[%s0 + $0x39] sm:$0xff]
  %v49 = vld [vmem:[%s0 + $0x41] sm:$0xff]
  %v50 = vld [vmem:[%s0 + $0x49] sm:$0xff]
  %v51 = vld [vmem:[%s0 + $0x51] sm:$0xff]
  %v52 = vld [vmem:[%s0 + $0x59] sm:$0xff]
  %v53 = vld [vmem:[%s0 + $0x61] sm:$0xff]
  %v54 = vld [vmem:[%s0 + $0x69] sm:$0xff]
  %v55 = vld [vmem:[%s0 + $0x71] sm:$0xff]
  %v56 = vld [vmem:[%s0 + $0x79] sm:$0xff]
  %v57 = vld [vmem:[%s0 + $0x81] sm:$0xff]
  %v58 = vld [vmem:[%s0 + $0x89] sm:$0xff]
  %v59 = vld [vmem:[%s0 + $0x91] sm:$0xff]
  %v60 = vld [vmem:[%s0 + $0x99] sm:$0xff]
  %v61 = vld [vmem:[%s0 + $0xa1] sm:$0xff]
  %v62 = vld [vmem:[%s0 + $0xa9] sm:$0xff]
  %v63 = vld [vmem:[%s0 + $0xb1] sm:$0xff]
  %v64 = vld [vmem:[%s0 + $0xb9] sm:$0xff]
  %v65 = vld [vmem:[%s0 + $0xc1] sm:$0xff]
  %s66 = scalar_lea.vmem %s1, 16
  %v67 = vld [vmem:[%s66] sm:$0xff]
  %v68 = vld [vmem:[%s66 + $0x8] sm:$0xff]
  %vm69 = vcmask 130048
  %v71 = vsel %vm69, %v41, 0
  %v74 = vsel %vm69, %v42, 0
  %v77 = vsel %vm69, %v43, 0
  %v80 = vsel %vm69, %v44, 0
  %v83 = vsel %vm69, %v45, 0
  %v86 = vsel %vm69, %v46, 0
  %v89 = vsel %vm69, %v47, 0
  %v92 = vsel %vm69, %v48, 0
  %v95 = vsel %vm69, %v49, 0
  %v98 = vsel %vm69, %v50, 0
  %v101 = vsel %vm69, %v51, 0
  %v104 = vsel %vm69, %v52, 0
  %v107 = vsel %vm69, %v53, 0
  %v110 = vsel %vm69, %v54, 0
  %v113 = vsel %vm69, %v55, 0
  %v116 = vsel %vm69, %v56, 0
  %v119 = vsel %vm69, %v57, 0
  %v122 = vsel %vm69, %v58, 0
  %v125 = vsel %vm69, %v59, 0
  %v128 = vsel %vm69, %v60, 0
  %v131 = vsel %vm69, %v61, 0
  %v134 = vsel %vm69, %v62, 0
  %v137 = vsel %vm69, %v63, 0
  %v140 = vsel %vm69, %v64, 0
  %v143 = vsel %vm69, %v65, 0
  %145 = vmatprep.subr.mxu0 0.0
  %146 = vmatpush1.msra.mxu0 %v67
  %147 = vmatprep.subr.mxu0 0.0
  %148 = vmatpush1.msra.mxu0 %v68
  %149 = vmatprep.subr.mxu0 0.0
  %150 = vmatpush1.msra.mxu0 0.0
  %151 = vmatprep.subr.mxu0 0.0
  %152 = vmatpush1.msra.mxu0 0.0
  %153 = vmatprep.subr.mxu0 0.0
  %154 = vmatpush1.msra.mxu0 0.0
  %155 = vmatprep.subr.mxu0 0.0
  %156 = vmatpush1.msra.mxu0 0.0
  %157 = vmatprep.subr.mxu0 0.0
  %158 = vmatpush1.msra.mxu0 0.0
  %159 = vmatprep.subr.mxu0 0.0
  %160 = vmatpush1.msra.mxu0 0.0
  %161 = vmatprep.subr.mxu0 0.0
  %162 = vmatpush1.msra.mxu0 0.0
  %163 = vmatprep.subr.mxu0 0.0
  %164 = vmatpush1.msra.mxu0 0.0
  %165 = vmatprep.subr.mxu0 0.0
  %166 = vmatpush1.msra.mxu0 0.0
  %167 = vmatprep.subr.mxu0 0.0
  %168 = vmatpush1.msra.mxu0 0.0
  %169 = vmatprep.subr.mxu0 0.0
  %170 = vmatpush1.msra.mxu0 0.0
  %171 = vmatprep.subr.mxu0 0.0
  %172 = vmatpush1.msra.mxu0 0.0
  %173 = vmatprep.subr.mxu0 0.0
  %174 = vmatpush1.msra.mxu0 0.0
  %175 = vmatprep.subr.mxu0 0.0
  %176 = vmatpush1.msra.mxu0 0.0
  %177 = vmatprep.subr.mxu0 0.0
  %178 = vmatpush1.msra.mxu0 0.0
  %179 = vmatprep.subr.mxu0 0.0
  %180 = vmatpush1.msra.mxu0 0.0
  %181 = vmatprep.subr.mxu0 0.0
  %182 = vmatpush1.msra.mxu0 0.0
  %183 = vmatprep.subr.mxu0 0.0
  %184 = vmatpush1.msra.mxu0 0.0
  %185 = vmatprep.subr.mxu0 0.0
  %186 = vmatpush1.msra.mxu0 0.0
  %187 = vmatprep.subr.mxu0 0.0
  %188 = vmatpush1.msra.mxu0 0.0
  %189 = vmatprep.subr.mxu0 0.0
  %190 = vmatpush1.msra.mxu0 0.0
  %191 = vmatprep.subr.mxu0 0.0
  %192 = vmatpush1.msra.mxu0 0.0
  %193 = vmatprep.subr.mxu0 0.0
  %194 = vmatpush1.msra.mxu0 0.0
  %195 = vmatprep.subr.mxu0 0.0
  %196 = vmatpush1.msra.mxu0 0.0
  %197 = vmatprep.subr.mxu0 0.0
  %198 = vmatpush1.msra.mxu0 0.0
  %199 = vmatprep.subr.mxu0 0.0
  %200 = vmatpush1.msra.mxu0 0.0
  %201 = vmatprep.subr.mxu0 0.0
  %202 = vmatpush1.msra.mxu0 0.0
  %203 = vmatprep.subr.mxu0 0.0
  %204 = vmatpush1.msra.mxu0 0.0
  %205 = vmatprep.subr.mxu0 0.0
  %206 = vmatpush1.msra.mxu0 0.0
  %207 = vmatprep.subr.mxu0 0.0
  %208 = vmatpush1.msra.mxu0 0.0
  %209 = vmatprep.mubr.f32.mxu0 0.0
  %210 = vmatmul.mubr.f32.gmra.mrb[0].mxu0 %v71
  %v211 = vpop.f32.mrb[0].mxu0
  %v212 = vadd.f32 0.0, %v211
  %v213 = vpop.f32.mrb[0].mxu0
  %214 = vmatprep.mubr.f32.mxu0 0.0
  %215 = vmatmul.mubr.f32.gmra.mrb[0].mxu0 %v74
  %v216 = vpop.f32.mrb[0].mxu0
  %v217 = vadd.f32 0.0, %v216
  %v218 = vpop.f32.mrb[0].mxu0
  %219 = vmatprep.mubr.f32.mxu0 0.0
  %220 = vmatmul.mubr.f32.gmra.mrb[0].mxu0 %v77
  %v221 = vpop.f32.mrb[0].mxu0
  %v222 = vadd.f32 0.0, %v221
  %v223 = vpop.f32.mrb[0].mxu0
  %224 = vmatprep.mubr.f32.mxu0 0.0
  %225 = vmatmul.mubr.f32.gmra.mrb[0].mxu0 %v80
  %v226 = vpop.f32.mrb[0].mxu0
  %v227 = vadd.f32 0.0, %v226
  %v228 = vpop.f32.mrb[0].mxu0
  %229 = vmatprep.mubr.f32.mxu0 0.0
  %230 = vmatmul.mubr.f32.gmra.mrb[0].mxu0 %v83
  %v231 = vpop.f32.mrb[0].mxu0
  %v232 = vadd.f32 0.0, %v231
  %v233 = vpop.f32.mrb[0].mxu0
  %234 = vmatprep.mubr.f32.mxu0 0.0
  %235 = vmatmul.mubr.f32.gmra.mrb[0].mxu0 %v86
  %v236 = vpop.f32.mrb[0].mxu0
  %v237 = vadd.f32 0.0, %v236
  %v238 = vpop.f32.mrb[0].mxu0
  %239 = vmatprep.mubr.f32.mxu0 0.0
  %240 = vmatmul.mubr.f32.gmra.mrb[0].mxu0 %v89
  %v241 = vpop.f32.mrb[0].mxu0
  %v242 = vadd.f32 0.0, %v241
  %v243 = vpop.f32.mrb[0].mxu0
  %244 = vmatprep.mubr.f32.mxu0 0.0
  %245 = vmatmul.mubr.f32.gmra.mrb[0].mxu0 %v92
  %v246 = vpop.f32.mrb[0].mxu0
  %v247 = vadd.f32 0.0, %v246
  %v248 = vpop.f32.mrb[0].mxu0
  %249 = vmatprep.mubr.f32.mxu0 0.0
  %250 = vmatmul.mubr.f32.gmra.mrb[0].mxu0 %v95
  %v251 = vpop.f32.mrb[0].mxu0
  %v252 = vadd.f32 0.0, %v251
  %v253 = vpop.f32.mrb[0].mxu0
  %254 = vmatprep.mubr.f32.mxu0 0.0
  %255 = vmatmul.mubr.f32.gmra.mrb[0].mxu0 %v98
  %v256 = vpop.f32.mrb[0].mxu0
  %v257 = vadd.f32 0.0, %v256
  %v258 = vpop.f32.mrb[0].mxu0
  %259 = vmatprep.mubr.f32.mxu0 0.0
  %260 = vmatmul.mubr.f32.gmra.mrb[0].mxu0 %v101
  %v261 = vpop.f32.mrb[0].mxu0
  %v262 = vadd.f32 0.0, %v261
  %v263 = vpop.f32.mrb[0].mxu0
  %264 = vmatprep.mubr.f32.mxu0 0.0
  %265 = vmatmul.mubr.f32.gmra.mrb[0].mxu0 %v104
  %v266 = vpop.f32.mrb[0].mxu0
  %v267 = vadd.f32 0.0, %v266
  %v268 = vpop.f32.mrb[0].mxu0
  %269 = vmatprep.mubr.f32.mxu0 0.0
  %270 = vmatmul.mubr.f32.gmra.mrb[0].mxu0 %v107
  %v271 = vpop.f32.mrb[0].mxu0
  %v272 = vadd.f32 0.0, %v271
  %v273 = vpop.f32.mrb[0].mxu0
  %274 = vmatprep.mubr.f32.mxu0 0.0
  %275 = vmatmul.mubr.f32.gmra.mrb[0].mxu0 %v110
  %v276 = vpop.f32.mrb[0].mxu0
  %v277 = vadd.f32 0.0, %v276
  %v278 = vpop.f32.mrb[0].mxu0
  %279 = vmatprep.mubr.f32.mxu0 0.0
  %280 = vmatmul.mubr.f32.gmra.mrb[0].mxu0 %v113
  %v281 = vpop.f32.mrb[0].mxu0
  %v282 = vadd.f32 0.0, %v281
  %v283 = vpop.f32.mrb[0].mxu0
  %284 = vmatprep.mubr.f32.mxu0 0.0
  %285 = vmatmul.mubr.f32.gmra.mrb[0].mxu0 %v116
  %v286 = vpop.f32.mrb[0].mxu0
  %v287 = vadd.f32 0.0, %v286
  %v288 = vpop.f32.mrb[0].mxu0
  %289 = vmatprep.mubr.f32.mxu0 0.0
  %290 = vmatmul.mubr.f32.gmra.mrb[0].mxu0 %v119
  %v291 = vpop.f32.mrb[0].mxu0
  %v292 = vadd.f32 0.0, %v291
  %v293 = vpop.f32.mrb[0].mxu0
  %294 = vmatprep.mubr.f32.mxu0 0.0
  %295 = vmatmul.mubr.f32.gmra.mrb[0].mxu0 %v122
  %v296 = vpop.f32.mrb[0].mxu0
  %v297 = vadd.f32 0.0, %v296
  %v298 = vpop.f32.mrb[0].mxu0
  %299 = vmatprep.mubr.f32.mxu0 0.0
  %300 = vmatmul.mubr.f32.gmra.mrb[0].mxu0 %v125
  %v301 = vpop.f32.mrb[0].mxu0
  %v302 = vadd.f32 0.0, %v301
  %v303 = vpop.f32.mrb[0].mxu0
  %304 = vmatprep.mubr.f32.mxu0 0.0
  %305 = vmatmul.mubr.f32.gmra.mrb[0].mxu0 %v128
  %v306 = vpop.f32.mrb[0].mxu0
  %v307 = vadd.f32 0.0, %v306
  %v308 = vpop.f32.mrb[0].mxu0
  %309 = vmatprep.mubr.f32.mxu0 0.0
  %310 = vmatmul.mubr.f32.gmra.mrb[0].mxu0 %v131
  %v311 = vpop.f32.mrb[0].mxu0
  %v312 = vadd.f32 0.0, %v311
  %v313 = vpop.f32.mrb[0].mxu0
  %314 = vmatprep.mubr.f32.mxu0 0.0
  %315 = vmatmul.mubr.f32.gmra.mrb[0].mxu0 %v134
  %v316 = vpop.f32.mrb[0].mxu0
  %v317 = vadd.f32 0.0, %v316
  %v318 = vpop.f32.mrb[0].mxu0
  %319 = vmatprep.mubr.f32.mxu0 0.0
  %320 = vmatmul.mubr.f32.gmra.mrb[0].mxu0 %v137
  %v321 = vpop.f32.mrb[0].mxu0
  %v322 = vadd.f32 0.0, %v321
  %v323 = vpop.f32.mrb[0].mxu0
  %324 = vmatprep.mubr.f32.mxu0 0.0
  %325 = vmatmul.mubr.f32.gmra.mrb[0].mxu0 %v140
  %v326 = vpop.f32.mrb[0].mxu0
  %v327 = vadd.f32 0.0, %v326
  %v328 = vpop.f32.mrb[0].mxu0
  %329 = vmatprep.mubr.f32.mxu0 0.0
  %330 = vmatmul.mubr.f32.gmra.mrb[0].mxu0 %v143
  %v331 = vpop.f32.mrb[0].mxu0
  %v332 = vadd.f32 0.0, %v331
  %v333 = vpop.f32.mrb[0].mxu0
  %334 = vdwg.mxu0
  %v336 = vsel %vm69, %v14, 0
  %v339 = vsel %vm69, %v15, 0
  %v342 = vsel %vm69, %v16, 0
  %v345 = vsel %vm69, %v17, 0
  %v348 = vsel %vm69, %v18, 0
  %v351 = vsel %vm69, %v19, 0
  %v354 = vsel %vm69, %v20, 0
  %v357 = vsel %vm69, %v21, 0
  %v360 = vsel %vm69, %v22, 0
  %v363 = vsel %vm69, %v23, 0
  %v366 = vsel %vm69, %v24, 0
  %v369 = vsel %vm69, %v25, 0
  %v372 = vsel %vm69, %v26, 0
  %v375 = vsel %vm69, %v27, 0
  %v378 = vsel %vm69, %v28, 0
  %v381 = vsel %vm69, %v29, 0
  %v384 = vsel %vm69, %v30, 0
  %v387 = vsel %vm69, %v31, 0
  %v390 = vsel %vm69, %v32, 0
  %v393 = vsel %vm69, %v33, 0
  %v396 = vsel %vm69, %v34, 0
  %v399 = vsel %vm69, %v35, 0
  %v402 = vsel %vm69, %v36, 0
  %v405 = vsel %vm69, %v37, 0
  %v408 = vsel %vm69, %v38, 0
  %410 = vmatprep.subr.mxu0 0.0
  %411 = vmatpush1.msra.mxu0 %v39
  %412 = vmatprep.subr.mxu0 0.0
  %413 = vmatpush1.msra.mxu0 %v40
  %414 = vmatprep.subr.mxu0 0.0
  %415 = vmatpush1.msra.mxu0 0.0
  %416 = vmatprep.subr.mxu0 0.0
  %417 = vmatpush1.msra.mxu0 0.0
  %418 = vmatprep.subr.mxu0 0.0
  %419 = vmatpush1.msra.mxu0 0.0
  %420 = vmatprep.subr.mxu0 0.0
  %421 = vmatpush1.msra.mxu0 0.0
  %422 = vmatprep.subr.mxu0 0.0
  %423 = vmatpush1.msra.mxu0 0.0
  %424 = vmatprep.subr.mxu0 0.0
  %425 = vmatpush1.msra.mxu0 0.0
  %426 = vmatprep.subr.mxu0 0.0
  %427 = vmatpush1.msra.mxu0 0.0
  %428 = vmatprep.subr.mxu0 0.0
  %429 = vmatpush1.msra.mxu0 0.0
  %430 = vmatprep.subr.mxu0 0.0
  %431 = vmatpush1.msra.mxu0 0.0
  %432 = vmatprep.subr.mxu0 0.0
  %433 = vmatpush1.msra.mxu0 0.0
  %434 = vmatprep.subr.mxu0 0.0
  %435 = vmatpush1.msra.mxu0 0.0
  %436 = vmatprep.subr.mxu0 0.0
  %437 = vmatpush1.msra.mxu0 0.0
  %438 = vmatprep.subr.mxu0 0.0
  %439 = vmatpush1.msra.mxu0 0.0
  %440 = vmatprep.subr.mxu0 0.0
  %441 = vmatpush1.msra.mxu0 0.0
  %442 = vmatprep.subr.mxu0 0.0
  %443 = vmatpush1.msra.mxu0 0.0
  %444 = vmatprep.subr.mxu0 0.0
  %445 = vmatpush1.msra.mxu0 0.0
  %446 = vmatprep.subr.mxu0 0.0
  %447 = vmatpush1.msra.mxu0 0.0
  %448 = vmatprep.subr.mxu0 0.0
  %449 = vmatpush1.msra.mxu0 0.0
  %450 = vmatprep.subr.mxu0 0.0
  %451 = vmatpush1.msra.mxu0 0.0
  %452 = vmatprep.subr.mxu0 0.0
  %453 = vmatpush1.msra.mxu0 0.0
  %454 = vmatprep.subr.mxu0 0.0
  %455 = vmatpush1.msra.mxu0 0.0
  %456 = vmatprep.subr.mxu0 0.0
  %457 = vmatpush1.msra.mxu0 0.0
  %458 = vmatprep.subr.mxu0 0.0
  %459 = vmatpush1.msra.mxu0 0.0
  %460 = vmatprep.subr.mxu0 0.0
  %461 = vmatpush1.msra.mxu0 0.0
  %462 = vmatprep.subr.mxu0 0.0
  %463 = vmatpush1.msra.mxu0 0.0
  %464 = vmatprep.subr.mxu0 0.0
  %465 = vmatpush1.msra.mxu0 0.0
  %466 = vmatprep.subr.mxu0 0.0
  %467 = vmatpush1.msra.mxu0 0.0
  %468 = vmatprep.subr.mxu0 0.0
  %469 = vmatpush1.msra.mxu0 0.0
  %470 = vmatprep.subr.mxu0 0.0
  %471 = vmatpush1.msra.mxu0 0.0
  %472 = vmatprep.subr.mxu0 0.0
  %473 = vmatpush1.msra.mxu0 0.0
  %474 = vmatprep.mubr.f32.mxu0 0.0
  %475 = vmatmul.mubr.f32.gmra.mrb[0].mxu0 %v336
  %v476 = vpop.f32.mrb[0].mxu0
  %v477 = vadd.f32 %v212, %v476
  %v478 = vpop.f32.mrb[0].mxu0
  %479 = vmatprep.mubr.f32.mxu0 0.0
  %480 = vmatmul.mubr.f32.gmra.mrb[0].mxu0 %v339
  %v481 = vpop.f32.mrb[0].mxu0
  %v482 = vadd.f32 %v217, %v481
  %v483 = vpop.f32.mrb[0].mxu0
  %484 = vmatprep.mubr.f32.mxu0 0.0
  %485 = vmatmul.mubr.f32.gmra.mrb[0].mxu0 %v342
  %v486 = vpop.f32.mrb[0].mxu0
  %v487 = vadd.f32 %v222, %v486
  %v488 = vpop.f32.mrb[0].mxu0
  %489 = vmatprep.mubr.f32.mxu0 0.0
  %490 = vmatmul.mubr.f32.gmra.mrb[0].mxu0 %v345
  %v491 = vpop.f32.mrb[0].mxu0
  %v492 = vadd.f32 %v227, %v491
  %v493 = vpop.f32.mrb[0].mxu0
  %494 = vmatprep.mubr.f32.mxu0 0.0
  %495 = vmatmul.mubr.f32.gmra.mrb[0].mxu0 %v348
  %v496 = vpop.f32.mrb[0].mxu0
  %v497 = vadd.f32 %v232, %v496
  %v498 = vpop.f32.mrb[0].mxu0
  %499 = vmatprep.mubr.f32.mxu0 0.0
  %500 = vmatmul.mubr.f32.gmra.mrb[0].mxu0 %v351
  %v501 = vpop.f32.mrb[0].mxu0
  %v502 = vadd.f32 %v237, %v501
  %v503 = vpop.f32.mrb[0].mxu0
  %504 = vmatprep.mubr.f32.mxu0 0.0
  %505 = vmatmul.mubr.f32.gmra.mrb[0].mxu0 %v354
  %v506 = vpop.f32.mrb[0].mxu0
  %v507 = vadd.f32 %v242, %v506
  %v508 = vpop.f32.mrb[0].mxu0
  %509 = vmatprep.mubr.f32.mxu0 0.0
  %510 = vmatmul.mubr.f32.gmra.mrb[0].mxu0 %v357
  %v511 = vpop.f32.mrb[0].mxu0
  %v512 = vadd.f32 %v247, %v511
  %v513 = vpop.f32.mrb[0].mxu0
  %514 = vmatprep.mubr.f32.mxu0 0.0
  %515 = vmatmul.mubr.f32.gmra.mrb[0].mxu0 %v360
  %v516 = vpop.f32.mrb[0].mxu0
  %v517 = vadd.f32 %v252, %v516
  %v518 = vpop.f32.mrb[0].mxu0
  %519 = vmatprep.mubr.f32.mxu0 0.0
  %520 = vmatmul.mubr.f32.gmra.mrb[0].mxu0 %v363
  %v521 = vpop.f32.mrb[0].mxu0
  %v522 = vadd.f32 %v257, %v521
  %v523 = vpop.f32.mrb[0].mxu0
  %524 = vmatprep.mubr.f32.mxu0 0.0
  %525 = vmatmul.mubr.f32.gmra.mrb[0].mxu0 %v366
  %v526 = vpop.f32.mrb[0].mxu0
  %v527 = vadd.f32 %v262, %v526
  %v528 = vpop.f32.mrb[0].mxu0
  %529 = vmatprep.mubr.f32.mxu0 0.0
  %530 = vmatmul.mubr.f32.gmra.mrb[0].mxu0 %v369
  %v531 = vpop.f32.mrb[0].mxu0
  %v532 = vadd.f32 %v267, %v531
  %v533 = vpop.f32.mrb[0].mxu0
  %534 = vmatprep.mubr.f32.mxu0 0.0
  %535 = vmatmul.mubr.f32.gmra.mrb[0].mxu0 %v372
  %v536 = vpop.f32.mrb[0].mxu0
  %v537 = vadd.f32 %v272, %v536
  %v538 = vpop.f32.mrb[0].mxu0
  %539 = vmatprep.mubr.f32.mxu0 0.0
  %540 = vmatmul.mubr.f32.gmra.mrb[0].mxu0 %v375
  %v541 = vpop.f32.mrb[0].mxu0
  %v542 = vadd.f32 %v277, %v541
  %v543 = vpop.f32.mrb[0].mxu0
  %544 = vmatprep.mubr.f32.mxu0 0.0
  %545 = vmatmul.mubr.f32.gmra.mrb[0].mxu0 %v378
  %v546 = vpop.f32.mrb[0].mxu0
  %v547 = vadd.f32 %v282, %v546
  %v548 = vpop.f32.mrb[0].mxu0
  %549 = vmatprep.mubr.f32.mxu0 0.0
  %550 = vmatmul.mubr.f32.gmra.mrb[0].mxu0 %v381
  %v551 = vpop.f32.mrb[0].mxu0
  %v552 = vadd.f32 %v287, %v551
  %v553 = vpop.f32.mrb[0].mxu0
  %554 = vmatprep.mubr.f32.mxu0 0.0
  %555 = vmatmul.mubr.f32.gmra.mrb[0].mxu0 %v384
  %v556 = vpop.f32.mrb[0].mxu0
  %v557 = vadd.f32 %v292, %v556
  %v558 = vpop.f32.mrb[0].mxu0
  %559 = vmatprep.mubr.f32.mxu0 0.0
  %560 = vmatmul.mubr.f32.gmra.mrb[0].mxu0 %v387
  %v561 = vpop.f32.mrb[0].mxu0
  %v562 = vadd.f32 %v297, %v561
  %v563 = vpop.f32.mrb[0].mxu0
  %564 = vmatprep.mubr.f32.mxu0 0.0
  %565 = vmatmul.mubr.f32.gmra.mrb[0].mxu0 %v390
  %v566 = vpop.f32.mrb[0].mxu0
  %v567 = vadd.f32 %v302, %v566
  %v568 = vpop.f32.mrb[0].mxu0
  %569 = vmatprep.mubr.f32.mxu0 0.0
  %570 = vmatmul.mubr.f32.gmra.mrb[0].mxu0 %v393
  %v571 = vpop.f32.mrb[0].mxu0
  %v572 = vadd.f32 %v307, %v571
  %v573 = vpop.f32.mrb[0].mxu0
  %574 = vmatprep.mubr.f32.mxu0 0.0
  %575 = vmatmul.mubr.f32.gmra.mrb[0].mxu0 %v396
  %v576 = vpop.f32.mrb[0].mxu0
  %v577 = vadd.f32 %v312, %v576
  %v578 = vpop.f32.mrb[0].mxu0
  %579 = vmatprep.mubr.f32.mxu0 0.0
  %580 = vmatmul.mubr.f32.gmra.mrb[0].mxu0 %v399
  %v581 = vpop.f32.mrb[0].mxu0
  %v582 = vadd.f32 %v317, %v581
  %v583 = vpop.f32.mrb[0].mxu0
  %584 = vmatprep.mubr.f32.mxu0 0.0
  %585 = vmatmul.mubr.f32.gmra.mrb[0].mxu0 %v402
  %v586 = vpop.f32.mrb[0].mxu0
  %v587 = vadd.f32 %v322, %v586
  %v588 = vpop.f32.mrb[0].mxu0
  %589 = vmatprep.mubr.f32.mxu0 0.0
  %590 = vmatmul.mubr.f32.gmra.mrb[0].mxu0 %v405
  %v591 = vpop.f32.mrb[0].mxu0
  %v592 = vadd.f32 %v327, %v591
  %v593 = vpop.f32.mrb[0].mxu0
  %594 = vmatprep.mubr.f32.mxu0 0.0
  %595 = vmatmul.mubr.f32.gmra.mrb[0].mxu0 %v408
  %v596 = vpop.f32.mrb[0].mxu0
  %v597 = vadd.f32 %v332, %v596
  %v598 = vpop.f32.mrb[0].mxu0
  %599 = vdwg.mxu0
  %v600 = vld [vmem:[%s0 + $0x2] sm:$0xff]
  %v601 = vld [vmem:[%s0 + $0xa] sm:$0xff]
  %v602 = vld [vmem:[%s0 + $0x12] sm:$0xff]
  %v603 = vld [vmem:[%s0 + $0x1a] sm:$0xff]
  %v604 = vld [vmem:[%s0 + $0x22] sm:$0xff]
  %v605 = vld [vmem:[%s0 + $0x2a] sm:$0xff]
  %v606 = vld [vmem:[%s0 + $0x32] sm:$0xff]
  %v607 = vld [vmem:[%s0 + $0x3a] sm:$0xff]
  %v608 = vld [vmem:[%s0 + $0x42] sm:$0xff]
  %v609 = vld [vmem:[%s0 + $0x4a] sm:$0xff]
  %v610 = vld [vmem:[%s0 + $0x52] sm:$0xff]
  %v611 = vld [vmem:[%s0 + $0x5a] sm:$0xff]
  %v612 = vld [vmem:[%s0 + $0x62] sm:$0xff]
  %v613 = vld [vmem:[%s0 + $0x6a] sm:$0xff]
  %v614 = vld [vmem:[%s0 + $0x72] sm:$0xff]
  %v615 = vld [vmem:[%s0 + $0x7a] sm:$0xff]
  %v616 = vld [vmem:[%s0 + $0x82] sm:$0xff]
  %v617 = vld [vmem:[%s0 + $0x8a] sm:$0xff]
  %v618 = vld [vmem:[%s0 + $0x92] sm:$0xff]
  %v619 = vld [vmem:[%s0 + $0x9a] sm:$0xff]
  %v620 = vld [vmem:[%s0 + $0xa2] sm:$0xff]
  %v621 = vld [vmem:[%s0 + $0xaa] sm:$0xff]
  %v622 = vld [vmem:[%s0 + $0xb2] sm:$0xff]
  %v623 = vld [vmem:[%s0 + $0xba] sm:$0xff]
  %v624 = vld [vmem:[%s0 + $0xc2] sm:$0xff]
  %s625 = scalar_lea.vmem %s1, 32
  %v626 = vld [vmem:[%s625] sm:$0xff]
  %v627 = vld [vmem:[%s625 + $0x8] sm:$0xff]
  %v629 = vsel %vm69, %v600, 0
  %v632 = vsel %vm69, %v601, 0
  %v635 = vsel %vm69, %v602, 0
  %v638 = vsel %vm69, %v603, 0
  %v641 = vsel %vm69, %v604, 0
  %v644 = vsel %vm69, %v605, 0
  %v647 = vsel %vm69, %v606, 0
  %v650 = vsel %vm69, %v607, 0
  %v653 = vsel %vm69, %v608, 0
  %v656 = vsel %vm69, %v609, 0
  %v659 = vsel %vm69, %v610, 0
  %v662 = vsel %vm69, %v611, 0
  %v665 = vsel %vm69, %v612, 0
  %v668 = vsel %vm69, %v613, 0
  %v671 = vsel %vm69, %v614, 0
  %v674 = vsel %vm69, %v615, 0
  %v677 = vsel %vm69, %v616, 0
  %v680 = vsel %vm69, %v617, 0
  %v683 = vsel %vm69, %v618, 0
  %v686 = vsel %vm69, %v619, 0
  %v689 = vsel %vm69, %v620, 0
  %v692 = vsel %vm69, %v621, 0
  %v695 = vsel %vm69, %v622, 0
  %v698 = vsel %vm69, %v623, 0
  %v701 = vsel %vm69, %v624, 0
  %703 = vmatprep.subr.mxu0 0.0
  %704 = vmatpush1.msra.mxu0 %v626
  %705 = vmatprep.subr.mxu0 0.0
  %706 = vmatpush1.msra.mxu0 %v627
  %707 = vmatprep.subr.mxu0 0.0
  %708 = vmatpush1.msra.mxu0 0.0
  %709 = vmatprep.subr.mxu0 0.0
  %710 = vmatpush1.msra.mxu0 0.0
  %711 = vmatprep.subr.mxu0 0.0
  %712 = vmatpush1.msra.mxu0 0.0
  %713 = vmatprep.subr.mxu0 0.0
  %714 = vmatpush1.msra.mxu0 0.0
  %715 = vmatprep.subr.mxu0 0.0
  %716 = vmatpush1.msra.mxu0 0.0
  %717 = vmatprep.subr.mxu0 0.0
  %718 = vmatpush1.msra.mxu0 0.0
  %719 = vmatprep.subr.mxu0 0.0
  %720 = vmatpush1.msra.mxu0 0.0
  %721 = vmatprep.subr.mxu0 0.0
  %722 = vmatpush1.msra.mxu0 0.0
  %723 = vmatprep.subr.mxu0 0.0
  %724 = vmatpush1.msra.mxu0 0.0
  %725 = vmatprep.subr.mxu0 0.0
  %726 = vmatpush1.msra.mxu0 0.0
  %727 = vmatprep.subr.mxu0 0.0
  %728 = vmatpush1.msra.mxu0 0.0
  %729 = vmatprep.subr.mxu0 0.0
  %730 = vmatpush1.msra.mxu0 0.0
  %731 = vmatprep.subr.mxu0 0.0
  %732 = vmatpush1.msra.mxu0 0.0
  %733 = vmatprep.subr.mxu0 0.0
  %734 = vmatpush1.msra.mxu0 0.0
  %735 = vmatprep.subr.mxu0 0.0
  %736 = vmatpush1.msra.mxu0 0.0
  %737 = vmatprep.subr.mxu0 0.0
  %738 = vmatpush1.msra.mxu0 0.0
  %739 = vmatprep.subr.mxu0 0.0
  %740 = vmatpush1.msra.mxu0 0.0
  %741 = vmatprep.subr.mxu0 0.0
  %742 = vmatpush1.msra.mxu0 0.0
  %743 = vmatprep.subr.mxu0 0.0
  %744 = vmatpush1.msra.mxu0 0.0
  %745 = vmatprep.subr.mxu0 0.0
  %746 = vmatpush1.msra.mxu0 0.0
  %747 = vmatprep.subr.mxu0 0.0
  %748 = vmatpush1.msra.mxu0 0.0
  %749 = vmatprep.subr.mxu0 0.0
  %750 = vmatpush1.msra.mxu0 0.0
  %751 = vmatprep.subr.mxu0 0.0
  %752 = vmatpush1.msra.mxu0 0.0
  %753 = vmatprep.subr.mxu0 0.0
  %754 = vmatpush1.msra.mxu0 0.0
  %755 = vmatprep.subr.mxu0 0.0
  %756 = vmatpush1.msra.mxu0 0.0
  %757 = vmatprep.subr.mxu0 0.0
  %758 = vmatpush1.msra.mxu0 0.0
  %759 = vmatprep.subr.mxu0 0.0
  %760 = vmatpush1.msra.mxu0 0.0
  %761 = vmatprep.subr.mxu0 0.0
  %762 = vmatpush1.msra.mxu0 0.0
  %763 = vmatprep.subr.mxu0 0.0
  %764 = vmatpush1.msra.mxu0 0.0
  %765 = vmatprep.subr.mxu0 0.0
  %766 = vmatpush1.msra.mxu0 0.0
  %767 = vmatprep.mubr.f32.mxu0 0.0
  %768 = vmatmul.mubr.f32.gmra.mrb[0].mxu0 %v629
  %v769 = vpop.f32.mrb[0].mxu0
  %v770 = vadd.f32 0.0, %v769
  %v771 = vpop.f32.mrb[0].mxu0
  %772 = vmatprep.mubr.f32.mxu0 0.0
  %773 = vmatmul.mubr.f32.gmra.mrb[0].mxu0 %v632
  %v774 = vpop.f32.mrb[0].mxu0
  %v775 = vadd.f32 0.0, %v774
  %v776 = vpop.f32.mrb[0].mxu0
  %777 = vmatprep.mubr.f32.mxu0 0.0
  %778 = vmatmul.mubr.f32.gmra.mrb[0].mxu0 %v635
  %v779 = vpop.f32.mrb[0].mxu0
  %v780 = vadd.f32 0.0, %v779
  %v781 = vpop.f32.mrb[0].mxu0
  %782 = vmatprep.mubr.f32.mxu0 0.0
  %783 = vmatmul.mubr.f32.gmra.mrb[0].mxu0 %v638
  %v784 = vpop.f32.mrb[0].mxu0
  %v785 = vadd.f32 0.0, %v784
  %v786 = vpop.f32.mrb[0].mxu0
  %787 = vmatprep.mubr.f32.mxu0 0.0
  %788 = vmatmul.mubr.f32.gmra.mrb[0].mxu0 %v641
  %v789 = vpop.f32.mrb[0].mxu0
  %v790 = vadd.f32 0.0, %v789
  %v791 = vpop.f32.mrb[0].mxu0
  %792 = vmatprep.mubr.f32.mxu0 0.0
  %793 = vmatmul.mubr.f32.gmra.mrb[0].mxu0 %v644
  %v794 = vpop.f32.mrb[0].mxu0
  %v795 = vadd.f32 0.0, %v794
  %v796 = vpop.f32.mrb[0].mxu0
  %797 = vmatprep.mubr.f32.mxu0 0.0
  %798 = vmatmul.mubr.f32.gmra.mrb[0].mxu0 %v647
  %v799 = vpop.f32.mrb[0].mxu0
  %v800 = vadd.f32 0.0, %v799
  %v801 = vpop.f32.mrb[0].mxu0
  %802 = vmatprep.mubr.f32.mxu0 0.0
  %803 = vmatmul.mubr.f32.gmra.mrb[0].mxu0 %v650
  %v804 = vpop.f32.mrb[0].mxu0
  %v805 = vadd.f32 0.0, %v804
  %v806 = vpop.f32.mrb[0].mxu0
  %807 = vmatprep.mubr.f32.mxu0 0.0
  %808 = vmatmul.mubr.f32.gmra.mrb[0].mxu0 %v653
  %v809 = vpop.f32.mrb[0].mxu0
  %v810 = vadd.f32 0.0, %v809
  %v811 = vpop.f32.mrb[0].mxu0
  %812 = vmatprep.mubr.f32.mxu0 0.0
  %813 = vmatmul.mubr.f32.gmra.mrb[0].mxu0 %v656
  %v814 = vpop.f32.mrb[0].mxu0
  %v815 = vadd.f32 0.0, %v814
  %v816 = vpop.f32.mrb[0].mxu0
  %817 = vmatprep.mubr.f32.mxu0 0.0
  %818 = vmatmul.mubr.f32.gmra.mrb[0].mxu0 %v659
  %v819 = vpop.f32.mrb[0].mxu0
  %v820 = vadd.f32 0.0, %v819
  %v821 = vpop.f32.mrb[0].mxu0
  %822 = vmatprep.mubr.f32.mxu0 0.0
  %823 = vmatmul.mubr.f32.gmra.mrb[0].mxu0 %v662
  %v824 = vpop.f32.mrb[0].mxu0
  %v825 = vadd.f32 0.0, %v824
  %v826 = vpop.f32.mrb[0].mxu0
  %827 = vmatprep.mubr.f32.mxu0 0.0
  %828 = vmatmul.mubr.f32.gmra.mrb[0].mxu0 %v665
  %v829 = vpop.f32.mrb[0].mxu0
  %v830 = vadd.f32 0.0, %v829
  %v831 = vpop.f32.mrb[0].mxu0
  %832 = vmatprep.mubr.f32.mxu0 0.0
  %833 = vmatmul.mubr.f32.gmra.mrb[0].mxu0 %v668
  %v834 = vpop.f32.mrb[0].mxu0
  %v835 = vadd.f32 0.0, %v834
  %v836 = vpop.f32.mrb[0].mxu0
  %837 = vmatprep.mubr.f32.mxu0 0.0
  %838 = vmatmul.mubr.f32.gmra.mrb[0].mxu0 %v671
  %v839 = vpop.f32.mrb[0].mxu0
  %v840 = vadd.f32 0.0, %v839
  %v841 = vpop.f32.mrb[0].mxu0
  %842 = vmatprep.mubr.f32.mxu0 0.0
  %843 = vmatmul.mubr.f32.gmra.mrb[0].mxu0 %v674
  %v844 = vpop.f32.mrb[0].mxu0
  %v845 = vadd.f32 0.0, %v844
  %v846 = vpop.f32.mrb[0].mxu0
  %847 = vmatprep.mubr.f32.mxu0 0.0
  %848 = vmatmul.mubr.f32.gmra.mrb[0].mxu0 %v677
  %v849 = vpop.f32.mrb[0].mxu0
  %v850 = vadd.f32 0.0, %v849
  %v851 = vpop.f32.mrb[0].mxu0
  %852 = vmatprep.mubr.f32.mxu0 0.0
  %853 = vmatmul.mubr.f32.gmra.mrb[0].mxu0 %v680
  %v854 = vpop.f32.mrb[0].mxu0
  %v855 = vadd.f32 0.0, %v854
  %v856 = vpop.f32.mrb[0].mxu0
  %857 = vmatprep.mubr.f32.mxu0 0.0
  %858 = vmatmul.mubr.f32.gmra.mrb[0].mxu0 %v683
  %v859 = vpop.f32.mrb[0].mxu0
  %v860 = vadd.f32 0.0, %v859
  %v861 = vpop.f32.mrb[0].mxu0
  %862 = vmatprep.mubr.f32.mxu0 0.0
  %863 = vmatmul.mubr.f32.gmra.mrb[0].mxu0 %v686
  %v864 = vpop.f32.mrb[0].mxu0
  %v865 = vadd.f32 0.0, %v864
  %v866 = vpop.f32.mrb[0].mxu0
  %867 = vmatprep.mubr.f32.mxu0 0.0
  %868 = vmatmul.mubr.f32.gmra.mrb[0].mxu0 %v689
  %v869 = vpop.f32.mrb[0].mxu0
  %v870 = vadd.f32 0.0, %v869
  %v871 = vpop.f32.mrb[0].mxu0
  %872 = vmatprep.mubr.f32.mxu0 0.0
  %873 = vmatmul.mubr.f32.gmra.mrb[0].mxu0 %v692
  %v874 = vpop.f32.mrb[0].mxu0
  %v875 = vadd.f32 0.0, %v874
  %v876 = vpop.f32.mrb[0].mxu0
  %877 = vmatprep.mubr.f32.mxu0 0.0
  %878 = vmatmul.mubr.f32.gmra.mrb[0].mxu0 %v695
  %v879 = vpop.f32.mrb[0].mxu0
  %v880 = vadd.f32 0.0, %v879
  %v881 = vpop.f32.mrb[0].mxu0
  %882 = vmatprep.mubr.f32.mxu0 0.0
  %883 = vmatmul.mubr.f32.gmra.mrb[0].mxu0 %v698
  %v884 = vpop.f32.mrb[0].mxu0
  %v885 = vadd.f32 0.0, %v884
  %v886 = vpop.f32.mrb[0].mxu0
  %887 = vmatprep.mubr.f32.mxu0 0.0
  %888 = vmatmul.mubr.f32.gmra.mrb[0].mxu0 %v701
  %v889 = vpop.f32.mrb[0].mxu0
  %v890 = vadd.f32 0.0, %v889
  %v891 = vpop.f32.mrb[0].mxu0
  %892 = vdwg.mxu0
  %v893 = vadd.f32 %v477, %v770
  %v894 = vadd.f32 %v482, %v775
  %v895 = vadd.f32 %v487, %v780
  %v896 = vadd.f32 %v492, %v785
  %v897 = vadd.f32 %v497, %v790
  %v898 = vadd.f32 %v502, %v795
  %v899 = vadd.f32 %v507, %v800
  %v900 = vadd.f32 %v512, %v805
  %v901 = vadd.f32 %v517, %v810
  %v902 = vadd.f32 %v522, %v815
  %v903 = vadd.f32 %v527, %v820
  %v904 = vadd.f32 %v532, %v825
  %v905 = vadd.f32 %v537, %v830
  %v906 = vadd.f32 %v542, %v835
  %v907 = vadd.f32 %v547, %v840
  %v908 = vadd.f32 %v552, %v845
  %v909 = vadd.f32 %v557, %v850
  %v910 = vadd.f32 %v562, %v855
  %v911 = vadd.f32 %v567, %v860
  %v912 = vadd.f32 %v572, %v865
  %v913 = vadd.f32 %v577, %v870
  %v914 = vadd.f32 %v582, %v875
  %v915 = vadd.f32 %v587, %v880
  %v916 = vadd.f32 %v592, %v885
  %v917 = vadd.f32 %v597, %v890
  %v918 = vld [vmem:[%s0 + $0xa] sm:$0xff]
  %v919 = vld [vmem:[%s0 + $0x12] sm:$0xff]
  %v920 = vld [vmem:[%s0 + $0x1a] sm:$0xff]
  %v921 = vld [vmem:[%s0 + $0x22] sm:$0xff]
  %v922 = vld [vmem:[%s0 + $0x2a] sm:$0xff]
  %v923 = vld [vmem:[%s0 + $0x32] sm:$0xff]
  %v924 = vld [vmem:[%s0 + $0x3a] sm:$0xff]
  %v925 = vld [vmem:[%s0 + $0x42] sm:$0xff]
  %v926 = vld [vmem:[%s0 + $0x4a] sm:$0xff]
  %v927 = vld [vmem:[%s0 + $0x52] sm:$0xff]
  %v928 = vld [vmem:[%s0 + $0x5a] sm:$0xff]
  %v929 = vld [vmem:[%s0 + $0x62] sm:$0xff]
  %v930 = vld [vmem:[%s0 + $0x6a] sm:$0xff]
  %v931 = vld [vmem:[%s0 + $0x72] sm:$0xff]
  %v932 = vld [vmem:[%s0 + $0x7a] sm:$0xff]
  %v933 = vld [vmem:[%s0 + $0x82] sm:$0xff]
  %v934 = vld [vmem:[%s0 + $0x8a] sm:$0xff]
  %v935 = vld [vmem:[%s0 + $0x92] sm:$0xff]
  %v936 = vld [vmem:[%s0 + $0x9a] sm:$0xff]
  %v937 = vld [vmem:[%s0 + $0xa2] sm:$0xff]
  %v938 = vld [vmem:[%s0 + $0xaa] sm:$0xff]
  %v939 = vld [vmem:[%s0 + $0xb2] sm:$0xff]
  %v940 = vld [vmem:[%s0 + $0xba] sm:$0xff]
  %v941 = vld [vmem:[%s0 + $0xc2] sm:$0xff]
  %v942 = vld [vmem:[%s0 + $0xca] sm:$0xff]
  %s943 = scalar_lea.vmem %s1, 48
  %v944 = vld [vmem:[%s943] sm:$0xff]
  %v945 = vld [vmem:[%s943 + $0x8] sm:$0xff]
  %v947 = vsel %vm69, %v918, 0
  %v950 = vsel %vm69, %v919, 0
  %v953 = vsel %vm69, %v920, 0
  %v956 = vsel %vm69, %v921, 0
  %v959 = vsel %vm69, %v922, 0
  %v962 = vsel %vm69, %v923, 0
  %v965 = vsel %vm69, %v924, 0
  %v968 = vsel %vm69, %v925, 0
  %v971 = vsel %vm69, %v926, 0
  %v974 = vsel %vm69, %v927, 0
  %v977 = vsel %vm69, %v928, 0
  %v980 = vsel %vm69, %v929, 0
  %v983 = vsel %vm69, %v930, 0
  %v986 = vsel %vm69, %v931, 0
  %v989 = vsel %vm69, %v932, 0
  %v992 = vsel %vm69, %v933, 0
  %v995 = vsel %vm69, %v934, 0
  %v998 = vsel %vm69, %v935, 0
  %v1001 = vsel %vm69, %v936, 0
  %v1004 = vsel %vm69, %v937, 0
  %v1007 = vsel %vm69, %v938, 0
  %v1010 = vsel %vm69, %v939, 0
  %v1013 = vsel %vm69, %v940, 0
  %v1016 = vsel %vm69, %v941, 0
  %v1019 = vsel %vm69, %v942, 0
  %1021 = vmatprep.subr.mxu0 0.0
  %1022 = vmatpush1.msra.mxu0 %v944
  %1023 = vmatprep.subr.mxu0 0.0
  %1024 = vmatpush1.msra.mxu0 %v945
  %1025 = vmatprep.subr.mxu0 0.0
  %1026 = vmatpush1.msra.mxu0 0.0
  %1027 = vmatprep.subr.mxu0 0.0
  %1028 = vmatpush1.msra.mxu0 0.0
  %1029 = vmatprep.subr.mxu0 0.0
  %1030 = vmatpush1.msra.mxu0 0.0
  %1031 = vmatprep.subr.mxu0 0.0
  %1032 = vmatpush1.msra.mxu0 0.0
  %1033 = vmatprep.subr.mxu0 0.0
  %1034 = vmatpush1.msra.mxu0 0.0
  %1035 = vmatprep.subr.mxu0 0.0
  %1036 = vmatpush1.msra.mxu0 0.0
  %1037 = vmatprep.subr.mxu0 0.0
  %1038 = vmatpush1.msra.mxu0 0.0
  %1039 = vmatprep.subr.mxu0 0.0
  %1040 = vmatpush1.msra.mxu0 0.0
  %1041 = vmatprep.subr.mxu0 0.0
  %1042 = vmatpush1.msra.mxu0 0.0
  %1043 = vmatprep.subr.mxu0 0.0
  %1044 = vmatpush1.msra.mxu0 0.0
  %1045 = vmatprep.subr.mxu0 0.0
  %1046 = vmatpush1.msra.mxu0 0.0
  %1047 = vmatprep.subr.mxu0 0.0
  %1048 = vmatpush1.msra.mxu0 0.0
  %1049 = vmatprep.subr.mxu0 0.0
  %1050 = vmatpush1.msra.mxu0 0.0
  %1051 = vmatprep.subr.mxu0 0.0
  %1052 = vmatpush1.msra.mxu0 0.0
  %1053 = vmatprep.subr.mxu0 0.0
  %1054 = vmatpush1.msra.mxu0 0.0
  %1055 = vmatprep.subr.mxu0 0.0
  %1056 = vmatpush1.msra.mxu0 0.0
  %1057 = vmatprep.subr.mxu0 0.0
  %1058 = vmatpush1.msra.mxu0 0.0
  %1059 = vmatprep.subr.mxu0 0.0
  %1060 = vmatpush1.msra.mxu0 0.0
  %1061 = vmatprep.subr.mxu0 0.0
  %1062 = vmatpush1.msra.mxu0 0.0
  %1063 = vmatprep.subr.mxu0 0.0
  %1064 = vmatpush1.msra.mxu0 0.0
  %1065 = vmatprep.subr.mxu0 0.0
  %1066 = vmatpush1.msra.mxu0 0.0
  %1067 = vmatprep.subr.mxu0 0.0
  %1068 = vmatpush1.msra.mxu0 0.0
  %1069 = vmatprep.subr.mxu0 0.0
  %1070 = vmatpush1.msra.mxu0 0.0
  %1071 = vmatprep.subr.mxu0 0.0
  %1072 = vmatpush1.msra.mxu0 0.0
  %1073 = vmatprep.subr.mxu0 0.0
  %1074 = vmatpush1.msra.mxu0 0.0
  %1075 = vmatprep.subr.mxu0 0.0
  %1076 = vmatpush1.msra.mxu0 0.0
  %1077 = vmatprep.subr.mxu0 0.0
  %1078 = vmatpush1.msra.mxu0 0.0
  %1079 = vmatprep.subr.mxu0 0.0
  %1080 = vmatpush1.msra.mxu0 0.0
  %1081 = vmatprep.subr.mxu0 0.0
  %1082 = vmatpush1.msra.mxu0 0.0
  %1083 = vmatprep.subr.mxu0 0.0
  %1084 = vmatpush1.msra.mxu0 0.0
  %1085 = vmatprep.mubr.f32.mxu0 0.0
  %1086 = vmatmul.mubr.f32.gmra.mrb[0].mxu0 %v947
  %v1087 = vpop.f32.mrb[0].mxu0
  %v1088 = vadd.f32 0.0, %v1087
  %v1089 = vpop.f32.mrb[0].mxu0
  %1090 = vmatprep.mubr.f32.mxu0 0.0
  %1091 = vmatmul.mubr.f32.gmra.mrb[0].mxu0 %v950
  %v1092 = vpop.f32.mrb[0].mxu0
  %v1093 = vadd.f32 0.0, %v1092
  %v1094 = vpop.f32.mrb[0].mxu0
  %1095 = vmatprep.mubr.f32.mxu0 0.0
  %1096 = vmatmul.mubr.f32.gmra.mrb[0].mxu0 %v953
  %v1097 = vpop.f32.mrb[0].mxu0
  %v1098 = vadd.f32 0.0, %v1097
  %v1099 = vpop.f32.mrb[0].mxu0
  %1100 = vmatprep.mubr.f32.mxu0 0.0
  %1101 = vmatmul.mubr.f32.gmra.mrb[0].mxu0 %v956
  %v1102 = vpop.f32.mrb[0].mxu0
  %v1103 = vadd.f32 0.0, %v1102
  %v1104 = vpop.f32.mrb[0].mxu0
  %1105 = vmatprep.mubr.f32.mxu0 0.0
  %1106 = vmatmul.mubr.f32.gmra.mrb[0].mxu0 %v959
  %v1107 = vpop.f32.mrb[0].mxu0
  %v1108 = vadd.f32 0.0, %v1107
  %v1109 = vpop.f32.mrb[0].mxu0
  %1110 = vmatprep.mubr.f32.mxu0 0.0
  %1111 = vmatmul.mubr.f32.gmra.mrb[0].mxu0 %v962
  %v1112 = vpop.f32.mrb[0].mxu0
  %v1113 = vadd.f32 0.0, %v1112
  %v1114 = vpop.f32.mrb[0].mxu0
  %1115 = vmatprep.mubr.f32.mxu0 0.0
  %1116 = vmatmul.mubr.f32.gmra.mrb[0].mxu0 %v965
  %v1117 = vpop.f32.mrb[0].mxu0
  %v1118 = vadd.f32 0.0, %v1117
  %v1119 = vpop.f32.mrb[0].mxu0
  %1120 = vmatprep.mubr.f32.mxu0 0.0
  %1121 = vmatmul.mubr.f32.gmra.mrb[0].mxu0 %v968
  %v1122 = vpop.f32.mrb[0].mxu0
  %v1123 = vadd.f32 0.0, %v1122
  %v1124 = vpop.f32.mrb[0].mxu0
  %1125 = vmatprep.mubr.f32.mxu0 0.0
  %1126 = vmatmul.mubr.f32.gmra.mrb[0].mxu0 %v971
  %v1127 = vpop.f32.mrb[0].mxu0
  %v1128 = vadd.f32 0.0, %v1127
  %v1129 = vpop.f32.mrb[0].mxu0
  %1130 = vmatprep.mubr.f32.mxu0 0.0
  %1131 = vmatmul.mubr.f32.gmra.mrb[0].mxu0 %v974
  %v1132 = vpop.f32.mrb[0].mxu0
  %v1133 = vadd.f32 0.0, %v1132
  %v1134 = vpop.f32.mrb[0].mxu0
  %1135 = vmatprep.mubr.f32.mxu0 0.0
  %1136 = vmatmul.mubr.f32.gmra.mrb[0].mxu0 %v977
  %v1137 = vpop.f32.mrb[0].mxu0
  %v1138 = vadd.f32 0.0, %v1137
  %v1139 = vpop.f32.mrb[0].mxu0
  %1140 = vmatprep.mubr.f32.mxu0 0.0
  %1141 = vmatmul.mubr.f32.gmra.mrb[0].mxu0 %v980
  %v1142 = vpop.f32.mrb[0].mxu0
  %v1143 = vadd.f32 0.0, %v1142
  %v1144 = vpop.f32.mrb[0].mxu0
  %1145 = vmatprep.mubr.f32.mxu0 0.0
  %1146 = vmatmul.mubr.f32.gmra.mrb[0].mxu0 %v983
  %v1147 = vpop.f32.mrb[0].mxu0
  %v1148 = vadd.f32 0.0, %v1147
  %v1149 = vpop.f32.mrb[0].mxu0
  %1150 = vmatprep.mubr.f32.mxu0 0.0
  %1151 = vmatmul.mubr.f32.gmra.mrb[0].mxu0 %v986
  %v1152 = vpop.f32.mrb[0].mxu0
  %v1153 = vadd.f32 0.0, %v1152
  %v1154 = vpop.f32.mrb[0].mxu0
  %1155 = vmatprep.mubr.f32.mxu0 0.0
  %1156 = vmatmul.mubr.f32.gmra.mrb[0].mxu0 %v989
  %v1157 = vpop.f32.mrb[0].mxu0
  %v1158 = vadd.f32 0.0, %v1157
  %v1159 = vpop.f32.mrb[0].mxu0
  %1160 = vmatprep.mubr.f32.mxu0 0.0
  %1161 = vmatmul.mubr.f32.gmra.mrb[0].mxu0 %v992
  %v1162 = vpop.f32.mrb[0].mxu0
  %v1163 = vadd.f32 0.0, %v1162
  %v1164 = vpop.f32.mrb[0].mxu0
  %1165 = vmatprep.mubr.f32.mxu0 0.0
  %1166 = vmatmul.mubr.f32.gmra.mrb[0].mxu0 %v995
  %v1167 = vpop.f32.mrb[0].mxu0
  %v1168 = vadd.f32 0.0, %v1167
  %v1169 = vpop.f32.mrb[0].mxu0
  %1170 = vmatprep.mubr.f32.mxu0 0.0
  %1171 = vmatmul.mubr.f32.gmra.mrb[0].mxu0 %v998
  %v1172 = vpop.f32.mrb[0].mxu0
  %v1173 = vadd.f32 0.0, %v1172
  %v1174 = vpop.f32.mrb[0].mxu0
  %1175 = vmatprep.mubr.f32.mxu0 0.0
  %1176 = vmatmul.mubr.f32.gmra.mrb[0].mxu0 %v1001
  %v1177 = vpop.f32.mrb[0].mxu0
  %v1178 = vadd.f32 0.0, %v1177
  %v1179 = vpop.f32.mrb[0].mxu0
  %1180 = vmatprep.mubr.f32.mxu0 0.0
  %1181 = vmatmul.mubr.f32.gmra.mrb[0].mxu0 %v1004
  %v1182 = vpop.f32.mrb[0].mxu0
  %v1183 = vadd.f32 0.0, %v1182
  %v1184 = vpop.f32.mrb[0].mxu0
  %1185 = vmatprep.mubr.f32.mxu0 0.0
  %1186 = vmatmul.mubr.f32.gmra.mrb[0].mxu0 %v1007
  %v1187 = vpop.f32.mrb[0].mxu0
  %v1188 = vadd.f32 0.0, %v1187
  %v1189 = vpop.f32.mrb[0].mxu0
  %1190 = vmatprep.mubr.f32.mxu0 0.0
  %1191 = vmatmul.mubr.f32.gmra.mrb[0].mxu0 %v1010
  %v1192 = vpop.f32.mrb[0].mxu0
  %v1193 = vadd.f32 0.0, %v1192
  %v1194 = vpop.f32.mrb[0].mxu0
  %1195 = vmatprep.mubr.f32.mxu0 0.0
  %1196 = vmatmul.mubr.f32.gmra.mrb[0].mxu0 %v1013
  %v1197 = vpop.f32.mrb[0].mxu0
  %v1198 = vadd.f32 0.0, %v1197
  %v1199 = vpop.f32.mrb[0].mxu0
  %1200 = vmatprep.mubr.f32.mxu0 0.0
  %1201 = vmatmul.mubr.f32.gmra.mrb[0].mxu0 %v1016
  %v1202 = vpop.f32.mrb[0].mxu0
  %v1203 = vadd.f32 0.0, %v1202
  %v1204 = vpop.f32.mrb[0].mxu0
  %1205 = vmatprep.mubr.f32.mxu0 0.0
  %1206 = vmatmul.mubr.f32.gmra.mrb[0].mxu0 %v1019
  %v1207 = vpop.f32.mrb[0].mxu0
  %v1208 = vadd.f32 0.0, %v1207
  %v1209 = vpop.f32.mrb[0].mxu0
  %1210 = vdwg.mxu0
  %v1211 = vadd.f32 %v893, %v1088
  %v1212 = vadd.f32 %v894, %v1093
  %v1213 = vadd.f32 %v895, %v1098
  %v1214 = vadd.f32 %v896, %v1103
  %v1215 = vadd.f32 %v897, %v1108
  %v1216 = vadd.f32 %v898, %v1113
  %v1217 = vadd.f32 %v899, %v1118
  %v1218 = vadd.f32 %v900, %v1123
  %v1219 = vadd.f32 %v901, %v1128
  %v1220 = vadd.f32 %v902, %v1133
  %v1221 = vadd.f32 %v903, %v1138
  %v1222 = vadd.f32 %v904, %v1143
  %v1223 = vadd.f32 %v905, %v1148
  %v1224 = vadd.f32 %v906, %v1153
  %v1225 = vadd.f32 %v907, %v1158
  %v1226 = vadd.f32 %v908, %v1163
  %v1227 = vadd.f32 %v909, %v1168
  %v1228 = vadd.f32 %v910, %v1173
  %v1229 = vadd.f32 %v911, %v1178
  %v1230 = vadd.f32 %v912, %v1183
  %v1231 = vadd.f32 %v913, %v1188
  %v1232 = vadd.f32 %v914, %v1193
  %v1233 = vadd.f32 %v915, %v1198
  %v1234 = vadd.f32 %v916, %v1203
  %v1235 = vadd.f32 %v917, %v1208
  %v1236 = vld [vmem:[%s0 + $0xb] sm:$0xff]
  %v1237 = vld [vmem:[%s0 + $0x13] sm:$0xff]
  %v1238 = vld [vmem:[%s0 + $0x1b] sm:$0xff]
  %v1239 = vld [vmem:[%s0 + $0x23] sm:$0xff]
  %v1240 = vld [vmem:[%s0 + $0x2b] sm:$0xff]
  %v1241 = vld [vmem:[%s0 + $0x33] sm:$0xff]
  %v1242 = vld [vmem:[%s0 + $0x3b] sm:$0xff]
  %v1243 = vld [vmem:[%s0 + $0x43] sm:$0xff]
  %v1244 = vld [vmem:[%s0 + $0x4b] sm:$0xff]
  %v1245 = vld [vmem:[%s0 + $0x53] sm:$0xff]
  %v1246 = vld [vmem:[%s0 + $0x5b] sm:$0xff]
  %v1247 = vld [vmem:[%s0 + $0x63] sm:$0xff]
  %v1248 = vld [vmem:[%s0 + $0x6b] sm:$0xff]
  %v1249 = vld [vmem:[%s0 + $0x73] sm:$0xff]
  %v1250 = vld [vmem:[%s0 + $0x7b] sm:$0xff]
  %v1251 = vld [vmem:[%s0 + $0x83] sm:$0xff]
  %v1252 = vld [vmem:[%s0 + $0x8b] sm:$0xff]
  %v1253 = vld [vmem:[%s0 + $0x93] sm:$0xff]
  %v1254 = vld [vmem:[%s0 + $0x9b] sm:$0xff]
  %v1255 = vld [vmem:[%s0 + $0xa3] sm:$0xff]
  %v1256 = vld [vmem:[%s0 + $0xab] sm:$0xff]
  %v1257 = vld [vmem:[%s0 + $0xb3] sm:$0xff]
  %v1258 = vld [vmem:[%s0 + $0xbb] sm:$0xff]
  %v1259 = vld [vmem:[%s0 + $0xc3] sm:$0xff]
  %v1260 = vld [vmem:[%s0 + $0xcb] sm:$0xff]
  %s1261 = scalar_lea.vmem %s1, 64
  %v1262 = vld [vmem:[%s1261] sm:$0xff]
  %v1263 = vld [vmem:[%s1261 + $0x8] sm:$0xff]
  %v1265 = vsel %vm69, %v1236, 0
  %v1268 = vsel %vm69, %v1237, 0
  %v1271 = vsel %vm69, %v1238, 0
  %v1274 = vsel %vm69, %v1239, 0
  %v1277 = vsel %vm69, %v1240, 0
  %v1280 = vsel %vm69, %v1241, 0
  %v1283 = vsel %vm69, %v1242, 0
  %v1286 = vsel %vm69, %v1243, 0
  %v1289 = vsel %vm69, %v1244, 0
  %v1292 = vsel %vm69, %v1245, 0
  %v1295 = vsel %vm69, %v1246, 0
  %v1298 = vsel %vm69, %v1247, 0
  %v1301 = vsel %vm69, %v1248, 0
  %v1304 = vsel %vm69, %v1249, 0
  %v1307 = vsel %vm69, %v1250, 0
  %v1310 = vsel %vm69, %v1251, 0
  %v1313 = vsel %vm69, %v1252, 0
  %v1316 = vsel %vm69, %v1253, 0
  %v1319 = vsel %vm69, %v1254, 0
  %v1322 = vsel %vm69, %v1255, 0
  %v1325 = vsel %vm69, %v1256, 0
  %v1328 = vsel %vm69, %v1257, 0
  %v1331 = vsel %vm69, %v1258, 0
  %v1334 = vsel %vm69, %v1259, 0
  %v1337 = vsel %vm69, %v1260, 0
  %1339 = vmatprep.subr.mxu0 0.0
  %1340 = vmatpush1.msra.mxu0 %v1262
  %1341 = vmatprep.subr.mxu0 0.0
  %1342 = vmatpush1.msra.mxu0 %v1263
  %1343 = vmatprep.subr.mxu0 0.0
  %1344 = vmatpush1.msra.mxu0 0.0
  %1345 = vmatprep.subr.mxu0 0.0
  %1346 = vmatpush1.msra.mxu0 0.0
  %1347 = vmatprep.subr.mxu0 0.0
  %1348 = vmatpush1.msra.mxu0 0.0
  %1349 = vmatprep.subr.mxu0 0.0
  %1350 = vmatpush1.msra.mxu0 0.0
  %1351 = vmatprep.subr.mxu0 0.0
  %1352 = vmatpush1.msra.mxu0 0.0
  %1353 = vmatprep.subr.mxu0 0.0
  %1354 = vmatpush1.msra.mxu0 0.0
  %1355 = vmatprep.subr.mxu0 0.0
  %1356 = vmatpush1.msra.mxu0 0.0
  %1357 = vmatprep.subr.mxu0 0.0
  %1358 = vmatpush1.msra.mxu0 0.0
  %1359 = vmatprep.subr.mxu0 0.0
  %1360 = vmatpush1.msra.mxu0 0.0
  %1361 = vmatprep.subr.mxu0 0.0
  %1362 = vmatpush1.msra.mxu0 0.0
  %1363 = vmatprep.subr.mxu0 0.0
  %1364 = vmatpush1.msra.mxu0 0.0
  %1365 = vmatprep.subr.mxu0 0.0
  %1366 = vmatpush1.msra.mxu0 0.0
  %1367 = vmatprep.subr.mxu0 0.0
  %1368 = vmatpush1.msra.mxu0 0.0
  %1369 = vmatprep.subr.mxu0 0.0
  %1370 = vmatpush1.msra.mxu0 0.0
  %1371 = vmatprep.subr.mxu0 0.0
  %1372 = vmatpush1.msra.mxu0 0.0
  %1373 = vmatprep.subr.mxu0 0.0
  %1374 = vmatpush1.msra.mxu0 0.0
  %1375 = vmatprep.subr.mxu0 0.0
  %1376 = vmatpush1.msra.mxu0 0.0
  %1377 = vmatprep.subr.mxu0 0.0
  %1378 = vmatpush1.msra.mxu0 0.0
  %1379 = vmatprep.subr.mxu0 0.0
  %1380 = vmatpush1.msra.mxu0 0.0
  %1381 = vmatprep.subr.mxu0 0.0
  %1382 = vmatpush1.msra.mxu0 0.0
  %1383 = vmatprep.subr.mxu0 0.0
  %1384 = vmatpush1.msra.mxu0 0.0
  %1385 = vmatprep.subr.mxu0 0.0
  %1386 = vmatpush1.msra.mxu0 0.0
  %1387 = vmatprep.subr.mxu0 0.0
  %1388 = vmatpush1.msra.mxu0 0.0
  %1389 = vmatprep.subr.mxu0 0.0
  %1390 = vmatpush1.msra.mxu0 0.0
  %1391 = vmatprep.subr.mxu0 0.0
  %1392 = vmatpush1.msra.mxu0 0.0
  %1393 = vmatprep.subr.mxu0 0.0
  %1394 = vmatpush1.msra.mxu0 0.0
  %1395 = vmatprep.subr.mxu0 0.0
  %1396 = vmatpush1.msra.mxu0 0.0
  %1397 = vmatprep.subr.mxu0 0.0
  %1398 = vmatpush1.msra.mxu0 0.0
  %1399 = vmatprep.subr.mxu0 0.0
  %1400 = vmatpush1.msra.mxu0 0.0
  %1401 = vmatprep.subr.mxu0 0.0
  %1402 = vmatpush1.msra.mxu0 0.0
  %1403 = vmatprep.mubr.f32.mxu0 0.0
  %1404 = vmatmul.mubr.f32.gmra.mrb[0].mxu0 %v1265
  %v1405 = vpop.f32.mrb[0].mxu0
  %v1406 = vadd.f32 0.0, %v1405
  %v1407 = vpop.f32.mrb[0].mxu0
  %1408 = vmatprep.mubr.f32.mxu0 0.0
  %1409 = vmatmul.mubr.f32.gmra.mrb[0].mxu0 %v1268
  %v1410 = vpop.f32.mrb[0].mxu0
  %v1411 = vadd.f32 0.0, %v1410
  %v1412 = vpop.f32.mrb[0].mxu0
  %1413 = vmatprep.mubr.f32.mxu0 0.0
  %1414 = vmatmul.mubr.f32.gmra.mrb[0].mxu0 %v1271
  %v1415 = vpop.f32.mrb[0].mxu0
  %v1416 = vadd.f32 0.0, %v1415
  %v1417 = vpop.f32.mrb[0].mxu0
  %1418 = vmatprep.mubr.f32.mxu0 0.0
  %1419 = vmatmul.mubr.f32.gmra.mrb[0].mxu0 %v1274
  %v1420 = vpop.f32.mrb[0].mxu0
  %v1421 = vadd.f32 0.0, %v1420
  %v1422 = vpop.f32.mrb[0].mxu0
  %1423 = vmatprep.mubr.f32.mxu0 0.0
  %1424 = vmatmul.mubr.f32.gmra.mrb[0].mxu0 %v1277
  %v1425 = vpop.f32.mrb[0].mxu0
  %v1426 = vadd.f32 0.0, %v1425
  %v1427 = vpop.f32.mrb[0].mxu0
  %1428 = vmatprep.mubr.f32.mxu0 0.0
  %1429 = vmatmul.mubr.f32.gmra.mrb[0].mxu0 %v1280
  %v1430 = vpop.f32.mrb[0].mxu0
  %v1431 = vadd.f32 0.0, %v1430
  %v1432 = vpop.f32.mrb[0].mxu0
  %1433 = vmatprep.mubr.f32.mxu0 0.0
  %1434 = vmatmul.mubr.f32.gmra.mrb[0].mxu0 %v1283
  %v1435 = vpop.f32.mrb[0].mxu0
  %v1436 = vadd.f32 0.0, %v1435
  %v1437 = vpop.f32.mrb[0].mxu0
  %1438 = vmatprep.mubr.f32.mxu0 0.0
  %1439 = vmatmul.mubr.f32.gmra.mrb[0].mxu0 %v1286
  %v1440 = vpop.f32.mrb[0].mxu0
  %v1441 = vadd.f32 0.0, %v1440
  %v1442 = vpop.f32.mrb[0].mxu0
  %1443 = vmatprep.mubr.f32.mxu0 0.0
  %1444 = vmatmul.mubr.f32.gmra.mrb[0].mxu0 %v1289
  %v1445 = vpop.f32.mrb[0].mxu0
  %v1446 = vadd.f32 0.0, %v1445
  %v1447 = vpop.f32.mrb[0].mxu0
  %1448 = vmatprep.mubr.f32.mxu0 0.0
  %1449 = vmatmul.mubr.f32.gmra.mrb[0].mxu0 %v1292
  %v1450 = vpop.f32.mrb[0].mxu0
  %v1451 = vadd.f32 0.0, %v1450
  %v1452 = vpop.f32.mrb[0].mxu0
  %1453 = vmatprep.mubr.f32.mxu0 0.0
  %1454 = vmatmul.mubr.f32.gmra.mrb[0].mxu0 %v1295
  %v1455 = vpop.f32.mrb[0].mxu0
  %v1456 = vadd.f32 0.0, %v1455
  %v1457 = vpop.f32.mrb[0].mxu0
  %1458 = vmatprep.mubr.f32.mxu0 0.0
  %1459 = vmatmul.mubr.f32.gmra.mrb[0].mxu0 %v1298
  %v1460 = vpop.f32.mrb[0].mxu0
  %v1461 = vadd.f32 0.0, %v1460
  %v1462 = vpop.f32.mrb[0].mxu0
  %1463 = vmatprep.mubr.f32.mxu0 0.0
  %1464 = vmatmul.mubr.f32.gmra.mrb[0].mxu0 %v1301
  %v1465 = vpop.f32.mrb[0].mxu0
  %v1466 = vadd.f32 0.0, %v1465
  %v1467 = vpop.f32.mrb[0].mxu0
  %1468 = vmatprep.mubr.f32.mxu0 0.0
  %1469 = vmatmul.mubr.f32.gmra.mrb[0].mxu0 %v1304
  %v1470 = vpop.f32.mrb[0].mxu0
  %v1471 = vadd.f32 0.0, %v1470
  %v1472 = vpop.f32.mrb[0].mxu0
  %1473 = vmatprep.mubr.f32.mxu0 0.0
  %1474 = vmatmul.mubr.f32.gmra.mrb[0].mxu0 %v1307
  %v1475 = vpop.f32.mrb[0].mxu0
  %v1476 = vadd.f32 0.0, %v1475
  %v1477 = vpop.f32.mrb[0].mxu0
  %1478 = vmatprep.mubr.f32.mxu0 0.0
  %1479 = vmatmul.mubr.f32.gmra.mrb[0].mxu0 %v1310
  %v1480 = vpop.f32.mrb[0].mxu0
  %v1481 = vadd.f32 0.0, %v1480
  %v1482 = vpop.f32.mrb[0].mxu0
  %1483 = vmatprep.mubr.f32.mxu0 0.0
  %1484 = vmatmul.mubr.f32.gmra.mrb[0].mxu0 %v1313
  %v1485 = vpop.f32.mrb[0].mxu0
  %v1486 = vadd.f32 0.0, %v1485
  %v1487 = vpop.f32.mrb[0].mxu0
  %1488 = vmatprep.mubr.f32.mxu0 0.0
  %1489 = vmatmul.mubr.f32.gmra.mrb[0].mxu0 %v1316
  %v1490 = vpop.f32.mrb[0].mxu0
  %v1491 = vadd.f32 0.0, %v1490
  %v1492 = vpop.f32.mrb[0].mxu0
  %1493 = vmatprep.mubr.f32.mxu0 0.0
  %1494 = vmatmul.mubr.f32.gmra.mrb[0].mxu0 %v1319
  %v1495 = vpop.f32.mrb[0].mxu0
  %v1496 = vadd.f32 0.0, %v1495
  %v1497 = vpop.f32.mrb[0].mxu0
  %1498 = vmatprep.mubr.f32.mxu0 0.0
  %1499 = vmatmul.mubr.f32.gmra.mrb[0].mxu0 %v1322
  %v1500 = vpop.f32.mrb[0].mxu0
  %v1501 = vadd.f32 0.0, %v1500
  %v1502 = vpop.f32.mrb[0].mxu0
  %1503 = vmatprep.mubr.f32.mxu0 0.0
  %1504 = vmatmul.mubr.f32.gmra.mrb[0].mxu0 %v1325
  %v1505 = vpop.f32.mrb[0].mxu0
  %v1506 = vadd.f32 0.0, %v1505
  %v1507 = vpop.f32.mrb[0].mxu0
  %1508 = vmatprep.mubr.f32.mxu0 0.0
  %1509 = vmatmul.mubr.f32.gmra.mrb[0].mxu0 %v1328
  %v1510 = vpop.f32.mrb[0].mxu0
  %v1511 = vadd.f32 0.0, %v1510
  %v1512 = vpop.f32.mrb[0].mxu0
  %1513 = vmatprep.mubr.f32.mxu0 0.0
  %1514 = vmatmul.mubr.f32.gmra.mrb[0].mxu0 %v1331
  %v1515 = vpop.f32.mrb[0].mxu0
  %v1516 = vadd.f32 0.0, %v1515
  %v1517 = vpop.f32.mrb[0].mxu0
  %1518 = vmatprep.mubr.f32.mxu0 0.0
  %1519 = vmatmul.mubr.f32.gmra.mrb[0].mxu0 %v1334
  %v1520 = vpop.f32.mrb[0].mxu0
  %v1521 = vadd.f32 0.0, %v1520
  %v1522 = vpop.f32.mrb[0].mxu0
  %1523 = vmatprep.mubr.f32.mxu0 0.0
  %1524 = vmatmul.mubr.f32.gmra.mrb[0].mxu0 %v1337
  %v1525 = vpop.f32.mrb[0].mxu0
  %v1526 = vadd.f32 0.0, %v1525
  %v1527 = vpop.f32.mrb[0].mxu0
  %1528 = vdwg.mxu0
  %v1529 = vadd.f32 %v1211, %v1406
  %v1530 = vadd.f32 %v1212, %v1411
  %v1531 = vadd.f32 %v1213, %v1416
  %v1532 = vadd.f32 %v1214, %v1421
  %v1533 = vadd.f32 %v1215, %v1426
  %v1534 = vadd.f32 %v1216, %v1431
  %v1535 = vadd.f32 %v1217, %v1436
  %v1536 = vadd.f32 %v1218, %v1441
  %v1537 = vadd.f32 %v1219, %v1446
  %v1538 = vadd.f32 %v1220, %v1451
  %v1539 = vadd.f32 %v1221, %v1456
  %v1540 = vadd.f32 %v1222, %v1461
  %v1541 = vadd.f32 %v1223, %v1466
  %v1542 = vadd.f32 %v1224, %v1471
  %v1543 = vadd.f32 %v1225, %v1476
  %v1544 = vadd.f32 %v1226, %v1481
  %v1545 = vadd.f32 %v1227, %v1486
  %v1546 = vadd.f32 %v1228, %v1491
  %v1547 = vadd.f32 %v1229, %v1496
  %v1548 = vadd.f32 %v1230, %v1501
  %v1549 = vadd.f32 %v1231, %v1506
  %v1550 = vadd.f32 %v1232, %v1511
  %v1551 = vadd.f32 %v1233, %v1516
  %v1552 = vadd.f32 %v1234, %v1521
  %v1553 = vadd.f32 %v1235, %v1526
  %v1554 = vld [vmem:[%s0 + $0xc] sm:$0xff]
  %v1555 = vld [vmem:[%s0 + $0x14] sm:$0xff]
  %v1556 = vld [vmem:[%s0 + $0x1c] sm:$0xff]
  %v1557 = vld [vmem:[%s0 + $0x24] sm:$0xff]
  %v1558 = vld [vmem:[%s0 + $0x2c] sm:$0xff]
  %v1559 = vld [vmem:[%s0 + $0x34] sm:$0xff]
  %v1560 = vld [vmem:[%s0 + $0x3c] sm:$0xff]
  %v1561 = vld [vmem:[%s0 + $0x44] sm:$0xff]
  %v1562 = vld [vmem:[%s0 + $0x4c] sm:$0xff]
  %v1563 = vld [vmem:[%s0 + $0x54] sm:$0xff]
  %v1564 = vld [vmem:[%s0 + $0x5c] sm:$0xff]
  %v1565 = vld [vmem:[%s0 + $0x64] sm:$0xff]
  %v1566 = vld [vmem:[%s0 + $0x6c] sm:$0xff]
  %v1567 = vld [vmem:[%s0 + $0x74] sm:$0xff]
  %v1568 = vld [vmem:[%s0 + $0x7c] sm:$0xff]
  %v1569 = vld [vmem:[%s0 + $0x84] sm:$0xff]
  %v1570 = vld [vmem:[%s0 + $0x8c] sm:$0xff]
  %v1571 = vld [vmem:[%s0 + $0x94] sm:$0xff]
  %v1572 = vld [vmem:[%s0 + $0x9c] sm:$0xff]
  %v1573 = vld [vmem:[%s0 + $0xa4] sm:$0xff]
  %v1574 = vld [vmem:[%s0 + $0xac] sm:$0xff]
  %v1575 = vld [vmem:[%s0 + $0xb4] sm:$0xff]
  %v1576 = vld [vmem:[%s0 + $0xbc] sm:$0xff]
  %v1577 = vld [vmem:[%s0 + $0xc4] sm:$0xff]
  %v1578 = vld [vmem:[%s0 + $0xcc] sm:$0xff]
  %s1579 = scalar_lea.vmem %s1, 80
  %v1580 = vld [vmem:[%s1579] sm:$0xff]
  %v1581 = vld [vmem:[%s1579 + $0x8] sm:$0xff]
  %v1583 = vsel %vm69, %v1554, 0
  %v1586 = vsel %vm69, %v1555, 0
  %v1589 = vsel %vm69, %v1556, 0
  %v1592 = vsel %vm69, %v1557, 0
  %v1595 = vsel %vm69, %v1558, 0
  %v1598 = vsel %vm69, %v1559, 0
  %v1601 = vsel %vm69, %v1560, 0
  %v1604 = vsel %vm69, %v1561, 0
  %v1607 = vsel %vm69, %v1562, 0
  %v1610 = vsel %vm69, %v1563, 0
  %v1613 = vsel %vm69, %v1564, 0
  %v1616 = vsel %vm69, %v1565, 0
  %v1619 = vsel %vm69, %v1566, 0
  %v1622 = vsel %vm69, %v1567, 0
  %v1625 = vsel %vm69, %v1568, 0
  %v1628 = vsel %vm69, %v1569, 0
  %v1631 = vsel %vm69, %v1570, 0
  %v1634 = vsel %vm69, %v1571, 0
  %v1637 = vsel %vm69, %v1572, 0
  %v1640 = vsel %vm69, %v1573, 0
  %v1643 = vsel %vm69, %v1574, 0
  %v1646 = vsel %vm69, %v1575, 0
  %v1649 = vsel %vm69, %v1576, 0
  %v1652 = vsel %vm69, %v1577, 0
  %v1655 = vsel %vm69, %v1578, 0
  %1657 = vmatprep.subr.mxu0 0.0
  %1658 = vmatpush1.msra.mxu0 %v1580
  %1659 = vmatprep.subr.mxu0 0.0
  %1660 = vmatpush1.msra.mxu0 %v1581
  %1661 = vmatprep.subr.mxu0 0.0
  %1662 = vmatpush1.msra.mxu0 0.0
  %1663 = vmatprep.subr.mxu0 0.0
  %1664 = vmatpush1.msra.mxu0 0.0
  %1665 = vmatprep.subr.mxu0 0.0
  %1666 = vmatpush1.msra.mxu0 0.0
  %1667 = vmatprep.subr.mxu0 0.0
  %1668 = vmatpush1.msra.mxu0 0.0
  %1669 = vmatprep.subr.mxu0 0.0
  %1670 = vmatpush1.msra.mxu0 0.0
  %1671 = vmatprep.subr.mxu0 0.0
  %1672 = vmatpush1.msra.mxu0 0.0
  %1673 = vmatprep.subr.mxu0 0.0
  %1674 = vmatpush1.msra.mxu0 0.0
  %1675 = vmatprep.subr.mxu0 0.0
  %1676 = vmatpush1.msra.mxu0 0.0
  %1677 = vmatprep.subr.mxu0 0.0
  %1678 = vmatpush1.msra.mxu0 0.0
  %1679 = vmatprep.subr.mxu0 0.0
  %1680 = vmatpush1.msra.mxu0 0.0
  %1681 = vmatprep.subr.mxu0 0.0
  %1682 = vmatpush1.msra.mxu0 0.0
  %1683 = vmatprep.subr.mxu0 0.0
  %1684 = vmatpush1.msra.mxu0 0.0
  %1685 = vmatprep.subr.mxu0 0.0
  %1686 = vmatpush1.msra.mxu0 0.0
  %1687 = vmatprep.subr.mxu0 0.0
  %1688 = vmatpush1.msra.mxu0 0.0
  %1689 = vmatprep.subr.mxu0 0.0
  %1690 = vmatpush1.msra.mxu0 0.0
  %1691 = vmatprep.subr.mxu0 0.0
  %1692 = vmatpush1.msra.mxu0 0.0
  %1693 = vmatprep.subr.mxu0 0.0
  %1694 = vmatpush1.msra.mxu0 0.0
  %1695 = vmatprep.subr.mxu0 0.0
  %1696 = vmatpush1.msra.mxu0 0.0
  %1697 = vmatprep.subr.mxu0 0.0
  %1698 = vmatpush1.msra.mxu0 0.0
  %1699 = vmatprep.subr.mxu0 0.0
  %1700 = vmatpush1.msra.mxu0 0.0
  %1701 = vmatprep.subr.mxu0 0.0
  %1702 = vmatpush1.msra.mxu0 0.0
  %1703 = vmatprep.subr.mxu0 0.0
  %1704 = vmatpush1.msra.mxu0 0.0
  %1705 = vmatprep.subr.mxu0 0.0
  %1706 = vmatpush1.msra.mxu0 0.0
  %1707 = vmatprep.subr.mxu0 0.0
  %1708 = vmatpush1.msra.mxu0 0.0
  %1709 = vmatprep.subr.mxu0 0.0
  %1710 = vmatpush1.msra.mxu0 0.0
  %1711 = vmatprep.subr.mxu0 0.0
  %1712 = vmatpush1.msra.mxu0 0.0
  %1713 = vmatprep.subr.mxu0 0.0
  %1714 = vmatpush1.msra.mxu0 0.0
  %1715 = vmatprep.subr.mxu0 0.0
  %1716 = vmatpush1.msra.mxu0 0.0
  %1717 = vmatprep.subr.mxu0 0.0
  %1718 = vmatpush1.msra.mxu0 0.0
  %1719 = vmatprep.subr.mxu0 0.0
  %1720 = vmatpush1.msra.mxu0 0.0
  %1721 = vmatprep.mubr.f32.mxu0 0.0
  %1722 = vmatmul.mubr.f32.gmra.mrb[0].mxu0 %v1583
  %v1723 = vpop.f32.mrb[0].mxu0
  %v1724 = vadd.f32 0.0, %v1723
  %v1725 = vpop.f32.mrb[0].mxu0
  %1726 = vmatprep.mubr.f32.mxu0 0.0
  %1727 = vmatmul.mubr.f32.gmra.mrb[0].mxu0 %v1586
  %v1728 = vpop.f32.mrb[0].mxu0
  %v1729 = vadd.f32 0.0, %v1728
  %v1730 = vpop.f32.mrb[0].mxu0
  %1731 = vmatprep.mubr.f32.mxu0 0.0
  %1732 = vmatmul.mubr.f32.gmra.mrb[0].mxu0 %v1589
  %v1733 = vpop.f32.mrb[0].mxu0
  %v1734 = vadd.f32 0.0, %v1733
  %v1735 = vpop.f32.mrb[0].mxu0
  %1736 = vmatprep.mubr.f32.mxu0 0.0
  %1737 = vmatmul.mubr.f32.gmra.mrb[0].mxu0 %v1592
  %v1738 = vpop.f32.mrb[0].mxu0
  %v1739 = vadd.f32 0.0, %v1738
  %v1740 = vpop.f32.mrb[0].mxu0
  %1741 = vmatprep.mubr.f32.mxu0 0.0
  %1742 = vmatmul.mubr.f32.gmra.mrb[0].mxu0 %v1595
  %v1743 = vpop.f32.mrb[0].mxu0
  %v1744 = vadd.f32 0.0, %v1743
  %v1745 = vpop.f32.mrb[0].mxu0
  %1746 = vmatprep.mubr.f32.mxu0 0.0
  %1747 = vmatmul.mubr.f32.gmra.mrb[0].mxu0 %v1598
  %v1748 = vpop.f32.mrb[0].mxu0
  %v1749 = vadd.f32 0.0, %v1748
  %v1750 = vpop.f32.mrb[0].mxu0
  %1751 = vmatprep.mubr.f32.mxu0 0.0
  %1752 = vmatmul.mubr.f32.gmra.mrb[0].mxu0 %v1601
  %v1753 = vpop.f32.mrb[0].mxu0
  %v1754 = vadd.f32 0.0, %v1753
  %v1755 = vpop.f32.mrb[0].mxu0
  %1756 = vmatprep.mubr.f32.mxu0 0.0
  %1757 = vmatmul.mubr.f32.gmra.mrb[0].mxu0 %v1604
  %v1758 = vpop.f32.mrb[0].mxu0
  %v1759 = vadd.f32 0.0, %v1758
  %v1760 = vpop.f32.mrb[0].mxu0
  %1761 = vmatprep.mubr.f32.mxu0 0.0
  %1762 = vmatmul.mubr.f32.gmra.mrb[0].mxu0 %v1607
  %v1763 = vpop.f32.mrb[0].mxu0
  %v1764 = vadd.f32 0.0, %v1763
  %v1765 = vpop.f32.mrb[0].mxu0
  %1766 = vmatprep.mubr.f32.mxu0 0.0
  %1767 = vmatmul.mubr.f32.gmra.mrb[0].mxu0 %v1610
  %v1768 = vpop.f32.mrb[0].mxu0
  %v1769 = vadd.f32 0.0, %v1768
  %v1770 = vpop.f32.mrb[0].mxu0
  %1771 = vmatprep.mubr.f32.mxu0 0.0
  %1772 = vmatmul.mubr.f32.gmra.mrb[0].mxu0 %v1613
  %v1773 = vpop.f32.mrb[0].mxu0
  %v1774 = vadd.f32 0.0, %v1773
  %v1775 = vpop.f32.mrb[0].mxu0
  %1776 = vmatprep.mubr.f32.mxu0 0.0
  %1777 = vmatmul.mubr.f32.gmra.mrb[0].mxu0 %v1616
  %v1778 = vpop.f32.mrb[0].mxu0
  %v1779 = vadd.f32 0.0, %v1778
  %v1780 = vpop.f32.mrb[0].mxu0
  %1781 = vmatprep.mubr.f32.mxu0 0.0
  %1782 = vmatmul.mubr.f32.gmra.mrb[0].mxu0 %v1619
  %v1783 = vpop.f32.mrb[0].mxu0
  %v1784 = vadd.f32 0.0, %v1783
  %v1785 = vpop.f32.mrb[0].mxu0
  %1786 = vmatprep.mubr.f32.mxu0 0.0
  %1787 = vmatmul.mubr.f32.gmra.mrb[0].mxu0 %v1622
  %v1788 = vpop.f32.mrb[0].mxu0
  %v1789 = vadd.f32 0.0, %v1788
  %v1790 = vpop.f32.mrb[0].mxu0
  %1791 = vmatprep.mubr.f32.mxu0 0.0
  %1792 = vmatmul.mubr.f32.gmra.mrb[0].mxu0 %v1625
  %v1793 = vpop.f32.mrb[0].mxu0
  %v1794 = vadd.f32 0.0, %v1793
  %v1795 = vpop.f32.mrb[0].mxu0
  %1796 = vmatprep.mubr.f32.mxu0 0.0
  %1797 = vmatmul.mubr.f32.gmra.mrb[0].mxu0 %v1628
  %v1798 = vpop.f32.mrb[0].mxu0
  %v1799 = vadd.f32 0.0, %v1798
  %v1800 = vpop.f32.mrb[0].mxu0
  %1801 = vmatprep.mubr.f32.mxu0 0.0
  %1802 = vmatmul.mubr.f32.gmra.mrb[0].mxu0 %v1631
  %v1803 = vpop.f32.mrb[0].mxu0
  %v1804 = vadd.f32 0.0, %v1803
  %v1805 = vpop.f32.mrb[0].mxu0
  %1806 = vmatprep.mubr.f32.mxu0 0.0
  %1807 = vmatmul.mubr.f32.gmra.mrb[0].mxu0 %v1634
  %v1808 = vpop.f32.mrb[0].mxu0
  %v1809 = vadd.f32 0.0, %v1808
  %v1810 = vpop.f32.mrb[0].mxu0
  %1811 = vmatprep.mubr.f32.mxu0 0.0
  %1812 = vmatmul.mubr.f32.gmra.mrb[0].mxu0 %v1637
  %v1813 = vpop.f32.mrb[0].mxu0
  %v1814 = vadd.f32 0.0, %v1813
  %v1815 = vpop.f32.mrb[0].mxu0
  %1816 = vmatprep.mubr.f32.mxu0 0.0
  %1817 = vmatmul.mubr.f32.gmra.mrb[0].mxu0 %v1640
  %v1818 = vpop.f32.mrb[0].mxu0
  %v1819 = vadd.f32 0.0, %v1818
  %v1820 = vpop.f32.mrb[0].mxu0
  %1821 = vmatprep.mubr.f32.mxu0 0.0
  %1822 = vmatmul.mubr.f32.gmra.mrb[0].mxu0 %v1643
  %v1823 = vpop.f32.mrb[0].mxu0
  %v1824 = vadd.f32 0.0, %v1823
  %v1825 = vpop.f32.mrb[0].mxu0
  %1826 = vmatprep.mubr.f32.mxu0 0.0
  %1827 = vmatmul.mubr.f32.gmra.mrb[0].mxu0 %v1646
  %v1828 = vpop.f32.mrb[0].mxu0
  %v1829 = vadd.f32 0.0, %v1828
  %v1830 = vpop.f32.mrb[0].mxu0
  %1831 = vmatprep.mubr.f32.mxu0 0.0
  %1832 = vmatmul.mubr.f32.gmra.mrb[0].mxu0 %v1649
  %v1833 = vpop.f32.mrb[0].mxu0
  %v1834 = vadd.f32 0.0, %v1833
  %v1835 = vpop.f32.mrb[0].mxu0
  %1836 = vmatprep.mubr.f32.mxu0 0.0
  %1837 = vmatmul.mubr.f32.gmra.mrb[0].mxu0 %v1652
  %v1838 = vpop.f32.mrb[0].mxu0
  %v1839 = vadd.f32 0.0, %v1838
  %v1840 = vpop.f32.mrb[0].mxu0
  %1841 = vmatprep.mubr.f32.mxu0 0.0
  %1842 = vmatmul.mubr.f32.gmra.mrb[0].mxu0 %v1655
  %v1843 = vpop.f32.mrb[0].mxu0
  %v1844 = vadd.f32 0.0, %v1843
  %v1845 = vpop.f32.mrb[0].mxu0
  %1846 = vdwg.mxu0
  %v1847 = vadd.f32 %v1529, %v1724
  %v1848 = vadd.f32 %v1530, %v1729
  %v1849 = vadd.f32 %v1531, %v1734
  %v1850 = vadd.f32 %v1532, %v1739
  %v1851 = vadd.f32 %v1533, %v1744
  %v1852 = vadd.f32 %v1534, %v1749
  %v1853 = vadd.f32 %v1535, %v1754
  %v1854 = vadd.f32 %v1536, %v1759
  %v1855 = vadd.f32 %v1537, %v1764
  %v1856 = vadd.f32 %v1538, %v1769
  %v1857 = vadd.f32 %v1539, %v1774
  %v1858 = vadd.f32 %v1540, %v1779
  %v1859 = vadd.f32 %v1541, %v1784
  %v1860 = vadd.f32 %v1542, %v1789
  %v1861 = vadd.f32 %v1543, %v1794
  %v1862 = vadd.f32 %v1544, %v1799
  %v1863 = vadd.f32 %v1545, %v1804
  %v1864 = vadd.f32 %v1546, %v1809
  %v1865 = vadd.f32 %v1547, %v1814
  %v1866 = vadd.f32 %v1548, %v1819
  %v1867 = vadd.f32 %v1549, %v1824
  %v1868 = vadd.f32 %v1550, %v1829
  %v1869 = vadd.f32 %v1551, %v1834
  %v1870 = vadd.f32 %v1552, %v1839
  %v1871 = vadd.f32 %v1553, %v1844
  %v1872 = vld [vmem:[%s0 + $0x14] sm:$0xff]
  %v1873 = vld [vmem:[%s0 + $0x1c] sm:$0xff]
  %v1874 = vld [vmem:[%s0 + $0x24] sm:$0xff]
  %v1875 = vld [vmem:[%s0 + $0x2c] sm:$0xff]
  %v1876 = vld [vmem:[%s0 + $0x34] sm:$0xff]
  %v1877 = vld [vmem:[%s0 + $0x3c] sm:$0xff]
  %v1878 = vld [vmem:[%s0 + $0x44] sm:$0xff]
  %v1879 = vld [vmem:[%s0 + $0x4c] sm:$0xff]
  %v1880 = vld [vmem:[%s0 + $0x54] sm:$0xff]
  %v1881 = vld [vmem:[%s0 + $0x5c] sm:$0xff]
  %v1882 = vld [vmem:[%s0 + $0x64] sm:$0xff]
  %v1883 = vld [vmem:[%s0 + $0x6c] sm:$0xff]
  %v1884 = vld [vmem:[%s0 + $0x74] sm:$0xff]
  %v1885 = vld [vmem:[%s0 + $0x7c] sm:$0xff]
  %v1886 = vld [vmem:[%s0 + $0x84] sm:$0xff]
  %v1887 = vld [vmem:[%s0 + $0x8c] sm:$0xff]
  %v1888 = vld [vmem:[%s0 + $0x94] sm:$0xff]
  %v1889 = vld [vmem:[%s0 + $0x9c] sm:$0xff]
  %v1890 = vld [vmem:[%s0 + $0xa4] sm:$0xff]
  %v1891 = vld [vmem:[%s0 + $0xac] sm:$0xff]
  %v1892 = vld [vmem:[%s0 + $0xb4] sm:$0xff]
  %v1893 = vld [vmem:[%s0 + $0xbc] sm:$0xff]
  %v1894 = vld [vmem:[%s0 + $0xc4] sm:$0xff]
  %v1895 = vld [vmem:[%s0 + $0xcc] sm:$0xff]
  %v1896 = vld [vmem:[%s0 + $0xd4] sm:$0xff]
  %s1897 = scalar_lea.vmem %s1, 96
  %v1898 = vld [vmem:[%s1897] sm:$0xff]
  %v1899 = vld [vmem:[%s1897 + $0x8] sm:$0xff]
  %v1901 = vsel %vm69, %v1872, 0
  %v1904 = vsel %vm69, %v1873, 0
  %v1907 = vsel %vm69, %v1874, 0
  %v1910 = vsel %vm69, %v1875, 0
  %v1913 = vsel %vm69, %v1876, 0
  %v1916 = vsel %vm69, %v1877, 0
  %v1919 = vsel %vm69, %v1878, 0
  %v1922 = vsel %vm69, %v1879, 0
  %v1925 = vsel %vm69, %v1880, 0
  %v1928 = vsel %vm69, %v1881, 0
  %v1931 = vsel %vm69, %v1882, 0
  %v1934 = vsel %vm69, %v1883, 0
  %v1937 = vsel %vm69, %v1884, 0
  %v1940 = vsel %vm69, %v1885, 0
  %v1943 = vsel %vm69, %v1886, 0
  %v1946 = vsel %vm69, %v1887, 0
  %v1949 = vsel %vm69, %v1888, 0
  %v1952 = vsel %vm69, %v1889, 0
  %v1955 = vsel %vm69, %v1890, 0
  %v1958 = vsel %vm69, %v1891, 0
  %v1961 = vsel %vm69, %v1892, 0
  %v1964 = vsel %vm69, %v1893, 0
  %v1967 = vsel %vm69, %v1894, 0
  %v1970 = vsel %vm69, %v1895, 0
  %v1973 = vsel %vm69, %v1896, 0
  %1975 = vmatprep.subr.mxu0 0.0
  %1976 = vmatpush1.msra.mxu0 %v1898
  %1977 = vmatprep.subr.mxu0 0.0
  %1978 = vmatpush1.msra.mxu0 %v1899
  %1979 = vmatprep.subr.mxu0 0.0
  %1980 = vmatpush1.msra.mxu0 0.0
  %1981 = vmatprep.subr.mxu0 0.0
  %1982 = vmatpush1.msra.mxu0 0.0
  %1983 = vmatprep.subr.mxu0 0.0
  %1984 = vmatpush1.msra.mxu0 0.0
  %1985 = vmatprep.subr.mxu0 0.0
  %1986 = vmatpush1.msra.mxu0 0.0
  %1987 = vmatprep.subr.mxu0 0.0
  %1988 = vmatpush1.msra.mxu0 0.0
  %1989 = vmatprep.subr.mxu0 0.0
  %1990 = vmatpush1.msra.mxu0 0.0
  %1991 = vmatprep.subr.mxu0 0.0
  %1992 = vmatpush1.msra.mxu0 0.0
  %1993 = vmatprep.subr.mxu0 0.0
  %1994 = vmatpush1.msra.mxu0 0.0
  %1995 = vmatprep.subr.mxu0 0.0
  %1996 = vmatpush1.msra.mxu0 0.0
  %1997 = vmatprep.subr.mxu0 0.0
  %1998 = vmatpush1.msra.mxu0 0.0
  %1999 = vmatprep.subr.mxu0 0.0
  %2000 = vmatpush1.msra.mxu0 0.0
  %2001 = vmatprep.subr.mxu0 0.0
  %2002 = vmatpush1.msra.mxu0 0.0
  %2003 = vmatprep.subr.mxu0 0.0
  %2004 = vmatpush1.msra.mxu0 0.0
  %2005 = vmatprep.subr.mxu0 0.0
  %2006 = vmatpush1.msra.mxu0 0.0
  %2007 = vmatprep.subr.mxu0 0.0
  %2008 = vmatpush1.msra.mxu0 0.0
  %2009 = vmatprep.subr.mxu0 0.0
  %2010 = vmatpush1.msra.mxu0 0.0
  %2011 = vmatprep.subr.mxu0 0.0
  %2012 = vmatpush1.msra.mxu0 0.0
  %2013 = vmatprep.subr.mxu0 0.0
  %2014 = vmatpush1.msra.mxu0 0.0
  %2015 = vmatprep.subr.mxu0 0.0
  %2016 = vmatpush1.msra.mxu0 0.0
  %2017 = vmatprep.subr.mxu0 0.0
  %2018 = vmatpush1.msra.mxu0 0.0
  %2019 = vmatprep.subr.mxu0 0.0
  %2020 = vmatpush1.msra.mxu0 0.0
  %2021 = vmatprep.subr.mxu0 0.0
  %2022 = vmatpush1.msra.mxu0 0.0
  %2023 = vmatprep.subr.mxu0 0.0
  %2024 = vmatpush1.msra.mxu0 0.0
  %2025 = vmatprep.subr.mxu0 0.0
  %2026 = vmatpush1.msra.mxu0 0.0
  %2027 = vmatprep.subr.mxu0 0.0
  %2028 = vmatpush1.msra.mxu0 0.0
  %2029 = vmatprep.subr.mxu0 0.0
  %2030 = vmatpush1.msra.mxu0 0.0
  %2031 = vmatprep.subr.mxu0 0.0
  %2032 = vmatpush1.msra.mxu0 0.0
  %2033 = vmatprep.subr.mxu0 0.0
  %2034 = vmatpush1.msra.mxu0 0.0
  %2035 = vmatprep.subr.mxu0 0.0
  %2036 = vmatpush1.msra.mxu0 0.0
  %2037 = vmatprep.subr.mxu0 0.0
  %2038 = vmatpush1.msra.mxu0 0.0
  %2039 = vmatprep.mubr.f32.mxu0 0.0
  %2040 = vmatmul.mubr.f32.gmra.mrb[0].mxu0 %v1901
  %v2041 = vpop.f32.mrb[0].mxu0
  %v2042 = vadd.f32 0.0, %v2041
  %v2043 = vpop.f32.mrb[0].mxu0
  %2044 = vmatprep.mubr.f32.mxu0 0.0
  %2045 = vmatmul.mubr.f32.gmra.mrb[0].mxu0 %v1904
  %v2046 = vpop.f32.mrb[0].mxu0
  %v2047 = vadd.f32 0.0, %v2046
  %v2048 = vpop.f32.mrb[0].mxu0
  %2049 = vmatprep.mubr.f32.mxu0 0.0
  %2050 = vmatmul.mubr.f32.gmra.mrb[0].mxu0 %v1907
  %v2051 = vpop.f32.mrb[0].mxu0
  %v2052 = vadd.f32 0.0, %v2051
  %v2053 = vpop.f32.mrb[0].mxu0
  %2054 = vmatprep.mubr.f32.mxu0 0.0
  %2055 = vmatmul.mubr.f32.gmra.mrb[0].mxu0 %v1910
  %v2056 = vpop.f32.mrb[0].mxu0
  %v2057 = vadd.f32 0.0, %v2056
  %v2058 = vpop.f32.mrb[0].mxu0
  %2059 = vmatprep.mubr.f32.mxu0 0.0
  %2060 = vmatmul.mubr.f32.gmra.mrb[0].mxu0 %v1913
  %v2061 = vpop.f32.mrb[0].mxu0
  %v2062 = vadd.f32 0.0, %v2061
  %v2063 = vpop.f32.mrb[0].mxu0
  %2064 = vmatprep.mubr.f32.mxu0 0.0
  %2065 = vmatmul.mubr.f32.gmra.mrb[0].mxu0 %v1916
  %v2066 = vpop.f32.mrb[0].mxu0
  %v2067 = vadd.f32 0.0, %v2066
  %v2068 = vpop.f32.mrb[0].mxu0
  %2069 = vmatprep.mubr.f32.mxu0 0.0
  %2070 = vmatmul.mubr.f32.gmra.mrb[0].mxu0 %v1919
  %v2071 = vpop.f32.mrb[0].mxu0
  %v2072 = vadd.f32 0.0, %v2071
  %v2073 = vpop.f32.mrb[0].mxu0
  %2074 = vmatprep.mubr.f32.mxu0 0.0
  %2075 = vmatmul.mubr.f32.gmra.mrb[0].mxu0 %v1922
  %v2076 = vpop.f32.mrb[0].mxu0
  %v2077 = vadd.f32 0.0, %v2076
  %v2078 = vpop.f32.mrb[0].mxu0
  %2079 = vmatprep.mubr.f32.mxu0 0.0
  %2080 = vmatmul.mubr.f32.gmra.mrb[0].mxu0 %v1925
  %v2081 = vpop.f32.mrb[0].mxu0
  %v2082 = vadd.f32 0.0, %v2081
  %v2083 = vpop.f32.mrb[0].mxu0
  %2084 = vmatprep.mubr.f32.mxu0 0.0
  %2085 = vmatmul.mubr.f32.gmra.mrb[0].mxu0 %v1928
  %v2086 = vpop.f32.mrb[0].mxu0
  %v2087 = vadd.f32 0.0, %v2086
  %v2088 = vpop.f32.mrb[0].mxu0
  %2089 = vmatprep.mubr.f32.mxu0 0.0
  %2090 = vmatmul.mubr.f32.gmra.mrb[0].mxu0 %v1931
  %v2091 = vpop.f32.mrb[0].mxu0
  %v2092 = vadd.f32 0.0, %v2091
  %v2093 = vpop.f32.mrb[0].mxu0
  %2094 = vmatprep.mubr.f32.mxu0 0.0
  %2095 = vmatmul.mubr.f32.gmra.mrb[0].mxu0 %v1934
  %v2096 = vpop.f32.mrb[0].mxu0
  %v2097 = vadd.f32 0.0, %v2096
  %v2098 = vpop.f32.mrb[0].mxu0
  %2099 = vmatprep.mubr.f32.mxu0 0.0
  %2100 = vmatmul.mubr.f32.gmra.mrb[0].mxu0 %v1937
  %v2101 = vpop.f32.mrb[0].mxu0
  %v2102 = vadd.f32 0.0, %v2101
  %v2103 = vpop.f32.mrb[0].mxu0
  %2104 = vmatprep.mubr.f32.mxu0 0.0
  %2105 = vmatmul.mubr.f32.gmra.mrb[0].mxu0 %v1940
  %v2106 = vpop.f32.mrb[0].mxu0
  %v2107 = vadd.f32 0.0, %v2106
  %v2108 = vpop.f32.mrb[0].mxu0
  %2109 = vmatprep.mubr.f32.mxu0 0.0
  %2110 = vmatmul.mubr.f32.gmra.mrb[0].mxu0 %v1943
  %v2111 = vpop.f32.mrb[0].mxu0
  %v2112 = vadd.f32 0.0, %v2111
  %v2113 = vpop.f32.mrb[0].mxu0
  %2114 = vmatprep.mubr.f32.mxu0 0.0
  %2115 = vmatmul.mubr.f32.gmra.mrb[0].mxu0 %v1946
  %v2116 = vpop.f32.mrb[0].mxu0
  %v2117 = vadd.f32 0.0, %v2116
  %v2118 = vpop.f32.mrb[0].mxu0
  %2119 = vmatprep.mubr.f32.mxu0 0.0
  %2120 = vmatmul.mubr.f32.gmra.mrb[0].mxu0 %v1949
  %v2121 = vpop.f32.mrb[0].mxu0
  %v2122 = vadd.f32 0.0, %v2121
  %v2123 = vpop.f32.mrb[0].mxu0
  %2124 = vmatprep.mubr.f32.mxu0 0.0
  %2125 = vmatmul.mubr.f32.gmra.mrb[0].mxu0 %v1952
  %v2126 = vpop.f32.mrb[0].mxu0
  %v2127 = vadd.f32 0.0, %v2126
  %v2128 = vpop.f32.mrb[0].mxu0
  %2129 = vmatprep.mubr.f32.mxu0 0.0
  %2130 = vmatmul.mubr.f32.gmra.mrb[0].mxu0 %v1955
  %v2131 = vpop.f32.mrb[0].mxu0
  %v2132 = vadd.f32 0.0, %v2131
  %v2133 = vpop.f32.mrb[0].mxu0
  %2134 = vmatprep.mubr.f32.mxu0 0.0
  %2135 = vmatmul.mubr.f32.gmra.mrb[0].mxu0 %v1958
  %v2136 = vpop.f32.mrb[0].mxu0
  %v2137 = vadd.f32 0.0, %v2136
  %v2138 = vpop.f32.mrb[0].mxu0
  %2139 = vmatprep.mubr.f32.mxu0 0.0
  %2140 = vmatmul.mubr.f32.gmra.mrb[0].mxu0 %v1961
  %v2141 = vpop.f32.mrb[0].mxu0
  %v2142 = vadd.f32 0.0, %v2141
  %v2143 = vpop.f32.mrb[0].mxu0
  %2144 = vmatprep.mubr.f32.mxu0 0.0
  %2145 = vmatmul.mubr.f32.gmra.mrb[0].mxu0 %v1964
  %v2146 = vpop.f32.mrb[0].mxu0
  %v2147 = vadd.f32 0.0, %v2146
  %v2148 = vpop.f32.mrb[0].mxu0
  %2149 = vmatprep.mubr.f32.mxu0 0.0
  %2150 = vmatmul.mubr.f32.gmra.mrb[0].mxu0 %v1967
  %v2151 = vpop.f32.mrb[0].mxu0
  %v2152 = vadd.f32 0.0, %v2151
  %v2153 = vpop.f32.mrb[0].mxu0
  %2154 = vmatprep.mubr.f32.mxu0 0.0
  %2155 = vmatmul.mubr.f32.gmra.mrb[0].mxu0 %v1970
  %v2156 = vpop.f32.mrb[0].mxu0
  %v2157 = vadd.f32 0.0, %v2156
  %v2158 = vpop.f32.mrb[0].mxu0
  %2159 = vmatprep.mubr.f32.mxu0 0.0
  %2160 = vmatmul.mubr.f32.gmra.mrb[0].mxu0 %v1973
  %v2161 = vpop.f32.mrb[0].mxu0
  %v2162 = vadd.f32 0.0, %v2161
  %v2163 = vpop.f32.mrb[0].mxu0
  %2164 = vdwg.mxu0
  %v2165 = vadd.f32 %v1847, %v2042
  %v2166 = vadd.f32 %v1848, %v2047
  %v2167 = vadd.f32 %v1849, %v2052
  %v2168 = vadd.f32 %v1850, %v2057
  %v2169 = vadd.f32 %v1851, %v2062
  %v2170 = vadd.f32 %v1852, %v2067
  %v2171 = vadd.f32 %v1853, %v2072
  %v2172 = vadd.f32 %v1854, %v2077
  %v2173 = vadd.f32 %v1855, %v2082
  %v2174 = vadd.f32 %v1856, %v2087
  %v2175 = vadd.f32 %v1857, %v2092
  %v2176 = vadd.f32 %v1858, %v2097
  %v2177 = vadd.f32 %v1859, %v2102
  %v2178 = vadd.f32 %v1860, %v2107
  %v2179 = vadd.f32 %v1861, %v2112
  %v2180 = vadd.f32 %v1862, %v2117
  %v2181 = vadd.f32 %v1863, %v2122
  %v2182 = vadd.f32 %v1864, %v2127
  %v2183 = vadd.f32 %v1865, %v2132
  %v2184 = vadd.f32 %v1866, %v2137
  %v2185 = vadd.f32 %v1867, %v2142
  %v2186 = vadd.f32 %v1868, %v2147
  %v2187 = vadd.f32 %v1869, %v2152
  %v2188 = vadd.f32 %v1870, %v2157
  %v2189 = vadd.f32 %v1871, %v2162
  %v2190 = vld [vmem:[%s0 + $0x15] sm:$0xff]
  %v2191 = vld [vmem:[%s0 + $0x1d] sm:$0xff]
  %v2192 = vld [vmem:[%s0 + $0x25] sm:$0xff]
  %v2193 = vld [vmem:[%s0 + $0x2d] sm:$0xff]
  %v2194 = vld [vmem:[%s0 + $0x35] sm:$0xff]
  %v2195 = vld [vmem:[%s0 + $0x3d] sm:$0xff]
  %v2196 = vld [vmem:[%s0 + $0x45] sm:$0xff]
  %v2197 = vld [vmem:[%s0 + $0x4d] sm:$0xff]
  %v2198 = vld [vmem:[%s0 + $0x55] sm:$0xff]
  %v2199 = vld [vmem:[%s0 + $0x5d] sm:$0xff]
  %v2200 = vld [vmem:[%s0 + $0x65] sm:$0xff]
  %v2201 = vld [vmem:[%s0 + $0x6d] sm:$0xff]
  %v2202 = vld [vmem:[%s0 + $0x75] sm:$0xff]
  %v2203 = vld [vmem:[%s0 + $0x7d] sm:$0xff]
  %v2204 = vld [vmem:[%s0 + $0x85] sm:$0xff]
  %v2205 = vld [vmem:[%s0 + $0x8d] sm:$0xff]
  %v2206 = vld [vmem:[%s0 + $0x95] sm:$0xff]
  %v2207 = vld [vmem:[%s0 + $0x9d] sm:$0xff]
  %v2208 = vld [vmem:[%s0 + $0xa5] sm:$0xff]
  %v2209 = vld [vmem:[%s0 + $0xad] sm:$0xff]
  %v2210 = vld [vmem:[%s0 + $0xb5] sm:$0xff]
  %v2211 = vld [vmem:[%s0 + $0xbd] sm:$0xff]
  %v2212 = vld [vmem:[%s0 + $0xc5] sm:$0xff]
  %v2213 = vld [vmem:[%s0 + $0xcd] sm:$0xff]
  %v2214 = vld [vmem:[%s0 + $0xd5] sm:$0xff]
  %s2215 = scalar_lea.vmem %s1, 112
  %v2216 = vld [vmem:[%s2215] sm:$0xff]
  %v2217 = vld [vmem:[%s2215 + $0x8] sm:$0xff]
  %v2219 = vsel %vm69, %v2190, 0
  %v2222 = vsel %vm69, %v2191, 0
  %v2225 = vsel %vm69, %v2192, 0
  %v2228 = vsel %vm69, %v2193, 0
  %v2231 = vsel %vm69, %v2194, 0
  %v2234 = vsel %vm69, %v2195, 0
  %v2237 = vsel %vm69, %v2196, 0
  %v2240 = vsel %vm69, %v2197, 0
  %v2243 = vsel %vm69, %v2198, 0
  %v2246 = vsel %vm69, %v2199, 0
  %v2249 = vsel %vm69, %v2200, 0
  %v2252 = vsel %vm69, %v2201, 0
  %v2255 = vsel %vm69, %v2202, 0
  %v2258 = vsel %vm69, %v2203, 0
  %v2261 = vsel %vm69, %v2204, 0
  %v2264 = vsel %vm69, %v2205, 0
  %v2267 = vsel %vm69, %v2206, 0
  %v2270 = vsel %vm69, %v2207, 0
  %v2273 = vsel %vm69, %v2208, 0
  %v2276 = vsel %vm69, %v2209, 0
  %v2279 = vsel %vm69, %v2210, 0
  %v2282 = vsel %vm69, %v2211, 0
  %v2285 = vsel %vm69, %v2212, 0
  %v2288 = vsel %vm69, %v2213, 0
  %v2291 = vsel %vm69, %v2214, 0
  %2293 = vmatprep.subr.mxu0 0.0
  %2294 = vmatpush1.msra.mxu0 %v2216
  %2295 = vmatprep.subr.mxu0 0.0
  %2296 = vmatpush1.msra.mxu0 %v2217
  %2297 = vmatprep.subr.mxu0 0.0
  %2298 = vmatpush1.msra.mxu0 0.0
  %2299 = vmatprep.subr.mxu0 0.0
  %2300 = vmatpush1.msra.mxu0 0.0
  %2301 = vmatprep.subr.mxu0 0.0
  %2302 = vmatpush1.msra.mxu0 0.0
  %2303 = vmatprep.subr.mxu0 0.0
  %2304 = vmatpush1.msra.mxu0 0.0
  %2305 = vmatprep.subr.mxu0 0.0
  %2306 = vmatpush1.msra.mxu0 0.0
  %2307 = vmatprep.subr.mxu0 0.0
  %2308 = vmatpush1.msra.mxu0 0.0
  %2309 = vmatprep.subr.mxu0 0.0
  %2310 = vmatpush1.msra.mxu0 0.0
  %2311 = vmatprep.subr.mxu0 0.0
  %2312 = vmatpush1.msra.mxu0 0.0
  %2313 = vmatprep.subr.mxu0 0.0
  %2314 = vmatpush1.msra.mxu0 0.0
  %2315 = vmatprep.subr.mxu0 0.0
  %2316 = vmatpush1.msra.mxu0 0.0
  %2317 = vmatprep.subr.mxu0 0.0
  %2318 = vmatpush1.msra.mxu0 0.0
  %2319 = vmatprep.subr.mxu0 0.0
  %2320 = vmatpush1.msra.mxu0 0.0
  %2321 = vmatprep.subr.mxu0 0.0
  %2322 = vmatpush1.msra.mxu0 0.0
  %2323 = vmatprep.subr.mxu0 0.0
  %2324 = vmatpush1.msra.mxu0 0.0
  %2325 = vmatprep.subr.mxu0 0.0
  %2326 = vmatpush1.msra.mxu0 0.0
  %2327 = vmatprep.subr.mxu0 0.0
  %2328 = vmatpush1.msra.mxu0 0.0
  %2329 = vmatprep.subr.mxu0 0.0
  %2330 = vmatpush1.msra.mxu0 0.0
  %2331 = vmatprep.subr.mxu0 0.0
  %2332 = vmatpush1.msra.mxu0 0.0
  %2333 = vmatprep.subr.mxu0 0.0
  %2334 = vmatpush1.msra.mxu0 0.0
  %2335 = vmatprep.subr.mxu0 0.0
  %2336 = vmatpush1.msra.mxu0 0.0
  %2337 = vmatprep.subr.mxu0 0.0
  %2338 = vmatpush1.msra.mxu0 0.0
  %2339 = vmatprep.subr.mxu0 0.0
  %2340 = vmatpush1.msra.mxu0 0.0
  %2341 = vmatprep.subr.mxu0 0.0
  %2342 = vmatpush1.msra.mxu0 0.0
  %2343 = vmatprep.subr.mxu0 0.0
  %2344 = vmatpush1.msra.mxu0 0.0
  %2345 = vmatprep.subr.mxu0 0.0
  %2346 = vmatpush1.msra.mxu0 0.0
  %2347 = vmatprep.subr.mxu0 0.0
  %2348 = vmatpush1.msra.mxu0 0.0
  %2349 = vmatprep.subr.mxu0 0.0
  %2350 = vmatpush1.msra.mxu0 0.0
  %2351 = vmatprep.subr.mxu0 0.0
  %2352 = vmatpush1.msra.mxu0 0.0
  %2353 = vmatprep.subr.mxu0 0.0
  %2354 = vmatpush1.msra.mxu0 0.0
  %2355 = vmatprep.subr.mxu0 0.0
  %2356 = vmatpush1.msra.mxu0 0.0
  %2357 = vmatprep.mubr.f32.mxu0 0.0
  %2358 = vmatmul.mubr.f32.gmra.mrb[0].mxu0 %v2219
  %v2359 = vpop.f32.mrb[0].mxu0
  %v2360 = vadd.f32 0.0, %v2359
  %v2361 = vpop.f32.mrb[0].mxu0
  %2362 = vmatprep.mubr.f32.mxu0 0.0
  %2363 = vmatmul.mubr.f32.gmra.mrb[0].mxu0 %v2222
  %v2364 = vpop.f32.mrb[0].mxu0
  %v2365 = vadd.f32 0.0, %v2364
  %v2366 = vpop.f32.mrb[0].mxu0
  %2367 = vmatprep.mubr.f32.mxu0 0.0
  %2368 = vmatmul.mubr.f32.gmra.mrb[0].mxu0 %v2225
  %v2369 = vpop.f32.mrb[0].mxu0
  %v2370 = vadd.f32 0.0, %v2369
  %v2371 = vpop.f32.mrb[0].mxu0
  %2372 = vmatprep.mubr.f32.mxu0 0.0
  %2373 = vmatmul.mubr.f32.gmra.mrb[0].mxu0 %v2228
  %v2374 = vpop.f32.mrb[0].mxu0
  %v2375 = vadd.f32 0.0, %v2374
  %v2376 = vpop.f32.mrb[0].mxu0
  %2377 = vmatprep.mubr.f32.mxu0 0.0
  %2378 = vmatmul.mubr.f32.gmra.mrb[0].mxu0 %v2231
  %v2379 = vpop.f32.mrb[0].mxu0
  %v2380 = vadd.f32 0.0, %v2379
  %v2381 = vpop.f32.mrb[0].mxu0
  %2382 = vmatprep.mubr.f32.mxu0 0.0
  %2383 = vmatmul.mubr.f32.gmra.mrb[0].mxu0 %v2234
  %v2384 = vpop.f32.mrb[0].mxu0
  %v2385 = vadd.f32 0.0, %v2384
  %v2386 = vpop.f32.mrb[0].mxu0
  %2387 = vmatprep.mubr.f32.mxu0 0.0
  %2388 = vmatmul.mubr.f32.gmra.mrb[0].mxu0 %v2237
  %v2389 = vpop.f32.mrb[0].mxu0
  %v2390 = vadd.f32 0.0, %v2389
  %v2391 = vpop.f32.mrb[0].mxu0
  %2392 = vmatprep.mubr.f32.mxu0 0.0
  %2393 = vmatmul.mubr.f32.gmra.mrb[0].mxu0 %v2240
  %v2394 = vpop.f32.mrb[0].mxu0
  %v2395 = vadd.f32 0.0, %v2394
  %v2396 = vpop.f32.mrb[0].mxu0
  %2397 = vmatprep.mubr.f32.mxu0 0.0
  %2398 = vmatmul.mubr.f32.gmra.mrb[0].mxu0 %v2243
  %v2399 = vpop.f32.mrb[0].mxu0
  %v2400 = vadd.f32 0.0, %v2399
  %v2401 = vpop.f32.mrb[0].mxu0
  %2402 = vmatprep.mubr.f32.mxu0 0.0
  %2403 = vmatmul.mubr.f32.gmra.mrb[0].mxu0 %v2246
  %v2404 = vpop.f32.mrb[0].mxu0
  %v2405 = vadd.f32 0.0, %v2404
  %v2406 = vpop.f32.mrb[0].mxu0
  %2407 = vmatprep.mubr.f32.mxu0 0.0
  %2408 = vmatmul.mubr.f32.gmra.mrb[0].mxu0 %v2249
  %v2409 = vpop.f32.mrb[0].mxu0
  %v2410 = vadd.f32 0.0, %v2409
  %v2411 = vpop.f32.mrb[0].mxu0
  %2412 = vmatprep.mubr.f32.mxu0 0.0
  %2413 = vmatmul.mubr.f32.gmra.mrb[0].mxu0 %v2252
  %v2414 = vpop.f32.mrb[0].mxu0
  %v2415 = vadd.f32 0.0, %v2414
  %v2416 = vpop.f32.mrb[0].mxu0
  %2417 = vmatprep.mubr.f32.mxu0 0.0
  %2418 = vmatmul.mubr.f32.gmra.mrb[0].mxu0 %v2255
  %v2419 = vpop.f32.mrb[0].mxu0
  %v2420 = vadd.f32 0.0, %v2419
  %v2421 = vpop.f32.mrb[0].mxu0
  %2422 = vmatprep.mubr.f32.mxu0 0.0
  %2423 = vmatmul.mubr.f32.gmra.mrb[0].mxu0 %v2258
  %v2424 = vpop.f32.mrb[0].mxu0
  %v2425 = vadd.f32 0.0, %v2424
  %v2426 = vpop.f32.mrb[0].mxu0
  %2427 = vmatprep.mubr.f32.mxu0 0.0
  %2428 = vmatmul.mubr.f32.gmra.mrb[0].mxu0 %v2261
  %v2429 = vpop.f32.mrb[0].mxu0
  %v2430 = vadd.f32 0.0, %v2429
  %v2431 = vpop.f32.mrb[0].mxu0
  %2432 = vmatprep.mubr.f32.mxu0 0.0
  %2433 = vmatmul.mubr.f32.gmra.mrb[0].mxu0 %v2264
  %v2434 = vpop.f32.mrb[0].mxu0
  %v2435 = vadd.f32 0.0, %v2434
  %v2436 = vpop.f32.mrb[0].mxu0
  %2437 = vmatprep.mubr.f32.mxu0 0.0
  %2438 = vmatmul.mubr.f32.gmra.mrb[0].mxu0 %v2267
  %v2439 = vpop.f32.mrb[0].mxu0
  %v2440 = vadd.f32 0.0, %v2439
  %v2441 = vpop.f32.mrb[0].mxu0
  %2442 = vmatprep.mubr.f32.mxu0 0.0
  %2443 = vmatmul.mubr.f32.gmra.mrb[0].mxu0 %v2270
  %v2444 = vpop.f32.mrb[0].mxu0
  %v2445 = vadd.f32 0.0, %v2444
  %v2446 = vpop.f32.mrb[0].mxu0
  %2447 = vmatprep.mubr.f32.mxu0 0.0
  %2448 = vmatmul.mubr.f32.gmra.mrb[0].mxu0 %v2273
  %v2449 = vpop.f32.mrb[0].mxu0
  %v2450 = vadd.f32 0.0, %v2449
  %v2451 = vpop.f32.mrb[0].mxu0
  %2452 = vmatprep.mubr.f32.mxu0 0.0
  %2453 = vmatmul.mubr.f32.gmra.mrb[0].mxu0 %v2276
  %v2454 = vpop.f32.mrb[0].mxu0
  %v2455 = vadd.f32 0.0, %v2454
  %v2456 = vpop.f32.mrb[0].mxu0
  %2457 = vmatprep.mubr.f32.mxu0 0.0
  %2458 = vmatmul.mubr.f32.gmra.mrb[0].mxu0 %v2279
  %v2459 = vpop.f32.mrb[0].mxu0
  %v2460 = vadd.f32 0.0, %v2459
  %v2461 = vpop.f32.mrb[0].mxu0
  %2462 = vmatprep.mubr.f32.mxu0 0.0
  %2463 = vmatmul.mubr.f32.gmra.mrb[0].mxu0 %v2282
  %v2464 = vpop.f32.mrb[0].mxu0
  %v2465 = vadd.f32 0.0, %v2464
  %v2466 = vpop.f32.mrb[0].mxu0
  %2467 = vmatprep.mubr.f32.mxu0 0.0
  %2468 = vmatmul.mubr.f32.gmra.mrb[0].mxu0 %v2285
  %v2469 = vpop.f32.mrb[0].mxu0
  %v2470 = vadd.f32 0.0, %v2469
  %v2471 = vpop.f32.mrb[0].mxu0
  %2472 = vmatprep.mubr.f32.mxu0 0.0
  %2473 = vmatmul.mubr.f32.gmra.mrb[0].mxu0 %v2288
  %v2474 = vpop.f32.mrb[0].mxu0
  %v2475 = vadd.f32 0.0, %v2474
  %v2476 = vpop.f32.mrb[0].mxu0
  %2477 = vmatprep.mubr.f32.mxu0 0.0
  %2478 = vmatmul.mubr.f32.gmra.mrb[0].mxu0 %v2291
  %v2479 = vpop.f32.mrb[0].mxu0
  %v2480 = vadd.f32 0.0, %v2479
  %v2481 = vpop.f32.mrb[0].mxu0
  %2482 = vdwg.mxu0
  %v2483 = vadd.f32 %v2165, %v2360
  %v2484 = vadd.f32 %v2166, %v2365
  %v2485 = vadd.f32 %v2167, %v2370
  %v2486 = vadd.f32 %v2168, %v2375
  %v2487 = vadd.f32 %v2169, %v2380
  %v2488 = vadd.f32 %v2170, %v2385
  %v2489 = vadd.f32 %v2171, %v2390
  %v2490 = vadd.f32 %v2172, %v2395
  %v2491 = vadd.f32 %v2173, %v2400
  %v2492 = vadd.f32 %v2174, %v2405
  %v2493 = vadd.f32 %v2175, %v2410
  %v2494 = vadd.f32 %v2176, %v2415
  %v2495 = vadd.f32 %v2177, %v2420
  %v2496 = vadd.f32 %v2178, %v2425
  %v2497 = vadd.f32 %v2179, %v2430
  %v2498 = vadd.f32 %v2180, %v2435
  %v2499 = vadd.f32 %v2181, %v2440
  %v2500 = vadd.f32 %v2182, %v2445
  %v2501 = vadd.f32 %v2183, %v2450
  %v2502 = vadd.f32 %v2184, %v2455
  %v2503 = vadd.f32 %v2185, %v2460
  %v2504 = vadd.f32 %v2186, %v2465
  %v2505 = vadd.f32 %v2187, %v2470
  %v2506 = vadd.f32 %v2188, %v2475
  %v2507 = vadd.f32 %v2189, %v2480
  %v2508 = vld [vmem:[%s0 + $0x16] sm:$0xff]
  %v2509 = vld [vmem:[%s0 + $0x1e] sm:$0xff]
  %v2510 = vld [vmem:[%s0 + $0x26] sm:$0xff]
  %v2511 = vld [vmem:[%s0 + $0x2e] sm:$0xff]
  %v2512 = vld [vmem:[%s0 + $0x36] sm:$0xff]
  %v2513 = vld [vmem:[%s0 + $0x3e] sm:$0xff]
  %v2514 = vld [vmem:[%s0 + $0x46] sm:$0xff]
  %v2515 = vld [vmem:[%s0 + $0x4e] sm:$0xff]
  %v2516 = vld [vmem:[%s0 + $0x56] sm:$0xff]
  %v2517 = vld [vmem:[%s0 + $0x5e] sm:$0xff]
  %v2518 = vld [vmem:[%s0 + $0x66] sm:$0xff]
  %v2519 = vld [vmem:[%s0 + $0x6e] sm:$0xff]
  %v2520 = vld [vmem:[%s0 + $0x76] sm:$0xff]
  %v2521 = vld [vmem:[%s0 + $0x7e] sm:$0xff]
  %v2522 = vld [vmem:[%s0 + $0x86] sm:$0xff]
  %v2523 = vld [vmem:[%s0 + $0x8e] sm:$0xff]
  %v2524 = vld [vmem:[%s0 + $0x96] sm:$0xff]
  %v2525 = vld [vmem:[%s0 + $0x9e] sm:$0xff]
  %v2526 = vld [vmem:[%s0 + $0xa6] sm:$0xff]
  %v2527 = vld [vmem:[%s0 + $0xae] sm:$0xff]
  %v2528 = vld [vmem:[%s0 + $0xb6] sm:$0xff]
  %v2529 = vld [vmem:[%s0 + $0xbe] sm:$0xff]
  %v2530 = vld [vmem:[%s0 + $0xc6] sm:$0xff]
  %v2531 = vld [vmem:[%s0 + $0xce] sm:$0xff]
  %v2532 = vld [vmem:[%s0 + $0xd6] sm:$0xff]
  %s2533 = scalar_lea.vmem %s1, 128
  %v2534 = vld [vmem:[%s2533] sm:$0xff]
  %v2535 = vld [vmem:[%s2533 + $0x8] sm:$0xff]
  %v2537 = vsel %vm69, %v2508, 0
  %v2540 = vsel %vm69, %v2509, 0
  %v2543 = vsel %vm69, %v2510, 0
  %v2546 = vsel %vm69, %v2511, 0
  %v2549 = vsel %vm69, %v2512, 0
  %v2552 = vsel %vm69, %v2513, 0
  %v2555 = vsel %vm69, %v2514, 0
  %v2558 = vsel %vm69, %v2515, 0
  %v2561 = vsel %vm69, %v2516, 0
  %v2564 = vsel %vm69, %v2517, 0
  %v2567 = vsel %vm69, %v2518, 0
  %v2570 = vsel %vm69, %v2519, 0
  %v2573 = vsel %vm69, %v2520, 0
  %v2576 = vsel %vm69, %v2521, 0
  %v2579 = vsel %vm69, %v2522, 0
  %v2582 = vsel %vm69, %v2523, 0
  %v2585 = vsel %vm69, %v2524, 0
  %v2588 = vsel %vm69, %v2525, 0
  %v2591 = vsel %vm69, %v2526, 0
  %v2594 = vsel %vm69, %v2527, 0
  %v2597 = vsel %vm69, %v2528, 0
  %v2600 = vsel %vm69, %v2529, 0
  %v2603 = vsel %vm69, %v2530, 0
  %v2606 = vsel %vm69, %v2531, 0
  %v2609 = vsel %vm69, %v2532, 0
  %2611 = vmatprep.subr.mxu0 0.0
  %2612 = vmatpush1.msra.mxu0 %v2534
  %2613 = vmatprep.subr.mxu0 0.0
  %2614 = vmatpush1.msra.mxu0 %v2535
  %2615 = vmatprep.subr.mxu0 0.0
  %2616 = vmatpush1.msra.mxu0 0.0
  %2617 = vmatprep.subr.mxu0 0.0
  %2618 = vmatpush1.msra.mxu0 0.0
  %2619 = vmatprep.subr.mxu0 0.0
  %2620 = vmatpush1.msra.mxu0 0.0
  %2621 = vmatprep.subr.mxu0 0.0
  %2622 = vmatpush1.msra.mxu0 0.0
  %2623 = vmatprep.subr.mxu0 0.0
  %2624 = vmatpush1.msra.mxu0 0.0
  %2625 = vmatprep.subr.mxu0 0.0
  %2626 = vmatpush1.msra.mxu0 0.0
  %2627 = vmatprep.subr.mxu0 0.0
  %2628 = vmatpush1.msra.mxu0 0.0
  %2629 = vmatprep.subr.mxu0 0.0
  %2630 = vmatpush1.msra.mxu0 0.0
  %2631 = vmatprep.subr.mxu0 0.0
  %2632 = vmatpush1.msra.mxu0 0.0
  %2633 = vmatprep.subr.mxu0 0.0
  %2634 = vmatpush1.msra.mxu0 0.0
  %2635 = vmatprep.subr.mxu0 0.0
  %2636 = vmatpush1.msra.mxu0 0.0
  %2637 = vmatprep.subr.mxu0 0.0
  %2638 = vmatpush1.msra.mxu0 0.0
  %2639 = vmatprep.subr.mxu0 0.0
  %2640 = vmatpush1.msra.mxu0 0.0
  %2641 = vmatprep.subr.mxu0 0.0
  %2642 = vmatpush1.msra.mxu0 0.0
  %2643 = vmatprep.subr.mxu0 0.0
  %2644 = vmatpush1.msra.mxu0 0.0
  %2645 = vmatprep.subr.mxu0 0.0
  %2646 = vmatpush1.msra.mxu0 0.0
  %2647 = vmatprep.subr.mxu0 0.0
  %2648 = vmatpush1.msra.mxu0 0.0
  %2649 = vmatprep.subr.mxu0 0.0
  %2650 = vmatpush1.msra.mxu0 0.0
  %2651 = vmatprep.subr.mxu0 0.0
  %2652 = vmatpush1.msra.mxu0 0.0
  %2653 = vmatprep.subr.mxu0 0.0
  %2654 = vmatpush1.msra.mxu0 0.0
  %2655 = vmatprep.subr.mxu0 0.0
  %2656 = vmatpush1.msra.mxu0 0.0
  %2657 = vmatprep.subr.mxu0 0.0
  %2658 = vmatpush1.msra.mxu0 0.0
  %2659 = vmatprep.subr.mxu0 0.0
  %2660 = vmatpush1.msra.mxu0 0.0
  %2661 = vmatprep.subr.mxu0 0.0
  %2662 = vmatpush1.msra.mxu0 0.0
  %2663 = vmatprep.subr.mxu0 0.0
  %2664 = vmatpush1.msra.mxu0 0.0
  %2665 = vmatprep.subr.mxu0 0.0
  %2666 = vmatpush1.msra.mxu0 0.0
  %2667 = vmatprep.subr.mxu0 0.0
  %2668 = vmatpush1.msra.mxu0 0.0
  %2669 = vmatprep.subr.mxu0 0.0
  %2670 = vmatpush1.msra.mxu0 0.0
  %2671 = vmatprep.subr.mxu0 0.0
  %2672 = vmatpush1.msra.mxu0 0.0
  %2673 = vmatprep.subr.mxu0 0.0
  %2674 = vmatpush1.msra.mxu0 0.0
  %2675 = vmatprep.mubr.f32.mxu0 0.0
  %2676 = vmatmul.mubr.f32.gmra.mrb[0].mxu0 %v2537
  %v2677 = vpop.f32.mrb[0].mxu0
  %v2678 = vadd.f32 0.0, %v2677
  %v2679 = vpop.f32.mrb[0].mxu0
  %2680 = vmatprep.mubr.f32.mxu0 0.0
  %2681 = vmatmul.mubr.f32.gmra.mrb[0].mxu0 %v2540
  %v2682 = vpop.f32.mrb[0].mxu0
  %v2683 = vadd.f32 0.0, %v2682
  %v2684 = vpop.f32.mrb[0].mxu0
  %2685 = vmatprep.mubr.f32.mxu0 0.0
  %2686 = vmatmul.mubr.f32.gmra.mrb[0].mxu0 %v2543
  %v2687 = vpop.f32.mrb[0].mxu0
  %v2688 = vadd.f32 0.0, %v2687
  %v2689 = vpop.f32.mrb[0].mxu0
  %2690 = vmatprep.mubr.f32.mxu0 0.0
  %2691 = vmatmul.mubr.f32.gmra.mrb[0].mxu0 %v2546
  %v2692 = vpop.f32.mrb[0].mxu0
  %v2693 = vadd.f32 0.0, %v2692
  %v2694 = vpop.f32.mrb[0].mxu0
  %2695 = vmatprep.mubr.f32.mxu0 0.0
  %2696 = vmatmul.mubr.f32.gmra.mrb[0].mxu0 %v2549
  %v2697 = vpop.f32.mrb[0].mxu0
  %v2698 = vadd.f32 0.0, %v2697
  %v2699 = vpop.f32.mrb[0].mxu0
  %2700 = vmatprep.mubr.f32.mxu0 0.0
  %2701 = vmatmul.mubr.f32.gmra.mrb[0].mxu0 %v2552
  %v2702 = vpop.f32.mrb[0].mxu0
  %v2703 = vadd.f32 0.0, %v2702
  %v2704 = vpop.f32.mrb[0].mxu0
  %2705 = vmatprep.mubr.f32.mxu0 0.0
  %2706 = vmatmul.mubr.f32.gmra.mrb[0].mxu0 %v2555
  %v2707 = vpop.f32.mrb[0].mxu0
  %v2708 = vadd.f32 0.0, %v2707
  %v2709 = vpop.f32.mrb[0].mxu0
  %2710 = vmatprep.mubr.f32.mxu0 0.0
  %2711 = vmatmul.mubr.f32.gmra.mrb[0].mxu0 %v2558
  %v2712 = vpop.f32.mrb[0].mxu0
  %v2713 = vadd.f32 0.0, %v2712
  %v2714 = vpop.f32.mrb[0].mxu0
  %2715 = vmatprep.mubr.f32.mxu0 0.0
  %2716 = vmatmul.mubr.f32.gmra.mrb[0].mxu0 %v2561
  %v2717 = vpop.f32.mrb[0].mxu0
  %v2718 = vadd.f32 0.0, %v2717
  %v2719 = vpop.f32.mrb[0].mxu0
  %2720 = vmatprep.mubr.f32.mxu0 0.0
  %2721 = vmatmul.mubr.f32.gmra.mrb[0].mxu0 %v2564
  %v2722 = vpop.f32.mrb[0].mxu0
  %v2723 = vadd.f32 0.0, %v2722
  %v2724 = vpop.f32.mrb[0].mxu0
  %2725 = vmatprep.mubr.f32.mxu0 0.0
  %2726 = vmatmul.mubr.f32.gmra.mrb[0].mxu0 %v2567
  %v2727 = vpop.f32.mrb[0].mxu0
  %v2728 = vadd.f32 0.0, %v2727
  %v2729 = vpop.f32.mrb[0].mxu0
  %2730 = vmatprep.mubr.f32.mxu0 0.0
  %2731 = vmatmul.mubr.f32.gmra.mrb[0].mxu0 %v2570
  %v2732 = vpop.f32.mrb[0].mxu0
  %v2733 = vadd.f32 0.0, %v2732
  %v2734 = vpop.f32.mrb[0].mxu0
  %2735 = vmatprep.mubr.f32.mxu0 0.0
  %2736 = vmatmul.mubr.f32.gmra.mrb[0].mxu0 %v2573
  %v2737 = vpop.f32.mrb[0].mxu0
  %v2738 = vadd.f32 0.0, %v2737
  %v2739 = vpop.f32.mrb[0].mxu0
  %2740 = vmatprep.mubr.f32.mxu0 0.0
  %2741 = vmatmul.mubr.f32.gmra.mrb[0].mxu0 %v2576
  %v2742 = vpop.f32.mrb[0].mxu0
  %v2743 = vadd.f32 0.0, %v2742
  %v2744 = vpop.f32.mrb[0].mxu0
  %2745 = vmatprep.mubr.f32.mxu0 0.0
  %2746 = vmatmul.mubr.f32.gmra.mrb[0].mxu0 %v2579
  %v2747 = vpop.f32.mrb[0].mxu0
  %v2748 = vadd.f32 0.0, %v2747
  %v2749 = vpop.f32.mrb[0].mxu0
  %2750 = vmatprep.mubr.f32.mxu0 0.0
  %2751 = vmatmul.mubr.f32.gmra.mrb[0].mxu0 %v2582
  %v2752 = vpop.f32.mrb[0].mxu0
  %v2753 = vadd.f32 0.0, %v2752
  %v2754 = vpop.f32.mrb[0].mxu0
  %2755 = vmatprep.mubr.f32.mxu0 0.0
  %2756 = vmatmul.mubr.f32.gmra.mrb[0].mxu0 %v2585
  %v2757 = vpop.f32.mrb[0].mxu0
  %v2758 = vadd.f32 0.0, %v2757
  %v2759 = vpop.f32.mrb[0].mxu0
  %2760 = vmatprep.mubr.f32.mxu0 0.0
  %2761 = vmatmul.mubr.f32.gmra.mrb[0].mxu0 %v2588
  %v2762 = vpop.f32.mrb[0].mxu0
  %v2763 = vadd.f32 0.0, %v2762
  %v2764 = vpop.f32.mrb[0].mxu0
  %2765 = vmatprep.mubr.f32.mxu0 0.0
  %2766 = vmatmul.mubr.f32.gmra.mrb[0].mxu0 %v2591
  %v2767 = vpop.f32.mrb[0].mxu0
  %v2768 = vadd.f32 0.0, %v2767
  %v2769 = vpop.f32.mrb[0].mxu0
  %2770 = vmatprep.mubr.f32.mxu0 0.0
  %2771 = vmatmul.mubr.f32.gmra.mrb[0].mxu0 %v2594
  %v2772 = vpop.f32.mrb[0].mxu0
  %v2773 = vadd.f32 0.0, %v2772
  %v2774 = vpop.f32.mrb[0].mxu0
  %2775 = vmatprep.mubr.f32.mxu0 0.0
  %2776 = vmatmul.mubr.f32.gmra.mrb[0].mxu0 %v2597
  %v2777 = vpop.f32.mrb[0].mxu0
  %v2778 = vadd.f32 0.0, %v2777
  %v2779 = vpop.f32.mrb[0].mxu0
  %2780 = vmatprep.mubr.f32.mxu0 0.0
  %2781 = vmatmul.mubr.f32.gmra.mrb[0].mxu0 %v2600
  %v2782 = vpop.f32.mrb[0].mxu0
  %v2783 = vadd.f32 0.0, %v2782
  %v2784 = vpop.f32.mrb[0].mxu0
  %2785 = vmatprep.mubr.f32.mxu0 0.0
  %2786 = vmatmul.mubr.f32.gmra.mrb[0].mxu0 %v2603
  %v2787 = vpop.f32.mrb[0].mxu0
  %v2788 = vadd.f32 0.0, %v2787
  %v2789 = vpop.f32.mrb[0].mxu0
  %2790 = vmatprep.mubr.f32.mxu0 0.0
  %2791 = vmatmul.mubr.f32.gmra.mrb[0].mxu0 %v2606
  %v2792 = vpop.f32.mrb[0].mxu0
  %v2793 = vadd.f32 0.0, %v2792
  %v2794 = vpop.f32.mrb[0].mxu0
  %2795 = vmatprep.mubr.f32.mxu0 0.0
  %2796 = vmatmul.mubr.f32.gmra.mrb[0].mxu0 %v2609
  %v2797 = vpop.f32.mrb[0].mxu0
  %v2798 = vadd.f32 0.0, %v2797
  %v2799 = vpop.f32.mrb[0].mxu0
  %2800 = vdwg.mxu0
  %v2801 = vadd.f32 %v2483, %v2678
  %v2802 = vadd.f32 %v2484, %v2683
  %v2803 = vadd.f32 %v2485, %v2688
  %v2804 = vadd.f32 %v2486, %v2693
  %v2805 = vadd.f32 %v2487, %v2698
  %v2806 = vadd.f32 %v2488, %v2703
  %v2807 = vadd.f32 %v2489, %v2708
  %v2808 = vadd.f32 %v2490, %v2713
  %v2809 = vadd.f32 %v2491, %v2718
  %v2810 = vadd.f32 %v2492, %v2723
  %v2811 = vadd.f32 %v2493, %v2728
  %v2812 = vadd.f32 %v2494, %v2733
  %v2813 = vadd.f32 %v2495, %v2738
  %v2814 = vadd.f32 %v2496, %v2743
  %v2815 = vadd.f32 %v2497, %v2748
  %v2816 = vadd.f32 %v2498, %v2753
  %v2817 = vadd.f32 %v2499, %v2758
  %v2818 = vadd.f32 %v2500, %v2763
  %v2819 = vadd.f32 %v2501, %v2768
  %v2820 = vadd.f32 %v2502, %v2773
  %v2821 = vadd.f32 %v2503, %v2778
  %v2822 = vadd.f32 %v2504, %v2783
  %v2823 = vadd.f32 %v2505, %v2788
  %v2824 = vadd.f32 %v2506, %v2793
  %v2825 = vadd.f32 %v2507, %v2798
  %v2826 = vld [vmem:[%s2] sm:$0x1]
  %v2828 = vlaneseq
  %v2829 = vshrl.u32 %v2828, 7
  %v2830 = vsub.s32 0, %v2829
  %v2831 = vrot.slane %v2826, %v2830
  %v2833 = vadd.f32 %v2801, %v2831
  %v2834 = vadd.f32 %v2802, %v2831
  %v2835 = vadd.f32 %v2803, %v2831
  %v2836 = vadd.f32 %v2804, %v2831
  %v2837 = vadd.f32 %v2805, %v2831
  %v2838 = vadd.f32 %v2806, %v2831
  %v2839 = vadd.f32 %v2807, %v2831
  %v2840 = vadd.f32 %v2808, %v2831
  %v2841 = vadd.f32 %v2809, %v2831
  %v2842 = vadd.f32 %v2810, %v2831
  %v2843 = vadd.f32 %v2811, %v2831
  %v2844 = vadd.f32 %v2812, %v2831
  %v2845 = vadd.f32 %v2813, %v2831
  %v2846 = vadd.f32 %v2814, %v2831
  %v2847 = vadd.f32 %v2815, %v2831
  %v2848 = vadd.f32 %v2816, %v2831
  %v2849 = vadd.f32 %v2817, %v2831
  %v2850 = vadd.f32 %v2818, %v2831
  %v2851 = vadd.f32 %v2819, %v2831
  %v2852 = vadd.f32 %v2820, %v2831
  %v2853 = vadd.f32 %v2821, %v2831
  %v2854 = vadd.f32 %v2822, %v2831
  %v2855 = vadd.f32 %v2823, %v2831
  %v2856 = vadd.f32 %v2824, %v2831
  %v2857 = vadd.f32 %v2825, %v2831
  %v2858 = vmax.f32 %v2833, 0.0
  %v2859 = vmax.f32 %v2834, 0.0
  %v2860 = vmax.f32 %v2835, 0.0
  %v2861 = vmax.f32 %v2836, 0.0
  %v2862 = vmax.f32 %v2837, 0.0
  %v2863 = vmax.f32 %v2838, 0.0
  %v2864 = vmax.f32 %v2839, 0.0
  %v2865 = vmax.f32 %v2840, 0.0
  %v2866 = vmax.f32 %v2841, 0.0
  %v2867 = vmax.f32 %v2842, 0.0
  %v2868 = vmax.f32 %v2843, 0.0
  %v2869 = vmax.f32 %v2844, 0.0
  %v2870 = vmax.f32 %v2845, 0.0
  %v2871 = vmax.f32 %v2846, 0.0
  %v2872 = vmax.f32 %v2847, 0.0
  %v2873 = vmax.f32 %v2848, 0.0
  %v2874 = vmax.f32 %v2849, 0.0
  %v2875 = vmax.f32 %v2850, 0.0
  %v2876 = vmax.f32 %v2851, 0.0
  %v2877 = vmax.f32 %v2852, 0.0
  %v2878 = vmax.f32 %v2853, 0.0
  %v2879 = vmax.f32 %v2854, 0.0
  %v2880 = vmax.f32 %v2855, 0.0
  %v2881 = vmax.f32 %v2856, 0.0
  %v2882 = vmax.f32 %v2857, 0.0
  %vm2883 = vcmask 15360
  %2884 = vst.msk [vmem:[%s3] sm:$0xff] %vm2883, %v2858
  %2885 = vst.msk [vmem:[%s3 + $0x8] sm:$0xff] %vm2883, %v2859
  %2886 = vst.msk [vmem:[%s3 + $0x10] sm:$0xff] %vm2883, %v2860
  %2887 = vst.msk [vmem:[%s3 + $0x18] sm:$0xff] %vm2883, %v2861
  %2888 = vst.msk [vmem:[%s3 + $0x20] sm:$0xff] %vm2883, %v2862
  %2889 = vst.msk [vmem:[%s3 + $0x28] sm:$0xff] %vm2883, %v2863
  %2890 = vst.msk [vmem:[%s3 + $0x30] sm:$0xff] %vm2883, %v2864
  %2891 = vst.msk [vmem:[%s3 + $0x38] sm:$0xff] %vm2883, %v2865
  %2892 = vst.msk [vmem:[%s3 + $0x40] sm:$0xff] %vm2883, %v2866
  %2893 = vst.msk [vmem:[%s3 + $0x48] sm:$0xff] %vm2883, %v2867
  %2894 = vst.msk [vmem:[%s3 + $0x50] sm:$0xff] %vm2883, %v2868
  %2895 = vst.msk [vmem:[%s3 + $0x58] sm:$0xff] %vm2883, %v2869
  %2896 = vst.msk [vmem:[%s3 + $0x60] sm:$0xff] %vm2883, %v2870
  %2897 = vst.msk [vmem:[%s3 + $0x68] sm:$0xff] %vm2883, %v2871
  %2898 = vst.msk [vmem:[%s3 + $0x70] sm:$0xff] %vm2883, %v2872
  %2899 = vst.msk [vmem:[%s3 + $0x78] sm:$0xff] %vm2883, %v2873
  %2900 = vst.msk [vmem:[%s3 + $0x80] sm:$0xff] %vm2883, %v2874
  %2901 = vst.msk [vmem:[%s3 + $0x88] sm:$0xff] %vm2883, %v2875
  %2902 = vst.msk [vmem:[%s3 + $0x90] sm:$0xff] %vm2883, %v2876
  %2903 = vst.msk [vmem:[%s3 + $0x98] sm:$0xff] %vm2883, %v2877
  %2904 = vst.msk [vmem:[%s3 + $0xa0] sm:$0xff] %vm2883, %v2878
  %2905 = vst.msk [vmem:[%s3 + $0xa8] sm:$0xff] %vm2883, %v2879
  %2906 = vst.msk [vmem:[%s3 + $0xb0] sm:$0xff] %vm2883, %v2880
  %2907 = vst.msk [vmem:[%s3 + $0xb8] sm:$0xff] %vm2883, %v2881
  %2908 = vst.msk [vmem:[%s3 + $0xc0] sm:$0xff] %vm2883, %v2882
  // Predicated region
  $region14: #{network_forward.10} parent=0 // pred_check
    _
  $region15: #{network_forward.10} parent=0 // pred_check_branch
    %2910 = sbr.rel (0) target = $region17
  $region16: #{network_forward.10} parent=0 // pred_region
    _
  $region17: #{network_forward.10} parent=0 // pred_fallthru
    _
  // Predicated region
  $region18: #{network_forward.10} parent=0 // pred_check
    _
  $region19: #{network_forward.10} parent=0 // pred_check_branch
    %2912 = sbr.rel (0) target = $region21
  $region20: #{network_forward.10} parent=0 // pred_region
    _
  $region21: #{network_forward.10} parent=0 // pred_fallthru
    _

// kernel: network_forward.9
$region0: #{network_forward.9}
  #allocation0 [shape = 'u32[]', space=smem, size = 0x4, offset = 0x4, fixed_abs, tag = 'smem constant byte address 0x4 - core index']
  #allocation1 [shape = 'u32[144,128]{1,0:T(1,128)}', space=vmem, size = 0x12000, scoped, tag = 'internal scratch']
  %s0 = inlined_call_operand.vmem [shape: f32[224,3], index: 0, kind: input, shape index: {}]
  %s1 = inlined_call_operand.vmem [shape: f32[9,3,16], index: 1, kind: input, shape index: {}]
  %s2 = inlined_call_operand.vmem [shape: f32[1,16], index: 2, kind: input, shape index: {}]
  %s3 = inlined_call_operand.vmem [shape: f32[200,16], index: 3, kind: output, shape index: {}]
  %s4 = sld [smem:[#allocation0]]
  $region22: #{network_forward.9} parent=0
    _
  %s6 = ssub.s32 1, %s4
  %s7 = scalar_select 0, %s6, %s4
  // Predicated region
  $region2: #{network_forward.9} parent=0 // pred_check
    _
  $region3: #{network_forward.9} parent=0 // pred_check_branch
    %9 = sbr.rel (0) target = $region5
  $region4: #{network_forward.9} parent=0 // pred_region
    _
  $region5: #{network_forward.9} parent=0 // pred_fallthru
    _
  // Predicated region
  $region6: #{network_forward.9} parent=0 // pred_check
    _
  $region7: #{network_forward.9} parent=0 // pred_check_branch
    %11 = sbr.rel (0) target = $region9
  $region8: #{network_forward.9} parent=0 // pred_region
    _
  $region9: #{network_forward.9} parent=0 // pred_fallthru
    _
  // Predicated region
  $region10: #{network_forward.9} parent=0 // pred_check
    _
  $region11: #{network_forward.9} parent=0 // pred_check_branch
    %13 = sbr.rel (0) target = $region13
  $region12: #{network_forward.9} parent=0 // pred_region
    _
  $region13: #{network_forward.9} parent=0 // pred_fallthru
    _
  %v14 = vld [vmem:[%s0] sm:$0xff]
  %v15 = vld [vmem:[%s0 + $0x8] sm:$0xff]
  %v16 = vld [vmem:[%s0 + $0x10] sm:$0xff]
  %v17 = vld [vmem:[%s0 + $0x18] sm:$0xff]
  %v18 = vld [vmem:[%s0 + $0x20] sm:$0xff]
  %v19 = vld [vmem:[%s0 + $0x28] sm:$0xff]
  %v20 = vld [vmem:[%s0 + $0x30] sm:$0xff]
  %v21 = vld [vmem:[%s0 + $0x38] sm:$0xff]
  %v22 = vld [vmem:[%s0 + $0x40] sm:$0xff]
  %v23 = vld [vmem:[%s0 + $0x48] sm:$0xff]
  %v24 = vld [vmem:[%s0 + $0x50] sm:$0xff]
  %v25 = vld [vmem:[%s0 + $0x58] sm:$0xff]
  %v26 = vld [vmem:[%s0 + $0x60] sm:$0xff]
  %v27 = vld [vmem:[%s0 + $0x68] sm:$0xff]
  %v28 = vld [vmem:[%s0 + $0x70] sm:$0xff]
  %v29 = vld [vmem:[%s0 + $0x78] sm:$0xff]
  %v30 = vld [vmem:[%s0 + $0x80] sm:$0xff]
  %v31 = vld [vmem:[%s0 + $0x88] sm:$0xff]
  %v32 = vld [vmem:[%s0 + $0x90] sm:$0xff]
  %v33 = vld [vmem:[%s0 + $0x98] sm:$0xff]
  %v34 = vld [vmem:[%s0 + $0xa0] sm:$0xff]
  %v35 = vld [vmem:[%s0 + $0xa8] sm:$0xff]
  %v36 = vld [vmem:[%s0 + $0xb0] sm:$0xff]
  %v37 = vld [vmem:[%s0 + $0xb8] sm:$0xff]
  %v38 = vld [vmem:[%s0 + $0xc0] sm:$0xff]
  %v39 = vld [vmem:[%s1] sm:$0x7]
  %v40 = vld [vmem:[%s0 + $0x1] sm:$0xff]
  %v41 = vld [vmem:[%s0 + $0x9] sm:$0xff]
  %v42 = vld [vmem:[%s0 + $0x11] sm:$0xff]
  %v43 = vld [vmem:[%s0 + $0x19] sm:$0xff]
  %v44 = vld [vmem:[%s0 + $0x21] sm:$0xff]
  %v45 = vld [vmem:[%s0 + $0x29] sm:$0xff]
  %v46 = vld [vmem:[%s0 + $0x31] sm:$0xff]
  %v47 = vld [vmem:[%s0 + $0x39] sm:$0xff]
  %v48 = vld [vmem:[%s0 + $0x41] sm:$0xff]
  %v49 = vld [vmem:[%s0 + $0x49] sm:$0xff]
  %v50 = vld [vmem:[%s0 + $0x51] sm:$0xff]
  %v51 = vld [vmem:[%s0 + $0x59] sm:$0xff]
  %v52 = vld [vmem:[%s0 + $0x61] sm:$0xff]
  %v53 = vld [vmem:[%s0 + $0x69] sm:$0xff]
  %v54 = vld [vmem:[%s0 + $0x71] sm:$0xff]
  %v55 = vld [vmem:[%s0 + $0x79] sm:$0xff]
  %v56 = vld [vmem:[%s0 + $0x81] sm:$0xff]
  %v57 = vld [vmem:[%s0 + $0x89] sm:$0xff]
  %v58 = vld [vmem:[%s0 + $0x91] sm:$0xff]
  %v59 = vld [vmem:[%s0 + $0x99] sm:$0xff]
  %v60 = vld [vmem:[%s0 + $0xa1] sm:$0xff]
  %v61 = vld [vmem:[%s0 + $0xa9] sm:$0xff]
  %v62 = vld [vmem:[%s0 + $0xb1] sm:$0xff]
  %v63 = vld [vmem:[%s0 + $0xb9] sm:$0xff]
  %v64 = vld [vmem:[%s0 + $0xc1] sm:$0xff]
  %s65 = scalar_lea.vmem %s1, 4
  %v66 = vld [vmem:[%s65] sm:$0x7]
  %vm67 = vcmask 23552
  %v69 = vsel %vm67, %v40, 0
  %v72 = vsel %vm67, %v41, 0
  %v75 = vsel %vm67, %v42, 0
  %v78 = vsel %vm67, %v43, 0
  %v81 = vsel %vm67, %v44, 0
  %v84 = vsel %vm67, %v45, 0
  %v87 = vsel %vm67, %v46, 0
  %v90 = vsel %vm67, %v47, 0
  %v93 = vsel %vm67, %v48, 0
  %v96 = vsel %vm67, %v49, 0
  %v99 = vsel %vm67, %v50, 0
  %v102 = vsel %vm67, %v51, 0
  %v105 = vsel %vm67, %v52, 0
  %v108 = vsel %vm67, %v53, 0
  %v111 = vsel %vm67, %v54, 0
  %v114 = vsel %vm67, %v55, 0
  %v117 = vsel %vm67, %v56, 0
  %v120 = vsel %vm67, %v57, 0
  %v123 = vsel %vm67, %v58, 0
  %v126 = vsel %vm67, %v59, 0
  %v129 = vsel %vm67, %v60, 0
  %v132 = vsel %vm67, %v61, 0
  %v135 = vsel %vm67, %v62, 0
  %v138 = vsel %vm67, %v63, 0
  %v141 = vsel %vm67, %v64, 0
  %vm143 = vcmask 1042432
  %v145 = vsel %vm143, %v66, 0
  %147 = vmatprep.subr.mxu0 0.0
  %148 = vmatpush1.msra.mxu0 %v145
  %149 = vmatprep.subr.mxu0 0.0
  %150 = vmatpush1.msra.mxu0 0.0
  %151 = vmatprep.subr.mxu0 0.0
  %152 = vmatpush1.msra.mxu0 0.0
  %153 = vmatprep.subr.mxu0 0.0
  %154 = vmatpush1.msra.mxu0 0.0
  %155 = vmatprep.subr.mxu0 0.0
  %156 = vmatpush1.msra.mxu0 0.0
  %157 = vmatprep.subr.mxu0 0.0
  %158 = vmatpush1.msra.mxu0 0.0
  %159 = vmatprep.subr.mxu0 0.0
  %160 = vmatpush1.msra.mxu0 0.0
  %161 = vmatprep.subr.mxu0 0.0
  %162 = vmatpush1.msra.mxu0 0.0
  %163 = vmatprep.subr.mxu0 0.0
  %164 = vmatpush1.msra.mxu0 0.0
  %165 = vmatprep.subr.mxu0 0.0
  %166 = vmatpush1.msra.mxu0 0.0
  %167 = vmatprep.subr.mxu0 0.0
  %168 = vmatpush1.msra.mxu0 0.0
  %169 = vmatprep.subr.mxu0 0.0
  %170 = vmatpush1.msra.mxu0 0.0
  %171 = vmatprep.subr.mxu0 0.0
  %172 = vmatpush1.msra.mxu0 0.0
  %173 = vmatprep.subr.mxu0 0.0
  %174 = vmatpush1.msra.mxu0 0.0
  %175 = vmatprep.subr.mxu0 0.0
  %176 = vmatpush1.msra.mxu0 0.0
  %177 = vmatprep.subr.mxu0 0.0
  %178 = vmatpush1.msra.mxu0 0.0
  %179 = vmatprep.subr.mxu0 0.0
  %180 = vmatpush1.msra.mxu0 0.0
  %181 = vmatprep.subr.mxu0 0.0
  %182 = vmatpush1.msra.mxu0 0.0
  %183 = vmatprep.subr.mxu0 0.0
  %184 = vmatpush1.msra.mxu0 0.0
  %185 = vmatprep.subr.mxu0 0.0
  %186 = vmatpush1.msra.mxu0 0.0
  %187 = vmatprep.subr.mxu0 0.0
  %188 = vmatpush1.msra.mxu0 0.0
  %189 = vmatprep.subr.mxu0 0.0
  %190 = vmatpush1.msra.mxu0 0.0
  %191 = vmatprep.subr.mxu0 0.0
  %192 = vmatpush1.msra.mxu0 0.0
  %193 = vmatprep.subr.mxu0 0.0
  %194 = vmatpush1.msra.mxu0 0.0
  %195 = vmatprep.subr.mxu0 0.0
  %196 = vmatpush1.msra.mxu0 0.0
  %197 = vmatprep.subr.mxu0 0.0
  %198 = vmatpush1.msra.mxu0 0.0
  %199 = vmatprep.subr.mxu0 0.0
  %200 = vmatpush1.msra.mxu0 0.0
  %201 = vmatprep.subr.mxu0 0.0
  %202 = vmatpush1.msra.mxu0 0.0
  %203 = vmatprep.subr.mxu0 0.0
  %204 = vmatpush1.msra.mxu0 0.0
  %205 = vmatprep.subr.mxu0 0.0
  %206 = vmatpush1.msra.mxu0 0.0
  %207 = vmatprep.subr.mxu0 0.0
  %208 = vmatpush1.msra.mxu0 0.0
  %209 = vmatprep.subr.mxu0 0.0
  %210 = vmatpush1.msra.mxu0 0.0
  %211 = vmatprep.mubr.f32.mxu0 0.0
  %212 = vmatmul.mubr.f32.gmra.mrb[0].mxu0 %v69
  %v213 = vpop.f32.mrb[0].mxu0
  %v214 = vadd.f32 0.0, %v213
  %v215 = vpop.f32.mrb[0].mxu0
  %216 = vmatprep.mubr.f32.mxu0 0.0
  %217 = vmatmul.mubr.f32.gmra.mrb[0].mxu0 %v72
  %v218 = vpop.f32.mrb[0].mxu0
  %v219 = vadd.f32 0.0, %v218
  %v220 = vpop.f32.mrb[0].mxu0
  %221 = vmatprep.mubr.f32.mxu0 0.0
  %222 = vmatmul.mubr.f32.gmra.mrb[0].mxu0 %v75
  %v223 = vpop.f32.mrb[0].mxu0
  %v224 = vadd.f32 0.0, %v223
  %v225 = vpop.f32.mrb[0].mxu0
  %226 = vmatprep.mubr.f32.mxu0 0.0
  %227 = vmatmul.mubr.f32.gmra.mrb[0].mxu0 %v78
  %v228 = vpop.f32.mrb[0].mxu0
  %v229 = vadd.f32 0.0, %v228
  %v230 = vpop.f32.mrb[0].mxu0
  %231 = vmatprep.mubr.f32.mxu0 0.0
  %232 = vmatmul.mubr.f32.gmra.mrb[0].mxu0 %v81
  %v233 = vpop.f32.mrb[0].mxu0
  %v234 = vadd.f32 0.0, %v233
  %v235 = vpop.f32.mrb[0].mxu0
  %236 = vmatprep.mubr.f32.mxu0 0.0
  %237 = vmatmul.mubr.f32.gmra.mrb[0].mxu0 %v84
  %v238 = vpop.f32.mrb[0].mxu0
  %v239 = vadd.f32 0.0, %v238
  %v240 = vpop.f32.mrb[0].mxu0
  %241 = vmatprep.mubr.f32.mxu0 0.0
  %242 = vmatmul.mubr.f32.gmra.mrb[0].mxu0 %v87
  %v243 = vpop.f32.mrb[0].mxu0
  %v244 = vadd.f32 0.0, %v243
  %v245 = vpop.f32.mrb[0].mxu0
  %246 = vmatprep.mubr.f32.mxu0 0.0
  %247 = vmatmul.mubr.f32.gmra.mrb[0].mxu0 %v90
  %v248 = vpop.f32.mrb[0].mxu0
  %v249 = vadd.f32 0.0, %v248
  %v250 = vpop.f32.mrb[0].mxu0
  %251 = vmatprep.mubr.f32.mxu0 0.0
  %252 = vmatmul.mubr.f32.gmra.mrb[0].mxu0 %v93
  %v253 = vpop.f32.mrb[0].mxu0
  %v254 = vadd.f32 0.0, %v253
  %v255 = vpop.f32.mrb[0].mxu0
  %256 = vmatprep.mubr.f32.mxu0 0.0
  %257 = vmatmul.mubr.f32.gmra.mrb[0].mxu0 %v96
  %v258 = vpop.f32.mrb[0].mxu0
  %v259 = vadd.f32 0.0, %v258
  %v260 = vpop.f32.mrb[0].mxu0
  %261 = vmatprep.mubr.f32.mxu0 0.0
  %262 = vmatmul.mubr.f32.gmra.mrb[0].mxu0 %v99
  %v263 = vpop.f32.mrb[0].mxu0
  %v264 = vadd.f32 0.0, %v263
  %v265 = vpop.f32.mrb[0].mxu0
  %266 = vmatprep.mubr.f32.mxu0 0.0
  %267 = vmatmul.mubr.f32.gmra.mrb[0].mxu0 %v102
  %v268 = vpop.f32.mrb[0].mxu0
  %v269 = vadd.f32 0.0, %v268
  %v270 = vpop.f32.mrb[0].mxu0
  %271 = vmatprep.mubr.f32.mxu0 0.0
  %272 = vmatmul.mubr.f32.gmra.mrb[0].mxu0 %v105
  %v273 = vpop.f32.mrb[0].mxu0
  %v274 = vadd.f32 0.0, %v273
  %v275 = vpop.f32.mrb[0].mxu0
  %276 = vmatprep.mubr.f32.mxu0 0.0
  %277 = vmatmul.mubr.f32.gmra.mrb[0].mxu0 %v108
  %v278 = vpop.f32.mrb[0].mxu0
  %v279 = vadd.f32 0.0, %v278
  %v280 = vpop.f32.mrb[0].mxu0
  %281 = vmatprep.mubr.f32.mxu0 0.0
  %282 = vmatmul.mubr.f32.gmra.mrb[0].mxu0 %v111
  %v283 = vpop.f32.mrb[0].mxu0
  %v284 = vadd.f32 0.0, %v283
  %v285 = vpop.f32.mrb[0].mxu0
  %286 = vmatprep.mubr.f32.mxu0 0.0
  %287 = vmatmul.mubr.f32.gmra.mrb[0].mxu0 %v114
  %v288 = vpop.f32.mrb[0].mxu0
  %v289 = vadd.f32 0.0, %v288
  %v290 = vpop.f32.mrb[0].mxu0
  %291 = vmatprep.mubr.f32.mxu0 0.0
  %292 = vmatmul.mubr.f32.gmra.mrb[0].mxu0 %v117
  %v293 = vpop.f32.mrb[0].mxu0
  %v294 = vadd.f32 0.0, %v293
  %v295 = vpop.f32.mrb[0].mxu0
  %296 = vmatprep.mubr.f32.mxu0 0.0
  %297 = vmatmul.mubr.f32.gmra.mrb[0].mxu0 %v120
  %v298 = vpop.f32.mrb[0].mxu0
  %v299 = vadd.f32 0.0, %v298
  %v300 = vpop.f32.mrb[0].mxu0
  %301 = vmatprep.mubr.f32.mxu0 0.0
  %302 = vmatmul.mubr.f32.gmra.mrb[0].mxu0 %v123
  %v303 = vpop.f32.mrb[0].mxu0
  %v304 = vadd.f32 0.0, %v303
  %v305 = vpop.f32.mrb[0].mxu0
  %306 = vmatprep.mubr.f32.mxu0 0.0
  %307 = vmatmul.mubr.f32.gmra.mrb[0].mxu0 %v126
  %v308 = vpop.f32.mrb[0].mxu0
  %v309 = vadd.f32 0.0, %v308
  %v310 = vpop.f32.mrb[0].mxu0
  %311 = vmatprep.mubr.f32.mxu0 0.0
  %312 = vmatmul.mubr.f32.gmra.mrb[0].mxu0 %v129
  %v313 = vpop.f32.mrb[0].mxu0
  %v314 = vadd.f32 0.0, %v313
  %v315 = vpop.f32.mrb[0].mxu0
  %316 = vmatprep.mubr.f32.mxu0 0.0
  %317 = vmatmul.mubr.f32.gmra.mrb[0].mxu0 %v132
  %v318 = vpop.f32.mrb[0].mxu0
  %v319 = vadd.f32 0.0, %v318
  %v320 = vpop.f32.mrb[0].mxu0
  %321 = vmatprep.mubr.f32.mxu0 0.0
  %322 = vmatmul.mubr.f32.gmra.mrb[0].mxu0 %v135
  %v323 = vpop.f32.mrb[0].mxu0
  %v324 = vadd.f32 0.0, %v323
  %v325 = vpop.f32.mrb[0].mxu0
  %326 = vmatprep.mubr.f32.mxu0 0.0
  %327 = vmatmul.mubr.f32.gmra.mrb[0].mxu0 %v138
  %v328 = vpop.f32.mrb[0].mxu0
  %v329 = vadd.f32 0.0, %v328
  %v330 = vpop.f32.mrb[0].mxu0
  %331 = vmatprep.mubr.f32.mxu0 0.0
  %332 = vmatmul.mubr.f32.gmra.mrb[0].mxu0 %v141
  %v333 = vpop.f32.mrb[0].mxu0
  %v334 = vadd.f32 0.0, %v333
  %v335 = vpop.f32.mrb[0].mxu0
  %336 = vdwg.mxu0
  %v338 = vsel %vm67, %v14, 0
  %v341 = vsel %vm67, %v15, 0
  %v344 = vsel %vm67, %v16, 0
  %v347 = vsel %vm67, %v17, 0
  %v350 = vsel %vm67, %v18, 0
  %v353 = vsel %vm67, %v19, 0
  %v356 = vsel %vm67, %v20, 0
  %v359 = vsel %vm67, %v21, 0
  %v362 = vsel %vm67, %v22, 0
  %v365 = vsel %vm67, %v23, 0
  %v368 = vsel %vm67, %v24, 0
  %v371 = vsel %vm67, %v25, 0
  %v374 = vsel %vm67, %v26, 0
  %v377 = vsel %vm67, %v27, 0
  %v380 = vsel %vm67, %v28, 0
  %v383 = vsel %vm67, %v29, 0
  %v386 = vsel %vm67, %v30, 0
  %v389 = vsel %vm67, %v31, 0
  %v392 = vsel %vm67, %v32, 0
  %v395 = vsel %vm67, %v33, 0
  %v398 = vsel %vm67, %v34, 0
  %v401 = vsel %vm67, %v35, 0
  %v404 = vsel %vm67, %v36, 0
  %v407 = vsel %vm67, %v37, 0
  %v410 = vsel %vm67, %v38, 0
  %v413 = vsel %vm143, %v39, 0
  %415 = vmatprep.subr.mxu0 0.0
  %416 = vmatpush1.msra.mxu0 %v413
  %417 = vmatprep.subr.mxu0 0.0
  %418 = vmatpush1.msra.mxu0 0.0
  %419 = vmatprep.subr.mxu0 0.0
  %420 = vmatpush1.msra.mxu0 0.0
  %421 = vmatprep.subr.mxu0 0.0
  %422 = vmatpush1.msra.mxu0 0.0
  %423 = vmatprep.subr.mxu0 0.0
  %424 = vmatpush1.msra.mxu0 0.0
  %425 = vmatprep.subr.mxu0 0.0
  %426 = vmatpush1.msra.mxu0 0.0
  %427 = vmatprep.subr.mxu0 0.0
  %428 = vmatpush1.msra.mxu0 0.0
  %429 = vmatprep.subr.mxu0 0.0
  %430 = vmatpush1.msra.mxu0 0.0
  %431 = vmatprep.subr.mxu0 0.0
  %432 = vmatpush1.msra.mxu0 0.0
  %433 = vmatprep.subr.mxu0 0.0
  %434 = vmatpush1.msra.mxu0 0.0
  %435 = vmatprep.subr.mxu0 0.0
  %436 = vmatpush1.msra.mxu0 0.0
  %437 = vmatprep.subr.mxu0 0.0
  %438 = vmatpush1.msra.mxu0 0.0
  %439 = vmatprep.subr.mxu0 0.0
  %440 = vmatpush1.msra.mxu0 0.0
  %441 = vmatprep.subr.mxu0 0.0
  %442 = vmatpush1.msra.mxu0 0.0
  %443 = vmatprep.subr.mxu0 0.0
  %444 = vmatpush1.msra.mxu0 0.0
  %445 = vmatprep.subr.mxu0 0.0
  %446 = vmatpush1.msra.mxu0 0.0
  %447 = vmatprep.subr.mxu0 0.0
  %448 = vmatpush1.msra.mxu0 0.0
  %449 = vmatprep.subr.mxu0 0.0
  %450 = vmatpush1.msra.mxu0 0.0
  %451 = vmatprep.subr.mxu0 0.0
  %452 = vmatpush1.msra.mxu0 0.0
  %453 = vmatprep.subr.mxu0 0.0
  %454 = vmatpush1.msra.mxu0 0.0
  %455 = vmatprep.subr.mxu0 0.0
  %456 = vmatpush1.msra.mxu0 0.0
  %457 = vmatprep.subr.mxu0 0.0
  %458 = vmatpush1.msra.mxu0 0.0
  %459 = vmatprep.subr.mxu0 0.0
  %460 = vmatpush1.msra.mxu0 0.0
  %461 = vmatprep.subr.mxu0 0.0
  %462 = vmatpush1.msra.mxu0 0.0
  %463 = vmatprep.subr.mxu0 0.0
  %464 = vmatpush1.msra.mxu0 0.0
  %465 = vmatprep.subr.mxu0 0.0
  %466 = vmatpush1.msra.mxu0 0.0
  %467 = vmatprep.subr.mxu0 0.0
  %468 = vmatpush1.msra.mxu0 0.0
  %469 = vmatprep.subr.mxu0 0.0
  %470 = vmatpush1.msra.mxu0 0.0
  %471 = vmatprep.subr.mxu0 0.0
  %472 = vmatpush1.msra.mxu0 0.0
  %473 = vmatprep.subr.mxu0 0.0
  %474 = vmatpush1.msra.mxu0 0.0
  %475 = vmatprep.subr.mxu0 0.0
  %476 = vmatpush1.msra.mxu0 0.0
  %477 = vmatprep.subr.mxu0 0.0
  %478 = vmatpush1.msra.mxu0 0.0
  %479 = vmatprep.mubr.f32.mxu0 0.0
  %480 = vmatmul.mubr.f32.gmra.mrb[0].mxu0 %v338
  %v481 = vpop.f32.mrb[0].mxu0
  %v482 = vadd.f32 %v214, %v481
  %v483 = vpop.f32.mrb[0].mxu0
  %484 = vmatprep.mubr.f32.mxu0 0.0
  %485 = vmatmul.mubr.f32.gmra.mrb[0].mxu0 %v341
  %v486 = vpop.f32.mrb[0].mxu0
  %v487 = vadd.f32 %v219, %v486
  %v488 = vpop.f32.mrb[0].mxu0
  %489 = vmatprep.mubr.f32.mxu0 0.0
  %490 = vmatmul.mubr.f32.gmra.mrb[0].mxu0 %v344
  %v491 = vpop.f32.mrb[0].mxu0
  %v492 = vadd.f32 %v224, %v491
  %v493 = vpop.f32.mrb[0].mxu0
  %494 = vmatprep.mubr.f32.mxu0 0.0
  %495 = vmatmul.mubr.f32.gmra.mrb[0].mxu0 %v347
  %v496 = vpop.f32.mrb[0].mxu0
  %v497 = vadd.f32 %v229, %v496
  %v498 = vpop.f32.mrb[0].mxu0
  %499 = vmatprep.mubr.f32.mxu0 0.0
  %500 = vmatmul.mubr.f32.gmra.mrb[0].mxu0 %v350
  %v501 = vpop.f32.mrb[0].mxu0
  %v502 = vadd.f32 %v234, %v501
  %v503 = vpop.f32.mrb[0].mxu0
  %504 = vmatprep.mubr.f32.mxu0 0.0
  %505 = vmatmul.mubr.f32.gmra.mrb[0].mxu0 %v353
  %v506 = vpop.f32.mrb[0].mxu0
  %v507 = vadd.f32 %v239, %v506
  %v508 = vpop.f32.mrb[0].mxu0
  %509 = vmatprep.mubr.f32.mxu0 0.0
  %510 = vmatmul.mubr.f32.gmra.mrb[0].mxu0 %v356
  %v511 = vpop.f32.mrb[0].mxu0
  %v512 = vadd.f32 %v244, %v511
  %v513 = vpop.f32.mrb[0].mxu0
  %514 = vmatprep.mubr.f32.mxu0 0.0
  %515 = vmatmul.mubr.f32.gmra.mrb[0].mxu0 %v359
  %v516 = vpop.f32.mrb[0].mxu0
  %v517 = vadd.f32 %v249, %v516
  %v518 = vpop.f32.mrb[0].mxu0
  %519 = vmatprep.mubr.f32.mxu0 0.0
  %520 = vmatmul.mubr.f32.gmra.mrb[0].mxu0 %v362
  %v521 = vpop.f32.mrb[0].mxu0
  %v522 = vadd.f32 %v254, %v521
  %v523 = vpop.f32.mrb[0].mxu0
  %524 = vmatprep.mubr.f32.mxu0 0.0
  %525 = vmatmul.mubr.f32.gmra.mrb[0].mxu0 %v365
  %v526 = vpop.f32.mrb[0].mxu0
  %v527 = vadd.f32 %v259, %v526
  %v528 = vpop.f32.mrb[0].mxu0
  %529 = vmatprep.mubr.f32.mxu0 0.0
  %530 = vmatmul.mubr.f32.gmra.mrb[0].mxu0 %v368
  %v531 = vpop.f32.mrb[0].mxu0
  %v532 = vadd.f32 %v264, %v531
  %v533 = vpop.f32.mrb[0].mxu0
  %534 = vmatprep.mubr.f32.mxu0 0.0
  %535 = vmatmul.mubr.f32.gmra.mrb[0].mxu0 %v371
  %v536 = vpop.f32.mrb[0].mxu0
  %v537 = vadd.f32 %v269, %v536
  %v538 = vpop.f32.mrb[0].mxu0
  %539 = vmatprep.mubr.f32.mxu0 0.0
  %540 = vmatmul.mubr.f32.gmra.mrb[0].mxu0 %v374
  %v541 = vpop.f32.mrb[0].mxu0
  %v542 = vadd.f32 %v274, %v541
  %v543 = vpop.f32.mrb[0].mxu0
  %544 = vmatprep.mubr.f32.mxu0 0.0
  %545 = vmatmul.mubr.f32.gmra.mrb[0].mxu0 %v377
  %v546 = vpop.f32.mrb[0].mxu0
  %v547 = vadd.f32 %v279, %v546
  %v548 = vpop.f32.mrb[0].mxu0
  %549 = vmatprep.mubr.f32.mxu0 0.0
  %550 = vmatmul.mubr.f32.gmra.mrb[0].mxu0 %v380
  %v551 = vpop.f32.mrb[0].mxu0
  %v552 = vadd.f32 %v284, %v551
  %v553 = vpop.f32.mrb[0].mxu0
  %554 = vmatprep.mubr.f32.mxu0 0.0
  %555 = vmatmul.mubr.f32.gmra.mrb[0].mxu0 %v383
  %v556 = vpop.f32.mrb[0].mxu0
  %v557 = vadd.f32 %v289, %v556
  %v558 = vpop.f32.mrb[0].mxu0
  %559 = vmatprep.mubr.f32.mxu0 0.0
  %560 = vmatmul.mubr.f32.gmra.mrb[0].mxu0 %v386
  %v561 = vpop.f32.mrb[0].mxu0
  %v562 = vadd.f32 %v294, %v561
  %v563 = vpop.f32.mrb[0].mxu0
  %564 = vmatprep.mubr.f32.mxu0 0.0
  %565 = vmatmul.mubr.f32.gmra.mrb[0].mxu0 %v389
  %v566 = vpop.f32.mrb[0].mxu0
  %v567 = vadd.f32 %v299, %v566
  %v568 = vpop.f32.mrb[0].mxu0
  %569 = vmatprep.mubr.f32.mxu0 0.0
  %570 = vmatmul.mubr.f32.gmra.mrb[0].mxu0 %v392
  %v571 = vpop.f32.mrb[0].mxu0
  %v572 = vadd.f32 %v304, %v571
  %v573 = vpop.f32.mrb[0].mxu0
  %574 = vmatprep.mubr.f32.mxu0 0.0
  %575 = vmatmul.mubr.f32.gmra.mrb[0].mxu0 %v395
  %v576 = vpop.f32.mrb[0].mxu0
  %v577 = vadd.f32 %v309, %v576
  %v578 = vpop.f32.mrb[0].mxu0
  %579 = vmatprep.mubr.f32.mxu0 0.0
  %580 = vmatmul.mubr.f32.gmra.mrb[0].mxu0 %v398
  %v581 = vpop.f32.mrb[0].mxu0
  %v582 = vadd.f32 %v314, %v581
  %v583 = vpop.f32.mrb[0].mxu0
  %584 = vmatprep.mubr.f32.mxu0 0.0
  %585 = vmatmul.mubr.f32.gmra.mrb[0].mxu0 %v401
  %v586 = vpop.f32.mrb[0].mxu0
  %v587 = vadd.f32 %v319, %v586
  %v588 = vpop.f32.mrb[0].mxu0
  %589 = vmatprep.mubr.f32.mxu0 0.0
  %590 = vmatmul.mubr.f32.gmra.mrb[0].mxu0 %v404
  %v591 = vpop.f32.mrb[0].mxu0
  %v592 = vadd.f32 %v324, %v591
  %v593 = vpop.f32.mrb[0].mxu0
  %594 = vmatprep.mubr.f32.mxu0 0.0
  %595 = vmatmul.mubr.f32.gmra.mrb[0].mxu0 %v407
  %v596 = vpop.f32.mrb[0].mxu0
  %v597 = vadd.f32 %v329, %v596
  %v598 = vpop.f32.mrb[0].mxu0
  %599 = vmatprep.mubr.f32.mxu0 0.0
  %600 = vmatmul.mubr.f32.gmra.mrb[0].mxu0 %v410
  %v601 = vpop.f32.mrb[0].mxu0
  %v602 = vadd.f32 %v334, %v601
  %v603 = vpop.f32.mrb[0].mxu0
  %604 = vdwg.mxu0
  %v605 = vld [vmem:[%s0 + $0x2] sm:$0xff]
  %v606 = vld [vmem:[%s0 + $0xa] sm:$0xff]
  %v607 = vld [vmem:[%s0 + $0x12] sm:$0xff]
  %v608 = vld [vmem:[%s0 + $0x1a] sm:$0xff]
  %v609 = vld [vmem:[%s0 + $0x22] sm:$0xff]
  %v610 = vld [vmem:[%s0 + $0x2a] sm:$0xff]
  %v611 = vld [vmem:[%s0 + $0x32] sm:$0xff]
  %v612 = vld [vmem:[%s0 + $0x3a] sm:$0xff]
  %v613 = vld [vmem:[%s0 + $0x42] sm:$0xff]
  %v614 = vld [vmem:[%s0 + $0x4a] sm:$0xff]
  %v615 = vld [vmem:[%s0 + $0x52] sm:$0xff]
  %v616 = vld [vmem:[%s0 + $0x5a] sm:$0xff]
  %v617 = vld [vmem:[%s0 + $0x62] sm:$0xff]
  %v618 = vld [vmem:[%s0 + $0x6a] sm:$0xff]
  %v619 = vld [vmem:[%s0 + $0x72] sm:$0xff]
  %v620 = vld [vmem:[%s0 + $0x7a] sm:$0xff]
  %v621 = vld [vmem:[%s0 + $0x82] sm:$0xff]
  %v622 = vld [vmem:[%s0 + $0x8a] sm:$0xff]
  %v623 = vld [vmem:[%s0 + $0x92] sm:$0xff]
  %v624 = vld [vmem:[%s0 + $0x9a] sm:$0xff]
  %v625 = vld [vmem:[%s0 + $0xa2] sm:$0xff]
  %v626 = vld [vmem:[%s0 + $0xaa] sm:$0xff]
  %v627 = vld [vmem:[%s0 + $0xb2] sm:$0xff]
  %v628 = vld [vmem:[%s0 + $0xba] sm:$0xff]
  %v629 = vld [vmem:[%s0 + $0xc2] sm:$0xff]
  %s630 = scalar_lea.vmem %s1, 8
  %v631 = vld [vmem:[%s630] sm:$0x7]
  %v633 = vsel %vm67, %v605, 0
  %v636 = vsel %vm67, %v606, 0
  %v639 = vsel %vm67, %v607, 0
  %v642 = vsel %vm67, %v608, 0
  %v645 = vsel %vm67, %v609, 0
  %v648 = vsel %vm67, %v610, 0
  %v651 = vsel %vm67, %v611, 0
  %v654 = vsel %vm67, %v612, 0
  %v657 = vsel %vm67, %v613, 0
  %v660 = vsel %vm67, %v614, 0
  %v663 = vsel %vm67, %v615, 0
  %v666 = vsel %vm67, %v616, 0
  %v669 = vsel %vm67, %v617, 0
  %v672 = vsel %vm67, %v618, 0
  %v675 = vsel %vm67, %v619, 0
  %v678 = vsel %vm67, %v620, 0
  %v681 = vsel %vm67, %v621, 0
  %v684 = vsel %vm67, %v622, 0
  %v687 = vsel %vm67, %v623, 0
  %v690 = vsel %vm67, %v624, 0
  %v693 = vsel %vm67, %v625, 0
  %v696 = vsel %vm67, %v626, 0
  %v699 = vsel %vm67, %v627, 0
  %v702 = vsel %vm67, %v628, 0
  %v705 = vsel %vm67, %v629, 0
  %v708 = vsel %vm143, %v631, 0
  %710 = vmatprep.subr.mxu0 0.0
  %711 = vmatpush1.msra.mxu0 %v708
  %712 = vmatprep.subr.mxu0 0.0
  %713 = vmatpush1.msra.mxu0 0.0
  %714 = vmatprep.subr.mxu0 0.0
  %715 = vmatpush1.msra.mxu0 0.0
  %716 = vmatprep.subr.mxu0 0.0
  %717 = vmatpush1.msra.mxu0 0.0
  %718 = vmatprep.subr.mxu0 0.0
  %719 = vmatpush1.msra.mxu0 0.0
  %720 = vmatprep.subr.mxu0 0.0
  %721 = vmatpush1.msra.mxu0 0.0
  %722 = vmatprep.subr.mxu0 0.0
  %723 = vmatpush1.msra.mxu0 0.0
  %724 = vmatprep.subr.mxu0 0.0
  %725 = vmatpush1.msra.mxu0 0.0
  %726 = vmatprep.subr.mxu0 0.0
  %727 = vmatpush1.msra.mxu0 0.0
  %728 = vmatprep.subr.mxu0 0.0
  %729 = vmatpush1.msra.mxu0 0.0
  %730 = vmatprep.subr.mxu0 0.0
  %731 = vmatpush1.msra.mxu0 0.0
  %732 = vmatprep.subr.mxu0 0.0
  %733 = vmatpush1.msra.mxu0 0.0
  %734 = vmatprep.subr.mxu0 0.0
  %735 = vmatpush1.msra.mxu0 0.0
  %736 = vmatprep.subr.mxu0 0.0
  %737 = vmatpush1.msra.mxu0 0.0
  %738 = vmatprep.subr.mxu0 0.0
  %739 = vmatpush1.msra.mxu0 0.0
  %740 = vmatprep.subr.mxu0 0.0
  %741 = vmatpush1.msra.mxu0 0.0
  %742 = vmatprep.subr.mxu0 0.0
  %743 = vmatpush1.msra.mxu0 0.0
  %744 = vmatprep.subr.mxu0 0.0
  %745 = vmatpush1.msra.mxu0 0.0
  %746 = vmatprep.subr.mxu0 0.0
  %747 = vmatpush1.msra.mxu0 0.0
  %748 = vmatprep.subr.mxu0 0.0
  %749 = vmatpush1.msra.mxu0 0.0
  %750 = vmatprep.subr.mxu0 0.0
  %751 = vmatpush1.msra.mxu0 0.0
  %752 = vmatprep.subr.mxu0 0.0
  %753 = vmatpush1.msra.mxu0 0.0
  %754 = vmatprep.subr.mxu0 0.0
  %755 = vmatpush1.msra.mxu0 0.0
  %756 = vmatprep.subr.mxu0 0.0
  %757 = vmatpush1.msra.mxu0 0.0
  %758 = vmatprep.subr.mxu0 0.0
  %759 = vmatpush1.msra.mxu0 0.0
  %760 = vmatprep.subr.mxu0 0.0
  %761 = vmatpush1.msra.mxu0 0.0
  %762 = vmatprep.subr.mxu0 0.0
  %763 = vmatpush1.msra.mxu0 0.0
  %764 = vmatprep.subr.mxu0 0.0
  %765 = vmatpush1.msra.mxu0 0.0
  %766 = vmatprep.subr.mxu0 0.0
  %767 = vmatpush1.msra.mxu0 0.0
  %768 = vmatprep.subr.mxu0 0.0
  %769 = vmatpush1.msra.mxu0 0.0
  %770 = vmatprep.subr.mxu0 0.0
  %771 = vmatpush1.msra.mxu0 0.0
  %772 = vmatprep.subr.mxu0 0.0
  %773 = vmatpush1.msra.mxu0 0.0
  %774 = vmatprep.mubr.f32.mxu0 0.0
  %775 = vmatmul.mubr.f32.gmra.mrb[0].mxu0 %v633
  %v776 = vpop.f32.mrb[0].mxu0
  %v777 = vadd.f32 0.0, %v776
  %v778 = vpop.f32.mrb[0].mxu0
  %779 = vmatprep.mubr.f32.mxu0 0.0
  %780 = vmatmul.mubr.f32.gmra.mrb[0].mxu0 %v636
  %v781 = vpop.f32.mrb[0].mxu0
  %v782 = vadd.f32 0.0, %v781
  %v783 = vpop.f32.mrb[0].mxu0
  %784 = vmatprep.mubr.f32.mxu0 0.0
  %785 = vmatmul.mubr.f32.gmra.mrb[0].mxu0 %v639
  %v786 = vpop.f32.mrb[0].mxu0
  %v787 = vadd.f32 0.0, %v786
  %v788 = vpop.f32.mrb[0].mxu0
  %789 = vmatprep.mubr.f32.mxu0 0.0
  %790 = vmatmul.mubr.f32.gmra.mrb[0].mxu0 %v642
  %v791 = vpop.f32.mrb[0].mxu0
  %v792 = vadd.f32 0.0, %v791
  %v793 = vpop.f32.mrb[0].mxu0
  %794 = vmatprep.mubr.f32.mxu0 0.0
  %795 = vmatmul.mubr.f32.gmra.mrb[0].mxu0 %v645
  %v796 = vpop.f32.mrb[0].mxu0
  %v797 = vadd.f32 0.0, %v796
  %v798 = vpop.f32.mrb[0].mxu0
  %799 = vmatprep.mubr.f32.mxu0 0.0
  %800 = vmatmul.mubr.f32.gmra.mrb[0].mxu0 %v648
  %v801 = vpop.f32.mrb[0].mxu0
  %v802 = vadd.f32 0.0, %v801
  %v803 = vpop.f32.mrb[0].mxu0
  %804 = vmatprep.mubr.f32.mxu0 0.0
  %805 = vmatmul.mubr.f32.gmra.mrb[0].mxu0 %v651
  %v806 = vpop.f32.mrb[0].mxu0
  %v807 = vadd.f32 0.0, %v806
  %v808 = vpop.f32.mrb[0].mxu0
  %809 = vmatprep.mubr.f32.mxu0 0.0
  %810 = vmatmul.mubr.f32.gmra.mrb[0].mxu0 %v654
  %v811 = vpop.f32.mrb[0].mxu0
  %v812 = vadd.f32 0.0, %v811
  %v813 = vpop.f32.mrb[0].mxu0
  %814 = vmatprep.mubr.f32.mxu0 0.0
  %815 = vmatmul.mubr.f32.gmra.mrb[0].mxu0 %v657
  %v816 = vpop.f32.mrb[0].mxu0
  %v817 = vadd.f32 0.0, %v816
  %v818 = vpop.f32.mrb[0].mxu0
  %819 = vmatprep.mubr.f32.mxu0 0.0
  %820 = vmatmul.mubr.f32.gmra.mrb[0].mxu0 %v660
  %v821 = vpop.f32.mrb[0].mxu0
  %v822 = vadd.f32 0.0, %v821
  %v823 = vpop.f32.mrb[0].mxu0
  %824 = vmatprep.mubr.f32.mxu0 0.0
  %825 = vmatmul.mubr.f32.gmra.mrb[0].mxu0 %v663
  %v826 = vpop.f32.mrb[0].mxu0
  %v827 = vadd.f32 0.0, %v826
  %v828 = vpop.f32.mrb[0].mxu0
  %829 = vmatprep.mubr.f32.mxu0 0.0
  %830 = vmatmul.mubr.f32.gmra.mrb[0].mxu0 %v666
  %v831 = vpop.f32.mrb[0].mxu0
  %v832 = vadd.f32 0.0, %v831
  %v833 = vpop.f32.mrb[0].mxu0
  %834 = vmatprep.mubr.f32.mxu0 0.0
  %835 = vmatmul.mubr.f32.gmra.mrb[0].mxu0 %v669
  %v836 = vpop.f32.mrb[0].mxu0
  %v837 = vadd.f32 0.0, %v836
  %v838 = vpop.f32.mrb[0].mxu0
  %839 = vmatprep.mubr.f32.mxu0 0.0
  %840 = vmatmul.mubr.f32.gmra.mrb[0].mxu0 %v672
  %v841 = vpop.f32.mrb[0].mxu0
  %v842 = vadd.f32 0.0, %v841
  %v843 = vpop.f32.mrb[0].mxu0
  %844 = vmatprep.mubr.f32.mxu0 0.0
  %845 = vmatmul.mubr.f32.gmra.mrb[0].mxu0 %v675
  %v846 = vpop.f32.mrb[0].mxu0
  %v847 = vadd.f32 0.0, %v846
  %v848 = vpop.f32.mrb[0].mxu0
  %849 = vmatprep.mubr.f32.mxu0 0.0
  %850 = vmatmul.mubr.f32.gmra.mrb[0].mxu0 %v678
  %v851 = vpop.f32.mrb[0].mxu0
  %v852 = vadd.f32 0.0, %v851
  %v853 = vpop.f32.mrb[0].mxu0
  %854 = vmatprep.mubr.f32.mxu0 0.0
  %855 = vmatmul.mubr.f32.gmra.mrb[0].mxu0 %v681
  %v856 = vpop.f32.mrb[0].mxu0
  %v857 = vadd.f32 0.0, %v856
  %v858 = vpop.f32.mrb[0].mxu0
  %859 = vmatprep.mubr.f32.mxu0 0.0
  %860 = vmatmul.mubr.f32.gmra.mrb[0].mxu0 %v684
  %v861 = vpop.f32.mrb[0].mxu0
  %v862 = vadd.f32 0.0, %v861
  %v863 = vpop.f32.mrb[0].mxu0
  %864 = vmatprep.mubr.f32.mxu0 0.0
  %865 = vmatmul.mubr.f32.gmra.mrb[0].mxu0 %v687
  %v866 = vpop.f32.mrb[0].mxu0
  %v867 = vadd.f32 0.0, %v866
  %v868 = vpop.f32.mrb[0].mxu0
  %869 = vmatprep.mubr.f32.mxu0 0.0
  %870 = vmatmul.mubr.f32.gmra.mrb[0].mxu0 %v690
  %v871 = vpop.f32.mrb[0].mxu0
  %v872 = vadd.f32 0.0, %v871
  %v873 = vpop.f32.mrb[0].mxu0
  %874 = vmatprep.mubr.f32.mxu0 0.0
  %875 = vmatmul.mubr.f32.gmra.mrb[0].mxu0 %v693
  %v876 = vpop.f32.mrb[0].mxu0
  %v877 = vadd.f32 0.0, %v876
  %v878 = vpop.f32.mrb[0].mxu0
  %879 = vmatprep.mubr.f32.mxu0 0.0
  %880 = vmatmul.mubr.f32.gmra.mrb[0].mxu0 %v696
  %v881 = vpop.f32.mrb[0].mxu0
  %v882 = vadd.f32 0.0, %v881
  %v883 = vpop.f32.mrb[0].mxu0
  %884 = vmatprep.mubr.f32.mxu0 0.0
  %885 = vmatmul.mubr.f32.gmra.mrb[0].mxu0 %v699
  %v886 = vpop.f32.mrb[0].mxu0
  %v887 = vadd.f32 0.0, %v886
  %v888 = vpop.f32.mrb[0].mxu0
  %889 = vmatprep.mubr.f32.mxu0 0.0
  %890 = vmatmul.mubr.f32.gmra.mrb[0].mxu0 %v702
  %v891 = vpop.f32.mrb[0].mxu0
  %v892 = vadd.f32 0.0, %v891
  %v893 = vpop.f32.mrb[0].mxu0
  %894 = vmatprep.mubr.f32.mxu0 0.0
  %895 = vmatmul.mubr.f32.gmra.mrb[0].mxu0 %v705
  %v896 = vpop.f32.mrb[0].mxu0
  %v897 = vadd.f32 0.0, %v896
  %v898 = vpop.f32.mrb[0].mxu0
  %899 = vdwg.mxu0
  %v900 = vadd.f32 %v482, %v777
  %v901 = vadd.f32 %v487, %v782
  %v902 = vadd.f32 %v492, %v787
  %v903 = vadd.f32 %v497, %v792
  %v904 = vadd.f32 %v502, %v797
  %v905 = vadd.f32 %v507, %v802
  %v906 = vadd.f32 %v512, %v807
  %v907 = vadd.f32 %v517, %v812
  %v908 = vadd.f32 %v522, %v817
  %v909 = vadd.f32 %v527, %v822
  %v910 = vadd.f32 %v532, %v827
  %v911 = vadd.f32 %v537, %v832
  %v912 = vadd.f32 %v542, %v837
  %v913 = vadd.f32 %v547, %v842
  %v914 = vadd.f32 %v552, %v847
  %v915 = vadd.f32 %v557, %v852
  %v916 = vadd.f32 %v562, %v857
  %v917 = vadd.f32 %v567, %v862
  %v918 = vadd.f32 %v572, %v867
  %v919 = vadd.f32 %v577, %v872
  %v920 = vadd.f32 %v582, %v877
  %v921 = vadd.f32 %v587, %v882
  %v922 = vadd.f32 %v592, %v887
  %v923 = vadd.f32 %v597, %v892
  %v924 = vadd.f32 %v602, %v897
  %v925 = vld [vmem:[%s0 + $0xa] sm:$0xff]
  %v926 = vld [vmem:[%s0 + $0x12] sm:$0xff]
  %v927 = vld [vmem:[%s0 + $0x1a] sm:$0xff]
  %v928 = vld [vmem:[%s0 + $0x22] sm:$0xff]
  %v929 = vld [vmem:[%s0 + $0x2a] sm:$0xff]
  %v930 = vld [vmem:[%s0 + $0x32] sm:$0xff]
  %v931 = vld [vmem:[%s0 + $0x3a] sm:$0xff]
  %v932 = vld [vmem:[%s0 + $0x42] sm:$0xff]
  %v933 = vld [vmem:[%s0 + $0x4a] sm:$0xff]
  %v934 = vld [vmem:[%s0 + $0x52] sm:$0xff]
  %v935 = vld [vmem:[%s0 + $0x5a] sm:$0xff]
  %v936 = vld [vmem:[%s0 + $0x62] sm:$0xff]
  %v937 = vld [vmem:[%s0 + $0x6a] sm:$0xff]
  %v938 = vld [vmem:[%s0 + $0x72] sm:$0xff]
  %v939 = vld [vmem:[%s0 + $0x7a] sm:$0xff]
  %v940 = vld [vmem:[%s0 + $0x82] sm:$0xff]
  %v941 = vld [vmem:[%s0 + $0x8a] sm:$0xff]
  %v942 = vld [vmem:[%s0 + $0x92] sm:$0xff]
  %v943 = vld [vmem:[%s0 + $0x9a] sm:$0xff]
  %v944 = vld [vmem:[%s0 + $0xa2] sm:$0xff]
  %v945 = vld [vmem:[%s0 + $0xaa] sm:$0xff]
  %v946 = vld [vmem:[%s0 + $0xb2] sm:$0xff]
  %v947 = vld [vmem:[%s0 + $0xba] sm:$0xff]
  %v948 = vld [vmem:[%s0 + $0xc2] sm:$0xff]
  %v949 = vld [vmem:[%s0 + $0xca] sm:$0xff]
  %s950 = scalar_lea.vmem %s1, 12
  %v951 = vld [vmem:[%s950] sm:$0x7]
  %v953 = vsel %vm67, %v925, 0
  %v956 = vsel %vm67, %v926, 0
  %v959 = vsel %vm67, %v927, 0
  %v962 = vsel %vm67, %v928, 0
  %v965 = vsel %vm67, %v929, 0
  %v968 = vsel %vm67, %v930, 0
  %v971 = vsel %vm67, %v931, 0
  %v974 = vsel %vm67, %v932, 0
  %v977 = vsel %vm67, %v933, 0
  %v980 = vsel %vm67, %v934, 0
  %v983 = vsel %vm67, %v935, 0
  %v986 = vsel %vm67, %v936, 0
  %v989 = vsel %vm67, %v937, 0
  %v992 = vsel %vm67, %v938, 0
  %v995 = vsel %vm67, %v939, 0
  %v998 = vsel %vm67, %v940, 0
  %v1001 = vsel %vm67, %v941, 0
  %v1004 = vsel %vm67, %v942, 0
  %v1007 = vsel %vm67, %v943, 0
  %v1010 = vsel %vm67, %v944, 0
  %v1013 = vsel %vm67, %v945, 0
  %v1016 = vsel %vm67, %v946, 0
  %v1019 = vsel %vm67, %v947, 0
  %v1022 = vsel %vm67, %v948, 0
  %v1025 = vsel %vm67, %v949, 0
  %v1028 = vsel %vm143, %v951, 0
  %1030 = vmatprep.subr.mxu0 0.0
  %1031 = vmatpush1.msra.mxu0 %v1028
  %1032 = vmatprep.subr.mxu0 0.0
  %1033 = vmatpush1.msra.mxu0 0.0
  %1034 = vmatprep.subr.mxu0 0.0
  %1035 = vmatpush1.msra.mxu0 0.0
  %1036 = vmatprep.subr.mxu0 0.0
  %1037 = vmatpush1.msra.mxu0 0.0
  %1038 = vmatprep.subr.mxu0 0.0
  %1039 = vmatpush1.msra.mxu0 0.0
  %1040 = vmatprep.subr.mxu0 0.0
  %1041 = vmatpush1.msra.mxu0 0.0
  %1042 = vmatprep.subr.mxu0 0.0
  %1043 = vmatpush1.msra.mxu0 0.0
  %1044 = vmatprep.subr.mxu0 0.0
  %1045 = vmatpush1.msra.mxu0 0.0
  %1046 = vmatprep.subr.mxu0 0.0
  %1047 = vmatpush1.msra.mxu0 0.0
  %1048 = vmatprep.subr.mxu0 0.0
  %1049 = vmatpush1.msra.mxu0 0.0
  %1050 = vmatprep.subr.mxu0 0.0
  %1051 = vmatpush1.msra.mxu0 0.0
  %1052 = vmatprep.subr.mxu0 0.0
  %1053 = vmatpush1.msra.mxu0 0.0
  %1054 = vmatprep.subr.mxu0 0.0
  %1055 = vmatpush1.msra.mxu0 0.0
  %1056 = vmatprep.subr.mxu0 0.0
  %1057 = vmatpush1.msra.mxu0 0.0
  %1058 = vmatprep.subr.mxu0 0.0
  %1059 = vmatpush1.msra.mxu0 0.0
  %1060 = vmatprep.subr.mxu0 0.0
  %1061 = vmatpush1.msra.mxu0 0.0
  %1062 = vmatprep.subr.mxu0 0.0
  %1063 = vmatpush1.msra.mxu0 0.0
  %1064 = vmatprep.subr.mxu0 0.0
  %1065 = vmatpush1.msra.mxu0 0.0
  %1066 = vmatprep.subr.mxu0 0.0
  %1067 = vmatpush1.msra.mxu0 0.0
  %1068 = vmatprep.subr.mxu0 0.0
  %1069 = vmatpush1.msra.mxu0 0.0
  %1070 = vmatprep.subr.mxu0 0.0
  %1071 = vmatpush1.msra.mxu0 0.0
  %1072 = vmatprep.subr.mxu0 0.0
  %1073 = vmatpush1.msra.mxu0 0.0
  %1074 = vmatprep.subr.mxu0 0.0
  %1075 = vmatpush1.msra.mxu0 0.0
  %1076 = vmatprep.subr.mxu0 0.0
  %1077 = vmatpush1.msra.mxu0 0.0
  %1078 = vmatprep.subr.mxu0 0.0
  %1079 = vmatpush1.msra.mxu0 0.0
  %1080 = vmatprep.subr.mxu0 0.0
  %1081 = vmatpush1.msra.mxu0 0.0
  %1082 = vmatprep.subr.mxu0 0.0
  %1083 = vmatpush1.msra.mxu0 0.0
  %1084 = vmatprep.subr.mxu0 0.0
  %1085 = vmatpush1.msra.mxu0 0.0
  %1086 = vmatprep.subr.mxu0 0.0
  %1087 = vmatpush1.msra.mxu0 0.0
  %1088 = vmatprep.subr.mxu0 0.0
  %1089 = vmatpush1.msra.mxu0 0.0
  %1090 = vmatprep.subr.mxu0 0.0
  %1091 = vmatpush1.msra.mxu0 0.0
  %1092 = vmatprep.subr.mxu0 0.0
  %1093 = vmatpush1.msra.mxu0 0.0
  %1094 = vmatprep.mubr.f32.mxu0 0.0
  %1095 = vmatmul.mubr.f32.gmra.mrb[0].mxu0 %v953
  %v1096 = vpop.f32.mrb[0].mxu0
  %v1097 = vadd.f32 0.0, %v1096
  %v1098 = vpop.f32.mrb[0].mxu0
  %1099 = vmatprep.mubr.f32.mxu0 0.0
  %1100 = vmatmul.mubr.f32.gmra.mrb[0].mxu0 %v956
  %v1101 = vpop.f32.mrb[0].mxu0
  %v1102 = vadd.f32 0.0, %v1101
  %v1103 = vpop.f32.mrb[0].mxu0
  %1104 = vmatprep.mubr.f32.mxu0 0.0
  %1105 = vmatmul.mubr.f32.gmra.mrb[0].mxu0 %v959
  %v1106 = vpop.f32.mrb[0].mxu0
  %v1107 = vadd.f32 0.0, %v1106
  %v1108 = vpop.f32.mrb[0].mxu0
  %1109 = vmatprep.mubr.f32.mxu0 0.0
  %1110 = vmatmul.mubr.f32.gmra.mrb[0].mxu0 %v962
  %v1111 = vpop.f32.mrb[0].mxu0
  %v1112 = vadd.f32 0.0, %v1111
  %v1113 = vpop.f32.mrb[0].mxu0
  %1114 = vmatprep.mubr.f32.mxu0 0.0
  %1115 = vmatmul.mubr.f32.gmra.mrb[0].mxu0 %v965
  %v1116 = vpop.f32.mrb[0].mxu0
  %v1117 = vadd.f32 0.0, %v1116
  %v1118 = vpop.f32.mrb[0].mxu0
  %1119 = vmatprep.mubr.f32.mxu0 0.0
  %1120 = vmatmul.mubr.f32.gmra.mrb[0].mxu0 %v968
  %v1121 = vpop.f32.mrb[0].mxu0
  %v1122 = vadd.f32 0.0, %v1121
  %v1123 = vpop.f32.mrb[0].mxu0
  %1124 = vmatprep.mubr.f32.mxu0 0.0
  %1125 = vmatmul.mubr.f32.gmra.mrb[0].mxu0 %v971
  %v1126 = vpop.f32.mrb[0].mxu0
  %v1127 = vadd.f32 0.0, %v1126
  %v1128 = vpop.f32.mrb[0].mxu0
  %1129 = vmatprep.mubr.f32.mxu0 0.0
  %1130 = vmatmul.mubr.f32.gmra.mrb[0].mxu0 %v974
  %v1131 = vpop.f32.mrb[0].mxu0
  %v1132 = vadd.f32 0.0, %v1131
  %v1133 = vpop.f32.mrb[0].mxu0
  %1134 = vmatprep.mubr.f32.mxu0 0.0
  %1135 = vmatmul.mubr.f32.gmra.mrb[0].mxu0 %v977
  %v1136 = vpop.f32.mrb[0].mxu0
  %v1137 = vadd.f32 0.0, %v1136
  %v1138 = vpop.f32.mrb[0].mxu0
  %1139 = vmatprep.mubr.f32.mxu0 0.0
  %1140 = vmatmul.mubr.f32.gmra.mrb[0].mxu0 %v980
  %v1141 = vpop.f32.mrb[0].mxu0
  %v1142 = vadd.f32 0.0, %v1141
  %v1143 = vpop.f32.mrb[0].mxu0
  %1144 = vmatprep.mubr.f32.mxu0 0.0
  %1145 = vmatmul.mubr.f32.gmra.mrb[0].mxu0 %v983
  %v1146 = vpop.f32.mrb[0].mxu0
  %v1147 = vadd.f32 0.0, %v1146
  %v1148 = vpop.f32.mrb[0].mxu0
  %1149 = vmatprep.mubr.f32.mxu0 0.0
  %1150 = vmatmul.mubr.f32.gmra.mrb[0].mxu0 %v986
  %v1151 = vpop.f32.mrb[0].mxu0
  %v1152 = vadd.f32 0.0, %v1151
  %v1153 = vpop.f32.mrb[0].mxu0
  %1154 = vmatprep.mubr.f32.mxu0 0.0
  %1155 = vmatmul.mubr.f32.gmra.mrb[0].mxu0 %v989
  %v1156 = vpop.f32.mrb[0].mxu0
  %v1157 = vadd.f32 0.0, %v1156
  %v1158 = vpop.f32.mrb[0].mxu0
  %1159 = vmatprep.mubr.f32.mxu0 0.0
  %1160 = vmatmul.mubr.f32.gmra.mrb[0].mxu0 %v992
  %v1161 = vpop.f32.mrb[0].mxu0
  %v1162 = vadd.f32 0.0, %v1161
  %v1163 = vpop.f32.mrb[0].mxu0
  %1164 = vmatprep.mubr.f32.mxu0 0.0
  %1165 = vmatmul.mubr.f32.gmra.mrb[0].mxu0 %v995
  %v1166 = vpop.f32.mrb[0].mxu0
  %v1167 = vadd.f32 0.0, %v1166
  %v1168 = vpop.f32.mrb[0].mxu0
  %1169 = vmatprep.mubr.f32.mxu0 0.0
  %1170 = vmatmul.mubr.f32.gmra.mrb[0].mxu0 %v998
  %v1171 = vpop.f32.mrb[0].mxu0
  %v1172 = vadd.f32 0.0, %v1171
  %v1173 = vpop.f32.mrb[0].mxu0
  %1174 = vmatprep.mubr.f32.mxu0 0.0
  %1175 = vmatmul.mubr.f32.gmra.mrb[0].mxu0 %v1001
  %v1176 = vpop.f32.mrb[0].mxu0
  %v1177 = vadd.f32 0.0, %v1176
  %v1178 = vpop.f32.mrb[0].mxu0
  %1179 = vmatprep.mubr.f32.mxu0 0.0
  %1180 = vmatmul.mubr.f32.gmra.mrb[0].mxu0 %v1004
  %v1181 = vpop.f32.mrb[0].mxu0
  %v1182 = vadd.f32 0.0, %v1181
  %v1183 = vpop.f32.mrb[0].mxu0
  %1184 = vmatprep.mubr.f32.mxu0 0.0
  %1185 = vmatmul.mubr.f32.gmra.mrb[0].mxu0 %v1007
  %v1186 = vpop.f32.mrb[0].mxu0
  %v1187 = vadd.f32 0.0, %v1186
  %v1188 = vpop.f32.mrb[0].mxu0
  %1189 = vmatprep.mubr.f32.mxu0 0.0
  %1190 = vmatmul.mubr.f32.gmra.mrb[0].mxu0 %v1010
  %v1191 = vpop.f32.mrb[0].mxu0
  %v1192 = vadd.f32 0.0, %v1191
  %v1193 = vpop.f32.mrb[0].mxu0
  %1194 = vmatprep.mubr.f32.mxu0 0.0
  %1195 = vmatmul.mubr.f32.gmra.mrb[0].mxu0 %v1013
  %v1196 = vpop.f32.mrb[0].mxu0
  %v1197 = vadd.f32 0.0, %v1196
  %v1198 = vpop.f32.mrb[0].mxu0
  %1199 = vmatprep.mubr.f32.mxu0 0.0
  %1200 = vmatmul.mubr.f32.gmra.mrb[0].mxu0 %v1016
  %v1201 = vpop.f32.mrb[0].mxu0
  %v1202 = vadd.f32 0.0, %v1201
  %v1203 = vpop.f32.mrb[0].mxu0
  %1204 = vmatprep.mubr.f32.mxu0 0.0
  %1205 = vmatmul.mubr.f32.gmra.mrb[0].mxu0 %v1019
  %v1206 = vpop.f32.mrb[0].mxu0
  %v1207 = vadd.f32 0.0, %v1206
  %v1208 = vpop.f32.mrb[0].mxu0
  %1209 = vmatprep.mubr.f32.mxu0 0.0
  %1210 = vmatmul.mubr.f32.gmra.mrb[0].mxu0 %v1022
  %v1211 = vpop.f32.mrb[0].mxu0
  %v1212 = vadd.f32 0.0, %v1211
  %v1213 = vpop.f32.mrb[0].mxu0
  %1214 = vmatprep.mubr.f32.mxu0 0.0
  %1215 = vmatmul.mubr.f32.gmra.mrb[0].mxu0 %v1025
  %v1216 = vpop.f32.mrb[0].mxu0
  %v1217 = vadd.f32 0.0, %v1216
  %v1218 = vpop.f32.mrb[0].mxu0
  %1219 = vdwg.mxu0
  %v1220 = vadd.f32 %v900, %v1097
  %v1221 = vadd.f32 %v901, %v1102
  %v1222 = vadd.f32 %v902, %v1107
  %v1223 = vadd.f32 %v903, %v1112
  %v1224 = vadd.f32 %v904, %v1117
  %v1225 = vadd.f32 %v905, %v1122
  %v1226 = vadd.f32 %v906, %v1127
  %v1227 = vadd.f32 %v907, %v1132
  %v1228 = vadd.f32 %v908, %v1137
  %v1229 = vadd.f32 %v909, %v1142
  %v1230 = vadd.f32 %v910, %v1147
  %v1231 = vadd.f32 %v911, %v1152
  %v1232 = vadd.f32 %v912, %v1157
  %v1233 = vadd.f32 %v913, %v1162
  %v1234 = vadd.f32 %v914, %v1167
  %v1235 = vadd.f32 %v915, %v1172
  %v1236 = vadd.f32 %v916, %v1177
  %v1237 = vadd.f32 %v917, %v1182
  %v1238 = vadd.f32 %v918, %v1187
  %v1239 = vadd.f32 %v919, %v1192
  %v1240 = vadd.f32 %v920, %v1197
  %v1241 = vadd.f32 %v921, %v1202
  %v1242 = vadd.f32 %v922, %v1207
  %v1243 = vadd.f32 %v923, %v1212
  %v1244 = vadd.f32 %v924, %v1217
  %v1245 = vld [vmem:[%s0 + $0xb] sm:$0xff]
  %v1246 = vld [vmem:[%s0 + $0x13] sm:$0xff]
  %v1247 = vld [vmem:[%s0 + $0x1b] sm:$0xff]
  %v1248 = vld [vmem:[%s0 + $0x23] sm:$0xff]
  %v1249 = vld [vmem:[%s0 + $0x2b] sm:$0xff]
  %v1250 = vld [vmem:[%s0 + $0x33] sm:$0xff]
  %v1251 = vld [vmem:[%s0 + $0x3b] sm:$0xff]
  %v1252 = vld [vmem:[%s0 + $0x43] sm:$0xff]
  %v1253 = vld [vmem:[%s0 + $0x4b] sm:$0xff]
  %v1254 = vld [vmem:[%s0 + $0x53] sm:$0xff]
  %v1255 = vld [vmem:[%s0 + $0x5b] sm:$0xff]
  %v1256 = vld [vmem:[%s0 + $0x63] sm:$0xff]
  %v1257 = vld [vmem:[%s0 + $0x6b] sm:$0xff]
  %v1258 = vld [vmem:[%s0 + $0x73] sm:$0xff]
  %v1259 = vld [vmem:[%s0 + $0x7b] sm:$0xff]
  %v1260 = vld [vmem:[%s0 + $0x83] sm:$0xff]
  %v1261 = vld [vmem:[%s0 + $0x8b] sm:$0xff]
  %v1262 = vld [vmem:[%s0 + $0x93] sm:$0xff]
  %v1263 = vld [vmem:[%s0 + $0x9b] sm:$0xff]
  %v1264 = vld [vmem:[%s0 + $0xa3] sm:$0xff]
  %v1265 = vld [vmem:[%s0 + $0xab] sm:$0xff]
  %v1266 = vld [vmem:[%s0 + $0xb3] sm:$0xff]
  %v1267 = vld [vmem:[%s0 + $0xbb] sm:$0xff]
  %v1268 = vld [vmem:[%s0 + $0xc3] sm:$0xff]
  %v1269 = vld [vmem:[%s0 + $0xcb] sm:$0xff]
  %s1270 = scalar_lea.vmem %s1, 16
  %v1271 = vld [vmem:[%s1270] sm:$0x7]
  %v1273 = vsel %vm67, %v1245, 0
  %v1276 = vsel %vm67, %v1246, 0
  %v1279 = vsel %vm67, %v1247, 0
  %v1282 = vsel %vm67, %v1248, 0
  %v1285 = vsel %vm67, %v1249, 0
  %v1288 = vsel %vm67, %v1250, 0
  %v1291 = vsel %vm67, %v1251, 0
  %v1294 = vsel %vm67, %v1252, 0
  %v1297 = vsel %vm67, %v1253, 0
  %v1300 = vsel %vm67, %v1254, 0
  %v1303 = vsel %vm67, %v1255, 0
  %v1306 = vsel %vm67, %v1256, 0
  %v1309 = vsel %vm67, %v1257, 0
  %v1312 = vsel %vm67, %v1258, 0
  %v1315 = vsel %vm67, %v1259, 0
  %v1318 = vsel %vm67, %v1260, 0
  %v1321 = vsel %vm67, %v1261, 0
  %v1324 = vsel %vm67, %v1262, 0
  %v1327 = vsel %vm67, %v1263, 0
  %v1330 = vsel %vm67, %v1264, 0
  %v1333 = vsel %vm67, %v1265, 0
  %v1336 = vsel %vm67, %v1266, 0
  %v1339 = vsel %vm67, %v1267, 0
  %v1342 = vsel %vm67, %v1268, 0
  %v1345 = vsel %vm67, %v1269, 0
  %v1348 = vsel %vm143, %v1271, 0
  %1350 = vmatprep.subr.mxu0 0.0
  %1351 = vmatpush1.msra.mxu0 %v1348
  %1352 = vmatprep.subr.mxu0 0.0
  %1353 = vmatpush1.msra.mxu0 0.0
  %1354 = vmatprep.subr.mxu0 0.0
  %1355 = vmatpush1.msra.mxu0 0.0
  %1356 = vmatprep.subr.mxu0 0.0
  %1357 = vmatpush1.msra.mxu0 0.0
  %1358 = vmatprep.subr.mxu0 0.0
  %1359 = vmatpush1.msra.mxu0 0.0
  %1360 = vmatprep.subr.mxu0 0.0
  %1361 = vmatpush1.msra.mxu0 0.0
  %1362 = vmatprep.subr.mxu0 0.0
  %1363 = vmatpush1.msra.mxu0 0.0
  %1364 = vmatprep.subr.mxu0 0.0
  %1365 = vmatpush1.msra.mxu0 0.0
  %1366 = vmatprep.subr.mxu0 0.0
  %1367 = vmatpush1.msra.mxu0 0.0
  %1368 = vmatprep.subr.mxu0 0.0
  %1369 = vmatpush1.msra.mxu0 0.0
  %1370 = vmatprep.subr.mxu0 0.0
  %1371 = vmatpush1.msra.mxu0 0.0
  %1372 = vmatprep.subr.mxu0 0.0
  %1373 = vmatpush1.msra.mxu0 0.0
  %1374 = vmatprep.subr.mxu0 0.0
  %1375 = vmatpush1.msra.mxu0 0.0
  %1376 = vmatprep.subr.mxu0 0.0
  %1377 = vmatpush1.msra.mxu0 0.0
  %1378 = vmatprep.subr.mxu0 0.0
  %1379 = vmatpush1.msra.mxu0 0.0
  %1380 = vmatprep.subr.mxu0 0.0
  %1381 = vmatpush1.msra.mxu0 0.0
  %1382 = vmatprep.subr.mxu0 0.0
  %1383 = vmatpush1.msra.mxu0 0.0
  %1384 = vmatprep.subr.mxu0 0.0
  %1385 = vmatpush1.msra.mxu0 0.0
  %1386 = vmatprep.subr.mxu0 0.0
  %1387 = vmatpush1.msra.mxu0 0.0
  %1388 = vmatprep.subr.mxu0 0.0
  %1389 = vmatpush1.msra.mxu0 0.0
  %1390 = vmatprep.subr.mxu0 0.0
  %1391 = vmatpush1.msra.mxu0 0.0
  %1392 = vmatprep.subr.mxu0 0.0
  %1393 = vmatpush1.msra.mxu0 0.0
  %1394 = vmatprep.subr.mxu0 0.0
  %1395 = vmatpush1.msra.mxu0 0.0
  %1396 = vmatprep.subr.mxu0 0.0
  %1397 = vmatpush1.msra.mxu0 0.0
  %1398 = vmatprep.subr.mxu0 0.0
  %1399 = vmatpush1.msra.mxu0 0.0
  %1400 = vmatprep.subr.mxu0 0.0
  %1401 = vmatpush1.msra.mxu0 0.0
  %1402 = vmatprep.subr.mxu0 0.0
  %1403 = vmatpush1.msra.mxu0 0.0
  %1404 = vmatprep.subr.mxu0 0.0
  %1405 = vmatpush1.msra.mxu0 0.0
  %1406 = vmatprep.subr.mxu0 0.0
  %1407 = vmatpush1.msra.mxu0 0.0
  %1408 = vmatprep.subr.mxu0 0.0
  %1409 = vmatpush1.msra.mxu0 0.0
  %1410 = vmatprep.subr.mxu0 0.0
  %1411 = vmatpush1.msra.mxu0 0.0
  %1412 = vmatprep.subr.mxu0 0.0
  %1413 = vmatpush1.msra.mxu0 0.0
  %1414 = vmatprep.mubr.f32.mxu0 0.0
  %1415 = vmatmul.mubr.f32.gmra.mrb[0].mxu0 %v1273
  %v1416 = vpop.f32.mrb[0].mxu0
  %v1417 = vadd.f32 0.0, %v1416
  %v1418 = vpop.f32.mrb[0].mxu0
  %1419 = vmatprep.mubr.f32.mxu0 0.0
  %1420 = vmatmul.mubr.f32.gmra.mrb[0].mxu0 %v1276
  %v1421 = vpop.f32.mrb[0].mxu0
  %v1422 = vadd.f32 0.0, %v1421
  %v1423 = vpop.f32.mrb[0].mxu0
  %1424 = vmatprep.mubr.f32.mxu0 0.0
  %1425 = vmatmul.mubr.f32.gmra.mrb[0].mxu0 %v1279
  %v1426 = vpop.f32.mrb[0].mxu0
  %v1427 = vadd.f32 0.0, %v1426
  %v1428 = vpop.f32.mrb[0].mxu0
  %1429 = vmatprep.mubr.f32.mxu0 0.0
  %1430 = vmatmul.mubr.f32.gmra.mrb[0].mxu0 %v1282
  %v1431 = vpop.f32.mrb[0].mxu0
  %v1432 = vadd.f32 0.0, %v1431
  %v1433 = vpop.f32.mrb[0].mxu0
  %1434 = vmatprep.mubr.f32.mxu0 0.0
  %1435 = vmatmul.mubr.f32.gmra.mrb[0].mxu0 %v1285
  %v1436 = vpop.f32.mrb[0].mxu0
  %v1437 = vadd.f32 0.0, %v1436
  %v1438 = vpop.f32.mrb[0].mxu0
  %1439 = vmatprep.mubr.f32.mxu0 0.0
  %1440 = vmatmul.mubr.f32.gmra.mrb[0].mxu0 %v1288
  %v1441 = vpop.f32.mrb[0].mxu0
  %v1442 = vadd.f32 0.0, %v1441
  %v1443 = vpop.f32.mrb[0].mxu0
  %1444 = vmatprep.mubr.f32.mxu0 0.0
  %1445 = vmatmul.mubr.f32.gmra.mrb[0].mxu0 %v1291
  %v1446 = vpop.f32.mrb[0].mxu0
  %v1447 = vadd.f32 0.0, %v1446
  %v1448 = vpop.f32.mrb[0].mxu0
  %1449 = vmatprep.mubr.f32.mxu0 0.0
  %1450 = vmatmul.mubr.f32.gmra.mrb[0].mxu0 %v1294
  %v1451 = vpop.f32.mrb[0].mxu0
  %v1452 = vadd.f32 0.0, %v1451
  %v1453 = vpop.f32.mrb[0].mxu0
  %1454 = vmatprep.mubr.f32.mxu0 0.0
  %1455 = vmatmul.mubr.f32.gmra.mrb[0].mxu0 %v1297
  %v1456 = vpop.f32.mrb[0].mxu0
  %v1457 = vadd.f32 0.0, %v1456
  %v1458 = vpop.f32.mrb[0].mxu0
  %1459 = vmatprep.mubr.f32.mxu0 0.0
  %1460 = vmatmul.mubr.f32.gmra.mrb[0].mxu0 %v1300
  %v1461 = vpop.f32.mrb[0].mxu0
  %v1462 = vadd.f32 0.0, %v1461
  %v1463 = vpop.f32.mrb[0].mxu0
  %1464 = vmatprep.mubr.f32.mxu0 0.0
  %1465 = vmatmul.mubr.f32.gmra.mrb[0].mxu0 %v1303
  %v1466 = vpop.f32.mrb[0].mxu0
  %v1467 = vadd.f32 0.0, %v1466
  %v1468 = vpop.f32.mrb[0].mxu0
  %1469 = vmatprep.mubr.f32.mxu0 0.0
  %1470 = vmatmul.mubr.f32.gmra.mrb[0].mxu0 %v1306
  %v1471 = vpop.f32.mrb[0].mxu0
  %v1472 = vadd.f32 0.0, %v1471
  %v1473 = vpop.f32.mrb[0].mxu0
  %1474 = vmatprep.mubr.f32.mxu0 0.0
  %1475 = vmatmul.mubr.f32.gmra.mrb[0].mxu0 %v1309
  %v1476 = vpop.f32.mrb[0].mxu0
  %v1477 = vadd.f32 0.0, %v1476
  %v1478 = vpop.f32.mrb[0].mxu0
  %1479 = vmatprep.mubr.f32.mxu0 0.0
  %1480 = vmatmul.mubr.f32.gmra.mrb[0].mxu0 %v1312
  %v1481 = vpop.f32.mrb[0].mxu0
  %v1482 = vadd.f32 0.0, %v1481
  %v1483 = vpop.f32.mrb[0].mxu0
  %1484 = vmatprep.mubr.f32.mxu0 0.0
  %1485 = vmatmul.mubr.f32.gmra.mrb[0].mxu0 %v1315
  %v1486 = vpop.f32.mrb[0].mxu0
  %v1487 = vadd.f32 0.0, %v1486
  %v1488 = vpop.f32.mrb[0].mxu0
  %1489 = vmatprep.mubr.f32.mxu0 0.0
  %1490 = vmatmul.mubr.f32.gmra.mrb[0].mxu0 %v1318
  %v1491 = vpop.f32.mrb[0].mxu0
  %v1492 = vadd.f32 0.0, %v1491
  %v1493 = vpop.f32.mrb[0].mxu0
  %1494 = vmatprep.mubr.f32.mxu0 0.0
  %1495 = vmatmul.mubr.f32.gmra.mrb[0].mxu0 %v1321
  %v1496 = vpop.f32.mrb[0].mxu0
  %v1497 = vadd.f32 0.0, %v1496
  %v1498 = vpop.f32.mrb[0].mxu0
  %1499 = vmatprep.mubr.f32.mxu0 0.0
  %1500 = vmatmul.mubr.f32.gmra.mrb[0].mxu0 %v1324
  %v1501 = vpop.f32.mrb[0].mxu0
  %v1502 = vadd.f32 0.0, %v1501
  %v1503 = vpop.f32.mrb[0].mxu0
  %1504 = vmatprep.mubr.f32.mxu0 0.0
  %1505 = vmatmul.mubr.f32.gmra.mrb[0].mxu0 %v1327
  %v1506 = vpop.f32.mrb[0].mxu0
  %v1507 = vadd.f32 0.0, %v1506
  %v1508 = vpop.f32.mrb[0].mxu0
  %1509 = vmatprep.mubr.f32.mxu0 0.0
  %1510 = vmatmul.mubr.f32.gmra.mrb[0].mxu0 %v1330
  %v1511 = vpop.f32.mrb[0].mxu0
  %v1512 = vadd.f32 0.0, %v1511
  %v1513 = vpop.f32.mrb[0].mxu0
  %1514 = vmatprep.mubr.f32.mxu0 0.0
  %1515 = vmatmul.mubr.f32.gmra.mrb[0].mxu0 %v1333
  %v1516 = vpop.f32.mrb[0].mxu0
  %v1517 = vadd.f32 0.0, %v1516
  %v1518 = vpop.f32.mrb[0].mxu0
  %1519 = vmatprep.mubr.f32.mxu0 0.0
  %1520 = vmatmul.mubr.f32.gmra.mrb[0].mxu0 %v1336
  %v1521 = vpop.f32.mrb[0].mxu0
  %v1522 = vadd.f32 0.0, %v1521
  %v1523 = vpop.f32.mrb[0].mxu0
  %1524 = vmatprep.mubr.f32.mxu0 0.0
  %1525 = vmatmul.mubr.f32.gmra.mrb[0].mxu0 %v1339
  %v1526 = vpop.f32.mrb[0].mxu0
  %v1527 = vadd.f32 0.0, %v1526
  %v1528 = vpop.f32.mrb[0].mxu0
  %1529 = vmatprep.mubr.f32.mxu0 0.0
  %1530 = vmatmul.mubr.f32.gmra.mrb[0].mxu0 %v1342
  %v1531 = vpop.f32.mrb[0].mxu0
  %v1532 = vadd.f32 0.0, %v1531
  %v1533 = vpop.f32.mrb[0].mxu0
  %1534 = vmatprep.mubr.f32.mxu0 0.0
  %1535 = vmatmul.mubr.f32.gmra.mrb[0].mxu0 %v1345
  %v1536 = vpop.f32.mrb[0].mxu0
  %v1537 = vadd.f32 0.0, %v1536
  %v1538 = vpop.f32.mrb[0].mxu0
  %1539 = vdwg.mxu0
  %v1540 = vadd.f32 %v1220, %v1417
  %v1541 = vadd.f32 %v1221, %v1422
  %v1542 = vadd.f32 %v1222, %v1427
  %v1543 = vadd.f32 %v1223, %v1432
  %v1544 = vadd.f32 %v1224, %v1437
  %v1545 = vadd.f32 %v1225, %v1442
  %v1546 = vadd.f32 %v1226, %v1447
  %v1547 = vadd.f32 %v1227, %v1452
  %v1548 = vadd.f32 %v1228, %v1457
  %v1549 = vadd.f32 %v1229, %v1462
  %v1550 = vadd.f32 %v1230, %v1467
  %v1551 = vadd.f32 %v1231, %v1472
  %v1552 = vadd.f32 %v1232, %v1477
  %v1553 = vadd.f32 %v1233, %v1482
  %v1554 = vadd.f32 %v1234, %v1487
  %v1555 = vadd.f32 %v1235, %v1492
  %v1556 = vadd.f32 %v1236, %v1497
  %v1557 = vadd.f32 %v1237, %v1502
  %v1558 = vadd.f32 %v1238, %v1507
  %v1559 = vadd.f32 %v1239, %v1512
  %v1560 = vadd.f32 %v1240, %v1517
  %v1561 = vadd.f32 %v1241, %v1522
  %v1562 = vadd.f32 %v1242, %v1527
  %v1563 = vadd.f32 %v1243, %v1532
  %v1564 = vadd.f32 %v1244, %v1537
  %v1565 = vld [vmem:[%s0 + $0xc] sm:$0xff]
  %v1566 = vld [vmem:[%s0 + $0x14] sm:$0xff]
  %v1567 = vld [vmem:[%s0 + $0x1c] sm:$0xff]
  %v1568 = vld [vmem:[%s0 + $0x24] sm:$0xff]
  %v1569 = vld [vmem:[%s0 + $0x2c] sm:$0xff]
  %v1570 = vld [vmem:[%s0 + $0x34] sm:$0xff]
  %v1571 = vld [vmem:[%s0 + $0x3c] sm:$0xff]
  %v1572 = vld [vmem:[%s0 + $0x44] sm:$0xff]
  %v1573 = vld [vmem:[%s0 + $0x4c] sm:$0xff]
  %v1574 = vld [vmem:[%s0 + $0x54] sm:$0xff]
  %v1575 = vld [vmem:[%s0 + $0x5c] sm:$0xff]
  %v1576 = vld [vmem:[%s0 + $0x64] sm:$0xff]
  %v1577 = vld [vmem:[%s0 + $0x6c] sm:$0xff]
  %v1578 = vld [vmem:[%s0 + $0x74] sm:$0xff]
  %v1579 = vld [vmem:[%s0 + $0x7c] sm:$0xff]
  %v1580 = vld [vmem:[%s0 + $0x84] sm:$0xff]
  %v1581 = vld [vmem:[%s0 + $0x8c] sm:$0xff]
  %v1582 = vld [vmem:[%s0 + $0x94] sm:$0xff]
  %v1583 = vld [vmem:[%s0 + $0x9c] sm:$0xff]
  %v1584 = vld [vmem:[%s0 + $0xa4] sm:$0xff]
  %v1585 = vld [vmem:[%s0 + $0xac] sm:$0xff]
  %v1586 = vld [vmem:[%s0 + $0xb4] sm:$0xff]
  %v1587 = vld [vmem:[%s0 + $0xbc] sm:$0xff]
  %v1588 = vld [vmem:[%s0 + $0xc4] sm:$0xff]
  %v1589 = vld [vmem:[%s0 + $0xcc] sm:$0xff]
  %s1590 = scalar_lea.vmem %s1, 20
  %v1591 = vld [vmem:[%s1590] sm:$0x7]
  %v1593 = vsel %vm67, %v1565, 0
  %v1596 = vsel %vm67, %v1566, 0
  %v1599 = vsel %vm67, %v1567, 0
  %v1602 = vsel %vm67, %v1568, 0
  %v1605 = vsel %vm67, %v1569, 0
  %v1608 = vsel %vm67, %v1570, 0
  %v1611 = vsel %vm67, %v1571, 0
  %v1614 = vsel %vm67, %v1572, 0
  %v1617 = vsel %vm67, %v1573, 0
  %v1620 = vsel %vm67, %v1574, 0
  %v1623 = vsel %vm67, %v1575, 0
  %v1626 = vsel %vm67, %v1576, 0
  %v1629 = vsel %vm67, %v1577, 0
  %v1632 = vsel %vm67, %v1578, 0
  %v1635 = vsel %vm67, %v1579, 0
  %v1638 = vsel %vm67, %v1580, 0
  %v1641 = vsel %vm67, %v1581, 0
  %v1644 = vsel %vm67, %v1582, 0
  %v1647 = vsel %vm67, %v1583, 0
  %v1650 = vsel %vm67, %v1584, 0
  %v1653 = vsel %vm67, %v1585, 0
  %v1656 = vsel %vm67, %v1586, 0
  %v1659 = vsel %vm67, %v1587, 0
  %v1662 = vsel %vm67, %v1588, 0
  %v1665 = vsel %vm67, %v1589, 0
  %v1668 = vsel %vm143, %v1591, 0
  %1670 = vmatprep.subr.mxu0 0.0
  %1671 = vmatpush1.msra.mxu0 %v1668
  %1672 = vmatprep.subr.mxu0 0.0
  %1673 = vmatpush1.msra.mxu0 0.0
  %1674 = vmatprep.subr.mxu0 0.0
  %1675 = vmatpush1.msra.mxu0 0.0
  %1676 = vmatprep.subr.mxu0 0.0
  %1677 = vmatpush1.msra.mxu0 0.0
  %1678 = vmatprep.subr.mxu0 0.0
  %1679 = vmatpush1.msra.mxu0 0.0
  %1680 = vmatprep.subr.mxu0 0.0
  %1681 = vmatpush1.msra.mxu0 0.0
  %1682 = vmatprep.subr.mxu0 0.0
  %1683 = vmatpush1.msra.mxu0 0.0
  %1684 = vmatprep.subr.mxu0 0.0
  %1685 = vmatpush1.msra.mxu0 0.0
  %1686 = vmatprep.subr.mxu0 0.0
  %1687 = vmatpush1.msra.mxu0 0.0
  %1688 = vmatprep.subr.mxu0 0.0
  %1689 = vmatpush1.msra.mxu0 0.0
  %1690 = vmatprep.subr.mxu0 0.0
  %1691 = vmatpush1.msra.mxu0 0.0
  %1692 = vmatprep.subr.mxu0 0.0
  %1693 = vmatpush1.msra.mxu0 0.0
  %1694 = vmatprep.subr.mxu0 0.0
  %1695 = vmatpush1.msra.mxu0 0.0
  %1696 = vmatprep.subr.mxu0 0.0
  %1697 = vmatpush1.msra.mxu0 0.0
  %1698 = vmatprep.subr.mxu0 0.0
  %1699 = vmatpush1.msra.mxu0 0.0
  %1700 = vmatprep.subr.mxu0 0.0
  %1701 = vmatpush1.msra.mxu0 0.0
  %1702 = vmatprep.subr.mxu0 0.0
  %1703 = vmatpush1.msra.mxu0 0.0
  %1704 = vmatprep.subr.mxu0 0.0
  %1705 = vmatpush1.msra.mxu0 0.0
  %1706 = vmatprep.subr.mxu0 0.0
  %1707 = vmatpush1.msra.mxu0 0.0
  %1708 = vmatprep.subr.mxu0 0.0
  %1709 = vmatpush1.msra.mxu0 0.0
  %1710 = vmatprep.subr.mxu0 0.0
  %1711 = vmatpush1.msra.mxu0 0.0
  %1712 = vmatprep.subr.mxu0 0.0
  %1713 = vmatpush1.msra.mxu0 0.0
  %1714 = vmatprep.subr.mxu0 0.0
  %1715 = vmatpush1.msra.mxu0 0.0
  %1716 = vmatprep.subr.mxu0 0.0
  %1717 = vmatpush1.msra.mxu0 0.0
  %1718 = vmatprep.subr.mxu0 0.0
  %1719 = vmatpush1.msra.mxu0 0.0
  %1720 = vmatprep.subr.mxu0 0.0
  %1721 = vmatpush1.msra.mxu0 0.0
  %1722 = vmatprep.subr.mxu0 0.0
  %1723 = vmatpush1.msra.mxu0 0.0
  %1724 = vmatprep.subr.mxu0 0.0
  %1725 = vmatpush1.msra.mxu0 0.0
  %1726 = vmatprep.subr.mxu0 0.0
  %1727 = vmatpush1.msra.mxu0 0.0
  %1728 = vmatprep.subr.mxu0 0.0
  %1729 = vmatpush1.msra.mxu0 0.0
  %1730 = vmatprep.subr.mxu0 0.0
  %1731 = vmatpush1.msra.mxu0 0.0
  %1732 = vmatprep.subr.mxu0 0.0
  %1733 = vmatpush1.msra.mxu0 0.0
  %1734 = vmatprep.mubr.f32.mxu0 0.0
  %1735 = vmatmul.mubr.f32.gmra.mrb[0].mxu0 %v1593
  %v1736 = vpop.f32.mrb[0].mxu0
  %v1737 = vadd.f32 0.0, %v1736
  %v1738 = vpop.f32.mrb[0].mxu0
  %1739 = vmatprep.mubr.f32.mxu0 0.0
  %1740 = vmatmul.mubr.f32.gmra.mrb[0].mxu0 %v1596
  %v1741 = vpop.f32.mrb[0].mxu0
  %v1742 = vadd.f32 0.0, %v1741
  %v1743 = vpop.f32.mrb[0].mxu0
  %1744 = vmatprep.mubr.f32.mxu0 0.0
  %1745 = vmatmul.mubr.f32.gmra.mrb[0].mxu0 %v1599
  %v1746 = vpop.f32.mrb[0].mxu0
  %v1747 = vadd.f32 0.0, %v1746
  %v1748 = vpop.f32.mrb[0].mxu0
  %1749 = vmatprep.mubr.f32.mxu0 0.0
  %1750 = vmatmul.mubr.f32.gmra.mrb[0].mxu0 %v1602
  %v1751 = vpop.f32.mrb[0].mxu0
  %v1752 = vadd.f32 0.0, %v1751
  %v1753 = vpop.f32.mrb[0].mxu0
  %1754 = vmatprep.mubr.f32.mxu0 0.0
  %1755 = vmatmul.mubr.f32.gmra.mrb[0].mxu0 %v1605
  %v1756 = vpop.f32.mrb[0].mxu0
  %v1757 = vadd.f32 0.0, %v1756
  %v1758 = vpop.f32.mrb[0].mxu0
  %1759 = vmatprep.mubr.f32.mxu0 0.0
  %1760 = vmatmul.mubr.f32.gmra.mrb[0].mxu0 %v1608
  %v1761 = vpop.f32.mrb[0].mxu0
  %v1762 = vadd.f32 0.0, %v1761
  %v1763 = vpop.f32.mrb[0].mxu0
  %1764 = vmatprep.mubr.f32.mxu0 0.0
  %1765 = vmatmul.mubr.f32.gmra.mrb[0].mxu0 %v1611
  %v1766 = vpop.f32.mrb[0].mxu0
  %v1767 = vadd.f32 0.0, %v1766
  %v1768 = vpop.f32.mrb[0].mxu0
  %1769 = vmatprep.mubr.f32.mxu0 0.0
  %1770 = vmatmul.mubr.f32.gmra.mrb[0].mxu0 %v1614
  %v1771 = vpop.f32.mrb[0].mxu0
  %v1772 = vadd.f32 0.0, %v1771
  %v1773 = vpop.f32.mrb[0].mxu0
  %1774 = vmatprep.mubr.f32.mxu0 0.0
  %1775 = vmatmul.mubr.f32.gmra.mrb[0].mxu0 %v1617
  %v1776 = vpop.f32.mrb[0].mxu0
  %v1777 = vadd.f32 0.0, %v1776
  %v1778 = vpop.f32.mrb[0].mxu0
  %1779 = vmatprep.mubr.f32.mxu0 0.0
  %1780 = vmatmul.mubr.f32.gmra.mrb[0].mxu0 %v1620
  %v1781 = vpop.f32.mrb[0].mxu0
  %v1782 = vadd.f32 0.0, %v1781
  %v1783 = vpop.f32.mrb[0].mxu0
  %1784 = vmatprep.mubr.f32.mxu0 0.0
  %1785 = vmatmul.mubr.f32.gmra.mrb[0].mxu0 %v1623
  %v1786 = vpop.f32.mrb[0].mxu0
  %v1787 = vadd.f32 0.0, %v1786
  %v1788 = vpop.f32.mrb[0].mxu0
  %1789 = vmatprep.mubr.f32.mxu0 0.0
  %1790 = vmatmul.mubr.f32.gmra.mrb[0].mxu0 %v1626
  %v1791 = vpop.f32.mrb[0].mxu0
  %v1792 = vadd.f32 0.0, %v1791
  %v1793 = vpop.f32.mrb[0].mxu0
  %1794 = vmatprep.mubr.f32.mxu0 0.0
  %1795 = vmatmul.mubr.f32.gmra.mrb[0].mxu0 %v1629
  %v1796 = vpop.f32.mrb[0].mxu0
  %v1797 = vadd.f32 0.0, %v1796
  %v1798 = vpop.f32.mrb[0].mxu0
  %1799 = vmatprep.mubr.f32.mxu0 0.0
  %1800 = vmatmul.mubr.f32.gmra.mrb[0].mxu0 %v1632
  %v1801 = vpop.f32.mrb[0].mxu0
  %v1802 = vadd.f32 0.0, %v1801
  %v1803 = vpop.f32.mrb[0].mxu0
  %1804 = vmatprep.mubr.f32.mxu0 0.0
  %1805 = vmatmul.mubr.f32.gmra.mrb[0].mxu0 %v1635
  %v1806 = vpop.f32.mrb[0].mxu0
  %v1807 = vadd.f32 0.0, %v1806
  %v1808 = vpop.f32.mrb[0].mxu0
  %1809 = vmatprep.mubr.f32.mxu0 0.0
  %1810 = vmatmul.mubr.f32.gmra.mrb[0].mxu0 %v1638
  %v1811 = vpop.f32.mrb[0].mxu0
  %v1812 = vadd.f32 0.0, %v1811
  %v1813 = vpop.f32.mrb[0].mxu0
  %1814 = vmatprep.mubr.f32.mxu0 0.0
  %1815 = vmatmul.mubr.f32.gmra.mrb[0].mxu0 %v1641
  %v1816 = vpop.f32.mrb[0].mxu0
  %v1817 = vadd.f32 0.0, %v1816
  %v1818 = vpop.f32.mrb[0].mxu0
  %1819 = vmatprep.mubr.f32.mxu0 0.0
  %1820 = vmatmul.mubr.f32.gmra.mrb[0].mxu0 %v1644
  %v1821 = vpop.f32.mrb[0].mxu0
  %v1822 = vadd.f32 0.0, %v1821
  %v1823 = vpop.f32.mrb[0].mxu0
  %1824 = vmatprep.mubr.f32.mxu0 0.0
  %1825 = vmatmul.mubr.f32.gmra.mrb[0].mxu0 %v1647
  %v1826 = vpop.f32.mrb[0].mxu0
  %v1827 = vadd.f32 0.0, %v1826
  %v1828 = vpop.f32.mrb[0].mxu0
  %1829 = vmatprep.mubr.f32.mxu0 0.0
  %1830 = vmatmul.mubr.f32.gmra.mrb[0].mxu0 %v1650
  %v1831 = vpop.f32.mrb[0].mxu0
  %v1832 = vadd.f32 0.0, %v1831
  %v1833 = vpop.f32.mrb[0].mxu0
  %1834 = vmatprep.mubr.f32.mxu0 0.0
  %1835 = vmatmul.mubr.f32.gmra.mrb[0].mxu0 %v1653
  %v1836 = vpop.f32.mrb[0].mxu0
  %v1837 = vadd.f32 0.0, %v1836
  %v1838 = vpop.f32.mrb[0].mxu0
  %1839 = vmatprep.mubr.f32.mxu0 0.0
  %1840 = vmatmul.mubr.f32.gmra.mrb[0].mxu0 %v1656
  %v1841 = vpop.f32.mrb[0].mxu0
  %v1842 = vadd.f32 0.0, %v1841
  %v1843 = vpop.f32.mrb[0].mxu0
  %1844 = vmatprep.mubr.f32.mxu0 0.0
  %1845 = vmatmul.mubr.f32.gmra.mrb[0].mxu0 %v1659
  %v1846 = vpop.f32.mrb[0].mxu0
  %v1847 = vadd.f32 0.0, %v1846
  %v1848 = vpop.f32.mrb[0].mxu0
  %1849 = vmatprep.mubr.f32.mxu0 0.0
  %1850 = vmatmul.mubr.f32.gmra.mrb[0].mxu0 %v1662
  %v1851 = vpop.f32.mrb[0].mxu0
  %v1852 = vadd.f32 0.0, %v1851
  %v1853 = vpop.f32.mrb[0].mxu0
  %1854 = vmatprep.mubr.f32.mxu0 0.0
  %1855 = vmatmul.mubr.f32.gmra.mrb[0].mxu0 %v1665
  %v1856 = vpop.f32.mrb[0].mxu0
  %v1857 = vadd.f32 0.0, %v1856
  %v1858 = vpop.f32.mrb[0].mxu0
  %1859 = vdwg.mxu0
  %v1860 = vadd.f32 %v1540, %v1737
  %v1861 = vadd.f32 %v1541, %v1742
  %v1862 = vadd.f32 %v1542, %v1747
  %v1863 = vadd.f32 %v1543, %v1752
  %v1864 = vadd.f32 %v1544, %v1757
  %v1865 = vadd.f32 %v1545, %v1762
  %v1866 = vadd.f32 %v1546, %v1767
  %v1867 = vadd.f32 %v1547, %v1772
  %v1868 = vadd.f32 %v1548, %v1777
  %v1869 = vadd.f32 %v1549, %v1782
  %v1870 = vadd.f32 %v1550, %v1787
  %v1871 = vadd.f32 %v1551, %v1792
  %v1872 = vadd.f32 %v1552, %v1797
  %v1873 = vadd.f32 %v1553, %v1802
  %v1874 = vadd.f32 %v1554, %v1807
  %v1875 = vadd.f32 %v1555, %v1812
  %v1876 = vadd.f32 %v1556, %v1817
  %v1877 = vadd.f32 %v1557, %v1822
  %v1878 = vadd.f32 %v1558, %v1827
  %v1879 = vadd.f32 %v1559, %v1832
  %v1880 = vadd.f32 %v1560, %v1837
  %v1881 = vadd.f32 %v1561, %v1842
  %v1882 = vadd.f32 %v1562, %v1847
  %v1883 = vadd.f32 %v1563, %v1852
  %v1884 = vadd.f32 %v1564, %v1857
  %v1885 = vld [vmem:[%s0 + $0x14] sm:$0xff]
  %v1886 = vld [vmem:[%s0 + $0x1c] sm:$0xff]
  %v1887 = vld [vmem:[%s0 + $0x24] sm:$0xff]
  %v1888 = vld [vmem:[%s0 + $0x2c] sm:$0xff]
  %v1889 = vld [vmem:[%s0 + $0x34] sm:$0xff]
  %v1890 = vld [vmem:[%s0 + $0x3c] sm:$0xff]
  %v1891 = vld [vmem:[%s0 + $0x44] sm:$0xff]
  %v1892 = vld [vmem:[%s0 + $0x4c] sm:$0xff]
  %v1893 = vld [vmem:[%s0 + $0x54] sm:$0xff]
  %v1894 = vld [vmem:[%s0 + $0x5c] sm:$0xff]
  %v1895 = vld [vmem:[%s0 + $0x64] sm:$0xff]
  %v1896 = vld [vmem:[%s0 + $0x6c] sm:$0xff]
  %v1897 = vld [vmem:[%s0 + $0x74] sm:$0xff]
  %v1898 = vld [vmem:[%s0 + $0x7c] sm:$0xff]
  %v1899 = vld [vmem:[%s0 + $0x84] sm:$0xff]
  %v1900 = vld [vmem:[%s0 + $0x8c] sm:$0xff]
  %v1901 = vld [vmem:[%s0 + $0x94] sm:$0xff]
  %v1902 = vld [vmem:[%s0 + $0x9c] sm:$0xff]
  %v1903 = vld [vmem:[%s0 + $0xa4] sm:$0xff]
  %v1904 = vld [vmem:[%s0 + $0xac] sm:$0xff]
  %v1905 = vld [vmem:[%s0 + $0xb4] sm:$0xff]
  %v1906 = vld [vmem:[%s0 + $0xbc] sm:$0xff]
  %v1907 = vld [vmem:[%s0 + $0xc4] sm:$0xff]
  %v1908 = vld [vmem:[%s0 + $0xcc] sm:$0xff]
  %v1909 = vld [vmem:[%s0 + $0xd4] sm:$0xff]
  %s1910 = scalar_lea.vmem %s1, 24
  %v1911 = vld [vmem:[%s1910] sm:$0x7]
  %v1913 = vsel %vm67, %v1885, 0
  %v1916 = vsel %vm67, %v1886, 0
  %v1919 = vsel %vm67, %v1887, 0
  %v1922 = vsel %vm67, %v1888, 0
  %v1925 = vsel %vm67, %v1889, 0
  %v1928 = vsel %vm67, %v1890, 0
  %v1931 = vsel %vm67, %v1891, 0
  %v1934 = vsel %vm67, %v1892, 0
  %v1937 = vsel %vm67, %v1893, 0
  %v1940 = vsel %vm67, %v1894, 0
  %v1943 = vsel %vm67, %v1895, 0
  %v1946 = vsel %vm67, %v1896, 0
  %v1949 = vsel %vm67, %v1897, 0
  %v1952 = vsel %vm67, %v1898, 0
  %v1955 = vsel %vm67, %v1899, 0
  %v1958 = vsel %vm67, %v1900, 0
  %v1961 = vsel %vm67, %v1901, 0
  %v1964 = vsel %vm67, %v1902, 0
  %v1967 = vsel %vm67, %v1903, 0
  %v1970 = vsel %vm67, %v1904, 0
  %v1973 = vsel %vm67, %v1905, 0
  %v1976 = vsel %vm67, %v1906, 0
  %v1979 = vsel %vm67, %v1907, 0
  %v1982 = vsel %vm67, %v1908, 0
  %v1985 = vsel %vm67, %v1909, 0
  %v1988 = vsel %vm143, %v1911, 0
  %1990 = vmatprep.subr.mxu0 0.0
  %1991 = vmatpush1.msra.mxu0 %v1988
  %1992 = vmatprep.subr.mxu0 0.0
  %1993 = vmatpush1.msra.mxu0 0.0
  %1994 = vmatprep.subr.mxu0 0.0
  %1995 = vmatpush1.msra.mxu0 0.0
  %1996 = vmatprep.subr.mxu0 0.0
  %1997 = vmatpush1.msra.mxu0 0.0
  %1998 = vmatprep.subr.mxu0 0.0
  %1999 = vmatpush1.msra.mxu0 0.0
  %2000 = vmatprep.subr.mxu0 0.0
  %2001 = vmatpush1.msra.mxu0 0.0
  %2002 = vmatprep.subr.mxu0 0.0
  %2003 = vmatpush1.msra.mxu0 0.0
  %2004 = vmatprep.subr.mxu0 0.0
  %2005 = vmatpush1.msra.mxu0 0.0
  %2006 = vmatprep.subr.mxu0 0.0
  %2007 = vmatpush1.msra.mxu0 0.0
  %2008 = vmatprep.subr.mxu0 0.0
  %2009 = vmatpush1.msra.mxu0 0.0
  %2010 = vmatprep.subr.mxu0 0.0
  %2011 = vmatpush1.msra.mxu0 0.0
  %2012 = vmatprep.subr.mxu0 0.0
  %2013 = vmatpush1.msra.mxu0 0.0
  %2014 = vmatprep.subr.mxu0 0.0
  %2015 = vmatpush1.msra.mxu0 0.0
  %2016 = vmatprep.subr.mxu0 0.0
  %2017 = vmatpush1.msra.mxu0 0.0
  %2018 = vmatprep.subr.mxu0 0.0
  %2019 = vmatpush1.msra.mxu0 0.0
  %2020 = vmatprep.subr.mxu0 0.0
  %2021 = vmatpush1.msra.mxu0 0.0
  %2022 = vmatprep.subr.mxu0 0.0
  %2023 = vmatpush1.msra.mxu0 0.0
  %2024 = vmatprep.subr.mxu0 0.0
  %2025 = vmatpush1.msra.mxu0 0.0
  %2026 = vmatprep.subr.mxu0 0.0
  %2027 = vmatpush1.msra.mxu0 0.0
  %2028 = vmatprep.subr.mxu0 0.0
  %2029 = vmatpush1.msra.mxu0 0.0
  %2030 = vmatprep.subr.mxu0 0.0
  %2031 = vmatpush1.msra.mxu0 0.0
  %2032 = vmatprep.subr.mxu0 0.0
  %2033 = vmatpush1.msra.mxu0 0.0
  %2034 = vmatprep.subr.mxu0 0.0
  %2035 = vmatpush1.msra.mxu0 0.0
  %2036 = vmatprep.subr.mxu0 0.0
  %2037 = vmatpush1.msra.mxu0 0.0
  %2038 = vmatprep.subr.mxu0 0.0
  %2039 = vmatpush1.msra.mxu0 0.0
  %2040 = vmatprep.subr.mxu0 0.0
  %2041 = vmatpush1.msra.mxu0 0.0
  %2042 = vmatprep.subr.mxu0 0.0
  %2043 = vmatpush1.msra.mxu0 0.0
  %2044 = vmatprep.subr.mxu0 0.0
  %2045 = vmatpush1.msra.mxu0 0.0
  %2046 = vmatprep.subr.mxu0 0.0
  %2047 = vmatpush1.msra.mxu0 0.0
  %2048 = vmatprep.subr.mxu0 0.0
  %2049 = vmatpush1.msra.mxu0 0.0
  %2050 = vmatprep.subr.mxu0 0.0
  %2051 = vmatpush1.msra.mxu0 0.0
  %2052 = vmatprep.subr.mxu0 0.0
  %2053 = vmatpush1.msra.mxu0 0.0
  %2054 = vmatprep.mubr.f32.mxu0 0.0
  %2055 = vmatmul.mubr.f32.gmra.mrb[0].mxu0 %v1913
  %v2056 = vpop.f32.mrb[0].mxu0
  %v2057 = vadd.f32 0.0, %v2056
  %v2058 = vpop.f32.mrb[0].mxu0
  %2059 = vmatprep.mubr.f32.mxu0 0.0
  %2060 = vmatmul.mubr.f32.gmra.mrb[0].mxu0 %v1916
  %v2061 = vpop.f32.mrb[0].mxu0
  %v2062 = vadd.f32 0.0, %v2061
  %v2063 = vpop.f32.mrb[0].mxu0
  %2064 = vmatprep.mubr.f32.mxu0 0.0
  %2065 = vmatmul.mubr.f32.gmra.mrb[0].mxu0 %v1919
  %v2066 = vpop.f32.mrb[0].mxu0
  %v2067 = vadd.f32 0.0, %v2066
  %v2068 = vpop.f32.mrb[0].mxu0
  %2069 = vmatprep.mubr.f32.mxu0 0.0
  %2070 = vmatmul.mubr.f32.gmra.mrb[0].mxu0 %v1922
  %v2071 = vpop.f32.mrb[0].mxu0
  %v2072 = vadd.f32 0.0, %v2071
  %v2073 = vpop.f32.mrb[0].mxu0
  %2074 = vmatprep.mubr.f32.mxu0 0.0
  %2075 = vmatmul.mubr.f32.gmra.mrb[0].mxu0 %v1925
  %v2076 = vpop.f32.mrb[0].mxu0
  %v2077 = vadd.f32 0.0, %v2076
  %v2078 = vpop.f32.mrb[0].mxu0
  %2079 = vmatprep.mubr.f32.mxu0 0.0
  %2080 = vmatmul.mubr.f32.gmra.mrb[0].mxu0 %v1928
  %v2081 = vpop.f32.mrb[0].mxu0
  %v2082 = vadd.f32 0.0, %v2081
  %v2083 = vpop.f32.mrb[0].mxu0
  %2084 = vmatprep.mubr.f32.mxu0 0.0
  %2085 = vmatmul.mubr.f32.gmra.mrb[0].mxu0 %v1931
  %v2086 = vpop.f32.mrb[0].mxu0
  %v2087 = vadd.f32 0.0, %v2086
  %v2088 = vpop.f32.mrb[0].mxu0
  %2089 = vmatprep.mubr.f32.mxu0 0.0
  %2090 = vmatmul.mubr.f32.gmra.mrb[0].mxu0 %v1934
  %v2091 = vpop.f32.mrb[0].mxu0
  %v2092 = vadd.f32 0.0, %v2091
  %v2093 = vpop.f32.mrb[0].mxu0
  %2094 = vmatprep.mubr.f32.mxu0 0.0
  %2095 = vmatmul.mubr.f32.gmra.mrb[0].mxu0 %v1937
  %v2096 = vpop.f32.mrb[0].mxu0
  %v2097 = vadd.f32 0.0, %v2096
  %v2098 = vpop.f32.mrb[0].mxu0
  %2099 = vmatprep.mubr.f32.mxu0 0.0
  %2100 = vmatmul.mubr.f32.gmra.mrb[0].mxu0 %v1940
  %v2101 = vpop.f32.mrb[0].mxu0
  %v2102 = vadd.f32 0.0, %v2101
  %v2103 = vpop.f32.mrb[0].mxu0
  %2104 = vmatprep.mubr.f32.mxu0 0.0
  %2105 = vmatmul.mubr.f32.gmra.mrb[0].mxu0 %v1943
  %v2106 = vpop.f32.mrb[0].mxu0
  %v2107 = vadd.f32 0.0, %v2106
  %v2108 = vpop.f32.mrb[0].mxu0
  %2109 = vmatprep.mubr.f32.mxu0 0.0
  %2110 = vmatmul.mubr.f32.gmra.mrb[0].mxu0 %v1946
  %v2111 = vpop.f32.mrb[0].mxu0
  %v2112 = vadd.f32 0.0, %v2111
  %v2113 = vpop.f32.mrb[0].mxu0
  %2114 = vmatprep.mubr.f32.mxu0 0.0
  %2115 = vmatmul.mubr.f32.gmra.mrb[0].mxu0 %v1949
  %v2116 = vpop.f32.mrb[0].mxu0
  %v2117 = vadd.f32 0.0, %v2116
  %v2118 = vpop.f32.mrb[0].mxu0
  %2119 = vmatprep.mubr.f32.mxu0 0.0
  %2120 = vmatmul.mubr.f32.gmra.mrb[0].mxu0 %v1952
  %v2121 = vpop.f32.mrb[0].mxu0
  %v2122 = vadd.f32 0.0, %v2121
  %v2123 = vpop.f32.mrb[0].mxu0
  %2124 = vmatprep.mubr.f32.mxu0 0.0
  %2125 = vmatmul.mubr.f32.gmra.mrb[0].mxu0 %v1955
  %v2126 = vpop.f32.mrb[0].mxu0
  %v2127 = vadd.f32 0.0, %v2126
  %v2128 = vpop.f32.mrb[0].mxu0
  %2129 = vmatprep.mubr.f32.mxu0 0.0
  %2130 = vmatmul.mubr.f32.gmra.mrb[0].mxu0 %v1958
  %v2131 = vpop.f32.mrb[0].mxu0
  %v2132 = vadd.f32 0.0, %v2131
  %v2133 = vpop.f32.mrb[0].mxu0
  %2134 = vmatprep.mubr.f32.mxu0 0.0
  %2135 = vmatmul.mubr.f32.gmra.mrb[0].mxu0 %v1961
  %v2136 = vpop.f32.mrb[0].mxu0
  %v2137 = vadd.f32 0.0, %v2136
  %v2138 = vpop.f32.mrb[0].mxu0
  %2139 = vmatprep.mubr.f32.mxu0 0.0
  %2140 = vmatmul.mubr.f32.gmra.mrb[0].mxu0 %v1964
  %v2141 = vpop.f32.mrb[0].mxu0
  %v2142 = vadd.f32 0.0, %v2141
  %v2143 = vpop.f32.mrb[0].mxu0
  %2144 = vmatprep.mubr.f32.mxu0 0.0
  %2145 = vmatmul.mubr.f32.gmra.mrb[0].mxu0 %v1967
  %v2146 = vpop.f32.mrb[0].mxu0
  %v2147 = vadd.f32 0.0, %v2146
  %v2148 = vpop.f32.mrb[0].mxu0
  %2149 = vmatprep.mubr.f32.mxu0 0.0
  %2150 = vmatmul.mubr.f32.gmra.mrb[0].mxu0 %v1970
  %v2151 = vpop.f32.mrb[0].mxu0
  %v2152 = vadd.f32 0.0, %v2151
  %v2153 = vpop.f32.mrb[0].mxu0
  %2154 = vmatprep.mubr.f32.mxu0 0.0
  %2155 = vmatmul.mubr.f32.gmra.mrb[0].mxu0 %v1973
  %v2156 = vpop.f32.mrb[0].mxu0
  %v2157 = vadd.f32 0.0, %v2156
  %v2158 = vpop.f32.mrb[0].mxu0
  %2159 = vmatprep.mubr.f32.mxu0 0.0
  %2160 = vmatmul.mubr.f32.gmra.mrb[0].mxu0 %v1976
  %v2161 = vpop.f32.mrb[0].mxu0
  %v2162 = vadd.f32 0.0, %v2161
  %v2163 = vpop.f32.mrb[0].mxu0
  %2164 = vmatprep.mubr.f32.mxu0 0.0
  %2165 = vmatmul.mubr.f32.gmra.mrb[0].mxu0 %v1979
  %v2166 = vpop.f32.mrb[0].mxu0
  %v2167 = vadd.f32 0.0, %v2166
  %v2168 = vpop.f32.mrb[0].mxu0
  %2169 = vmatprep.mubr.f32.mxu0 0.0
  %2170 = vmatmul.mubr.f32.gmra.mrb[0].mxu0 %v1982
  %v2171 = vpop.f32.mrb[0].mxu0
  %v2172 = vadd.f32 0.0, %v2171
  %v2173 = vpop.f32.mrb[0].mxu0
  %2174 = vmatprep.mubr.f32.mxu0 0.0
  %2175 = vmatmul.mubr.f32.gmra.mrb[0].mxu0 %v1985
  %v2176 = vpop.f32.mrb[0].mxu0
  %v2177 = vadd.f32 0.0, %v2176
  %v2178 = vpop.f32.mrb[0].mxu0
  %2179 = vdwg.mxu0
  %v2180 = vadd.f32 %v1860, %v2057
  %v2181 = vadd.f32 %v1861, %v2062
  %v2182 = vadd.f32 %v1862, %v2067
  %v2183 = vadd.f32 %v1863, %v2072
  %v2184 = vadd.f32 %v1864, %v2077
  %v2185 = vadd.f32 %v1865, %v2082
  %v2186 = vadd.f32 %v1866, %v2087
  %v2187 = vadd.f32 %v1867, %v2092
  %v2188 = vadd.f32 %v1868, %v2097
  %v2189 = vadd.f32 %v1869, %v2102
  %v2190 = vadd.f32 %v1870, %v2107
  %v2191 = vadd.f32 %v1871, %v2112
  %v2192 = vadd.f32 %v1872, %v2117
  %v2193 = vadd.f32 %v1873, %v2122
  %v2194 = vadd.f32 %v1874, %v2127
  %v2195 = vadd.f32 %v1875, %v2132
  %v2196 = vadd.f32 %v1876, %v2137
  %v2197 = vadd.f32 %v1877, %v2142
  %v2198 = vadd.f32 %v1878, %v2147
  %v2199 = vadd.f32 %v1879, %v2152
  %v2200 = vadd.f32 %v1880, %v2157
  %v2201 = vadd.f32 %v1881, %v2162
  %v2202 = vadd.f32 %v1882, %v2167
  %v2203 = vadd.f32 %v1883, %v2172
  %v2204 = vadd.f32 %v1884, %v2177
  %v2205 = vld [vmem:[%s0 + $0x15] sm:$0xff]
  %v2206 = vld [vmem:[%s0 + $0x1d] sm:$0xff]
  %v2207 = vld [vmem:[%s0 + $0x25] sm:$0xff]
  %v2208 = vld [vmem:[%s0 + $0x2d] sm:$0xff]
  %v2209 = vld [vmem:[%s0 + $0x35] sm:$0xff]
  %v2210 = vld [vmem:[%s0 + $0x3d] sm:$0xff]
  %v2211 = vld [vmem:[%s0 + $0x45] sm:$0xff]
  %v2212 = vld [vmem:[%s0 + $0x4d] sm:$0xff]
  %v2213 = vld [vmem:[%s0 + $0x55] sm:$0xff]
  %v2214 = vld [vmem:[%s0 + $0x5d] sm:$0xff]
  %v2215 = vld [vmem:[%s0 + $0x65] sm:$0xff]
  %v2216 = vld [vmem:[%s0 + $0x6d] sm:$0xff]
  %v2217 = vld [vmem:[%s0 + $0x75] sm:$0xff]
  %v2218 = vld [vmem:[%s0 + $0x7d] sm:$0xff]
  %v2219 = vld [vmem:[%s0 + $0x85] sm:$0xff]
  %v2220 = vld [vmem:[%s0 + $0x8d] sm:$0xff]
  %v2221 = vld [vmem:[%s0 + $0x95] sm:$0xff]
  %v2222 = vld [vmem:[%s0 + $0x9d] sm:$0xff]
  %v2223 = vld [vmem:[%s0 + $0xa5] sm:$0xff]
  %v2224 = vld [vmem:[%s0 + $0xad] sm:$0xff]
  %v2225 = vld [vmem:[%s0 + $0xb5] sm:$0xff]
  %v2226 = vld [vmem:[%s0 + $0xbd] sm:$0xff]
  %v2227 = vld [vmem:[%s0 + $0xc5] sm:$0xff]
  %v2228 = vld [vmem:[%s0 + $0xcd] sm:$0xff]
  %v2229 = vld [vmem:[%s0 + $0xd5] sm:$0xff]
  %s2230 = scalar_lea.vmem %s1, 28
  %v2231 = vld [vmem:[%s2230] sm:$0x7]
  %v2233 = vsel %vm67, %v2205, 0
  %v2236 = vsel %vm67, %v2206, 0
  %v2239 = vsel %vm67, %v2207, 0
  %v2242 = vsel %vm67, %v2208, 0
  %v2245 = vsel %vm67, %v2209, 0
  %v2248 = vsel %vm67, %v2210, 0
  %v2251 = vsel %vm67, %v2211, 0
  %v2254 = vsel %vm67, %v2212, 0
  %v2257 = vsel %vm67, %v2213, 0
  %v2260 = vsel %vm67, %v2214, 0
  %v2263 = vsel %vm67, %v2215, 0
  %v2266 = vsel %vm67, %v2216, 0
  %v2269 = vsel %vm67, %v2217, 0
  %v2272 = vsel %vm67, %v2218, 0
  %v2275 = vsel %vm67, %v2219, 0
  %v2278 = vsel %vm67, %v2220, 0
  %v2281 = vsel %vm67, %v2221, 0
  %v2284 = vsel %vm67, %v2222, 0
  %v2287 = vsel %vm67, %v2223, 0
  %v2290 = vsel %vm67, %v2224, 0
  %v2293 = vsel %vm67, %v2225, 0
  %v2296 = vsel %vm67, %v2226, 0
  %v2299 = vsel %vm67, %v2227, 0
  %v2302 = vsel %vm67, %v2228, 0
  %v2305 = vsel %vm67, %v2229, 0
  %v2308 = vsel %vm143, %v2231, 0
  %2310 = vmatprep.subr.mxu0 0.0
  %2311 = vmatpush1.msra.mxu0 %v2308
  %2312 = vmatprep.subr.mxu0 0.0
  %2313 = vmatpush1.msra.mxu0 0.0
  %2314 = vmatprep.subr.mxu0 0.0
  %2315 = vmatpush1.msra.mxu0 0.0
  %2316 = vmatprep.subr.mxu0 0.0
  %2317 = vmatpush1.msra.mxu0 0.0
  %2318 = vmatprep.subr.mxu0 0.0
  %2319 = vmatpush1.msra.mxu0 0.0
  %2320 = vmatprep.subr.mxu0 0.0
  %2321 = vmatpush1.msra.mxu0 0.0
  %2322 = vmatprep.subr.mxu0 0.0
  %2323 = vmatpush1.msra.mxu0 0.0
  %2324 = vmatprep.subr.mxu0 0.0
  %2325 = vmatpush1.msra.mxu0 0.0
  %2326 = vmatprep.subr.mxu0 0.0
  %2327 = vmatpush1.msra.mxu0 0.0
  %2328 = vmatprep.subr.mxu0 0.0
  %2329 = vmatpush1.msra.mxu0 0.0
  %2330 = vmatprep.subr.mxu0 0.0
  %2331 = vmatpush1.msra.mxu0 0.0
  %2332 = vmatprep.subr.mxu0 0.0
  %2333 = vmatpush1.msra.mxu0 0.0
  %2334 = vmatprep.subr.mxu0 0.0
  %2335 = vmatpush1.msra.mxu0 0.0
  %2336 = vmatprep.subr.mxu0 0.0
  %2337 = vmatpush1.msra.mxu0 0.0
  %2338 = vmatprep.subr.mxu0 0.0
  %2339 = vmatpush1.msra.mxu0 0.0
  %2340 = vmatprep.subr.mxu0 0.0
  %2341 = vmatpush1.msra.mxu0 0.0
  %2342 = vmatprep.subr.mxu0 0.0
  %2343 = vmatpush1.msra.mxu0 0.0
  %2344 = vmatprep.subr.mxu0 0.0
  %2345 = vmatpush1.msra.mxu0 0.0
  %2346 = vmatprep.subr.mxu0 0.0
  %2347 = vmatpush1.msra.mxu0 0.0
  %2348 = vmatprep.subr.mxu0 0.0
  %2349 = vmatpush1.msra.mxu0 0.0
  %2350 = vmatprep.subr.mxu0 0.0
  %2351 = vmatpush1.msra.mxu0 0.0
  %2352 = vmatprep.subr.mxu0 0.0
  %2353 = vmatpush1.msra.mxu0 0.0
  %2354 = vmatprep.subr.mxu0 0.0
  %2355 = vmatpush1.msra.mxu0 0.0
  %2356 = vmatprep.subr.mxu0 0.0
  %2357 = vmatpush1.msra.mxu0 0.0
  %2358 = vmatprep.subr.mxu0 0.0
  %2359 = vmatpush1.msra.mxu0 0.0
  %2360 = vmatprep.subr.mxu0 0.0
  %2361 = vmatpush1.msra.mxu0 0.0
  %2362 = vmatprep.subr.mxu0 0.0
  %2363 = vmatpush1.msra.mxu0 0.0
  %2364 = vmatprep.subr.mxu0 0.0
  %2365 = vmatpush1.msra.mxu0 0.0
  %2366 = vmatprep.subr.mxu0 0.0
  %2367 = vmatpush1.msra.mxu0 0.0
  %2368 = vmatprep.subr.mxu0 0.0
  %2369 = vmatpush1.msra.mxu0 0.0
  %2370 = vmatprep.subr.mxu0 0.0
  %2371 = vmatpush1.msra.mxu0 0.0
  %2372 = vmatprep.subr.mxu0 0.0
  %2373 = vmatpush1.msra.mxu0 0.0
  %2374 = vmatprep.mubr.f32.mxu0 0.0
  %2375 = vmatmul.mubr.f32.gmra.mrb[0].mxu0 %v2233
  %v2376 = vpop.f32.mrb[0].mxu0
  %v2377 = vadd.f32 0.0, %v2376
  %v2378 = vpop.f32.mrb[0].mxu0
  %2379 = vmatprep.mubr.f32.mxu0 0.0
  %2380 = vmatmul.mubr.f32.gmra.mrb[0].mxu0 %v2236
  %v2381 = vpop.f32.mrb[0].mxu0
  %v2382 = vadd.f32 0.0, %v2381
  %v2383 = vpop.f32.mrb[0].mxu0
  %2384 = vmatprep.mubr.f32.mxu0 0.0
  %2385 = vmatmul.mubr.f32.gmra.mrb[0].mxu0 %v2239
  %v2386 = vpop.f32.mrb[0].mxu0
  %v2387 = vadd.f32 0.0, %v2386
  %v2388 = vpop.f32.mrb[0].mxu0
  %2389 = vmatprep.mubr.f32.mxu0 0.0
  %2390 = vmatmul.mubr.f32.gmra.mrb[0].mxu0 %v2242
  %v2391 = vpop.f32.mrb[0].mxu0
  %v2392 = vadd.f32 0.0, %v2391
  %v2393 = vpop.f32.mrb[0].mxu0
  %2394 = vmatprep.mubr.f32.mxu0 0.0
  %2395 = vmatmul.mubr.f32.gmra.mrb[0].mxu0 %v2245
  %v2396 = vpop.f32.mrb[0].mxu0
  %v2397 = vadd.f32 0.0, %v2396
  %v2398 = vpop.f32.mrb[0].mxu0
  %2399 = vmatprep.mubr.f32.mxu0 0.0
  %2400 = vmatmul.mubr.f32.gmra.mrb[0].mxu0 %v2248
  %v2401 = vpop.f32.mrb[0].mxu0
  %v2402 = vadd.f32 0.0, %v2401
  %v2403 = vpop.f32.mrb[0].mxu0
  %2404 = vmatprep.mubr.f32.mxu0 0.0
  %2405 = vmatmul.mubr.f32.gmra.mrb[0].mxu0 %v2251
  %v2406 = vpop.f32.mrb[0].mxu0
  %v2407 = vadd.f32 0.0, %v2406
  %v2408 = vpop.f32.mrb[0].mxu0
  %2409 = vmatprep.mubr.f32.mxu0 0.0
  %2410 = vmatmul.mubr.f32.gmra.mrb[0].mxu0 %v2254
  %v2411 = vpop.f32.mrb[0].mxu0
  %v2412 = vadd.f32 0.0, %v2411
  %v2413 = vpop.f32.mrb[0].mxu0
  %2414 = vmatprep.mubr.f32.mxu0 0.0
  %2415 = vmatmul.mubr.f32.gmra.mrb[0].mxu0 %v2257
  %v2416 = vpop.f32.mrb[0].mxu0
  %v2417 = vadd.f32 0.0, %v2416
  %v2418 = vpop.f32.mrb[0].mxu0
  %2419 = vmatprep.mubr.f32.mxu0 0.0
  %2420 = vmatmul.mubr.f32.gmra.mrb[0].mxu0 %v2260
  %v2421 = vpop.f32.mrb[0].mxu0
  %v2422 = vadd.f32 0.0, %v2421
  %v2423 = vpop.f32.mrb[0].mxu0
  %2424 = vmatprep.mubr.f32.mxu0 0.0
  %2425 = vmatmul.mubr.f32.gmra.mrb[0].mxu0 %v2263
  %v2426 = vpop.f32.mrb[0].mxu0
  %v2427 = vadd.f32 0.0, %v2426
  %v2428 = vpop.f32.mrb[0].mxu0
  %2429 = vmatprep.mubr.f32.mxu0 0.0
  %2430 = vmatmul.mubr.f32.gmra.mrb[0].mxu0 %v2266
  %v2431 = vpop.f32.mrb[0].mxu0
  %v2432 = vadd.f32 0.0, %v2431
  %v2433 = vpop.f32.mrb[0].mxu0
  %2434 = vmatprep.mubr.f32.mxu0 0.0
  %2435 = vmatmul.mubr.f32.gmra.mrb[0].mxu0 %v2269
  %v2436 = vpop.f32.mrb[0].mxu0
  %v2437 = vadd.f32 0.0, %v2436
  %v2438 = vpop.f32.mrb[0].mxu0
  %2439 = vmatprep.mubr.f32.mxu0 0.0
  %2440 = vmatmul.mubr.f32.gmra.mrb[0].mxu0 %v2272
  %v2441 = vpop.f32.mrb[0].mxu0
  %v2442 = vadd.f32 0.0, %v2441
  %v2443 = vpop.f32.mrb[0].mxu0
  %2444 = vmatprep.mubr.f32.mxu0 0.0
  %2445 = vmatmul.mubr.f32.gmra.mrb[0].mxu0 %v2275
  %v2446 = vpop.f32.mrb[0].mxu0
  %v2447 = vadd.f32 0.0, %v2446
  %v2448 = vpop.f32.mrb[0].mxu0
  %2449 = vmatprep.mubr.f32.mxu0 0.0
  %2450 = vmatmul.mubr.f32.gmra.mrb[0].mxu0 %v2278
  %v2451 = vpop.f32.mrb[0].mxu0
  %v2452 = vadd.f32 0.0, %v2451
  %v2453 = vpop.f32.mrb[0].mxu0
  %2454 = vmatprep.mubr.f32.mxu0 0.0
  %2455 = vmatmul.mubr.f32.gmra.mrb[0].mxu0 %v2281
  %v2456 = vpop.f32.mrb[0].mxu0
  %v2457 = vadd.f32 0.0, %v2456
  %v2458 = vpop.f32.mrb[0].mxu0
  %2459 = vmatprep.mubr.f32.mxu0 0.0
  %2460 = vmatmul.mubr.f32.gmra.mrb[0].mxu0 %v2284
  %v2461 = vpop.f32.mrb[0].mxu0
  %v2462 = vadd.f32 0.0, %v2461
  %v2463 = vpop.f32.mrb[0].mxu0
  %2464 = vmatprep.mubr.f32.mxu0 0.0
  %2465 = vmatmul.mubr.f32.gmra.mrb[0].mxu0 %v2287
  %v2466 = vpop.f32.mrb[0].mxu0
  %v2467 = vadd.f32 0.0, %v2466
  %v2468 = vpop.f32.mrb[0].mxu0
  %2469 = vmatprep.mubr.f32.mxu0 0.0
  %2470 = vmatmul.mubr.f32.gmra.mrb[0].mxu0 %v2290
  %v2471 = vpop.f32.mrb[0].mxu0
  %v2472 = vadd.f32 0.0, %v2471
  %v2473 = vpop.f32.mrb[0].mxu0
  %2474 = vmatprep.mubr.f32.mxu0 0.0
  %2475 = vmatmul.mubr.f32.gmra.mrb[0].mxu0 %v2293
  %v2476 = vpop.f32.mrb[0].mxu0
  %v2477 = vadd.f32 0.0, %v2476
  %v2478 = vpop.f32.mrb[0].mxu0
  %2479 = vmatprep.mubr.f32.mxu0 0.0
  %2480 = vmatmul.mubr.f32.gmra.mrb[0].mxu0 %v2296
  %v2481 = vpop.f32.mrb[0].mxu0
  %v2482 = vadd.f32 0.0, %v2481
  %v2483 = vpop.f32.mrb[0].mxu0
  %2484 = vmatprep.mubr.f32.mxu0 0.0
  %2485 = vmatmul.mubr.f32.gmra.mrb[0].mxu0 %v2299
  %v2486 = vpop.f32.mrb[0].mxu0
  %v2487 = vadd.f32 0.0, %v2486
  %v2488 = vpop.f32.mrb[0].mxu0
  %2489 = vmatprep.mubr.f32.mxu0 0.0
  %2490 = vmatmul.mubr.f32.gmra.mrb[0].mxu0 %v2302
  %v2491 = vpop.f32.mrb[0].mxu0
  %v2492 = vadd.f32 0.0, %v2491
  %v2493 = vpop.f32.mrb[0].mxu0
  %2494 = vmatprep.mubr.f32.mxu0 0.0
  %2495 = vmatmul.mubr.f32.gmra.mrb[0].mxu0 %v2305
  %v2496 = vpop.f32.mrb[0].mxu0
  %v2497 = vadd.f32 0.0, %v2496
  %v2498 = vpop.f32.mrb[0].mxu0
  %2499 = vdwg.mxu0
  %v2500 = vadd.f32 %v2180, %v2377
  %v2501 = vadd.f32 %v2181, %v2382
  %v2502 = vadd.f32 %v2182, %v2387
  %v2503 = vadd.f32 %v2183, %v2392
  %v2504 = vadd.f32 %v2184, %v2397
  %v2505 = vadd.f32 %v2185, %v2402
  %v2506 = vadd.f32 %v2186, %v2407
  %v2507 = vadd.f32 %v2187, %v2412
  %v2508 = vadd.f32 %v2188, %v2417
  %v2509 = vadd.f32 %v2189, %v2422
  %v2510 = vadd.f32 %v2190, %v2427
  %v2511 = vadd.f32 %v2191, %v2432
  %v2512 = vadd.f32 %v2192, %v2437
  %v2513 = vadd.f32 %v2193, %v2442
  %v2514 = vadd.f32 %v2194, %v2447
  %v2515 = vadd.f32 %v2195, %v2452
  %v2516 = vadd.f32 %v2196, %v2457
  %v2517 = vadd.f32 %v2197, %v2462
  %v2518 = vadd.f32 %v2198, %v2467
  %v2519 = vadd.f32 %v2199, %v2472
  %v2520 = vadd.f32 %v2200, %v2477
  %v2521 = vadd.f32 %v2201, %v2482
  %v2522 = vadd.f32 %v2202, %v2487
  %v2523 = vadd.f32 %v2203, %v2492
  %v2524 = vadd.f32 %v2204, %v2497
  %v2525 = vld [vmem:[%s0 + $0x16] sm:$0xff]
  %v2526 = vld [vmem:[%s0 + $0x1e] sm:$0xff]
  %v2527 = vld [vmem:[%s0 + $0x26] sm:$0xff]
  %v2528 = vld [vmem:[%s0 + $0x2e] sm:$0xff]
  %v2529 = vld [vmem:[%s0 + $0x36] sm:$0xff]
  %v2530 = vld [vmem:[%s0 + $0x3e] sm:$0xff]
  %v2531 = vld [vmem:[%s0 + $0x46] sm:$0xff]
  %v2532 = vld [vmem:[%s0 + $0x4e] sm:$0xff]
  %v2533 = vld [vmem:[%s0 + $0x56] sm:$0xff]
  %v2534 = vld [vmem:[%s0 + $0x5e] sm:$0xff]
  %v2535 = vld [vmem:[%s0 + $0x66] sm:$0xff]
  %v2536 = vld [vmem:[%s0 + $0x6e] sm:$0xff]
  %v2537 = vld [vmem:[%s0 + $0x76] sm:$0xff]
  %v2538 = vld [vmem:[%s0 + $0x7e] sm:$0xff]
  %v2539 = vld [vmem:[%s0 + $0x86] sm:$0xff]
  %v2540 = vld [vmem:[%s0 + $0x8e] sm:$0xff]
  %v2541 = vld [vmem:[%s0 + $0x96] sm:$0xff]
  %v2542 = vld [vmem:[%s0 + $0x9e] sm:$0xff]
  %v2543 = vld [vmem:[%s0 + $0xa6] sm:$0xff]
  %v2544 = vld [vmem:[%s0 + $0xae] sm:$0xff]
  %v2545 = vld [vmem:[%s0 + $0xb6] sm:$0xff]
  %v2546 = vld [vmem:[%s0 + $0xbe] sm:$0xff]
  %v2547 = vld [vmem:[%s0 + $0xc6] sm:$0xff]
  %v2548 = vld [vmem:[%s0 + $0xce] sm:$0xff]
  %v2549 = vld [vmem:[%s0 + $0xd6] sm:$0xff]
  %s2550 = scalar_lea.vmem %s1, 32
  %v2551 = vld [vmem:[%s2550] sm:$0x7]
  %v2553 = vsel %vm67, %v2525, 0
  %v2556 = vsel %vm67, %v2526, 0
  %v2559 = vsel %vm67, %v2527, 0
  %v2562 = vsel %vm67, %v2528, 0
  %v2565 = vsel %vm67, %v2529, 0
  %v2568 = vsel %vm67, %v2530, 0
  %v2571 = vsel %vm67, %v2531, 0
  %v2574 = vsel %vm67, %v2532, 0
  %v2577 = vsel %vm67, %v2533, 0
  %v2580 = vsel %vm67, %v2534, 0
  %v2583 = vsel %vm67, %v2535, 0
  %v2586 = vsel %vm67, %v2536, 0
  %v2589 = vsel %vm67, %v2537, 0
  %v2592 = vsel %vm67, %v2538, 0
  %v2595 = vsel %vm67, %v2539, 0
  %v2598 = vsel %vm67, %v2540, 0
  %v2601 = vsel %vm67, %v2541, 0
  %v2604 = vsel %vm67, %v2542, 0
  %v2607 = vsel %vm67, %v2543, 0
  %v2610 = vsel %vm67, %v2544, 0
  %v2613 = vsel %vm67, %v2545, 0
  %v2616 = vsel %vm67, %v2546, 0
  %v2619 = vsel %vm67, %v2547, 0
  %v2622 = vsel %vm67, %v2548, 0
  %v2625 = vsel %vm67, %v2549, 0
  %v2628 = vsel %vm143, %v2551, 0
  %2630 = vmatprep.subr.mxu0 0.0
  %2631 = vmatpush1.msra.mxu0 %v2628
  %2632 = vmatprep.subr.mxu0 0.0
  %2633 = vmatpush1.msra.mxu0 0.0
  %2634 = vmatprep.subr.mxu0 0.0
  %2635 = vmatpush1.msra.mxu0 0.0
  %2636 = vmatprep.subr.mxu0 0.0
  %2637 = vmatpush1.msra.mxu0 0.0
  %2638 = vmatprep.subr.mxu0 0.0
  %2639 = vmatpush1.msra.mxu0 0.0
  %2640 = vmatprep.subr.mxu0 0.0
  %2641 = vmatpush1.msra.mxu0 0.0
  %2642 = vmatprep.subr.mxu0 0.0
  %2643 = vmatpush1.msra.mxu0 0.0
  %2644 = vmatprep.subr.mxu0 0.0
  %2645 = vmatpush1.msra.mxu0 0.0
  %2646 = vmatprep.subr.mxu0 0.0
  %2647 = vmatpush1.msra.mxu0 0.0
  %2648 = vmatprep.subr.mxu0 0.0
  %2649 = vmatpush1.msra.mxu0 0.0
  %2650 = vmatprep.subr.mxu0 0.0
  %2651 = vmatpush1.msra.mxu0 0.0
  %2652 = vmatprep.subr.mxu0 0.0
  %2653 = vmatpush1.msra.mxu0 0.0
  %2654 = vmatprep.subr.mxu0 0.0
  %2655 = vmatpush1.msra.mxu0 0.0
  %2656 = vmatprep.subr.mxu0 0.0
  %2657 = vmatpush1.msra.mxu0 0.0
  %2658 = vmatprep.subr.mxu0 0.0
  %2659 = vmatpush1.msra.mxu0 0.0
  %2660 = vmatprep.subr.mxu0 0.0
  %2661 = vmatpush1.msra.mxu0 0.0
  %2662 = vmatprep.subr.mxu0 0.0
  %2663 = vmatpush1.msra.mxu0 0.0
  %2664 = vmatprep.subr.mxu0 0.0
  %2665 = vmatpush1.msra.mxu0 0.0
  %2666 = vmatprep.subr.mxu0 0.0
  %2667 = vmatpush1.msra.mxu0 0.0
  %2668 = vmatprep.subr.mxu0 0.0
  %2669 = vmatpush1.msra.mxu0 0.0
  %2670 = vmatprep.subr.mxu0 0.0
  %2671 = vmatpush1.msra.mxu0 0.0
  %2672 = vmatprep.subr.mxu0 0.0
  %2673 = vmatpush1.msra.mxu0 0.0
  %2674 = vmatprep.subr.mxu0 0.0
  %2675 = vmatpush1.msra.mxu0 0.0
  %2676 = vmatprep.subr.mxu0 0.0
  %2677 = vmatpush1.msra.mxu0 0.0
  %2678 = vmatprep.subr.mxu0 0.0
  %2679 = vmatpush1.msra.mxu0 0.0
  %2680 = vmatprep.subr.mxu0 0.0
  %2681 = vmatpush1.msra.mxu0 0.0
  %2682 = vmatprep.subr.mxu0 0.0
  %2683 = vmatpush1.msra.mxu0 0.0
  %2684 = vmatprep.subr.mxu0 0.0
  %2685 = vmatpush1.msra.mxu0 0.0
  %2686 = vmatprep.subr.mxu0 0.0
  %2687 = vmatpush1.msra.mxu0 0.0
  %2688 = vmatprep.subr.mxu0 0.0
  %2689 = vmatpush1.msra.mxu0 0.0
  %2690 = vmatprep.subr.mxu0 0.0
  %2691 = vmatpush1.msra.mxu0 0.0
  %2692 = vmatprep.subr.mxu0 0.0
  %2693 = vmatpush1.msra.mxu0 0.0
  %2694 = vmatprep.mubr.f32.mxu0 0.0
  %2695 = vmatmul.mubr.f32.gmra.mrb[0].mxu0 %v2553
  %v2696 = vpop.f32.mrb[0].mxu0
  %v2697 = vadd.f32 0.0, %v2696
  %v2698 = vpop.f32.mrb[0].mxu0
  %2699 = vmatprep.mubr.f32.mxu0 0.0
  %2700 = vmatmul.mubr.f32.gmra.mrb[0].mxu0 %v2556
  %v2701 = vpop.f32.mrb[0].mxu0
  %v2702 = vadd.f32 0.0, %v2701
  %v2703 = vpop.f32.mrb[0].mxu0
  %2704 = vmatprep.mubr.f32.mxu0 0.0
  %2705 = vmatmul.mubr.f32.gmra.mrb[0].mxu0 %v2559
  %v2706 = vpop.f32.mrb[0].mxu0
  %v2707 = vadd.f32 0.0, %v2706
  %v2708 = vpop.f32.mrb[0].mxu0
  %2709 = vmatprep.mubr.f32.mxu0 0.0
  %2710 = vmatmul.mubr.f32.gmra.mrb[0].mxu0 %v2562
  %v2711 = vpop.f32.mrb[0].mxu0
  %v2712 = vadd.f32 0.0, %v2711
  %v2713 = vpop.f32.mrb[0].mxu0
  %2714 = vmatprep.mubr.f32.mxu0 0.0
  %2715 = vmatmul.mubr.f32.gmra.mrb[0].mxu0 %v2565
  %v2716 = vpop.f32.mrb[0].mxu0
  %v2717 = vadd.f32 0.0, %v2716
  %v2718 = vpop.f32.mrb[0].mxu0
  %2719 = vmatprep.mubr.f32.mxu0 0.0
  %2720 = vmatmul.mubr.f32.gmra.mrb[0].mxu0 %v2568
  %v2721 = vpop.f32.mrb[0].mxu0
  %v2722 = vadd.f32 0.0, %v2721
  %v2723 = vpop.f32.mrb[0].mxu0
  %2724 = vmatprep.mubr.f32.mxu0 0.0
  %2725 = vmatmul.mubr.f32.gmra.mrb[0].mxu0 %v2571
  %v2726 = vpop.f32.mrb[0].mxu0
  %v2727 = vadd.f32 0.0, %v2726
  %v2728 = vpop.f32.mrb[0].mxu0
  %2729 = vmatprep.mubr.f32.mxu0 0.0
  %2730 = vmatmul.mubr.f32.gmra.mrb[0].mxu0 %v2574
  %v2731 = vpop.f32.mrb[0].mxu0
  %v2732 = vadd.f32 0.0, %v2731
  %v2733 = vpop.f32.mrb[0].mxu0
  %2734 = vmatprep.mubr.f32.mxu0 0.0
  %2735 = vmatmul.mubr.f32.gmra.mrb[0].mxu0 %v2577
  %v2736 = vpop.f32.mrb[0].mxu0
  %v2737 = vadd.f32 0.0, %v2736
  %v2738 = vpop.f32.mrb[0].mxu0
  %2739 = vmatprep.mubr.f32.mxu0 0.0
  %2740 = vmatmul.mubr.f32.gmra.mrb[0].mxu0 %v2580
  %v2741 = vpop.f32.mrb[0].mxu0
  %v2742 = vadd.f32 0.0, %v2741
  %v2743 = vpop.f32.mrb[0].mxu0
  %2744 = vmatprep.mubr.f32.mxu0 0.0
  %2745 = vmatmul.mubr.f32.gmra.mrb[0].mxu0 %v2583
  %v2746 = vpop.f32.mrb[0].mxu0
  %v2747 = vadd.f32 0.0, %v2746
  %v2748 = vpop.f32.mrb[0].mxu0
  %2749 = vmatprep.mubr.f32.mxu0 0.0
  %2750 = vmatmul.mubr.f32.gmra.mrb[0].mxu0 %v2586
  %v2751 = vpop.f32.mrb[0].mxu0
  %v2752 = vadd.f32 0.0, %v2751
  %v2753 = vpop.f32.mrb[0].mxu0
  %2754 = vmatprep.mubr.f32.mxu0 0.0
  %2755 = vmatmul.mubr.f32.gmra.mrb[0].mxu0 %v2589
  %v2756 = vpop.f32.mrb[0].mxu0
  %v2757 = vadd.f32 0.0, %v2756
  %v2758 = vpop.f32.mrb[0].mxu0
  %2759 = vmatprep.mubr.f32.mxu0 0.0
  %2760 = vmatmul.mubr.f32.gmra.mrb[0].mxu0 %v2592
  %v2761 = vpop.f32.mrb[0].mxu0
  %v2762 = vadd.f32 0.0, %v2761
  %v2763 = vpop.f32.mrb[0].mxu0
  %2764 = vmatprep.mubr.f32.mxu0 0.0
  %2765 = vmatmul.mubr.f32.gmra.mrb[0].mxu0 %v2595
  %v2766 = vpop.f32.mrb[0].mxu0
  %v2767 = vadd.f32 0.0, %v2766
  %v2768 = vpop.f32.mrb[0].mxu0
  %2769 = vmatprep.mubr.f32.mxu0 0.0
  %2770 = vmatmul.mubr.f32.gmra.mrb[0].mxu0 %v2598
  %v2771 = vpop.f32.mrb[0].mxu0
  %v2772 = vadd.f32 0.0, %v2771
  %v2773 = vpop.f32.mrb[0].mxu0
  %2774 = vmatprep.mubr.f32.mxu0 0.0
  %2775 = vmatmul.mubr.f32.gmra.mrb[0].mxu0 %v2601
  %v2776 = vpop.f32.mrb[0].mxu0
  %v2777 = vadd.f32 0.0, %v2776
  %v2778 = vpop.f32.mrb[0].mxu0
  %2779 = vmatprep.mubr.f32.mxu0 0.0
  %2780 = vmatmul.mubr.f32.gmra.mrb[0].mxu0 %v2604
  %v2781 = vpop.f32.mrb[0].mxu0
  %v2782 = vadd.f32 0.0, %v2781
  %v2783 = vpop.f32.mrb[0].mxu0
  %2784 = vmatprep.mubr.f32.mxu0 0.0
  %2785 = vmatmul.mubr.f32.gmra.mrb[0].mxu0 %v2607
  %v2786 = vpop.f32.mrb[0].mxu0
  %v2787 = vadd.f32 0.0, %v2786
  %v2788 = vpop.f32.mrb[0].mxu0
  %2789 = vmatprep.mubr.f32.mxu0 0.0
  %2790 = vmatmul.mubr.f32.gmra.mrb[0].mxu0 %v2610
  %v2791 = vpop.f32.mrb[0].mxu0
  %v2792 = vadd.f32 0.0, %v2791
  %v2793 = vpop.f32.mrb[0].mxu0
  %2794 = vmatprep.mubr.f32.mxu0 0.0
  %2795 = vmatmul.mubr.f32.gmra.mrb[0].mxu0 %v2613
  %v2796 = vpop.f32.mrb[0].mxu0
  %v2797 = vadd.f32 0.0, %v2796
  %v2798 = vpop.f32.mrb[0].mxu0
  %2799 = vmatprep.mubr.f32.mxu0 0.0
  %2800 = vmatmul.mubr.f32.gmra.mrb[0].mxu0 %v2616
  %v2801 = vpop.f32.mrb[0].mxu0
  %v2802 = vadd.f32 0.0, %v2801
  %v2803 = vpop.f32.mrb[0].mxu0
  %2804 = vmatprep.mubr.f32.mxu0 0.0
  %2805 = vmatmul.mubr.f32.gmra.mrb[0].mxu0 %v2619
  %v2806 = vpop.f32.mrb[0].mxu0
  %v2807 = vadd.f32 0.0, %v2806
  %v2808 = vpop.f32.mrb[0].mxu0
  %2809 = vmatprep.mubr.f32.mxu0 0.0
  %2810 = vmatmul.mubr.f32.gmra.mrb[0].mxu0 %v2622
  %v2811 = vpop.f32.mrb[0].mxu0
  %v2812 = vadd.f32 0.0, %v2811
  %v2813 = vpop.f32.mrb[0].mxu0
  %2814 = vmatprep.mubr.f32.mxu0 0.0
  %2815 = vmatmul.mubr.f32.gmra.mrb[0].mxu0 %v2625
  %v2816 = vpop.f32.mrb[0].mxu0
  %v2817 = vadd.f32 0.0, %v2816
  %v2818 = vpop.f32.mrb[0].mxu0
  %2819 = vdwg.mxu0
  %v2820 = vadd.f32 %v2500, %v2697
  %v2821 = vadd.f32 %v2501, %v2702
  %v2822 = vadd.f32 %v2502, %v2707
  %v2823 = vadd.f32 %v2503, %v2712
  %v2824 = vadd.f32 %v2504, %v2717
  %v2825 = vadd.f32 %v2505, %v2722
  %v2826 = vadd.f32 %v2506, %v2727
  %v2827 = vadd.f32 %v2507, %v2732
  %v2828 = vadd.f32 %v2508, %v2737
  %v2829 = vadd.f32 %v2509, %v2742
  %v2830 = vadd.f32 %v2510, %v2747
  %v2831 = vadd.f32 %v2511, %v2752
  %v2832 = vadd.f32 %v2512, %v2757
  %v2833 = vadd.f32 %v2513, %v2762
  %v2834 = vadd.f32 %v2514, %v2767
  %v2835 = vadd.f32 %v2515, %v2772
  %v2836 = vadd.f32 %v2516, %v2777
  %v2837 = vadd.f32 %v2517, %v2782
  %v2838 = vadd.f32 %v2518, %v2787
  %v2839 = vadd.f32 %v2519, %v2792
  %v2840 = vadd.f32 %v2520, %v2797
  %v2841 = vadd.f32 %v2521, %v2802
  %v2842 = vadd.f32 %v2522, %v2807
  %v2843 = vadd.f32 %v2523, %v2812
  %v2844 = vadd.f32 %v2524, %v2817
  %v2845 = vld [vmem:[%s2] sm:$0x1]
  %v2847 = vlaneseq
  %v2848 = vshrl.u32 %v2847, 7
  %v2849 = vsub.s32 0, %v2848
  %v2850 = vrot.slane %v2845, %v2849
  %v2852 = vadd.f32 %v2820, %v2850
  %v2853 = vadd.f32 %v2821, %v2850
  %v2854 = vadd.f32 %v2822, %v2850
  %v2855 = vadd.f32 %v2823, %v2850
  %v2856 = vadd.f32 %v2824, %v2850
  %v2857 = vadd.f32 %v2825, %v2850
  %v2858 = vadd.f32 %v2826, %v2850
  %v2859 = vadd.f32 %v2827, %v2850
  %v2860 = vadd.f32 %v2828, %v2850
  %v2861 = vadd.f32 %v2829, %v2850
  %v2862 = vadd.f32 %v2830, %v2850
  %v2863 = vadd.f32 %v2831, %v2850
  %v2864 = vadd.f32 %v2832, %v2850
  %v2865 = vadd.f32 %v2833, %v2850
  %v2866 = vadd.f32 %v2834, %v2850
  %v2867 = vadd.f32 %v2835, %v2850
  %v2868 = vadd.f32 %v2836, %v2850
  %v2869 = vadd.f32 %v2837, %v2850
  %v2870 = vadd.f32 %v2838, %v2850
  %v2871 = vadd.f32 %v2839, %v2850
  %v2872 = vadd.f32 %v2840, %v2850
  %v2873 = vadd.f32 %v2841, %v2850
  %v2874 = vadd.f32 %v2842, %v2850
  %v2875 = vadd.f32 %v2843, %v2850
  %v2876 = vadd.f32 %v2844, %v2850
  %v2877 = vmax.f32 %v2852, 0.0
  %v2878 = vmax.f32 %v2853, 0.0
  %v2879 = vmax.f32 %v2854, 0.0
  %v2880 = vmax.f32 %v2855, 0.0
  %v2881 = vmax.f32 %v2856, 0.0
  %v2882 = vmax.f32 %v2857, 0.0
  %v2883 = vmax.f32 %v2858, 0.0
  %v2884 = vmax.f32 %v2859, 0.0
  %v2885 = vmax.f32 %v2860, 0.0
  %v2886 = vmax.f32 %v2861, 0.0
  %v2887 = vmax.f32 %v2862, 0.0
  %v2888 = vmax.f32 %v2863, 0.0
  %v2889 = vmax.f32 %v2864, 0.0
  %v2890 = vmax.f32 %v2865, 0.0
  %v2891 = vmax.f32 %v2866, 0.0
  %v2892 = vmax.f32 %v2867, 0.0
  %v2893 = vmax.f32 %v2868, 0.0
  %v2894 = vmax.f32 %v2869, 0.0
  %v2895 = vmax.f32 %v2870, 0.0
  %v2896 = vmax.f32 %v2871, 0.0
  %v2897 = vmax.f32 %v2872, 0.0
  %v2898 = vmax.f32 %v2873, 0.0
  %v2899 = vmax.f32 %v2874, 0.0
  %v2900 = vmax.f32 %v2875, 0.0
  %v2901 = vmax.f32 %v2876, 0.0
  %vm2902 = vcmask 130048
  %2903 = vst.msk [vmem:[%s3] sm:$0xff] %vm2902, %v2877
  %2904 = vst.msk [vmem:[%s3 + $0x8] sm:$0xff] %vm2902, %v2878
  %2905 = vst.msk [vmem:[%s3 + $0x10] sm:$0xff] %vm2902, %v2879
  %2906 = vst.msk [vmem:[%s3 + $0x18] sm:$0xff] %vm2902, %v2880
  %2907 = vst.msk [vmem:[%s3 + $0x20] sm:$0xff] %vm2902, %v2881
  %2908 = vst.msk [vmem:[%s3 + $0x28] sm:$0xff] %vm2902, %v2882
  %2909 = vst.msk [vmem:[%s3 + $0x30] sm:$0xff] %vm2902, %v2883
  %2910 = vst.msk [vmem:[%s3 + $0x38] sm:$0xff] %vm2902, %v2884
  %2911 = vst.msk [vmem:[%s3 + $0x40] sm:$0xff] %vm2902, %v2885
  %2912 = vst.msk [vmem:[%s3 + $0x48] sm:$0xff] %vm2902, %v2886
  %2913 = vst.msk [vmem:[%s3 + $0x50] sm:$0xff] %vm2902, %v2887
  %2914 = vst.msk [vmem:[%s3 + $0x58] sm:$0xff] %vm2902, %v2888
  %2915 = vst.msk [vmem:[%s3 + $0x60] sm:$0xff] %vm2902, %v2889
  %2916 = vst.msk [vmem:[%s3 + $0x68] sm:$0xff] %vm2902, %v2890
  %2917 = vst.msk [vmem:[%s3 + $0x70] sm:$0xff] %vm2902, %v2891
  %2918 = vst.msk [vmem:[%s3 + $0x78] sm:$0xff] %vm2902, %v2892
  %2919 = vst.msk [vmem:[%s3 + $0x80] sm:$0xff] %vm2902, %v2893
  %2920 = vst.msk [vmem:[%s3 + $0x88] sm:$0xff] %vm2902, %v2894
  %2921 = vst.msk [vmem:[%s3 + $0x90] sm:$0xff] %vm2902, %v2895
  %2922 = vst.msk [vmem:[%s3 + $0x98] sm:$0xff] %vm2902, %v2896
  %2923 = vst.msk [vmem:[%s3 + $0xa0] sm:$0xff] %vm2902, %v2897
  %2924 = vst.msk [vmem:[%s3 + $0xa8] sm:$0xff] %vm2902, %v2898
  %2925 = vst.msk [vmem:[%s3 + $0xb0] sm:$0xff] %vm2902, %v2899
  %2926 = vst.msk [vmem:[%s3 + $0xb8] sm:$0xff] %vm2902, %v2900
  %2927 = vst.msk [vmem:[%s3 + $0xc0] sm:$0xff] %vm2902, %v2901
  // Predicated region
  $region14: #{network_forward.9} parent=0 // pred_check
    _
  $region15: #{network_forward.9} parent=0 // pred_check_branch
    %2929 = sbr.rel (0) target = $region17
  $region16: #{network_forward.9} parent=0 // pred_region
    _
  $region17: #{network_forward.9} parent=0 // pred_fallthru
    _
  // Predicated region
  $region18: #{network_forward.9} parent=0 // pred_check
    _
  $region19: #{network_forward.9} parent=0 // pred_check_branch
    %2931 = sbr.rel (0) target = $region21
  $region20: #{network_forward.9} parent=0 // pred_region
    _
  $region21: #{network_forward.9} parent=0 // pred_fallthru
    _

// kernel: network_forward.6
$region0: #{network_forward.6}
  #allocation0 [shape = 'u32[]', space=smem, size = 0x4, offset = 0x4, fixed_abs, tag = 'smem constant byte address 0x4 - core index']
  #allocation1 [shape = 'u32[144,128]{1,0:T(1,128)}', space=vmem, size = 0x12000, scoped, tag = 'internal scratch']
  %s0 = inlined_call_operand.vmem [shape: f32[224,3], index: 0, kind: input, shape index: {}]
  %s1 = inlined_call_operand.vmem [shape: f32[9,3,32], index: 1, kind: input, shape index: {}]
  %s2 = inlined_call_operand.vmem [shape: f32[1,32], index: 2, kind: input, shape index: {}]
  %s3 = inlined_call_operand.vmem [shape: f32[200,32], index: 3, kind: output, shape index: {}]
  %s4 = sld [smem:[#allocation0]]
  $region22: #{network_forward.6} parent=0
    _
  %s6 = ssub.s32 1, %s4
  %s7 = scalar_select 0, %s6, %s4
  // Predicated region
  $region2: #{network_forward.6} parent=0 // pred_check
    _
  $region3: #{network_forward.6} parent=0 // pred_check_branch
    %9 = sbr.rel (0) target = $region5
  $region4: #{network_forward.6} parent=0 // pred_region
    _
  $region5: #{network_forward.6} parent=0 // pred_fallthru
    _
  // Predicated region
  $region6: #{network_forward.6} parent=0 // pred_check
    _
  $region7: #{network_forward.6} parent=0 // pred_check_branch
    %11 = sbr.rel (0) target = $region9
  $region8: #{network_forward.6} parent=0 // pred_region
    _
  $region9: #{network_forward.6} parent=0 // pred_fallthru
    _
  // Predicated region
  $region10: #{network_forward.6} parent=0 // pred_check
    _
  $region11: #{network_forward.6} parent=0 // pred_check_branch
    %13 = sbr.rel (0) target = $region13
  $region12: #{network_forward.6} parent=0 // pred_region
    _
  $region13: #{network_forward.6} parent=0 // pred_fallthru
    _
  %v14 = vld [vmem:[%s0] sm:$0xff]
  %v15 = vld [vmem:[%s0 + $0x8] sm:$0xff]
  %v16 = vld [vmem:[%s0 + $0x10] sm:$0xff]
  %v17 = vld [vmem:[%s0 + $0x18] sm:$0xff]
  %v18 = vld [vmem:[%s0 + $0x20] sm:$0xff]
  %v19 = vld [vmem:[%s0 + $0x28] sm:$0xff]
  %v20 = vld [vmem:[%s0 + $0x30] sm:$0xff]
  %v21 = vld [vmem:[%s0 + $0x38] sm:$0xff]
  %v22 = vld [vmem:[%s0 + $0x40] sm:$0xff]
  %v23 = vld [vmem:[%s0 + $0x48] sm:$0xff]
  %v24 = vld [vmem:[%s0 + $0x50] sm:$0xff]
  %v25 = vld [vmem:[%s0 + $0x58] sm:$0xff]
  %v26 = vld [vmem:[%s0 + $0x60] sm:$0xff]
  %v27 = vld [vmem:[%s0 + $0x68] sm:$0xff]
  %v28 = vld [vmem:[%s0 + $0x70] sm:$0xff]
  %v29 = vld [vmem:[%s0 + $0x78] sm:$0xff]
  %v30 = vld [vmem:[%s0 + $0x80] sm:$0xff]
  %v31 = vld [vmem:[%s0 + $0x88] sm:$0xff]
  %v32 = vld [vmem:[%s0 + $0x90] sm:$0xff]
  %v33 = vld [vmem:[%s0 + $0x98] sm:$0xff]
  %v34 = vld [vmem:[%s0 + $0xa0] sm:$0xff]
  %v35 = vld [vmem:[%s0 + $0xa8] sm:$0xff]
  %v36 = vld [vmem:[%s0 + $0xb0] sm:$0xff]
  %v37 = vld [vmem:[%s0 + $0xb8] sm:$0xff]
  %v38 = vld [vmem:[%s0 + $0xc0] sm:$0xff]
  %v39 = vld [vmem:[%s1] sm:$0x7]
  %v40 = vld [vmem:[%s0 + $0x1] sm:$0xff]
  %v41 = vld [vmem:[%s0 + $0x9] sm:$0xff]
  %v42 = vld [vmem:[%s0 + $0x11] sm:$0xff]
  %v43 = vld [vmem:[%s0 + $0x19] sm:$0xff]
  %v44 = vld [vmem:[%s0 + $0x21] sm:$0xff]
  %v45 = vld [vmem:[%s0 + $0x29] sm:$0xff]
  %v46 = vld [vmem:[%s0 + $0x31] sm:$0xff]
  %v47 = vld [vmem:[%s0 + $0x39] sm:$0xff]
  %v48 = vld [vmem:[%s0 + $0x41] sm:$0xff]
  %v49 = vld [vmem:[%s0 + $0x49] sm:$0xff]
  %v50 = vld [vmem:[%s0 + $0x51] sm:$0xff]
  %v51 = vld [vmem:[%s0 + $0x59] sm:$0xff]
  %v52 = vld [vmem:[%s0 + $0x61] sm:$0xff]
  %v53 = vld [vmem:[%s0 + $0x69] sm:$0xff]
  %v54 = vld [vmem:[%s0 + $0x71] sm:$0xff]
  %v55 = vld [vmem:[%s0 + $0x79] sm:$0xff]
  %v56 = vld [vmem:[%s0 + $0x81] sm:$0xff]
  %v57 = vld [vmem:[%s0 + $0x89] sm:$0xff]
  %v58 = vld [vmem:[%s0 + $0x91] sm:$0xff]
  %v59 = vld [vmem:[%s0 + $0x99] sm:$0xff]
  %v60 = vld [vmem:[%s0 + $0xa1] sm:$0xff]
  %v61 = vld [vmem:[%s0 + $0xa9] sm:$0xff]
  %v62 = vld [vmem:[%s0 + $0xb1] sm:$0xff]
  %v63 = vld [vmem:[%s0 + $0xb9] sm:$0xff]
  %v64 = vld [vmem:[%s0 + $0xc1] sm:$0xff]
  %s65 = scalar_lea.vmem %s1, 4
  %v66 = vld [vmem:[%s65] sm:$0x7]
  %vm67 = vcmask 23552
  %v69 = vsel %vm67, %v40, 0
  %v72 = vsel %vm67, %v41, 0
  %v75 = vsel %vm67, %v42, 0
  %v78 = vsel %vm67, %v43, 0
  %v81 = vsel %vm67, %v44, 0
  %v84 = vsel %vm67, %v45, 0
  %v87 = vsel %vm67, %v46, 0
  %v90 = vsel %vm67, %v47, 0
  %v93 = vsel %vm67, %v48, 0
  %v96 = vsel %vm67, %v49, 0
  %v99 = vsel %vm67, %v50, 0
  %v102 = vsel %vm67, %v51, 0
  %v105 = vsel %vm67, %v52, 0
  %v108 = vsel %vm67, %v53, 0
  %v111 = vsel %vm67, %v54, 0
  %v114 = vsel %vm67, %v55, 0
  %v117 = vsel %vm67, %v56, 0
  %v120 = vsel %vm67, %v57, 0
  %v123 = vsel %vm67, %v58, 0
  %v126 = vsel %vm67, %v59, 0
  %v129 = vsel %vm67, %v60, 0
  %v132 = vsel %vm67, %v61, 0
  %v135 = vsel %vm67, %v62, 0
  %v138 = vsel %vm67, %v63, 0
  %v141 = vsel %vm67, %v64, 0
  %vm143 = vcmask 1042432
  %v145 = vsel %vm143, %v66, 0
  %147 = vmatprep.subr.mxu0 0.0
  %148 = vmatpush1.msra.mxu0 %v145
  %149 = vmatprep.subr.mxu0 0.0
  %150 = vmatpush1.msra.mxu0 0.0
  %151 = vmatprep.subr.mxu0 0.0
  %152 = vmatpush1.msra.mxu0 0.0
  %153 = vmatprep.subr.mxu0 0.0
  %154 = vmatpush1.msra.mxu0 0.0
  %155 = vmatprep.subr.mxu0 0.0
  %156 = vmatpush1.msra.mxu0 0.0
  %157 = vmatprep.subr.mxu0 0.0
  %158 = vmatpush1.msra.mxu0 0.0
  %159 = vmatprep.subr.mxu0 0.0
  %160 = vmatpush1.msra.mxu0 0.0
  %161 = vmatprep.subr.mxu0 0.0
  %162 = vmatpush1.msra.mxu0 0.0
  %163 = vmatprep.subr.mxu0 0.0
  %164 = vmatpush1.msra.mxu0 0.0
  %165 = vmatprep.subr.mxu0 0.0
  %166 = vmatpush1.msra.mxu0 0.0
  %167 = vmatprep.subr.mxu0 0.0
  %168 = vmatpush1.msra.mxu0 0.0
  %169 = vmatprep.subr.mxu0 0.0
  %170 = vmatpush1.msra.mxu0 0.0
  %171 = vmatprep.subr.mxu0 0.0
  %172 = vmatpush1.msra.mxu0 0.0
  %173 = vmatprep.subr.mxu0 0.0
  %174 = vmatpush1.msra.mxu0 0.0
  %175 = vmatprep.subr.mxu0 0.0
  %176 = vmatpush1.msra.mxu0 0.0
  %177 = vmatprep.subr.mxu0 0.0
  %178 = vmatpush1.msra.mxu0 0.0
  %179 = vmatprep.subr.mxu0 0.0
  %180 = vmatpush1.msra.mxu0 0.0
  %181 = vmatprep.subr.mxu0 0.0
  %182 = vmatpush1.msra.mxu0 0.0
  %183 = vmatprep.subr.mxu0 0.0
  %184 = vmatpush1.msra.mxu0 0.0
  %185 = vmatprep.subr.mxu0 0.0
  %186 = vmatpush1.msra.mxu0 0.0
  %187 = vmatprep.subr.mxu0 0.0
  %188 = vmatpush1.msra.mxu0 0.0
  %189 = vmatprep.subr.mxu0 0.0
  %190 = vmatpush1.msra.mxu0 0.0
  %191 = vmatprep.subr.mxu0 0.0
  %192 = vmatpush1.msra.mxu0 0.0
  %193 = vmatprep.subr.mxu0 0.0
  %194 = vmatpush1.msra.mxu0 0.0
  %195 = vmatprep.subr.mxu0 0.0
  %196 = vmatpush1.msra.mxu0 0.0
  %197 = vmatprep.subr.mxu0 0.0
  %198 = vmatpush1.msra.mxu0 0.0
  %199 = vmatprep.subr.mxu0 0.0
  %200 = vmatpush1.msra.mxu0 0.0
  %201 = vmatprep.subr.mxu0 0.0
  %202 = vmatpush1.msra.mxu0 0.0
  %203 = vmatprep.subr.mxu0 0.0
  %204 = vmatpush1.msra.mxu0 0.0
  %205 = vmatprep.subr.mxu0 0.0
  %206 = vmatpush1.msra.mxu0 0.0
  %207 = vmatprep.subr.mxu0 0.0
  %208 = vmatpush1.msra.mxu0 0.0
  %209 = vmatprep.subr.mxu0 0.0
  %210 = vmatpush1.msra.mxu0 0.0
  %211 = vmatprep.mubr.f32.mxu0 0.0
  %212 = vmatmul.mubr.f32.gmra.mrb[0].mxu0 %v69
  %v213 = vpop.f32.mrb[0].mxu0
  %v214 = vadd.f32 0.0, %v213
  %v215 = vpop.f32.mrb[0].mxu0
  %216 = vmatprep.mubr.f32.mxu0 0.0
  %217 = vmatmul.mubr.f32.gmra.mrb[0].mxu0 %v72
  %v218 = vpop.f32.mrb[0].mxu0
  %v219 = vadd.f32 0.0, %v218
  %v220 = vpop.f32.mrb[0].mxu0
  %221 = vmatprep.mubr.f32.mxu0 0.0
  %222 = vmatmul.mubr.f32.gmra.mrb[0].mxu0 %v75
  %v223 = vpop.f32.mrb[0].mxu0
  %v224 = vadd.f32 0.0, %v223
  %v225 = vpop.f32.mrb[0].mxu0
  %226 = vmatprep.mubr.f32.mxu0 0.0
  %227 = vmatmul.mubr.f32.gmra.mrb[0].mxu0 %v78
  %v228 = vpop.f32.mrb[0].mxu0
  %v229 = vadd.f32 0.0, %v228
  %v230 = vpop.f32.mrb[0].mxu0
  %231 = vmatprep.mubr.f32.mxu0 0.0
  %232 = vmatmul.mubr.f32.gmra.mrb[0].mxu0 %v81
  %v233 = vpop.f32.mrb[0].mxu0
  %v234 = vadd.f32 0.0, %v233
  %v235 = vpop.f32.mrb[0].mxu0
  %236 = vmatprep.mubr.f32.mxu0 0.0
  %237 = vmatmul.mubr.f32.gmra.mrb[0].mxu0 %v84
  %v238 = vpop.f32.mrb[0].mxu0
  %v239 = vadd.f32 0.0, %v238
  %v240 = vpop.f32.mrb[0].mxu0
  %241 = vmatprep.mubr.f32.mxu0 0.0
  %242 = vmatmul.mubr.f32.gmra.mrb[0].mxu0 %v87
  %v243 = vpop.f32.mrb[0].mxu0
  %v244 = vadd.f32 0.0, %v243
  %v245 = vpop.f32.mrb[0].mxu0
  %246 = vmatprep.mubr.f32.mxu0 0.0
  %247 = vmatmul.mubr.f32.gmra.mrb[0].mxu0 %v90
  %v248 = vpop.f32.mrb[0].mxu0
  %v249 = vadd.f32 0.0, %v248
  %v250 = vpop.f32.mrb[0].mxu0
  %251 = vmatprep.mubr.f32.mxu0 0.0
  %252 = vmatmul.mubr.f32.gmra.mrb[0].mxu0 %v93
  %v253 = vpop.f32.mrb[0].mxu0
  %v254 = vadd.f32 0.0, %v253
  %v255 = vpop.f32.mrb[0].mxu0
  %256 = vmatprep.mubr.f32.mxu0 0.0
  %257 = vmatmul.mubr.f32.gmra.mrb[0].mxu0 %v96
  %v258 = vpop.f32.mrb[0].mxu0
  %v259 = vadd.f32 0.0, %v258
  %v260 = vpop.f32.mrb[0].mxu0
  %261 = vmatprep.mubr.f32.mxu0 0.0
  %262 = vmatmul.mubr.f32.gmra.mrb[0].mxu0 %v99
  %v263 = vpop.f32.mrb[0].mxu0
  %v264 = vadd.f32 0.0, %v263
  %v265 = vpop.f32.mrb[0].mxu0
  %266 = vmatprep.mubr.f32.mxu0 0.0
  %267 = vmatmul.mubr.f32.gmra.mrb[0].mxu0 %v102
  %v268 = vpop.f32.mrb[0].mxu0
  %v269 = vadd.f32 0.0, %v268
  %v270 = vpop.f32.mrb[0].mxu0
  %271 = vmatprep.mubr.f32.mxu0 0.0
  %272 = vmatmul.mubr.f32.gmra.mrb[0].mxu0 %v105
  %v273 = vpop.f32.mrb[0].mxu0
  %v274 = vadd.f32 0.0, %v273
  %v275 = vpop.f32.mrb[0].mxu0
  %276 = vmatprep.mubr.f32.mxu0 0.0
  %277 = vmatmul.mubr.f32.gmra.mrb[0].mxu0 %v108
  %v278 = vpop.f32.mrb[0].mxu0
  %v279 = vadd.f32 0.0, %v278
  %v280 = vpop.f32.mrb[0].mxu0
  %281 = vmatprep.mubr.f32.mxu0 0.0
  %282 = vmatmul.mubr.f32.gmra.mrb[0].mxu0 %v111
  %v283 = vpop.f32.mrb[0].mxu0
  %v284 = vadd.f32 0.0, %v283
  %v285 = vpop.f32.mrb[0].mxu0
  %286 = vmatprep.mubr.f32.mxu0 0.0
  %287 = vmatmul.mubr.f32.gmra.mrb[0].mxu0 %v114
  %v288 = vpop.f32.mrb[0].mxu0
  %v289 = vadd.f32 0.0, %v288
  %v290 = vpop.f32.mrb[0].mxu0
  %291 = vmatprep.mubr.f32.mxu0 0.0
  %292 = vmatmul.mubr.f32.gmra.mrb[0].mxu0 %v117
  %v293 = vpop.f32.mrb[0].mxu0
  %v294 = vadd.f32 0.0, %v293
  %v295 = vpop.f32.mrb[0].mxu0
  %296 = vmatprep.mubr.f32.mxu0 0.0
  %297 = vmatmul.mubr.f32.gmra.mrb[0].mxu0 %v120
  %v298 = vpop.f32.mrb[0].mxu0
  %v299 = vadd.f32 0.0, %v298
  %v300 = vpop.f32.mrb[0].mxu0
  %301 = vmatprep.mubr.f32.mxu0 0.0
  %302 = vmatmul.mubr.f32.gmra.mrb[0].mxu0 %v123
  %v303 = vpop.f32.mrb[0].mxu0
  %v304 = vadd.f32 0.0, %v303
  %v305 = vpop.f32.mrb[0].mxu0
  %306 = vmatprep.mubr.f32.mxu0 0.0
  %307 = vmatmul.mubr.f32.gmra.mrb[0].mxu0 %v126
  %v308 = vpop.f32.mrb[0].mxu0
  %v309 = vadd.f32 0.0, %v308
  %v310 = vpop.f32.mrb[0].mxu0
  %311 = vmatprep.mubr.f32.mxu0 0.0
  %312 = vmatmul.mubr.f32.gmra.mrb[0].mxu0 %v129
  %v313 = vpop.f32.mrb[0].mxu0
  %v314 = vadd.f32 0.0, %v313
  %v315 = vpop.f32.mrb[0].mxu0
  %316 = vmatprep.mubr.f32.mxu0 0.0
  %317 = vmatmul.mubr.f32.gmra.mrb[0].mxu0 %v132
  %v318 = vpop.f32.mrb[0].mxu0
  %v319 = vadd.f32 0.0, %v318
  %v320 = vpop.f32.mrb[0].mxu0
  %321 = vmatprep.mubr.f32.mxu0 0.0
  %322 = vmatmul.mubr.f32.gmra.mrb[0].mxu0 %v135
  %v323 = vpop.f32.mrb[0].mxu0
  %v324 = vadd.f32 0.0, %v323
  %v325 = vpop.f32.mrb[0].mxu0
  %326 = vmatprep.mubr.f32.mxu0 0.0
  %327 = vmatmul.mubr.f32.gmra.mrb[0].mxu0 %v138
  %v328 = vpop.f32.mrb[0].mxu0
  %v329 = vadd.f32 0.0, %v328
  %v330 = vpop.f32.mrb[0].mxu0
  %331 = vmatprep.mubr.f32.mxu0 0.0
  %332 = vmatmul.mubr.f32.gmra.mrb[0].mxu0 %v141
  %v333 = vpop.f32.mrb[0].mxu0
  %v334 = vadd.f32 0.0, %v333
  %v335 = vpop.f32.mrb[0].mxu0
  %336 = vdwg.mxu0
  %v338 = vsel %vm67, %v14, 0
  %v341 = vsel %vm67, %v15, 0
  %v344 = vsel %vm67, %v16, 0
  %v347 = vsel %vm67, %v17, 0
  %v350 = vsel %vm67, %v18, 0
  %v353 = vsel %vm67, %v19, 0
  %v356 = vsel %vm67, %v20, 0
  %v359 = vsel %vm67, %v21, 0
  %v362 = vsel %vm67, %v22, 0
  %v365 = vsel %vm67, %v23, 0
  %v368 = vsel %vm67, %v24, 0
  %v371 = vsel %vm67, %v25, 0
  %v374 = vsel %vm67, %v26, 0
  %v377 = vsel %vm67, %v27, 0
  %v380 = vsel %vm67, %v28, 0
  %v383 = vsel %vm67, %v29, 0
  %v386 = vsel %vm67, %v30, 0
  %v389 = vsel %vm67, %v31, 0
  %v392 = vsel %vm67, %v32, 0
  %v395 = vsel %vm67, %v33, 0
  %v398 = vsel %vm67, %v34, 0
  %v401 = vsel %vm67, %v35, 0
  %v404 = vsel %vm67, %v36, 0
  %v407 = vsel %vm67, %v37, 0
  %v410 = vsel %vm67, %v38, 0
  %v413 = vsel %vm143, %v39, 0
  %415 = vmatprep.subr.mxu0 0.0
  %416 = vmatpush1.msra.mxu0 %v413
  %417 = vmatprep.subr.mxu0 0.0
  %418 = vmatpush1.msra.mxu0 0.0
  %419 = vmatprep.subr.mxu0 0.0
  %420 = vmatpush1.msra.mxu0 0.0
  %421 = vmatprep.subr.mxu0 0.0
  %422 = vmatpush1.msra.mxu0 0.0
  %423 = vmatprep.subr.mxu0 0.0
  %424 = vmatpush1.msra.mxu0 0.0
  %425 = vmatprep.subr.mxu0 0.0
  %426 = vmatpush1.msra.mxu0 0.0
  %427 = vmatprep.subr.mxu0 0.0
  %428 = vmatpush1.msra.mxu0 0.0
  %429 = vmatprep.subr.mxu0 0.0
  %430 = vmatpush1.msra.mxu0 0.0
  %431 = vmatprep.subr.mxu0 0.0
  %432 = vmatpush1.msra.mxu0 0.0
  %433 = vmatprep.subr.mxu0 0.0
  %434 = vmatpush1.msra.mxu0 0.0
  %435 = vmatprep.subr.mxu0 0.0
  %436 = vmatpush1.msra.mxu0 0.0
  %437 = vmatprep.subr.mxu0 0.0
  %438 = vmatpush1.msra.mxu0 0.0
  %439 = vmatprep.subr.mxu0 0.0
  %440 = vmatpush1.msra.mxu0 0.0
  %441 = vmatprep.subr.mxu0 0.0
  %442 = vmatpush1.msra.mxu0 0.0
  %443 = vmatprep.subr.mxu0 0.0
  %444 = vmatpush1.msra.mxu0 0.0
  %445 = vmatprep.subr.mxu0 0.0
  %446 = vmatpush1.msra.mxu0 0.0
  %447 = vmatprep.subr.mxu0 0.0
  %448 = vmatpush1.msra.mxu0 0.0
  %449 = vmatprep.subr.mxu0 0.0
  %450 = vmatpush1.msra.mxu0 0.0
  %451 = vmatprep.subr.mxu0 0.0
  %452 = vmatpush1.msra.mxu0 0.0
  %453 = vmatprep.subr.mxu0 0.0
  %454 = vmatpush1.msra.mxu0 0.0
  %455 = vmatprep.subr.mxu0 0.0
  %456 = vmatpush1.msra.mxu0 0.0
  %457 = vmatprep.subr.mxu0 0.0
  %458 = vmatpush1.msra.mxu0 0.0
  %459 = vmatprep.subr.mxu0 0.0
  %460 = vmatpush1.msra.mxu0 0.0
  %461 = vmatprep.subr.mxu0 0.0
  %462 = vmatpush1.msra.mxu0 0.0
  %463 = vmatprep.subr.mxu0 0.0
  %464 = vmatpush1.msra.mxu0 0.0
  %465 = vmatprep.subr.mxu0 0.0
  %466 = vmatpush1.msra.mxu0 0.0
  %467 = vmatprep.subr.mxu0 0.0
  %468 = vmatpush1.msra.mxu0 0.0
  %469 = vmatprep.subr.mxu0 0.0
  %470 = vmatpush1.msra.mxu0 0.0
  %471 = vmatprep.subr.mxu0 0.0
  %472 = vmatpush1.msra.mxu0 0.0
  %473 = vmatprep.subr.mxu0 0.0
  %474 = vmatpush1.msra.mxu0 0.0
  %475 = vmatprep.subr.mxu0 0.0
  %476 = vmatpush1.msra.mxu0 0.0
  %477 = vmatprep.subr.mxu0 0.0
  %478 = vmatpush1.msra.mxu0 0.0
  %479 = vmatprep.mubr.f32.mxu0 0.0
  %480 = vmatmul.mubr.f32.gmra.mrb[0].mxu0 %v338
  %v481 = vpop.f32.mrb[0].mxu0
  %v482 = vadd.f32 %v214, %v481
  %v483 = vpop.f32.mrb[0].mxu0
  %484 = vmatprep.mubr.f32.mxu0 0.0
  %485 = vmatmul.mubr.f32.gmra.mrb[0].mxu0 %v341
  %v486 = vpop.f32.mrb[0].mxu0
  %v487 = vadd.f32 %v219, %v486
  %v488 = vpop.f32.mrb[0].mxu0
  %489 = vmatprep.mubr.f32.mxu0 0.0
  %490 = vmatmul.mubr.f32.gmra.mrb[0].mxu0 %v344
  %v491 = vpop.f32.mrb[0].mxu0
  %v492 = vadd.f32 %v224, %v491
  %v493 = vpop.f32.mrb[0].mxu0
  %494 = vmatprep.mubr.f32.mxu0 0.0
  %495 = vmatmul.mubr.f32.gmra.mrb[0].mxu0 %v347
  %v496 = vpop.f32.mrb[0].mxu0
  %v497 = vadd.f32 %v229, %v496
  %v498 = vpop.f32.mrb[0].mxu0
  %499 = vmatprep.mubr.f32.mxu0 0.0
  %500 = vmatmul.mubr.f32.gmra.mrb[0].mxu0 %v350
  %v501 = vpop.f32.mrb[0].mxu0
  %v502 = vadd.f32 %v234, %v501
  %v503 = vpop.f32.mrb[0].mxu0
  %504 = vmatprep.mubr.f32.mxu0 0.0
  %505 = vmatmul.mubr.f32.gmra.mrb[0].mxu0 %v353
  %v506 = vpop.f32.mrb[0].mxu0
  %v507 = vadd.f32 %v239, %v506
  %v508 = vpop.f32.mrb[0].mxu0
  %509 = vmatprep.mubr.f32.mxu0 0.0
  %510 = vmatmul.mubr.f32.gmra.mrb[0].mxu0 %v356
  %v511 = vpop.f32.mrb[0].mxu0
  %v512 = vadd.f32 %v244, %v511
  %v513 = vpop.f32.mrb[0].mxu0
  %514 = vmatprep.mubr.f32.mxu0 0.0
  %515 = vmatmul.mubr.f32.gmra.mrb[0].mxu0 %v359
  %v516 = vpop.f32.mrb[0].mxu0
  %v517 = vadd.f32 %v249, %v516
  %v518 = vpop.f32.mrb[0].mxu0
  %519 = vmatprep.mubr.f32.mxu0 0.0
  %520 = vmatmul.mubr.f32.gmra.mrb[0].mxu0 %v362
  %v521 = vpop.f32.mrb[0].mxu0
  %v522 = vadd.f32 %v254, %v521
  %v523 = vpop.f32.mrb[0].mxu0
  %524 = vmatprep.mubr.f32.mxu0 0.0
  %525 = vmatmul.mubr.f32.gmra.mrb[0].mxu0 %v365
  %v526 = vpop.f32.mrb[0].mxu0
  %v527 = vadd.f32 %v259, %v526
  %v528 = vpop.f32.mrb[0].mxu0
  %529 = vmatprep.mubr.f32.mxu0 0.0
  %530 = vmatmul.mubr.f32.gmra.mrb[0].mxu0 %v368
  %v531 = vpop.f32.mrb[0].mxu0
  %v532 = vadd.f32 %v264, %v531
  %v533 = vpop.f32.mrb[0].mxu0
  %534 = vmatprep.mubr.f32.mxu0 0.0
  %535 = vmatmul.mubr.f32.gmra.mrb[0].mxu0 %v371
  %v536 = vpop.f32.mrb[0].mxu0
  %v537 = vadd.f32 %v269, %v536
  %v538 = vpop.f32.mrb[0].mxu0
  %539 = vmatprep.mubr.f32.mxu0 0.0
  %540 = vmatmul.mubr.f32.gmra.mrb[0].mxu0 %v374
  %v541 = vpop.f32.mrb[0].mxu0
  %v542 = vadd.f32 %v274, %v541
  %v543 = vpop.f32.mrb[0].mxu0
  %544 = vmatprep.mubr.f32.mxu0 0.0
  %545 = vmatmul.mubr.f32.gmra.mrb[0].mxu0 %v377
  %v546 = vpop.f32.mrb[0].mxu0
  %v547 = vadd.f32 %v279, %v546
  %v548 = vpop.f32.mrb[0].mxu0
  %549 = vmatprep.mubr.f32.mxu0 0.0
  %550 = vmatmul.mubr.f32.gmra.mrb[0].mxu0 %v380
  %v551 = vpop.f32.mrb[0].mxu0
  %v552 = vadd.f32 %v284, %v551
  %v553 = vpop.f32.mrb[0].mxu0
  %554 = vmatprep.mubr.f32.mxu0 0.0
  %555 = vmatmul.mubr.f32.gmra.mrb[0].mxu0 %v383
  %v556 = vpop.f32.mrb[0].mxu0
  %v557 = vadd.f32 %v289, %v556
  %v558 = vpop.f32.mrb[0].mxu0
  %559 = vmatprep.mubr.f32.mxu0 0.0
  %560 = vmatmul.mubr.f32.gmra.mrb[0].mxu0 %v386
  %v561 = vpop.f32.mrb[0].mxu0
  %v562 = vadd.f32 %v294, %v561
  %v563 = vpop.f32.mrb[0].mxu0
  %564 = vmatprep.mubr.f32.mxu0 0.0
  %565 = vmatmul.mubr.f32.gmra.mrb[0].mxu0 %v389
  %v566 = vpop.f32.mrb[0].mxu0
  %v567 = vadd.f32 %v299, %v566
  %v568 = vpop.f32.mrb[0].mxu0
  %569 = vmatprep.mubr.f32.mxu0 0.0
  %570 = vmatmul.mubr.f32.gmra.mrb[0].mxu0 %v392
  %v571 = vpop.f32.mrb[0].mxu0
  %v572 = vadd.f32 %v304, %v571
  %v573 = vpop.f32.mrb[0].mxu0
  %574 = vmatprep.mubr.f32.mxu0 0.0
  %575 = vmatmul.mubr.f32.gmra.mrb[0].mxu0 %v395
  %v576 = vpop.f32.mrb[0].mxu0
  %v577 = vadd.f32 %v309, %v576
  %v578 = vpop.f32.mrb[0].mxu0
  %579 = vmatprep.mubr.f32.mxu0 0.0
  %580 = vmatmul.mubr.f32.gmra.mrb[0].mxu0 %v398
  %v581 = vpop.f32.mrb[0].mxu0
  %v582 = vadd.f32 %v314, %v581
  %v583 = vpop.f32.mrb[0].mxu0
  %584 = vmatprep.mubr.f32.mxu0 0.0
  %585 = vmatmul.mubr.f32.gmra.mrb[0].mxu0 %v401
  %v586 = vpop.f32.mrb[0].mxu0
  %v587 = vadd.f32 %v319, %v586
  %v588 = vpop.f32.mrb[0].mxu0
  %589 = vmatprep.mubr.f32.mxu0 0.0
  %590 = vmatmul.mubr.f32.gmra.mrb[0].mxu0 %v404
  %v591 = vpop.f32.mrb[0].mxu0
  %v592 = vadd.f32 %v324, %v591
  %v593 = vpop.f32.mrb[0].mxu0
  %594 = vmatprep.mubr.f32.mxu0 0.0
  %595 = vmatmul.mubr.f32.gmra.mrb[0].mxu0 %v407
  %v596 = vpop.f32.mrb[0].mxu0
  %v597 = vadd.f32 %v329, %v596
  %v598 = vpop.f32.mrb[0].mxu0
  %599 = vmatprep.mubr.f32.mxu0 0.0
  %600 = vmatmul.mubr.f32.gmra.mrb[0].mxu0 %v410
  %v601 = vpop.f32.mrb[0].mxu0
  %v602 = vadd.f32 %v334, %v601
  %v603 = vpop.f32.mrb[0].mxu0
  %604 = vdwg.mxu0
  %v605 = vld [vmem:[%s0 + $0x2] sm:$0xff]
  %v606 = vld [vmem:[%s0 + $0xa] sm:$0xff]
  %v607 = vld [vmem:[%s0 + $0x12] sm:$0xff]
  %v608 = vld [vmem:[%s0 + $0x1a] sm:$0xff]
  %v609 = vld [vmem:[%s0 + $0x22] sm:$0xff]
  %v610 = vld [vmem:[%s0 + $0x2a] sm:$0xff]
  %v611 = vld [vmem:[%s0 + $0x32] sm:$0xff]
  %v612 = vld [vmem:[%s0 + $0x3a] sm:$0xff]
  %v613 = vld [vmem:[%s0 + $0x42] sm:$0xff]
  %v614 = vld [vmem:[%s0 + $0x4a] sm:$0xff]
  %v615 = vld [vmem:[%s0 + $0x52] sm:$0xff]
  %v616 = vld [vmem:[%s0 + $0x5a] sm:$0xff]
  %v617 = vld [vmem:[%s0 + $0x62] sm:$0xff]
  %v618 = vld [vmem:[%s0 + $0x6a] sm:$0xff]
  %v619 = vld [vmem:[%s0 + $0x72] sm:$0xff]
  %v620 = vld [vmem:[%s0 + $0x7a] sm:$0xff]
  %v621 = vld [vmem:[%s0 + $0x82] sm:$0xff]
  %v622 = vld [vmem:[%s0 + $0x8a] sm:$0xff]
  %v623 = vld [vmem:[%s0 + $0x92] sm:$0xff]
  %v624 = vld [vmem:[%s0 + $0x9a] sm:$0xff]
  %v625 = vld [vmem:[%s0 + $0xa2] sm:$0xff]
  %v626 = vld [vmem:[%s0 + $0xaa] sm:$0xff]
  %v627 = vld [vmem:[%s0 + $0xb2] sm:$0xff]
  %v628 = vld [vmem:[%s0 + $0xba] sm:$0xff]
  %v629 = vld [vmem:[%s0 + $0xc2] sm:$0xff]
  %s630 = scalar_lea.vmem %s1, 8
  %v631 = vld [vmem:[%s630] sm:$0x7]
  %v633 = vsel %vm67, %v605, 0
  %v636 = vsel %vm67, %v606, 0
  %v639 = vsel %vm67, %v607, 0
  %v642 = vsel %vm67, %v608, 0
  %v645 = vsel %vm67, %v609, 0
  %v648 = vsel %vm67, %v610, 0
  %v651 = vsel %vm67, %v611, 0
  %v654 = vsel %vm67, %v612, 0
  %v657 = vsel %vm67, %v613, 0
  %v660 = vsel %vm67, %v614, 0
  %v663 = vsel %vm67, %v615, 0
  %v666 = vsel %vm67, %v616, 0
  %v669 = vsel %vm67, %v617, 0
  %v672 = vsel %vm67, %v618, 0
  %v675 = vsel %vm67, %v619, 0
  %v678 = vsel %vm67, %v620, 0
  %v681 = vsel %vm67, %v621, 0
  %v684 = vsel %vm67, %v622, 0
  %v687 = vsel %vm67, %v623, 0
  %v690 = vsel %vm67, %v624, 0
  %v693 = vsel %vm67, %v625, 0
  %v696 = vsel %vm67, %v626, 0
  %v699 = vsel %vm67, %v627, 0
  %v702 = vsel %vm67, %v628, 0
  %v705 = vsel %vm67, %v629, 0
  %v708 = vsel %vm143, %v631, 0
  %710 = vmatprep.subr.mxu0 0.0
  %711 = vmatpush1.msra.mxu0 %v708
  %712 = vmatprep.subr.mxu0 0.0
  %713 = vmatpush1.msra.mxu0 0.0
  %714 = vmatprep.subr.mxu0 0.0
  %715 = vmatpush1.msra.mxu0 0.0
  %716 = vmatprep.subr.mxu0 0.0
  %717 = vmatpush1.msra.mxu0 0.0
  %718 = vmatprep.subr.mxu0 0.0
  %719 = vmatpush1.msra.mxu0 0.0
  %720 = vmatprep.subr.mxu0 0.0
  %721 = vmatpush1.msra.mxu0 0.0
  %722 = vmatprep.subr.mxu0 0.0
  %723 = vmatpush1.msra.mxu0 0.0
  %724 = vmatprep.subr.mxu0 0.0
  %725 = vmatpush1.msra.mxu0 0.0
  %726 = vmatprep.subr.mxu0 0.0
  %727 = vmatpush1.msra.mxu0 0.0
  %728 = vmatprep.subr.mxu0 0.0
  %729 = vmatpush1.msra.mxu0 0.0
  %730 = vmatprep.subr.mxu0 0.0
  %731 = vmatpush1.msra.mxu0 0.0
  %732 = vmatprep.subr.mxu0 0.0
  %733 = vmatpush1.msra.mxu0 0.0
  %734 = vmatprep.subr.mxu0 0.0
  %735 = vmatpush1.msra.mxu0 0.0
  %736 = vmatprep.subr.mxu0 0.0
  %737 = vmatpush1.msra.mxu0 0.0
  %738 = vmatprep.subr.mxu0 0.0
  %739 = vmatpush1.msra.mxu0 0.0
  %740 = vmatprep.subr.mxu0 0.0
  %741 = vmatpush1.msra.mxu0 0.0
  %742 = vmatprep.subr.mxu0 0.0
  %743 = vmatpush1.msra.mxu0 0.0
  %744 = vmatprep.subr.mxu0 0.0
  %745 = vmatpush1.msra.mxu0 0.0
  %746 = vmatprep.subr.mxu0 0.0
  %747 = vmatpush1.msra.mxu0 0.0
  %748 = vmatprep.subr.mxu0 0.0
  %749 = vmatpush1.msra.mxu0 0.0
  %750 = vmatprep.subr.mxu0 0.0
  %751 = vmatpush1.msra.mxu0 0.0
  %752 = vmatprep.subr.mxu0 0.0
  %753 = vmatpush1.msra.mxu0 0.0
  %754 = vmatprep.subr.mxu0 0.0
  %755 = vmatpush1.msra.mxu0 0.0
  %756 = vmatprep.subr.mxu0 0.0
  %757 = vmatpush1.msra.mxu0 0.0
  %758 = vmatprep.subr.mxu0 0.0
  %759 = vmatpush1.msra.mxu0 0.0
  %760 = vmatprep.subr.mxu0 0.0
  %761 = vmatpush1.msra.mxu0 0.0
  %762 = vmatprep.subr.mxu0 0.0
  %763 = vmatpush1.msra.mxu0 0.0
  %764 = vmatprep.subr.mxu0 0.0
  %765 = vmatpush1.msra.mxu0 0.0
  %766 = vmatprep.subr.mxu0 0.0
  %767 = vmatpush1.msra.mxu0 0.0
  %768 = vmatprep.subr.mxu0 0.0
  %769 = vmatpush1.msra.mxu0 0.0
  %770 = vmatprep.subr.mxu0 0.0
  %771 = vmatpush1.msra.mxu0 0.0
  %772 = vmatprep.subr.mxu0 0.0
  %773 = vmatpush1.msra.mxu0 0.0
  %774 = vmatprep.mubr.f32.mxu0 0.0
  %775 = vmatmul.mubr.f32.gmra.mrb[0].mxu0 %v633
  %v776 = vpop.f32.mrb[0].mxu0
  %v777 = vadd.f32 0.0, %v776
  %v778 = vpop.f32.mrb[0].mxu0
  %779 = vmatprep.mubr.f32.mxu0 0.0
  %780 = vmatmul.mubr.f32.gmra.mrb[0].mxu0 %v636
  %v781 = vpop.f32.mrb[0].mxu0
  %v782 = vadd.f32 0.0, %v781
  %v783 = vpop.f32.mrb[0].mxu0
  %784 = vmatprep.mubr.f32.mxu0 0.0
  %785 = vmatmul.mubr.f32.gmra.mrb[0].mxu0 %v639
  %v786 = vpop.f32.mrb[0].mxu0
  %v787 = vadd.f32 0.0, %v786
  %v788 = vpop.f32.mrb[0].mxu0
  %789 = vmatprep.mubr.f32.mxu0 0.0
  %790 = vmatmul.mubr.f32.gmra.mrb[0].mxu0 %v642
  %v791 = vpop.f32.mrb[0].mxu0
  %v792 = vadd.f32 0.0, %v791
  %v793 = vpop.f32.mrb[0].mxu0
  %794 = vmatprep.mubr.f32.mxu0 0.0
  %795 = vmatmul.mubr.f32.gmra.mrb[0].mxu0 %v645
  %v796 = vpop.f32.mrb[0].mxu0
  %v797 = vadd.f32 0.0, %v796
  %v798 = vpop.f32.mrb[0].mxu0
  %799 = vmatprep.mubr.f32.mxu0 0.0
  %800 = vmatmul.mubr.f32.gmra.mrb[0].mxu0 %v648
  %v801 = vpop.f32.mrb[0].mxu0
  %v802 = vadd.f32 0.0, %v801
  %v803 = vpop.f32.mrb[0].mxu0
  %804 = vmatprep.mubr.f32.mxu0 0.0
  %805 = vmatmul.mubr.f32.gmra.mrb[0].mxu0 %v651
  %v806 = vpop.f32.mrb[0].mxu0
  %v807 = vadd.f32 0.0, %v806
  %v808 = vpop.f32.mrb[0].mxu0
  %809 = vmatprep.mubr.f32.mxu0 0.0
  %810 = vmatmul.mubr.f32.gmra.mrb[0].mxu0 %v654
  %v811 = vpop.f32.mrb[0].mxu0
  %v812 = vadd.f32 0.0, %v811
  %v813 = vpop.f32.mrb[0].mxu0
  %814 = vmatprep.mubr.f32.mxu0 0.0
  %815 = vmatmul.mubr.f32.gmra.mrb[0].mxu0 %v657
  %v816 = vpop.f32.mrb[0].mxu0
  %v817 = vadd.f32 0.0, %v816
  %v818 = vpop.f32.mrb[0].mxu0
  %819 = vmatprep.mubr.f32.mxu0 0.0
  %820 = vmatmul.mubr.f32.gmra.mrb[0].mxu0 %v660
  %v821 = vpop.f32.mrb[0].mxu0
  %v822 = vadd.f32 0.0, %v821
  %v823 = vpop.f32.mrb[0].mxu0
  %824 = vmatprep.mubr.f32.mxu0 0.0
  %825 = vmatmul.mubr.f32.gmra.mrb[0].mxu0 %v663
  %v826 = vpop.f32.mrb[0].mxu0
  %v827 = vadd.f32 0.0, %v826
  %v828 = vpop.f32.mrb[0].mxu0
  %829 = vmatprep.mubr.f32.mxu0 0.0
  %830 = vmatmul.mubr.f32.gmra.mrb[0].mxu0 %v666
  %v831 = vpop.f32.mrb[0].mxu0
  %v832 = vadd.f32 0.0, %v831
  %v833 = vpop.f32.mrb[0].mxu0
  %834 = vmatprep.mubr.f32.mxu0 0.0
  %835 = vmatmul.mubr.f32.gmra.mrb[0].mxu0 %v669
  %v836 = vpop.f32.mrb[0].mxu0
  %v837 = vadd.f32 0.0, %v836
  %v838 = vpop.f32.mrb[0].mxu0
  %839 = vmatprep.mubr.f32.mxu0 0.0
  %840 = vmatmul.mubr.f32.gmra.mrb[0].mxu0 %v672
  %v841 = vpop.f32.mrb[0].mxu0
  %v842 = vadd.f32 0.0, %v841
  %v843 = vpop.f32.mrb[0].mxu0
  %844 = vmatprep.mubr.f32.mxu0 0.0
  %845 = vmatmul.mubr.f32.gmra.mrb[0].mxu0 %v675
  %v846 = vpop.f32.mrb[0].mxu0
  %v847 = vadd.f32 0.0, %v846
  %v848 = vpop.f32.mrb[0].mxu0
  %849 = vmatprep.mubr.f32.mxu0 0.0
  %850 = vmatmul.mubr.f32.gmra.mrb[0].mxu0 %v678
  %v851 = vpop.f32.mrb[0].mxu0
  %v852 = vadd.f32 0.0, %v851
  %v853 = vpop.f32.mrb[0].mxu0
  %854 = vmatprep.mubr.f32.mxu0 0.0
  %855 = vmatmul.mubr.f32.gmra.mrb[0].mxu0 %v681
  %v856 = vpop.f32.mrb[0].mxu0
  %v857 = vadd.f32 0.0, %v856
  %v858 = vpop.f32.mrb[0].mxu0
  %859 = vmatprep.mubr.f32.mxu0 0.0
  %860 = vmatmul.mubr.f32.gmra.mrb[0].mxu0 %v684
  %v861 = vpop.f32.mrb[0].mxu0
  %v862 = vadd.f32 0.0, %v861
  %v863 = vpop.f32.mrb[0].mxu0
  %864 = vmatprep.mubr.f32.mxu0 0.0
  %865 = vmatmul.mubr.f32.gmra.mrb[0].mxu0 %v687
  %v866 = vpop.f32.mrb[0].mxu0
  %v867 = vadd.f32 0.0, %v866
  %v868 = vpop.f32.mrb[0].mxu0
  %869 = vmatprep.mubr.f32.mxu0 0.0
  %870 = vmatmul.mubr.f32.gmra.mrb[0].mxu0 %v690
  %v871 = vpop.f32.mrb[0].mxu0
  %v872 = vadd.f32 0.0, %v871
  %v873 = vpop.f32.mrb[0].mxu0
  %874 = vmatprep.mubr.f32.mxu0 0.0
  %875 = vmatmul.mubr.f32.gmra.mrb[0].mxu0 %v693
  %v876 = vpop.f32.mrb[0].mxu0
  %v877 = vadd.f32 0.0, %v876
  %v878 = vpop.f32.mrb[0].mxu0
  %879 = vmatprep.mubr.f32.mxu0 0.0
  %880 = vmatmul.mubr.f32.gmra.mrb[0].mxu0 %v696
  %v881 = vpop.f32.mrb[0].mxu0
  %v882 = vadd.f32 0.0, %v881
  %v883 = vpop.f32.mrb[0].mxu0
  %884 = vmatprep.mubr.f32.mxu0 0.0
  %885 = vmatmul.mubr.f32.gmra.mrb[0].mxu0 %v699
  %v886 = vpop.f32.mrb[0].mxu0
  %v887 = vadd.f32 0.0, %v886
  %v888 = vpop.f32.mrb[0].mxu0
  %889 = vmatprep.mubr.f32.mxu0 0.0
  %890 = vmatmul.mubr.f32.gmra.mrb[0].mxu0 %v702
  %v891 = vpop.f32.mrb[0].mxu0
  %v892 = vadd.f32 0.0, %v891
  %v893 = vpop.f32.mrb[0].mxu0
  %894 = vmatprep.mubr.f32.mxu0 0.0
  %895 = vmatmul.mubr.f32.gmra.mrb[0].mxu0 %v705
  %v896 = vpop.f32.mrb[0].mxu0
  %v897 = vadd.f32 0.0, %v896
  %v898 = vpop.f32.mrb[0].mxu0
  %899 = vdwg.mxu0
  %v900 = vadd.f32 %v482, %v777
  %v901 = vadd.f32 %v487, %v782
  %v902 = vadd.f32 %v492, %v787
  %v903 = vadd.f32 %v497, %v792
  %v904 = vadd.f32 %v502, %v797
  %v905 = vadd.f32 %v507, %v802
  %v906 = vadd.f32 %v512, %v807
  %v907 = vadd.f32 %v517, %v812
  %v908 = vadd.f32 %v522, %v817
  %v909 = vadd.f32 %v527, %v822
  %v910 = vadd.f32 %v532, %v827
  %v911 = vadd.f32 %v537, %v832
  %v912 = vadd.f32 %v542, %v837
  %v913 = vadd.f32 %v547, %v842
  %v914 = vadd.f32 %v552, %v847
  %v915 = vadd.f32 %v557, %v852
  %v916 = vadd.f32 %v562, %v857
  %v917 = vadd.f32 %v567, %v862
  %v918 = vadd.f32 %v572, %v867
  %v919 = vadd.f32 %v577, %v872
  %v920 = vadd.f32 %v582, %v877
  %v921 = vadd.f32 %v587, %v882
  %v922 = vadd.f32 %v592, %v887
  %v923 = vadd.f32 %v597, %v892
  %v924 = vadd.f32 %v602, %v897
  %v925 = vld [vmem:[%s0 + $0xa] sm:$0xff]
  %v926 = vld [vmem:[%s0 + $0x12] sm:$0xff]
  %v927 = vld [vmem:[%s0 + $0x1a] sm:$0xff]
  %v928 = vld [vmem:[%s0 + $0x22] sm:$0xff]
  %v929 = vld [vmem:[%s0 + $0x2a] sm:$0xff]
  %v930 = vld [vmem:[%s0 + $0x32] sm:$0xff]
  %v931 = vld [vmem:[%s0 + $0x3a] sm:$0xff]
  %v932 = vld [vmem:[%s0 + $0x42] sm:$0xff]
  %v933 = vld [vmem:[%s0 + $0x4a] sm:$0xff]
  %v934 = vld [vmem:[%s0 + $0x52] sm:$0xff]
  %v935 = vld [vmem:[%s0 + $0x5a] sm:$0xff]
  %v936 = vld [vmem:[%s0 + $0x62] sm:$0xff]
  %v937 = vld [vmem:[%s0 + $0x6a] sm:$0xff]
  %v938 = vld [vmem:[%s0 + $0x72] sm:$0xff]
  %v939 = vld [vmem:[%s0 + $0x7a] sm:$0xff]
  %v940 = vld [vmem:[%s0 + $0x82] sm:$0xff]
  %v941 = vld [vmem:[%s0 + $0x8a] sm:$0xff]
  %v942 = vld [vmem:[%s0 + $0x92] sm:$0xff]
  %v943 = vld [vmem:[%s0 + $0x9a] sm:$0xff]
  %v944 = vld [vmem:[%s0 + $0xa2] sm:$0xff]
  %v945 = vld [vmem:[%s0 + $0xaa] sm:$0xff]
  %v946 = vld [vmem:[%s0 + $0xb2] sm:$0xff]
  %v947 = vld [vmem:[%s0 + $0xba] sm:$0xff]
  %v948 = vld [vmem:[%s0 + $0xc2] sm:$0xff]
  %v949 = vld [vmem:[%s0 + $0xca] sm:$0xff]
  %s950 = scalar_lea.vmem %s1, 12
  %v951 = vld [vmem:[%s950] sm:$0x7]
  %v953 = vsel %vm67, %v925, 0
  %v956 = vsel %vm67, %v926, 0
  %v959 = vsel %vm67, %v927, 0
  %v962 = vsel %vm67, %v928, 0
  %v965 = vsel %vm67, %v929, 0
  %v968 = vsel %vm67, %v930, 0
  %v971 = vsel %vm67, %v931, 0
  %v974 = vsel %vm67, %v932, 0
  %v977 = vsel %vm67, %v933, 0
  %v980 = vsel %vm67, %v934, 0
  %v983 = vsel %vm67, %v935, 0
  %v986 = vsel %vm67, %v936, 0
  %v989 = vsel %vm67, %v937, 0
  %v992 = vsel %vm67, %v938, 0
  %v995 = vsel %vm67, %v939, 0
  %v998 = vsel %vm67, %v940, 0
  %v1001 = vsel %vm67, %v941, 0
  %v1004 = vsel %vm67, %v942, 0
  %v1007 = vsel %vm67, %v943, 0
  %v1010 = vsel %vm67, %v944, 0
  %v1013 = vsel %vm67, %v945, 0
  %v1016 = vsel %vm67, %v946, 0
  %v1019 = vsel %vm67, %v947, 0
  %v1022 = vsel %vm67, %v948, 0
  %v1025 = vsel %vm67, %v949, 0
  %v1028 = vsel %vm143, %v951, 0
  %1030 = vmatprep.subr.mxu0 0.0
  %1031 = vmatpush1.msra.mxu0 %v1028
  %1032 = vmatprep.subr.mxu0 0.0
  %1033 = vmatpush1.msra.mxu0 0.0
  %1034 = vmatprep.subr.mxu0 0.0
  %1035 = vmatpush1.msra.mxu0 0.0
  %1036 = vmatprep.subr.mxu0 0.0
  %1037 = vmatpush1.msra.mxu0 0.0
  %1038 = vmatprep.subr.mxu0 0.0
  %1039 = vmatpush1.msra.mxu0 0.0
  %1040 = vmatprep.subr.mxu0 0.0
  %1041 = vmatpush1.msra.mxu0 0.0
  %1042 = vmatprep.subr.mxu0 0.0
  %1043 = vmatpush1.msra.mxu0 0.0
  %1044 = vmatprep.subr.mxu0 0.0
  %1045 = vmatpush1.msra.mxu0 0.0
  %1046 = vmatprep.subr.mxu0 0.0
  %1047 = vmatpush1.msra.mxu0 0.0
  %1048 = vmatprep.subr.mxu0 0.0
  %1049 = vmatpush1.msra.mxu0 0.0
  %1050 = vmatprep.subr.mxu0 0.0
  %1051 = vmatpush1.msra.mxu0 0.0
  %1052 = vmatprep.subr.mxu0 0.0
  %1053 = vmatpush1.msra.mxu0 0.0
  %1054 = vmatprep.subr.mxu0 0.0
  %1055 = vmatpush1.msra.mxu0 0.0
  %1056 = vmatprep.subr.mxu0 0.0
  %1057 = vmatpush1.msra.mxu0 0.0
  %1058 = vmatprep.subr.mxu0 0.0
  %1059 = vmatpush1.msra.mxu0 0.0
  %1060 = vmatprep.subr.mxu0 0.0
  %1061 = vmatpush1.msra.mxu0 0.0
  %1062 = vmatprep.subr.mxu0 0.0
  %1063 = vmatpush1.msra.mxu0 0.0
  %1064 = vmatprep.subr.mxu0 0.0
  %1065 = vmatpush1.msra.mxu0 0.0
  %1066 = vmatprep.subr.mxu0 0.0
  %1067 = vmatpush1.msra.mxu0 0.0
  %1068 = vmatprep.subr.mxu0 0.0
  %1069 = vmatpush1.msra.mxu0 0.0
  %1070 = vmatprep.subr.mxu0 0.0
  %1071 = vmatpush1.msra.mxu0 0.0
  %1072 = vmatprep.subr.mxu0 0.0
  %1073 = vmatpush1.msra.mxu0 0.0
  %1074 = vmatprep.subr.mxu0 0.0
  %1075 = vmatpush1.msra.mxu0 0.0
  %1076 = vmatprep.subr.mxu0 0.0
  %1077 = vmatpush1.msra.mxu0 0.0
  %1078 = vmatprep.subr.mxu0 0.0
  %1079 = vmatpush1.msra.mxu0 0.0
  %1080 = vmatprep.subr.mxu0 0.0
  %1081 = vmatpush1.msra.mxu0 0.0
  %1082 = vmatprep.subr.mxu0 0.0
  %1083 = vmatpush1.msra.mxu0 0.0
  %1084 = vmatprep.subr.mxu0 0.0
  %1085 = vmatpush1.msra.mxu0 0.0
  %1086 = vmatprep.subr.mxu0 0.0
  %1087 = vmatpush1.msra.mxu0 0.0
  %1088 = vmatprep.subr.mxu0 0.0
  %1089 = vmatpush1.msra.mxu0 0.0
  %1090 = vmatprep.subr.mxu0 0.0
  %1091 = vmatpush1.msra.mxu0 0.0
  %1092 = vmatprep.subr.mxu0 0.0
  %1093 = vmatpush1.msra.mxu0 0.0
  %1094 = vmatprep.mubr.f32.mxu0 0.0
  %1095 = vmatmul.mubr.f32.gmra.mrb[0].mxu0 %v953
  %v1096 = vpop.f32.mrb[0].mxu0
  %v1097 = vadd.f32 0.0, %v1096
  %v1098 = vpop.f32.mrb[0].mxu0
  %1099 = vmatprep.mubr.f32.mxu0 0.0
  %1100 = vmatmul.mubr.f32.gmra.mrb[0].mxu0 %v956
  %v1101 = vpop.f32.mrb[0].mxu0
  %v1102 = vadd.f32 0.0, %v1101
  %v1103 = vpop.f32.mrb[0].mxu0
  %1104 = vmatprep.mubr.f32.mxu0 0.0
  %1105 = vmatmul.mubr.f32.gmra.mrb[0].mxu0 %v959
  %v1106 = vpop.f32.mrb[0].mxu0
  %v1107 = vadd.f32 0.0, %v1106
  %v1108 = vpop.f32.mrb[0].mxu0
  %1109 = vmatprep.mubr.f32.mxu0 0.0
  %1110 = vmatmul.mubr.f32.gmra.mrb[0].mxu0 %v962
  %v1111 = vpop.f32.mrb[0].mxu0
  %v1112 = vadd.f32 0.0, %v1111
  %v1113 = vpop.f32.mrb[0].mxu0
  %1114 = vmatprep.mubr.f32.mxu0 0.0
  %1115 = vmatmul.mubr.f32.gmra.mrb[0].mxu0 %v965
  %v1116 = vpop.f32.mrb[0].mxu0
  %v1117 = vadd.f32 0.0, %v1116
  %v1118 = vpop.f32.mrb[0].mxu0
  %1119 = vmatprep.mubr.f32.mxu0 0.0
  %1120 = vmatmul.mubr.f32.gmra.mrb[0].mxu0 %v968
  %v1121 = vpop.f32.mrb[0].mxu0
  %v1122 = vadd.f32 0.0, %v1121
  %v1123 = vpop.f32.mrb[0].mxu0
  %1124 = vmatprep.mubr.f32.mxu0 0.0
  %1125 = vmatmul.mubr.f32.gmra.mrb[0].mxu0 %v971
  %v1126 = vpop.f32.mrb[0].mxu0
  %v1127 = vadd.f32 0.0, %v1126
  %v1128 = vpop.f32.mrb[0].mxu0
  %1129 = vmatprep.mubr.f32.mxu0 0.0
  %1130 = vmatmul.mubr.f32.gmra.mrb[0].mxu0 %v974
  %v1131 = vpop.f32.mrb[0].mxu0
  %v1132 = vadd.f32 0.0, %v1131
  %v1133 = vpop.f32.mrb[0].mxu0
  %1134 = vmatprep.mubr.f32.mxu0 0.0
  %1135 = vmatmul.mubr.f32.gmra.mrb[0].mxu0 %v977
  %v1136 = vpop.f32.mrb[0].mxu0
  %v1137 = vadd.f32 0.0, %v1136
  %v1138 = vpop.f32.mrb[0].mxu0
  %1139 = vmatprep.mubr.f32.mxu0 0.0
  %1140 = vmatmul.mubr.f32.gmra.mrb[0].mxu0 %v980
  %v1141 = vpop.f32.mrb[0].mxu0
  %v1142 = vadd.f32 0.0, %v1141
  %v1143 = vpop.f32.mrb[0].mxu0
  %1144 = vmatprep.mubr.f32.mxu0 0.0
  %1145 = vmatmul.mubr.f32.gmra.mrb[0].mxu0 %v983
  %v1146 = vpop.f32.mrb[0].mxu0
  %v1147 = vadd.f32 0.0, %v1146
  %v1148 = vpop.f32.mrb[0].mxu0
  %1149 = vmatprep.mubr.f32.mxu0 0.0
  %1150 = vmatmul.mubr.f32.gmra.mrb[0].mxu0 %v986
  %v1151 = vpop.f32.mrb[0].mxu0
  %v1152 = vadd.f32 0.0, %v1151
  %v1153 = vpop.f32.mrb[0].mxu0
  %1154 = vmatprep.mubr.f32.mxu0 0.0
  %1155 = vmatmul.mubr.f32.gmra.mrb[0].mxu0 %v989
  %v1156 = vpop.f32.mrb[0].mxu0
  %v1157 = vadd.f32 0.0, %v1156
  %v1158 = vpop.f32.mrb[0].mxu0
  %1159 = vmatprep.mubr.f32.mxu0 0.0
  %1160 = vmatmul.mubr.f32.gmra.mrb[0].mxu0 %v992
  %v1161 = vpop.f32.mrb[0].mxu0
  %v1162 = vadd.f32 0.0, %v1161
  %v1163 = vpop.f32.mrb[0].mxu0
  %1164 = vmatprep.mubr.f32.mxu0 0.0
  %1165 = vmatmul.mubr.f32.gmra.mrb[0].mxu0 %v995
  %v1166 = vpop.f32.mrb[0].mxu0
  %v1167 = vadd.f32 0.0, %v1166
  %v1168 = vpop.f32.mrb[0].mxu0
  %1169 = vmatprep.mubr.f32.mxu0 0.0
  %1170 = vmatmul.mubr.f32.gmra.mrb[0].mxu0 %v998
  %v1171 = vpop.f32.mrb[0].mxu0
  %v1172 = vadd.f32 0.0, %v1171
  %v1173 = vpop.f32.mrb[0].mxu0
  %1174 = vmatprep.mubr.f32.mxu0 0.0
  %1175 = vmatmul.mubr.f32.gmra.mrb[0].mxu0 %v1001
  %v1176 = vpop.f32.mrb[0].mxu0
  %v1177 = vadd.f32 0.0, %v1176
  %v1178 = vpop.f32.mrb[0].mxu0
  %1179 = vmatprep.mubr.f32.mxu0 0.0
  %1180 = vmatmul.mubr.f32.gmra.mrb[0].mxu0 %v1004
  %v1181 = vpop.f32.mrb[0].mxu0
  %v1182 = vadd.f32 0.0, %v1181
  %v1183 = vpop.f32.mrb[0].mxu0
  %1184 = vmatprep.mubr.f32.mxu0 0.0
  %1185 = vmatmul.mubr.f32.gmra.mrb[0].mxu0 %v1007
  %v1186 = vpop.f32.mrb[0].mxu0
  %v1187 = vadd.f32 0.0, %v1186
  %v1188 = vpop.f32.mrb[0].mxu0
  %1189 = vmatprep.mubr.f32.mxu0 0.0
  %1190 = vmatmul.mubr.f32.gmra.mrb[0].mxu0 %v1010
  %v1191 = vpop.f32.mrb[0].mxu0
  %v1192 = vadd.f32 0.0, %v1191
  %v1193 = vpop.f32.mrb[0].mxu0
  %1194 = vmatprep.mubr.f32.mxu0 0.0
  %1195 = vmatmul.mubr.f32.gmra.mrb[0].mxu0 %v1013
  %v1196 = vpop.f32.mrb[0].mxu0
  %v1197 = vadd.f32 0.0, %v1196
  %v1198 = vpop.f32.mrb[0].mxu0
  %1199 = vmatprep.mubr.f32.mxu0 0.0
  %1200 = vmatmul.mubr.f32.gmra.mrb[0].mxu0 %v1016
  %v1201 = vpop.f32.mrb[0].mxu0
  %v1202 = vadd.f32 0.0, %v1201
  %v1203 = vpop.f32.mrb[0].mxu0
  %1204 = vmatprep.mubr.f32.mxu0 0.0
  %1205 = vmatmul.mubr.f32.gmra.mrb[0].mxu0 %v1019
  %v1206 = vpop.f32.mrb[0].mxu0
  %v1207 = vadd.f32 0.0, %v1206
  %v1208 = vpop.f32.mrb[0].mxu0
  %1209 = vmatprep.mubr.f32.mxu0 0.0
  %1210 = vmatmul.mubr.f32.gmra.mrb[0].mxu0 %v1022
  %v1211 = vpop.f32.mrb[0].mxu0
  %v1212 = vadd.f32 0.0, %v1211
  %v1213 = vpop.f32.mrb[0].mxu0
  %1214 = vmatprep.mubr.f32.mxu0 0.0
  %1215 = vmatmul.mubr.f32.gmra.mrb[0].mxu0 %v1025
  %v1216 = vpop.f32.mrb[0].mxu0
  %v1217 = vadd.f32 0.0, %v1216
  %v1218 = vpop.f32.mrb[0].mxu0
  %1219 = vdwg.mxu0
  %v1220 = vadd.f32 %v900, %v1097
  %v1221 = vadd.f32 %v901, %v1102
  %v1222 = vadd.f32 %v902, %v1107
  %v1223 = vadd.f32 %v903, %v1112
  %v1224 = vadd.f32 %v904, %v1117
  %v1225 = vadd.f32 %v905, %v1122
  %v1226 = vadd.f32 %v906, %v1127
  %v1227 = vadd.f32 %v907, %v1132
  %v1228 = vadd.f32 %v908, %v1137
  %v1229 = vadd.f32 %v909, %v1142
  %v1230 = vadd.f32 %v910, %v1147
  %v1231 = vadd.f32 %v911, %v1152
  %v1232 = vadd.f32 %v912, %v1157
  %v1233 = vadd.f32 %v913, %v1162
  %v1234 = vadd.f32 %v914, %v1167
  %v1235 = vadd.f32 %v915, %v1172
  %v1236 = vadd.f32 %v916, %v1177
  %v1237 = vadd.f32 %v917, %v1182
  %v1238 = vadd.f32 %v918, %v1187
  %v1239 = vadd.f32 %v919, %v1192
  %v1240 = vadd.f32 %v920, %v1197
  %v1241 = vadd.f32 %v921, %v1202
  %v1242 = vadd.f32 %v922, %v1207
  %v1243 = vadd.f32 %v923, %v1212
  %v1244 = vadd.f32 %v924, %v1217
  %v1245 = vld [vmem:[%s0 + $0xb] sm:$0xff]
  %v1246 = vld [vmem:[%s0 + $0x13] sm:$0xff]
  %v1247 = vld [vmem:[%s0 + $0x1b] sm:$0xff]
  %v1248 = vld [vmem:[%s0 + $0x23] sm:$0xff]
  %v1249 = vld [vmem:[%s0 + $0x2b] sm:$0xff]
  %v1250 = vld [vmem:[%s0 + $0x33] sm:$0xff]
  %v1251 = vld [vmem:[%s0 + $0x3b] sm:$0xff]
  %v1252 = vld [vmem:[%s0 + $0x43] sm:$0xff]
  %v1253 = vld [vmem:[%s0 + $0x4b] sm:$0xff]
  %v1254 = vld [vmem:[%s0 + $0x53] sm:$0xff]
  %v1255 = vld [vmem:[%s0 + $0x5b] sm:$0xff]
  %v1256 = vld [vmem:[%s0 + $0x63] sm:$0xff]
  %v1257 = vld [vmem:[%s0 + $0x6b] sm:$0xff]
  %v1258 = vld [vmem:[%s0 + $0x73] sm:$0xff]
  %v1259 = vld [vmem:[%s0 + $0x7b] sm:$0xff]
  %v1260 = vld [vmem:[%s0 + $0x83] sm:$0xff]
  %v1261 = vld [vmem:[%s0 + $0x8b] sm:$0xff]
  %v1262 = vld [vmem:[%s0 + $0x93] sm:$0xff]
  %v1263 = vld [vmem:[%s0 + $0x9b] sm:$0xff]
  %v1264 = vld [vmem:[%s0 + $0xa3] sm:$0xff]
  %v1265 = vld [vmem:[%s0 + $0xab] sm:$0xff]
  %v1266 = vld [vmem:[%s0 + $0xb3] sm:$0xff]
  %v1267 = vld [vmem:[%s0 + $0xbb] sm:$0xff]
  %v1268 = vld [vmem:[%s0 + $0xc3] sm:$0xff]
  %v1269 = vld [vmem:[%s0 + $0xcb] sm:$0xff]
  %s1270 = scalar_lea.vmem %s1, 16
  %v1271 = vld [vmem:[%s1270] sm:$0x7]
  %v1273 = vsel %vm67, %v1245, 0
  %v1276 = vsel %vm67, %v1246, 0
  %v1279 = vsel %vm67, %v1247, 0
  %v1282 = vsel %vm67, %v1248, 0
  %v1285 = vsel %vm67, %v1249, 0
  %v1288 = vsel %vm67, %v1250, 0
  %v1291 = vsel %vm67, %v1251, 0
  %v1294 = vsel %vm67, %v1252, 0
  %v1297 = vsel %vm67, %v1253, 0
  %v1300 = vsel %vm67, %v1254, 0
  %v1303 = vsel %vm67, %v1255, 0
  %v1306 = vsel %vm67, %v1256, 0
  %v1309 = vsel %vm67, %v1257, 0
  %v1312 = vsel %vm67, %v1258, 0
  %v1315 = vsel %vm67, %v1259, 0
  %v1318 = vsel %vm67, %v1260, 0
  %v1321 = vsel %vm67, %v1261, 0
  %v1324 = vsel %vm67, %v1262, 0
  %v1327 = vsel %vm67, %v1263, 0
  %v1330 = vsel %vm67, %v1264, 0
  %v1333 = vsel %vm67, %v1265, 0
  %v1336 = vsel %vm67, %v1266, 0
  %v1339 = vsel %vm67, %v1267, 0
  %v1342 = vsel %vm67, %v1268, 0
  %v1345 = vsel %vm67, %v1269, 0
  %v1348 = vsel %vm143, %v1271, 0
  %1350 = vmatprep.subr.mxu0 0.0
  %1351 = vmatpush1.msra.mxu0 %v1348
  %1352 = vmatprep.subr.mxu0 0.0
  %1353 = vmatpush1.msra.mxu0 0.0
  %1354 = vmatprep.subr.mxu0 0.0
  %1355 = vmatpush1.msra.mxu0 0.0
  %1356 = vmatprep.subr.mxu0 0.0
  %1357 = vmatpush1.msra.mxu0 0.0
  %1358 = vmatprep.subr.mxu0 0.0
  %1359 = vmatpush1.msra.mxu0 0.0
  %1360 = vmatprep.subr.mxu0 0.0
  %1361 = vmatpush1.msra.mxu0 0.0
  %1362 = vmatprep.subr.mxu0 0.0
  %1363 = vmatpush1.msra.mxu0 0.0
  %1364 = vmatprep.subr.mxu0 0.0
  %1365 = vmatpush1.msra.mxu0 0.0
  %1366 = vmatprep.subr.mxu0 0.0
  %1367 = vmatpush1.msra.mxu0 0.0
  %1368 = vmatprep.subr.mxu0 0.0
  %1369 = vmatpush1.msra.mxu0 0.0
  %1370 = vmatprep.subr.mxu0 0.0
  %1371 = vmatpush1.msra.mxu0 0.0
  %1372 = vmatprep.subr.mxu0 0.0
  %1373 = vmatpush1.msra.mxu0 0.0
  %1374 = vmatprep.subr.mxu0 0.0
  %1375 = vmatpush1.msra.mxu0 0.0
  %1376 = vmatprep.subr.mxu0 0.0
  %1377 = vmatpush1.msra.mxu0 0.0
  %1378 = vmatprep.subr.mxu0 0.0
  %1379 = vmatpush1.msra.mxu0 0.0
  %1380 = vmatprep.subr.mxu0 0.0
  %1381 = vmatpush1.msra.mxu0 0.0
  %1382 = vmatprep.subr.mxu0 0.0
  %1383 = vmatpush1.msra.mxu0 0.0
  %1384 = vmatprep.subr.mxu0 0.0
  %1385 = vmatpush1.msra.mxu0 0.0
  %1386 = vmatprep.subr.mxu0 0.0
  %1387 = vmatpush1.msra.mxu0 0.0
  %1388 = vmatprep.subr.mxu0 0.0
  %1389 = vmatpush1.msra.mxu0 0.0
  %1390 = vmatprep.subr.mxu0 0.0
  %1391 = vmatpush1.msra.mxu0 0.0
  %1392 = vmatprep.subr.mxu0 0.0
  %1393 = vmatpush1.msra.mxu0 0.0
  %1394 = vmatprep.subr.mxu0 0.0
  %1395 = vmatpush1.msra.mxu0 0.0
  %1396 = vmatprep.subr.mxu0 0.0
  %1397 = vmatpush1.msra.mxu0 0.0
  %1398 = vmatprep.subr.mxu0 0.0
  %1399 = vmatpush1.msra.mxu0 0.0
  %1400 = vmatprep.subr.mxu0 0.0
  %1401 = vmatpush1.msra.mxu0 0.0
  %1402 = vmatprep.subr.mxu0 0.0
  %1403 = vmatpush1.msra.mxu0 0.0
  %1404 = vmatprep.subr.mxu0 0.0
  %1405 = vmatpush1.msra.mxu0 0.0
  %1406 = vmatprep.subr.mxu0 0.0
  %1407 = vmatpush1.msra.mxu0 0.0
  %1408 = vmatprep.subr.mxu0 0.0
  %1409 = vmatpush1.msra.mxu0 0.0
  %1410 = vmatprep.subr.mxu0 0.0
  %1411 = vmatpush1.msra.mxu0 0.0
  %1412 = vmatprep.subr.mxu0 0.0
  %1413 = vmatpush1.msra.mxu0 0.0
  %1414 = vmatprep.mubr.f32.mxu0 0.0
  %1415 = vmatmul.mubr.f32.gmra.mrb[0].mxu0 %v1273
  %v1416 = vpop.f32.mrb[0].mxu0
  %v1417 = vadd.f32 0.0, %v1416
  %v1418 = vpop.f32.mrb[0].mxu0
  %1419 = vmatprep.mubr.f32.mxu0 0.0
  %1420 = vmatmul.mubr.f32.gmra.mrb[0].mxu0 %v1276
  %v1421 = vpop.f32.mrb[0].mxu0
  %v1422 = vadd.f32 0.0, %v1421
  %v1423 = vpop.f32.mrb[0].mxu0
  %1424 = vmatprep.mubr.f32.mxu0 0.0
  %1425 = vmatmul.mubr.f32.gmra.mrb[0].mxu0 %v1279
  %v1426 = vpop.f32.mrb[0].mxu0
  %v1427 = vadd.f32 0.0, %v1426
  %v1428 = vpop.f32.mrb[0].mxu0
  %1429 = vmatprep.mubr.f32.mxu0 0.0
  %1430 = vmatmul.mubr.f32.gmra.mrb[0].mxu0 %v1282
  %v1431 = vpop.f32.mrb[0].mxu0
  %v1432 = vadd.f32 0.0, %v1431
  %v1433 = vpop.f32.mrb[0].mxu0
  %1434 = vmatprep.mubr.f32.mxu0 0.0
  %1435 = vmatmul.mubr.f32.gmra.mrb[0].mxu0 %v1285
  %v1436 = vpop.f32.mrb[0].mxu0
  %v1437 = vadd.f32 0.0, %v1436
  %v1438 = vpop.f32.mrb[0].mxu0
  %1439 = vmatprep.mubr.f32.mxu0 0.0
  %1440 = vmatmul.mubr.f32.gmra.mrb[0].mxu0 %v1288
  %v1441 = vpop.f32.mrb[0].mxu0
  %v1442 = vadd.f32 0.0, %v1441
  %v1443 = vpop.f32.mrb[0].mxu0
  %1444 = vmatprep.mubr.f32.mxu0 0.0
  %1445 = vmatmul.mubr.f32.gmra.mrb[0].mxu0 %v1291
  %v1446 = vpop.f32.mrb[0].mxu0
  %v1447 = vadd.f32 0.0, %v1446
  %v1448 = vpop.f32.mrb[0].mxu0
  %1449 = vmatprep.mubr.f32.mxu0 0.0
  %1450 = vmatmul.mubr.f32.gmra.mrb[0].mxu0 %v1294
  %v1451 = vpop.f32.mrb[0].mxu0
  %v1452 = vadd.f32 0.0, %v1451
  %v1453 = vpop.f32.mrb[0].mxu0
  %1454 = vmatprep.mubr.f32.mxu0 0.0
  %1455 = vmatmul.mubr.f32.gmra.mrb[0].mxu0 %v1297
  %v1456 = vpop.f32.mrb[0].mxu0
  %v1457 = vadd.f32 0.0, %v1456
  %v1458 = vpop.f32.mrb[0].mxu0
  %1459 = vmatprep.mubr.f32.mxu0 0.0
  %1460 = vmatmul.mubr.f32.gmra.mrb[0].mxu0 %v1300
  %v1461 = vpop.f32.mrb[0].mxu0
  %v1462 = vadd.f32 0.0, %v1461
  %v1463 = vpop.f32.mrb[0].mxu0
  %1464 = vmatprep.mubr.f32.mxu0 0.0
  %1465 = vmatmul.mubr.f32.gmra.mrb[0].mxu0 %v1303
  %v1466 = vpop.f32.mrb[0].mxu0
  %v1467 = vadd.f32 0.0, %v1466
  %v1468 = vpop.f32.mrb[0].mxu0
  %1469 = vmatprep.mubr.f32.mxu0 0.0
  %1470 = vmatmul.mubr.f32.gmra.mrb[0].mxu0 %v1306
  %v1471 = vpop.f32.mrb[0].mxu0
  %v1472 = vadd.f32 0.0, %v1471
  %v1473 = vpop.f32.mrb[0].mxu0
  %1474 = vmatprep.mubr.f32.mxu0 0.0
  %1475 = vmatmul.mubr.f32.gmra.mrb[0].mxu0 %v1309
  %v1476 = vpop.f32.mrb[0].mxu0
  %v1477 = vadd.f32 0.0, %v1476
  %v1478 = vpop.f32.mrb[0].mxu0
  %1479 = vmatprep.mubr.f32.mxu0 0.0
  %1480 = vmatmul.mubr.f32.gmra.mrb[0].mxu0 %v1312
  %v1481 = vpop.f32.mrb[0].mxu0
  %v1482 = vadd.f32 0.0, %v1481
  %v1483 = vpop.f32.mrb[0].mxu0
  %1484 = vmatprep.mubr.f32.mxu0 0.0
  %1485 = vmatmul.mubr.f32.gmra.mrb[0].mxu0 %v1315
  %v1486 = vpop.f32.mrb[0].mxu0
  %v1487 = vadd.f32 0.0, %v1486
  %v1488 = vpop.f32.mrb[0].mxu0
  %1489 = vmatprep.mubr.f32.mxu0 0.0
  %1490 = vmatmul.mubr.f32.gmra.mrb[0].mxu0 %v1318
  %v1491 = vpop.f32.mrb[0].mxu0
  %v1492 = vadd.f32 0.0, %v1491
  %v1493 = vpop.f32.mrb[0].mxu0
  %1494 = vmatprep.mubr.f32.mxu0 0.0
  %1495 = vmatmul.mubr.f32.gmra.mrb[0].mxu0 %v1321
  %v1496 = vpop.f32.mrb[0].mxu0
  %v1497 = vadd.f32 0.0, %v1496
  %v1498 = vpop.f32.mrb[0].mxu0
  %1499 = vmatprep.mubr.f32.mxu0 0.0
  %1500 = vmatmul.mubr.f32.gmra.mrb[0].mxu0 %v1324
  %v1501 = vpop.f32.mrb[0].mxu0
  %v1502 = vadd.f32 0.0, %v1501
  %v1503 = vpop.f32.mrb[0].mxu0
  %1504 = vmatprep.mubr.f32.mxu0 0.0
  %1505 = vmatmul.mubr.f32.gmra.mrb[0].mxu0 %v1327
  %v1506 = vpop.f32.mrb[0].mxu0
  %v1507 = vadd.f32 0.0, %v1506
  %v1508 = vpop.f32.mrb[0].mxu0
  %1509 = vmatprep.mubr.f32.mxu0 0.0
  %1510 = vmatmul.mubr.f32.gmra.mrb[0].mxu0 %v1330
  %v1511 = vpop.f32.mrb[0].mxu0
  %v1512 = vadd.f32 0.0, %v1511
  %v1513 = vpop.f32.mrb[0].mxu0
  %1514 = vmatprep.mubr.f32.mxu0 0.0
  %1515 = vmatmul.mubr.f32.gmra.mrb[0].mxu0 %v1333
  %v1516 = vpop.f32.mrb[0].mxu0
  %v1517 = vadd.f32 0.0, %v1516
  %v1518 = vpop.f32.mrb[0].mxu0
  %1519 = vmatprep.mubr.f32.mxu0 0.0
  %1520 = vmatmul.mubr.f32.gmra.mrb[0].mxu0 %v1336
  %v1521 = vpop.f32.mrb[0].mxu0
  %v1522 = vadd.f32 0.0, %v1521
  %v1523 = vpop.f32.mrb[0].mxu0
  %1524 = vmatprep.mubr.f32.mxu0 0.0
  %1525 = vmatmul.mubr.f32.gmra.mrb[0].mxu0 %v1339
  %v1526 = vpop.f32.mrb[0].mxu0
  %v1527 = vadd.f32 0.0, %v1526
  %v1528 = vpop.f32.mrb[0].mxu0
  %1529 = vmatprep.mubr.f32.mxu0 0.0
  %1530 = vmatmul.mubr.f32.gmra.mrb[0].mxu0 %v1342
  %v1531 = vpop.f32.mrb[0].mxu0
  %v1532 = vadd.f32 0.0, %v1531
  %v1533 = vpop.f32.mrb[0].mxu0
  %1534 = vmatprep.mubr.f32.mxu0 0.0
  %1535 = vmatmul.mubr.f32.gmra.mrb[0].mxu0 %v1345
  %v1536 = vpop.f32.mrb[0].mxu0
  %v1537 = vadd.f32 0.0, %v1536
  %v1538 = vpop.f32.mrb[0].mxu0
  %1539 = vdwg.mxu0
  %v1540 = vadd.f32 %v1220, %v1417
  %v1541 = vadd.f32 %v1221, %v1422
  %v1542 = vadd.f32 %v1222, %v1427
  %v1543 = vadd.f32 %v1223, %v1432
  %v1544 = vadd.f32 %v1224, %v1437
  %v1545 = vadd.f32 %v1225, %v1442
  %v1546 = vadd.f32 %v1226, %v1447
  %v1547 = vadd.f32 %v1227, %v1452
  %v1548 = vadd.f32 %v1228, %v1457
  %v1549 = vadd.f32 %v1229, %v1462
  %v1550 = vadd.f32 %v1230, %v1467
  %v1551 = vadd.f32 %v1231, %v1472
  %v1552 = vadd.f32 %v1232, %v1477
  %v1553 = vadd.f32 %v1233, %v1482
  %v1554 = vadd.f32 %v1234, %v1487
  %v1555 = vadd.f32 %v1235, %v1492
  %v1556 = vadd.f32 %v1236, %v1497
  %v1557 = vadd.f32 %v1237, %v1502
  %v1558 = vadd.f32 %v1238, %v1507
  %v1559 = vadd.f32 %v1239, %v1512
  %v1560 = vadd.f32 %v1240, %v1517
  %v1561 = vadd.f32 %v1241, %v1522
  %v1562 = vadd.f32 %v1242, %v1527
  %v1563 = vadd.f32 %v1243, %v1532
  %v1564 = vadd.f32 %v1244, %v1537
  %v1565 = vld [vmem:[%s0 + $0xc] sm:$0xff]
  %v1566 = vld [vmem:[%s0 + $0x14] sm:$0xff]
  %v1567 = vld [vmem:[%s0 + $0x1c] sm:$0xff]
  %v1568 = vld [vmem:[%s0 + $0x24] sm:$0xff]
  %v1569 = vld [vmem:[%s0 + $0x2c] sm:$0xff]
  %v1570 = vld [vmem:[%s0 + $0x34] sm:$0xff]
  %v1571 = vld [vmem:[%s0 + $0x3c] sm:$0xff]
  %v1572 = vld [vmem:[%s0 + $0x44] sm:$0xff]
  %v1573 = vld [vmem:[%s0 + $0x4c] sm:$0xff]
  %v1574 = vld [vmem:[%s0 + $0x54] sm:$0xff]
  %v1575 = vld [vmem:[%s0 + $0x5c] sm:$0xff]
  %v1576 = vld [vmem:[%s0 + $0x64] sm:$0xff]
  %v1577 = vld [vmem:[%s0 + $0x6c] sm:$0xff]
  %v1578 = vld [vmem:[%s0 + $0x74] sm:$0xff]
  %v1579 = vld [vmem:[%s0 + $0x7c] sm:$0xff]
  %v1580 = vld [vmem:[%s0 + $0x84] sm:$0xff]
  %v1581 = vld [vmem:[%s0 + $0x8c] sm:$0xff]
  %v1582 = vld [vmem:[%s0 + $0x94] sm:$0xff]
  %v1583 = vld [vmem:[%s0 + $0x9c] sm:$0xff]
  %v1584 = vld [vmem:[%s0 + $0xa4] sm:$0xff]
  %v1585 = vld [vmem:[%s0 + $0xac] sm:$0xff]
  %v1586 = vld [vmem:[%s0 + $0xb4] sm:$0xff]
  %v1587 = vld [vmem:[%s0 + $0xbc] sm:$0xff]
  %v1588 = vld [vmem:[%s0 + $0xc4] sm:$0xff]
  %v1589 = vld [vmem:[%s0 + $0xcc] sm:$0xff]
  %s1590 = scalar_lea.vmem %s1, 20
  %v1591 = vld [vmem:[%s1590] sm:$0x7]
  %v1593 = vsel %vm67, %v1565, 0
  %v1596 = vsel %vm67, %v1566, 0
  %v1599 = vsel %vm67, %v1567, 0
  %v1602 = vsel %vm67, %v1568, 0
  %v1605 = vsel %vm67, %v1569, 0
  %v1608 = vsel %vm67, %v1570, 0
  %v1611 = vsel %vm67, %v1571, 0
  %v1614 = vsel %vm67, %v1572, 0
  %v1617 = vsel %vm67, %v1573, 0
  %v1620 = vsel %vm67, %v1574, 0
  %v1623 = vsel %vm67, %v1575, 0
  %v1626 = vsel %vm67, %v1576, 0
  %v1629 = vsel %vm67, %v1577, 0
  %v1632 = vsel %vm67, %v1578, 0
  %v1635 = vsel %vm67, %v1579, 0
  %v1638 = vsel %vm67, %v1580, 0
  %v1641 = vsel %vm67, %v1581, 0
  %v1644 = vsel %vm67, %v1582, 0
  %v1647 = vsel %vm67, %v1583, 0
  %v1650 = vsel %vm67, %v1584, 0
  %v1653 = vsel %vm67, %v1585, 0
  %v1656 = vsel %vm67, %v1586, 0
  %v1659 = vsel %vm67, %v1587, 0
  %v1662 = vsel %vm67, %v1588, 0
  %v1665 = vsel %vm67, %v1589, 0
  %v1668 = vsel %vm143, %v1591, 0
  %1670 = vmatprep.subr.mxu0 0.0
  %1671 = vmatpush1.msra.mxu0 %v1668
  %1672 = vmatprep.subr.mxu0 0.0
  %1673 = vmatpush1.msra.mxu0 0.0
  %1674 = vmatprep.subr.mxu0 0.0
  %1675 = vmatpush1.msra.mxu0 0.0
  %1676 = vmatprep.subr.mxu0 0.0
  %1677 = vmatpush1.msra.mxu0 0.0
  %1678 = vmatprep.subr.mxu0 0.0
  %1679 = vmatpush1.msra.mxu0 0.0
  %1680 = vmatprep.subr.mxu0 0.0
  %1681 = vmatpush1.msra.mxu0 0.0
  %1682 = vmatprep.subr.mxu0 0.0
  %1683 = vmatpush1.msra.mxu0 0.0
  %1684 = vmatprep.subr.mxu0 0.0
  %1685 = vmatpush1.msra.mxu0 0.0
  %1686 = vmatprep.subr.mxu0 0.0
  %1687 = vmatpush1.msra.mxu0 0.0
  %1688 = vmatprep.subr.mxu0 0.0
  %1689 = vmatpush1.msra.mxu0 0.0
  %1690 = vmatprep.subr.mxu0 0.0
  %1691 = vmatpush1.msra.mxu0 0.0
  %1692 = vmatprep.subr.mxu0 0.0
  %1693 = vmatpush1.msra.mxu0 0.0
  %1694 = vmatprep.subr.mxu0 0.0
  %1695 = vmatpush1.msra.mxu0 0.0
  %1696 = vmatprep.subr.mxu0 0.0
  %1697 = vmatpush1.msra.mxu0 0.0
  %1698 = vmatprep.subr.mxu0 0.0
  %1699 = vmatpush1.msra.mxu0 0.0
  %1700 = vmatprep.subr.mxu0 0.0
  %1701 = vmatpush1.msra.mxu0 0.0
  %1702 = vmatprep.subr.mxu0 0.0
  %1703 = vmatpush1.msra.mxu0 0.0
  %1704 = vmatprep.subr.mxu0 0.0
  %1705 = vmatpush1.msra.mxu0 0.0
  %1706 = vmatprep.subr.mxu0 0.0
  %1707 = vmatpush1.msra.mxu0 0.0
  %1708 = vmatprep.subr.mxu0 0.0
  %1709 = vmatpush1.msra.mxu0 0.0
  %1710 = vmatprep.subr.mxu0 0.0
  %1711 = vmatpush1.msra.mxu0 0.0
  %1712 = vmatprep.subr.mxu0 0.0
  %1713 = vmatpush1.msra.mxu0 0.0
  %1714 = vmatprep.subr.mxu0 0.0
  %1715 = vmatpush1.msra.mxu0 0.0
  %1716 = vmatprep.subr.mxu0 0.0
  %1717 = vmatpush1.msra.mxu0 0.0
  %1718 = vmatprep.subr.mxu0 0.0
  %1719 = vmatpush1.msra.mxu0 0.0
  %1720 = vmatprep.subr.mxu0 0.0
  %1721 = vmatpush1.msra.mxu0 0.0
  %1722 = vmatprep.subr.mxu0 0.0
  %1723 = vmatpush1.msra.mxu0 0.0
  %1724 = vmatprep.subr.mxu0 0.0
  %1725 = vmatpush1.msra.mxu0 0.0
  %1726 = vmatprep.subr.mxu0 0.0
  %1727 = vmatpush1.msra.mxu0 0.0
  %1728 = vmatprep.subr.mxu0 0.0
  %1729 = vmatpush1.msra.mxu0 0.0
  %1730 = vmatprep.subr.mxu0 0.0
  %1731 = vmatpush1.msra.mxu0 0.0
  %1732 = vmatprep.subr.mxu0 0.0
  %1733 = vmatpush1.msra.mxu0 0.0
  %1734 = vmatprep.mubr.f32.mxu0 0.0
  %1735 = vmatmul.mubr.f32.gmra.mrb[0].mxu0 %v1593
  %v1736 = vpop.f32.mrb[0].mxu0
  %v1737 = vadd.f32 0.0, %v1736
  %v1738 = vpop.f32.mrb[0].mxu0
  %1739 = vmatprep.mubr.f32.mxu0 0.0
  %1740 = vmatmul.mubr.f32.gmra.mrb[0].mxu0 %v1596
  %v1741 = vpop.f32.mrb[0].mxu0
  %v1742 = vadd.f32 0.0, %v1741
  %v1743 = vpop.f32.mrb[0].mxu0
  %1744 = vmatprep.mubr.f32.mxu0 0.0
  %1745 = vmatmul.mubr.f32.gmra.mrb[0].mxu0 %v1599
  %v1746 = vpop.f32.mrb[0].mxu0
  %v1747 = vadd.f32 0.0, %v1746
  %v1748 = vpop.f32.mrb[0].mxu0
  %1749 = vmatprep.mubr.f32.mxu0 0.0
  %1750 = vmatmul.mubr.f32.gmra.mrb[0].mxu0 %v1602
  %v1751 = vpop.f32.mrb[0].mxu0
  %v1752 = vadd.f32 0.0, %v1751
  %v1753 = vpop.f32.mrb[0].mxu0
  %1754 = vmatprep.mubr.f32.mxu0 0.0
  %1755 = vmatmul.mubr.f32.gmra.mrb[0].mxu0 %v1605
  %v1756 = vpop.f32.mrb[0].mxu0
  %v1757 = vadd.f32 0.0, %v1756
  %v1758 = vpop.f32.mrb[0].mxu0
  %1759 = vmatprep.mubr.f32.mxu0 0.0
  %1760 = vmatmul.mubr.f32.gmra.mrb[0].mxu0 %v1608
  %v1761 = vpop.f32.mrb[0].mxu0
  %v1762 = vadd.f32 0.0, %v1761
  %v1763 = vpop.f32.mrb[0].mxu0
  %1764 = vmatprep.mubr.f32.mxu0 0.0
  %1765 = vmatmul.mubr.f32.gmra.mrb[0].mxu0 %v1611
  %v1766 = vpop.f32.mrb[0].mxu0
  %v1767 = vadd.f32 0.0, %v1766
  %v1768 = vpop.f32.mrb[0].mxu0
  %1769 = vmatprep.mubr.f32.mxu0 0.0
  %1770 = vmatmul.mubr.f32.gmra.mrb[0].mxu0 %v1614
  %v1771 = vpop.f32.mrb[0].mxu0
  %v1772 = vadd.f32 0.0, %v1771
  %v1773 = vpop.f32.mrb[0].mxu0
  %1774 = vmatprep.mubr.f32.mxu0 0.0
  %1775 = vmatmul.mubr.f32.gmra.mrb[0].mxu0 %v1617
  %v1776 = vpop.f32.mrb[0].mxu0
  %v1777 = vadd.f32 0.0, %v1776
  %v1778 = vpop.f32.mrb[0].mxu0
  %1779 = vmatprep.mubr.f32.mxu0 0.0
  %1780 = vmatmul.mubr.f32.gmra.mrb[0].mxu0 %v1620
  %v1781 = vpop.f32.mrb[0].mxu0
  %v1782 = vadd.f32 0.0, %v1781
  %v1783 = vpop.f32.mrb[0].mxu0
  %1784 = vmatprep.mubr.f32.mxu0 0.0
  %1785 = vmatmul.mubr.f32.gmra.mrb[0].mxu0 %v1623
  %v1786 = vpop.f32.mrb[0].mxu0
  %v1787 = vadd.f32 0.0, %v1786
  %v1788 = vpop.f32.mrb[0].mxu0
  %1789 = vmatprep.mubr.f32.mxu0 0.0
  %1790 = vmatmul.mubr.f32.gmra.mrb[0].mxu0 %v1626
  %v1791 = vpop.f32.mrb[0].mxu0
  %v1792 = vadd.f32 0.0, %v1791
  %v1793 = vpop.f32.mrb[0].mxu0
  %1794 = vmatprep.mubr.f32.mxu0 0.0
  %1795 = vmatmul.mubr.f32.gmra.mrb[0].mxu0 %v1629
  %v1796 = vpop.f32.mrb[0].mxu0
  %v1797 = vadd.f32 0.0, %v1796
  %v1798 = vpop.f32.mrb[0].mxu0
  %1799 = vmatprep.mubr.f32.mxu0 0.0
  %1800 = vmatmul.mubr.f32.gmra.mrb[0].mxu0 %v1632
  %v1801 = vpop.f32.mrb[0].mxu0
  %v1802 = vadd.f32 0.0, %v1801
  %v1803 = vpop.f32.mrb[0].mxu0
  %1804 = vmatprep.mubr.f32.mxu0 0.0
  %1805 = vmatmul.mubr.f32.gmra.mrb[0].mxu0 %v1635
  %v1806 = vpop.f32.mrb[0].mxu0
  %v1807 = vadd.f32 0.0, %v1806
  %v1808 = vpop.f32.mrb[0].mxu0
  %1809 = vmatprep.mubr.f32.mxu0 0.0
  %1810 = vmatmul.mubr.f32.gmra.mrb[0].mxu0 %v1638
  %v1811 = vpop.f32.mrb[0].mxu0
  %v1812 = vadd.f32 0.0, %v1811
  %v1813 = vpop.f32.mrb[0].mxu0
  %1814 = vmatprep.mubr.f32.mxu0 0.0
  %1815 = vmatmul.mubr.f32.gmra.mrb[0].mxu0 %v1641
  %v1816 = vpop.f32.mrb[0].mxu0
  %v1817 = vadd.f32 0.0, %v1816
  %v1818 = vpop.f32.mrb[0].mxu0
  %1819 = vmatprep.mubr.f32.mxu0 0.0
  %1820 = vmatmul.mubr.f32.gmra.mrb[0].mxu0 %v1644
  %v1821 = vpop.f32.mrb[0].mxu0
  %v1822 = vadd.f32 0.0, %v1821
  %v1823 = vpop.f32.mrb[0].mxu0
  %1824 = vmatprep.mubr.f32.mxu0 0.0
  %1825 = vmatmul.mubr.f32.gmra.mrb[0].mxu0 %v1647
  %v1826 = vpop.f32.mrb[0].mxu0
  %v1827 = vadd.f32 0.0, %v1826
  %v1828 = vpop.f32.mrb[0].mxu0
  %1829 = vmatprep.mubr.f32.mxu0 0.0
  %1830 = vmatmul.mubr.f32.gmra.mrb[0].mxu0 %v1650
  %v1831 = vpop.f32.mrb[0].mxu0
  %v1832 = vadd.f32 0.0, %v1831
  %v1833 = vpop.f32.mrb[0].mxu0
  %1834 = vmatprep.mubr.f32.mxu0 0.0
  %1835 = vmatmul.mubr.f32.gmra.mrb[0].mxu0 %v1653
  %v1836 = vpop.f32.mrb[0].mxu0
  %v1837 = vadd.f32 0.0, %v1836
  %v1838 = vpop.f32.mrb[0].mxu0
  %1839 = vmatprep.mubr.f32.mxu0 0.0
  %1840 = vmatmul.mubr.f32.gmra.mrb[0].mxu0 %v1656
  %v1841 = vpop.f32.mrb[0].mxu0
  %v1842 = vadd.f32 0.0, %v1841
  %v1843 = vpop.f32.mrb[0].mxu0
  %1844 = vmatprep.mubr.f32.mxu0 0.0
  %1845 = vmatmul.mubr.f32.gmra.mrb[0].mxu0 %v1659
  %v1846 = vpop.f32.mrb[0].mxu0
  %v1847 = vadd.f32 0.0, %v1846
  %v1848 = vpop.f32.mrb[0].mxu0
  %1849 = vmatprep.mubr.f32.mxu0 0.0
  %1850 = vmatmul.mubr.f32.gmra.mrb[0].mxu0 %v1662
  %v1851 = vpop.f32.mrb[0].mxu0
  %v1852 = vadd.f32 0.0, %v1851
  %v1853 = vpop.f32.mrb[0].mxu0
  %1854 = vmatprep.mubr.f32.mxu0 0.0
  %1855 = vmatmul.mubr.f32.gmra.mrb[0].mxu0 %v1665
  %v1856 = vpop.f32.mrb[0].mxu0
  %v1857 = vadd.f32 0.0, %v1856
  %v1858 = vpop.f32.mrb[0].mxu0
  %1859 = vdwg.mxu0
  %v1860 = vadd.f32 %v1540, %v1737
  %v1861 = vadd.f32 %v1541, %v1742
  %v1862 = vadd.f32 %v1542, %v1747
  %v1863 = vadd.f32 %v1543, %v1752
  %v1864 = vadd.f32 %v1544, %v1757
  %v1865 = vadd.f32 %v1545, %v1762
  %v1866 = vadd.f32 %v1546, %v1767
  %v1867 = vadd.f32 %v1547, %v1772
  %v1868 = vadd.f32 %v1548, %v1777
  %v1869 = vadd.f32 %v1549, %v1782
  %v1870 = vadd.f32 %v1550, %v1787
  %v1871 = vadd.f32 %v1551, %v1792
  %v1872 = vadd.f32 %v1552, %v1797
  %v1873 = vadd.f32 %v1553, %v1802
  %v1874 = vadd.f32 %v1554, %v1807
  %v1875 = vadd.f32 %v1555, %v1812
  %v1876 = vadd.f32 %v1556, %v1817
  %v1877 = vadd.f32 %v1557, %v1822
  %v1878 = vadd.f32 %v1558, %v1827
  %v1879 = vadd.f32 %v1559, %v1832
  %v1880 = vadd.f32 %v1560, %v1837
  %v1881 = vadd.f32 %v1561, %v1842
  %v1882 = vadd.f32 %v1562, %v1847
  %v1883 = vadd.f32 %v1563, %v1852
  %v1884 = vadd.f32 %v1564, %v1857
  %v1885 = vld [vmem:[%s0 + $0x14] sm:$0xff]
  %v1886 = vld [vmem:[%s0 + $0x1c] sm:$0xff]
  %v1887 = vld [vmem:[%s0 + $0x24] sm:$0xff]
  %v1888 = vld [vmem:[%s0 + $0x2c] sm:$0xff]
  %v1889 = vld [vmem:[%s0 + $0x34] sm:$0xff]
  %v1890 = vld [vmem:[%s0 + $0x3c] sm:$0xff]
  %v1891 = vld [vmem:[%s0 + $0x44] sm:$0xff]
  %v1892 = vld [vmem:[%s0 + $0x4c] sm:$0xff]
  %v1893 = vld [vmem:[%s0 + $0x54] sm:$0xff]
  %v1894 = vld [vmem:[%s0 + $0x5c] sm:$0xff]
  %v1895 = vld [vmem:[%s0 + $0x64] sm:$0xff]
  %v1896 = vld [vmem:[%s0 + $0x6c] sm:$0xff]
  %v1897 = vld [vmem:[%s0 + $0x74] sm:$0xff]
  %v1898 = vld [vmem:[%s0 + $0x7c] sm:$0xff]
  %v1899 = vld [vmem:[%s0 + $0x84] sm:$0xff]
  %v1900 = vld [vmem:[%s0 + $0x8c] sm:$0xff]
  %v1901 = vld [vmem:[%s0 + $0x94] sm:$0xff]
  %v1902 = vld [vmem:[%s0 + $0x9c] sm:$0xff]
  %v1903 = vld [vmem:[%s0 + $0xa4] sm:$0xff]
  %v1904 = vld [vmem:[%s0 + $0xac] sm:$0xff]
  %v1905 = vld [vmem:[%s0 + $0xb4] sm:$0xff]
  %v1906 = vld [vmem:[%s0 + $0xbc] sm:$0xff]
  %v1907 = vld [vmem:[%s0 + $0xc4] sm:$0xff]
  %v1908 = vld [vmem:[%s0 + $0xcc] sm:$0xff]
  %v1909 = vld [vmem:[%s0 + $0xd4] sm:$0xff]
  %s1910 = scalar_lea.vmem %s1, 24
  %v1911 = vld [vmem:[%s1910] sm:$0x7]
  %v1913 = vsel %vm67, %v1885, 0
  %v1916 = vsel %vm67, %v1886, 0
  %v1919 = vsel %vm67, %v1887, 0
  %v1922 = vsel %vm67, %v1888, 0
  %v1925 = vsel %vm67, %v1889, 0
  %v1928 = vsel %vm67, %v1890, 0
  %v1931 = vsel %vm67, %v1891, 0
  %v1934 = vsel %vm67, %v1892, 0
  %v1937 = vsel %vm67, %v1893, 0
  %v1940 = vsel %vm67, %v1894, 0
  %v1943 = vsel %vm67, %v1895, 0
  %v1946 = vsel %vm67, %v1896, 0
  %v1949 = vsel %vm67, %v1897, 0
  %v1952 = vsel %vm67, %v1898, 0
  %v1955 = vsel %vm67, %v1899, 0
  %v1958 = vsel %vm67, %v1900, 0
  %v1961 = vsel %vm67, %v1901, 0
  %v1964 = vsel %vm67, %v1902, 0
  %v1967 = vsel %vm67, %v1903, 0
  %v1970 = vsel %vm67, %v1904, 0
  %v1973 = vsel %vm67, %v1905, 0
  %v1976 = vsel %vm67, %v1906, 0
  %v1979 = vsel %vm67, %v1907, 0
  %v1982 = vsel %vm67, %v1908, 0
  %v1985 = vsel %vm67, %v1909, 0
  %v1988 = vsel %vm143, %v1911, 0
  %1990 = vmatprep.subr.mxu0 0.0
  %1991 = vmatpush1.msra.mxu0 %v1988
  %1992 = vmatprep.subr.mxu0 0.0
  %1993 = vmatpush1.msra.mxu0 0.0
  %1994 = vmatprep.subr.mxu0 0.0
  %1995 = vmatpush1.msra.mxu0 0.0
  %1996 = vmatprep.subr.mxu0 0.0
  %1997 = vmatpush1.msra.mxu0 0.0
  %1998 = vmatprep.subr.mxu0 0.0
  %1999 = vmatpush1.msra.mxu0 0.0
  %2000 = vmatprep.subr.mxu0 0.0
  %2001 = vmatpush1.msra.mxu0 0.0
  %2002 = vmatprep.subr.mxu0 0.0
  %2003 = vmatpush1.msra.mxu0 0.0
  %2004 = vmatprep.subr.mxu0 0.0
  %2005 = vmatpush1.msra.mxu0 0.0
  %2006 = vmatprep.subr.mxu0 0.0
  %2007 = vmatpush1.msra.mxu0 0.0
  %2008 = vmatprep.subr.mxu0 0.0
  %2009 = vmatpush1.msra.mxu0 0.0
  %2010 = vmatprep.subr.mxu0 0.0
  %2011 = vmatpush1.msra.mxu0 0.0
  %2012 = vmatprep.subr.mxu0 0.0
  %2013 = vmatpush1.msra.mxu0 0.0
  %2014 = vmatprep.subr.mxu0 0.0
  %2015 = vmatpush1.msra.mxu0 0.0
  %2016 = vmatprep.subr.mxu0 0.0
  %2017 = vmatpush1.msra.mxu0 0.0
  %2018 = vmatprep.subr.mxu0 0.0
  %2019 = vmatpush1.msra.mxu0 0.0
  %2020 = vmatprep.subr.mxu0 0.0
  %2021 = vmatpush1.msra.mxu0 0.0
  %2022 = vmatprep.subr.mxu0 0.0
  %2023 = vmatpush1.msra.mxu0 0.0
  %2024 = vmatprep.subr.mxu0 0.0
  %2025 = vmatpush1.msra.mxu0 0.0
  %2026 = vmatprep.subr.mxu0 0.0
  %2027 = vmatpush1.msra.mxu0 0.0
  %2028 = vmatprep.subr.mxu0 0.0
  %2029 = vmatpush1.msra.mxu0 0.0
  %2030 = vmatprep.subr.mxu0 0.0
  %2031 = vmatpush1.msra.mxu0 0.0
  %2032 = vmatprep.subr.mxu0 0.0
  %2033 = vmatpush1.msra.mxu0 0.0
  %2034 = vmatprep.subr.mxu0 0.0
  %2035 = vmatpush1.msra.mxu0 0.0
  %2036 = vmatprep.subr.mxu0 0.0
  %2037 = vmatpush1.msra.mxu0 0.0
  %2038 = vmatprep.subr.mxu0 0.0
  %2039 = vmatpush1.msra.mxu0 0.0
  %2040 = vmatprep.subr.mxu0 0.0
  %2041 = vmatpush1.msra.mxu0 0.0
  %2042 = vmatprep.subr.mxu0 0.0
  %2043 = vmatpush1.msra.mxu0 0.0
  %2044 = vmatprep.subr.mxu0 0.0
  %2045 = vmatpush1.msra.mxu0 0.0
  %2046 = vmatprep.subr.mxu0 0.0
  %2047 = vmatpush1.msra.mxu0 0.0
  %2048 = vmatprep.subr.mxu0 0.0
  %2049 = vmatpush1.msra.mxu0 0.0
  %2050 = vmatprep.subr.mxu0 0.0
  %2051 = vmatpush1.msra.mxu0 0.0
  %2052 = vmatprep.subr.mxu0 0.0
  %2053 = vmatpush1.msra.mxu0 0.0
  %2054 = vmatprep.mubr.f32.mxu0 0.0
  %2055 = vmatmul.mubr.f32.gmra.mrb[0].mxu0 %v1913
  %v2056 = vpop.f32.mrb[0].mxu0
  %v2057 = vadd.f32 0.0, %v2056
  %v2058 = vpop.f32.mrb[0].mxu0
  %2059 = vmatprep.mubr.f32.mxu0 0.0
  %2060 = vmatmul.mubr.f32.gmra.mrb[0].mxu0 %v1916
  %v2061 = vpop.f32.mrb[0].mxu0
  %v2062 = vadd.f32 0.0, %v2061
  %v2063 = vpop.f32.mrb[0].mxu0
  %2064 = vmatprep.mubr.f32.mxu0 0.0
  %2065 = vmatmul.mubr.f32.gmra.mrb[0].mxu0 %v1919
  %v2066 = vpop.f32.mrb[0].mxu0
  %v2067 = vadd.f32 0.0, %v2066
  %v2068 = vpop.f32.mrb[0].mxu0
  %2069 = vmatprep.mubr.f32.mxu0 0.0
  %2070 = vmatmul.mubr.f32.gmra.mrb[0].mxu0 %v1922
  %v2071 = vpop.f32.mrb[0].mxu0
  %v2072 = vadd.f32 0.0, %v2071
  %v2073 = vpop.f32.mrb[0].mxu0
  %2074 = vmatprep.mubr.f32.mxu0 0.0
  %2075 = vmatmul.mubr.f32.gmra.mrb[0].mxu0 %v1925
  %v2076 = vpop.f32.mrb[0].mxu0
  %v2077 = vadd.f32 0.0, %v2076
  %v2078 = vpop.f32.mrb[0].mxu0
  %2079 = vmatprep.mubr.f32.mxu0 0.0
  %2080 = vmatmul.mubr.f32.gmra.mrb[0].mxu0 %v1928
  %v2081 = vpop.f32.mrb[0].mxu0
  %v2082 = vadd.f32 0.0, %v2081
  %v2083 = vpop.f32.mrb[0].mxu0
  %2084 = vmatprep.mubr.f32.mxu0 0.0
  %2085 = vmatmul.mubr.f32.gmra.mrb[0].mxu0 %v1931
  %v2086 = vpop.f32.mrb[0].mxu0
  %v2087 = vadd.f32 0.0, %v2086
  %v2088 = vpop.f32.mrb[0].mxu0
  %2089 = vmatprep.mubr.f32.mxu0 0.0
  %2090 = vmatmul.mubr.f32.gmra.mrb[0].mxu0 %v1934
  %v2091 = vpop.f32.mrb[0].mxu0
  %v2092 = vadd.f32 0.0, %v2091
  %v2093 = vpop.f32.mrb[0].mxu0
  %2094 = vmatprep.mubr.f32.mxu0 0.0
  %2095 = vmatmul.mubr.f32.gmra.mrb[0].mxu0 %v1937
  %v2096 = vpop.f32.mrb[0].mxu0
  %v2097 = vadd.f32 0.0, %v2096
  %v2098 = vpop.f32.mrb[0].mxu0
  %2099 = vmatprep.mubr.f32.mxu0 0.0
  %2100 = vmatmul.mubr.f32.gmra.mrb[0].mxu0 %v1940
  %v2101 = vpop.f32.mrb[0].mxu0
  %v2102 = vadd.f32 0.0, %v2101
  %v2103 = vpop.f32.mrb[0].mxu0
  %2104 = vmatprep.mubr.f32.mxu0 0.0
  %2105 = vmatmul.mubr.f32.gmra.mrb[0].mxu0 %v1943
  %v2106 = vpop.f32.mrb[0].mxu0
  %v2107 = vadd.f32 0.0, %v2106
  %v2108 = vpop.f32.mrb[0].mxu0
  %2109 = vmatprep.mubr.f32.mxu0 0.0
  %2110 = vmatmul.mubr.f32.gmra.mrb[0].mxu0 %v1946
  %v2111 = vpop.f32.mrb[0].mxu0
  %v2112 = vadd.f32 0.0, %v2111
  %v2113 = vpop.f32.mrb[0].mxu0
  %2114 = vmatprep.mubr.f32.mxu0 0.0
  %2115 = vmatmul.mubr.f32.gmra.mrb[0].mxu0 %v1949
  %v2116 = vpop.f32.mrb[0].mxu0
  %v2117 = vadd.f32 0.0, %v2116
  %v2118 = vpop.f32.mrb[0].mxu0
  %2119 = vmatprep.mubr.f32.mxu0 0.0
  %2120 = vmatmul.mubr.f32.gmra.mrb[0].mxu0 %v1952
  %v2121 = vpop.f32.mrb[0].mxu0
  %v2122 = vadd.f32 0.0, %v2121
  %v2123 = vpop.f32.mrb[0].mxu0
  %2124 = vmatprep.mubr.f32.mxu0 0.0
  %2125 = vmatmul.mubr.f32.gmra.mrb[0].mxu0 %v1955
  %v2126 = vpop.f32.mrb[0].mxu0
  %v2127 = vadd.f32 0.0, %v2126
  %v2128 = vpop.f32.mrb[0].mxu0
  %2129 = vmatprep.mubr.f32.mxu0 0.0
  %2130 = vmatmul.mubr.f32.gmra.mrb[0].mxu0 %v1958
  %v2131 = vpop.f32.mrb[0].mxu0
  %v2132 = vadd.f32 0.0, %v2131
  %v2133 = vpop.f32.mrb[0].mxu0
  %2134 = vmatprep.mubr.f32.mxu0 0.0
  %2135 = vmatmul.mubr.f32.gmra.mrb[0].mxu0 %v1961
  %v2136 = vpop.f32.mrb[0].mxu0
  %v2137 = vadd.f32 0.0, %v2136
  %v2138 = vpop.f32.mrb[0].mxu0
  %2139 = vmatprep.mubr.f32.mxu0 0.0
  %2140 = vmatmul.mubr.f32.gmra.mrb[0].mxu0 %v1964
  %v2141 = vpop.f32.mrb[0].mxu0
  %v2142 = vadd.f32 0.0, %v2141
  %v2143 = vpop.f32.mrb[0].mxu0
  %2144 = vmatprep.mubr.f32.mxu0 0.0
  %2145 = vmatmul.mubr.f32.gmra.mrb[0].mxu0 %v1967
  %v2146 = vpop.f32.mrb[0].mxu0
  %v2147 = vadd.f32 0.0, %v2146
  %v2148 = vpop.f32.mrb[0].mxu0
  %2149 = vmatprep.mubr.f32.mxu0 0.0
  %2150 = vmatmul.mubr.f32.gmra.mrb[0].mxu0 %v1970
  %v2151 = vpop.f32.mrb[0].mxu0
  %v2152 = vadd.f32 0.0, %v2151
  %v2153 = vpop.f32.mrb[0].mxu0
  %2154 = vmatprep.mubr.f32.mxu0 0.0
  %2155 = vmatmul.mubr.f32.gmra.mrb[0].mxu0 %v1973
  %v2156 = vpop.f32.mrb[0].mxu0
  %v2157 = vadd.f32 0.0, %v2156
  %v2158 = vpop.f32.mrb[0].mxu0
  %2159 = vmatprep.mubr.f32.mxu0 0.0
  %2160 = vmatmul.mubr.f32.gmra.mrb[0].mxu0 %v1976
  %v2161 = vpop.f32.mrb[0].mxu0
  %v2162 = vadd.f32 0.0, %v2161
  %v2163 = vpop.f32.mrb[0].mxu0
  %2164 = vmatprep.mubr.f32.mxu0 0.0
  %2165 = vmatmul.mubr.f32.gmra.mrb[0].mxu0 %v1979
  %v2166 = vpop.f32.mrb[0].mxu0
  %v2167 = vadd.f32 0.0, %v2166
  %v2168 = vpop.f32.mrb[0].mxu0
  %2169 = vmatprep.mubr.f32.mxu0 0.0
  %2170 = vmatmul.mubr.f32.gmra.mrb[0].mxu0 %v1982
  %v2171 = vpop.f32.mrb[0].mxu0
  %v2172 = vadd.f32 0.0, %v2171
  %v2173 = vpop.f32.mrb[0].mxu0
  %2174 = vmatprep.mubr.f32.mxu0 0.0
  %2175 = vmatmul.mubr.f32.gmra.mrb[0].mxu0 %v1985
  %v2176 = vpop.f32.mrb[0].mxu0
  %v2177 = vadd.f32 0.0, %v2176
  %v2178 = vpop.f32.mrb[0].mxu0
  %2179 = vdwg.mxu0
  %v2180 = vadd.f32 %v1860, %v2057
  %v2181 = vadd.f32 %v1861, %v2062
  %v2182 = vadd.f32 %v1862, %v2067
  %v2183 = vadd.f32 %v1863, %v2072
  %v2184 = vadd.f32 %v1864, %v2077
  %v2185 = vadd.f32 %v1865, %v2082
  %v2186 = vadd.f32 %v1866, %v2087
  %v2187 = vadd.f32 %v1867, %v2092
  %v2188 = vadd.f32 %v1868, %v2097
  %v2189 = vadd.f32 %v1869, %v2102
  %v2190 = vadd.f32 %v1870, %v2107
  %v2191 = vadd.f32 %v1871, %v2112
  %v2192 = vadd.f32 %v1872, %v2117
  %v2193 = vadd.f32 %v1873, %v2122
  %v2194 = vadd.f32 %v1874, %v2127
  %v2195 = vadd.f32 %v1875, %v2132
  %v2196 = vadd.f32 %v1876, %v2137
  %v2197 = vadd.f32 %v1877, %v2142
  %v2198 = vadd.f32 %v1878, %v2147
  %v2199 = vadd.f32 %v1879, %v2152
  %v2200 = vadd.f32 %v1880, %v2157
  %v2201 = vadd.f32 %v1881, %v2162
  %v2202 = vadd.f32 %v1882, %v2167
  %v2203 = vadd.f32 %v1883, %v2172
  %v2204 = vadd.f32 %v1884, %v2177
  %v2205 = vld [vmem:[%s0 + $0x15] sm:$0xff]
  %v2206 = vld [vmem:[%s0 + $0x1d] sm:$0xff]
  %v2207 = vld [vmem:[%s0 + $0x25] sm:$0xff]
  %v2208 = vld [vmem:[%s0 + $0x2d] sm:$0xff]
  %v2209 = vld [vmem:[%s0 + $0x35] sm:$0xff]
  %v2210 = vld [vmem:[%s0 + $0x3d] sm:$0xff]
  %v2211 = vld [vmem:[%s0 + $0x45] sm:$0xff]
  %v2212 = vld [vmem:[%s0 + $0x4d] sm:$0xff]
  %v2213 = vld [vmem:[%s0 + $0x55] sm:$0xff]
  %v2214 = vld [vmem:[%s0 + $0x5d] sm:$0xff]
  %v2215 = vld [vmem:[%s0 + $0x65] sm:$0xff]
  %v2216 = vld [vmem:[%s0 + $0x6d] sm:$0xff]
  %v2217 = vld [vmem:[%s0 + $0x75] sm:$0xff]
  %v2218 = vld [vmem:[%s0 + $0x7d] sm:$0xff]
  %v2219 = vld [vmem:[%s0 + $0x85] sm:$0xff]
  %v2220 = vld [vmem:[%s0 + $0x8d] sm:$0xff]
  %v2221 = vld [vmem:[%s0 + $0x95] sm:$0xff]
  %v2222 = vld [vmem:[%s0 + $0x9d] sm:$0xff]
  %v2223 = vld [vmem:[%s0 + $0xa5] sm:$0xff]
  %v2224 = vld [vmem:[%s0 + $0xad] sm:$0xff]
  %v2225 = vld [vmem:[%s0 + $0xb5] sm:$0xff]
  %v2226 = vld [vmem:[%s0 + $0xbd] sm:$0xff]
  %v2227 = vld [vmem:[%s0 + $0xc5] sm:$0xff]
  %v2228 = vld [vmem:[%s0 + $0xcd] sm:$0xff]
  %v2229 = vld [vmem:[%s0 + $0xd5] sm:$0xff]
  %s2230 = scalar_lea.vmem %s1, 28
  %v2231 = vld [vmem:[%s2230] sm:$0x7]
  %v2233 = vsel %vm67, %v2205, 0
  %v2236 = vsel %vm67, %v2206, 0
  %v2239 = vsel %vm67, %v2207, 0
  %v2242 = vsel %vm67, %v2208, 0
  %v2245 = vsel %vm67, %v2209, 0
  %v2248 = vsel %vm67, %v2210, 0
  %v2251 = vsel %vm67, %v2211, 0
  %v2254 = vsel %vm67, %v2212, 0
  %v2257 = vsel %vm67, %v2213, 0
  %v2260 = vsel %vm67, %v2214, 0
  %v2263 = vsel %vm67, %v2215, 0
  %v2266 = vsel %vm67, %v2216, 0
  %v2269 = vsel %vm67, %v2217, 0
  %v2272 = vsel %vm67, %v2218, 0
  %v2275 = vsel %vm67, %v2219, 0
  %v2278 = vsel %vm67, %v2220, 0
  %v2281 = vsel %vm67, %v2221, 0
  %v2284 = vsel %vm67, %v2222, 0
  %v2287 = vsel %vm67, %v2223, 0
  %v2290 = vsel %vm67, %v2224, 0
  %v2293 = vsel %vm67, %v2225, 0
  %v2296 = vsel %vm67, %v2226, 0
  %v2299 = vsel %vm67, %v2227, 0
  %v2302 = vsel %vm67, %v2228, 0
  %v2305 = vsel %vm67, %v2229, 0
  %v2308 = vsel %vm143, %v2231, 0
  %2310 = vmatprep.subr.mxu0 0.0
  %2311 = vmatpush1.msra.mxu0 %v2308
  %2312 = vmatprep.subr.mxu0 0.0
  %2313 = vmatpush1.msra.mxu0 0.0
  %2314 = vmatprep.subr.mxu0 0.0
  %2315 = vmatpush1.msra.mxu0 0.0
  %2316 = vmatprep.subr.mxu0 0.0
  %2317 = vmatpush1.msra.mxu0 0.0
  %2318 = vmatprep.subr.mxu0 0.0
  %2319 = vmatpush1.msra.mxu0 0.0
  %2320 = vmatprep.subr.mxu0 0.0
  %2321 = vmatpush1.msra.mxu0 0.0
  %2322 = vmatprep.subr.mxu0 0.0
  %2323 = vmatpush1.msra.mxu0 0.0
  %2324 = vmatprep.subr.mxu0 0.0
  %2325 = vmatpush1.msra.mxu0 0.0
  %2326 = vmatprep.subr.mxu0 0.0
  %2327 = vmatpush1.msra.mxu0 0.0
  %2328 = vmatprep.subr.mxu0 0.0
  %2329 = vmatpush1.msra.mxu0 0.0
  %2330 = vmatprep.subr.mxu0 0.0
  %2331 = vmatpush1.msra.mxu0 0.0
  %2332 = vmatprep.subr.mxu0 0.0
  %2333 = vmatpush1.msra.mxu0 0.0
  %2334 = vmatprep.subr.mxu0 0.0
  %2335 = vmatpush1.msra.mxu0 0.0
  %2336 = vmatprep.subr.mxu0 0.0
  %2337 = vmatpush1.msra.mxu0 0.0
  %2338 = vmatprep.subr.mxu0 0.0
  %2339 = vmatpush1.msra.mxu0 0.0
  %2340 = vmatprep.subr.mxu0 0.0
  %2341 = vmatpush1.msra.mxu0 0.0
  %2342 = vmatprep.subr.mxu0 0.0
  %2343 = vmatpush1.msra.mxu0 0.0
  %2344 = vmatprep.subr.mxu0 0.0
  %2345 = vmatpush1.msra.mxu0 0.0
  %2346 = vmatprep.subr.mxu0 0.0
  %2347 = vmatpush1.msra.mxu0 0.0
  %2348 = vmatprep.subr.mxu0 0.0
  %2349 = vmatpush1.msra.mxu0 0.0
  %2350 = vmatprep.subr.mxu0 0.0
  %2351 = vmatpush1.msra.mxu0 0.0
  %2352 = vmatprep.subr.mxu0 0.0
  %2353 = vmatpush1.msra.mxu0 0.0
  %2354 = vmatprep.subr.mxu0 0.0
  %2355 = vmatpush1.msra.mxu0 0.0
  %2356 = vmatprep.subr.mxu0 0.0
  %2357 = vmatpush1.msra.mxu0 0.0
  %2358 = vmatprep.subr.mxu0 0.0
  %2359 = vmatpush1.msra.mxu0 0.0
  %2360 = vmatprep.subr.mxu0 0.0
  %2361 = vmatpush1.msra.mxu0 0.0
  %2362 = vmatprep.subr.mxu0 0.0
  %2363 = vmatpush1.msra.mxu0 0.0
  %2364 = vmatprep.subr.mxu0 0.0
  %2365 = vmatpush1.msra.mxu0 0.0
  %2366 = vmatprep.subr.mxu0 0.0
  %2367 = vmatpush1.msra.mxu0 0.0
  %2368 = vmatprep.subr.mxu0 0.0
  %2369 = vmatpush1.msra.mxu0 0.0
  %2370 = vmatprep.subr.mxu0 0.0
  %2371 = vmatpush1.msra.mxu0 0.0
  %2372 = vmatprep.subr.mxu0 0.0
  %2373 = vmatpush1.msra.mxu0 0.0
  %2374 = vmatprep.mubr.f32.mxu0 0.0
  %2375 = vmatmul.mubr.f32.gmra.mrb[0].mxu0 %v2233
  %v2376 = vpop.f32.mrb[0].mxu0
  %v2377 = vadd.f32 0.0, %v2376
  %v2378 = vpop.f32.mrb[0].mxu0
  %2379 = vmatprep.mubr.f32.mxu0 0.0
  %2380 = vmatmul.mubr.f32.gmra.mrb[0].mxu0 %v2236
  %v2381 = vpop.f32.mrb[0].mxu0
  %v2382 = vadd.f32 0.0, %v2381
  %v2383 = vpop.f32.mrb[0].mxu0
  %2384 = vmatprep.mubr.f32.mxu0 0.0
  %2385 = vmatmul.mubr.f32.gmra.mrb[0].mxu0 %v2239
  %v2386 = vpop.f32.mrb[0].mxu0
  %v2387 = vadd.f32 0.0, %v2386
  %v2388 = vpop.f32.mrb[0].mxu0
  %2389 = vmatprep.mubr.f32.mxu0 0.0
  %2390 = vmatmul.mubr.f32.gmra.mrb[0].mxu0 %v2242
  %v2391 = vpop.f32.mrb[0].mxu0
  %v2392 = vadd.f32 0.0, %v2391
  %v2393 = vpop.f32.mrb[0].mxu0
  %2394 = vmatprep.mubr.f32.mxu0 0.0
  %2395 = vmatmul.mubr.f32.gmra.mrb[0].mxu0 %v2245
  %v2396 = vpop.f32.mrb[0].mxu0
  %v2397 = vadd.f32 0.0, %v2396
  %v2398 = vpop.f32.mrb[0].mxu0
  %2399 = vmatprep.mubr.f32.mxu0 0.0
  %2400 = vmatmul.mubr.f32.gmra.mrb[0].mxu0 %v2248
  %v2401 = vpop.f32.mrb[0].mxu0
  %v2402 = vadd.f32 0.0, %v2401
  %v2403 = vpop.f32.mrb[0].mxu0
  %2404 = vmatprep.mubr.f32.mxu0 0.0
  %2405 = vmatmul.mubr.f32.gmra.mrb[0].mxu0 %v2251
  %v2406 = vpop.f32.mrb[0].mxu0
  %v2407 = vadd.f32 0.0, %v2406
  %v2408 = vpop.f32.mrb[0].mxu0
  %2409 = vmatprep.mubr.f32.mxu0 0.0
  %2410 = vmatmul.mubr.f32.gmra.mrb[0].mxu0 %v2254
  %v2411 = vpop.f32.mrb[0].mxu0
  %v2412 = vadd.f32 0.0, %v2411
  %v2413 = vpop.f32.mrb[0].mxu0
  %2414 = vmatprep.mubr.f32.mxu0 0.0
  %2415 = vmatmul.mubr.f32.gmra.mrb[0].mxu0 %v2257
  %v2416 = vpop.f32.mrb[0].mxu0
  %v2417 = vadd.f32 0.0, %v2416
  %v2418 = vpop.f32.mrb[0].mxu0
  %2419 = vmatprep.mubr.f32.mxu0 0.0
  %2420 = vmatmul.mubr.f32.gmra.mrb[0].mxu0 %v2260
  %v2421 = vpop.f32.mrb[0].mxu0
  %v2422 = vadd.f32 0.0, %v2421
  %v2423 = vpop.f32.mrb[0].mxu0
  %2424 = vmatprep.mubr.f32.mxu0 0.0
  %2425 = vmatmul.mubr.f32.gmra.mrb[0].mxu0 %v2263
  %v2426 = vpop.f32.mrb[0].mxu0
  %v2427 = vadd.f32 0.0, %v2426
  %v2428 = vpop.f32.mrb[0].mxu0
  %2429 = vmatprep.mubr.f32.mxu0 0.0
  %2430 = vmatmul.mubr.f32.gmra.mrb[0].mxu0 %v2266
  %v2431 = vpop.f32.mrb[0].mxu0
  %v2432 = vadd.f32 0.0, %v2431
  %v2433 = vpop.f32.mrb[0].mxu0
  %2434 = vmatprep.mubr.f32.mxu0 0.0
  %2435 = vmatmul.mubr.f32.gmra.mrb[0].mxu0 %v2269
  %v2436 = vpop.f32.mrb[0].mxu0
  %v2437 = vadd.f32 0.0, %v2436
  %v2438 = vpop.f32.mrb[0].mxu0
  %2439 = vmatprep.mubr.f32.mxu0 0.0
  %2440 = vmatmul.mubr.f32.gmra.mrb[0].mxu0 %v2272
  %v2441 = vpop.f32.mrb[0].mxu0
  %v2442 = vadd.f32 0.0, %v2441
  %v2443 = vpop.f32.mrb[0].mxu0
  %2444 = vmatprep.mubr.f32.mxu0 0.0
  %2445 = vmatmul.mubr.f32.gmra.mrb[0].mxu0 %v2275
  %v2446 = vpop.f32.mrb[0].mxu0
  %v2447 = vadd.f32 0.0, %v2446
  %v2448 = vpop.f32.mrb[0].mxu0
  %2449 = vmatprep.mubr.f32.mxu0 0.0
  %2450 = vmatmul.mubr.f32.gmra.mrb[0].mxu0 %v2278
  %v2451 = vpop.f32.mrb[0].mxu0
  %v2452 = vadd.f32 0.0, %v2451
  %v2453 = vpop.f32.mrb[0].mxu0
  %2454 = vmatprep.mubr.f32.mxu0 0.0
  %2455 = vmatmul.mubr.f32.gmra.mrb[0].mxu0 %v2281
  %v2456 = vpop.f32.mrb[0].mxu0
  %v2457 = vadd.f32 0.0, %v2456
  %v2458 = vpop.f32.mrb[0].mxu0
  %2459 = vmatprep.mubr.f32.mxu0 0.0
  %2460 = vmatmul.mubr.f32.gmra.mrb[0].mxu0 %v2284
  %v2461 = vpop.f32.mrb[0].mxu0
  %v2462 = vadd.f32 0.0, %v2461
  %v2463 = vpop.f32.mrb[0].mxu0
  %2464 = vmatprep.mubr.f32.mxu0 0.0
  %2465 = vmatmul.mubr.f32.gmra.mrb[0].mxu0 %v2287
  %v2466 = vpop.f32.mrb[0].mxu0
  %v2467 = vadd.f32 0.0, %v2466
  %v2468 = vpop.f32.mrb[0].mxu0
  %2469 = vmatprep.mubr.f32.mxu0 0.0
  %2470 = vmatmul.mubr.f32.gmra.mrb[0].mxu0 %v2290
  %v2471 = vpop.f32.mrb[0].mxu0
  %v2472 = vadd.f32 0.0, %v2471
  %v2473 = vpop.f32.mrb[0].mxu0
  %2474 = vmatprep.mubr.f32.mxu0 0.0
  %2475 = vmatmul.mubr.f32.gmra.mrb[0].mxu0 %v2293
  %v2476 = vpop.f32.mrb[0].mxu0
  %v2477 = vadd.f32 0.0, %v2476
  %v2478 = vpop.f32.mrb[0].mxu0
  %2479 = vmatprep.mubr.f32.mxu0 0.0
  %2480 = vmatmul.mubr.f32.gmra.mrb[0].mxu0 %v2296
  %v2481 = vpop.f32.mrb[0].mxu0
  %v2482 = vadd.f32 0.0, %v2481
  %v2483 = vpop.f32.mrb[0].mxu0
  %2484 = vmatprep.mubr.f32.mxu0 0.0
  %2485 = vmatmul.mubr.f32.gmra.mrb[0].mxu0 %v2299
  %v2486 = vpop.f32.mrb[0].mxu0
  %v2487 = vadd.f32 0.0, %v2486
  %v2488 = vpop.f32.mrb[0].mxu0
  %2489 = vmatprep.mubr.f32.mxu0 0.0
  %2490 = vmatmul.mubr.f32.gmra.mrb[0].mxu0 %v2302
  %v2491 = vpop.f32.mrb[0].mxu0
  %v2492 = vadd.f32 0.0, %v2491
  %v2493 = vpop.f32.mrb[0].mxu0
  %2494 = vmatprep.mubr.f32.mxu0 0.0
  %2495 = vmatmul.mubr.f32.gmra.mrb[0].mxu0 %v2305
  %v2496 = vpop.f32.mrb[0].mxu0
  %v2497 = vadd.f32 0.0, %v2496
  %v2498 = vpop.f32.mrb[0].mxu0
  %2499 = vdwg.mxu0
  %v2500 = vadd.f32 %v2180, %v2377
  %v2501 = vadd.f32 %v2181, %v2382
  %v2502 = vadd.f32 %v2182, %v2387
  %v2503 = vadd.f32 %v2183, %v2392
  %v2504 = vadd.f32 %v2184, %v2397
  %v2505 = vadd.f32 %v2185, %v2402
  %v2506 = vadd.f32 %v2186, %v2407
  %v2507 = vadd.f32 %v2187, %v2412
  %v2508 = vadd.f32 %v2188, %v2417
  %v2509 = vadd.f32 %v2189, %v2422
  %v2510 = vadd.f32 %v2190, %v2427
  %v2511 = vadd.f32 %v2191, %v2432
  %v2512 = vadd.f32 %v2192, %v2437
  %v2513 = vadd.f32 %v2193, %v2442
  %v2514 = vadd.f32 %v2194, %v2447
  %v2515 = vadd.f32 %v2195, %v2452
  %v2516 = vadd.f32 %v2196, %v2457
  %v2517 = vadd.f32 %v2197, %v2462
  %v2518 = vadd.f32 %v2198, %v2467
  %v2519 = vadd.f32 %v2199, %v2472
  %v2520 = vadd.f32 %v2200, %v2477
  %v2521 = vadd.f32 %v2201, %v2482
  %v2522 = vadd.f32 %v2202, %v2487
  %v2523 = vadd.f32 %v2203, %v2492
  %v2524 = vadd.f32 %v2204, %v2497
  %v2525 = vld [vmem:[%s0 + $0x16] sm:$0xff]
  %v2526 = vld [vmem:[%s0 + $0x1e] sm:$0xff]
  %v2527 = vld [vmem:[%s0 + $0x26] sm:$0xff]
  %v2528 = vld [vmem:[%s0 + $0x2e] sm:$0xff]
  %v2529 = vld [vmem:[%s0 + $0x36] sm:$0xff]
  %v2530 = vld [vmem:[%s0 + $0x3e] sm:$0xff]
  %v2531 = vld [vmem:[%s0 + $0x46] sm:$0xff]
  %v2532 = vld [vmem:[%s0 + $0x4e] sm:$0xff]
  %v2533 = vld [vmem:[%s0 + $0x56] sm:$0xff]
  %v2534 = vld [vmem:[%s0 + $0x5e] sm:$0xff]
  %v2535 = vld [vmem:[%s0 + $0x66] sm:$0xff]
  %v2536 = vld [vmem:[%s0 + $0x6e] sm:$0xff]
  %v2537 = vld [vmem:[%s0 + $0x76] sm:$0xff]
  %v2538 = vld [vmem:[%s0 + $0x7e] sm:$0xff]
  %v2539 = vld [vmem:[%s0 + $0x86] sm:$0xff]
  %v2540 = vld [vmem:[%s0 + $0x8e] sm:$0xff]
  %v2541 = vld [vmem:[%s0 + $0x96] sm:$0xff]
  %v2542 = vld [vmem:[%s0 + $0x9e] sm:$0xff]
  %v2543 = vld [vmem:[%s0 + $0xa6] sm:$0xff]
  %v2544 = vld [vmem:[%s0 + $0xae] sm:$0xff]
  %v2545 = vld [vmem:[%s0 + $0xb6] sm:$0xff]
  %v2546 = vld [vmem:[%s0 + $0xbe] sm:$0xff]
  %v2547 = vld [vmem:[%s0 + $0xc6] sm:$0xff]
  %v2548 = vld [vmem:[%s0 + $0xce] sm:$0xff]
  %v2549 = vld [vmem:[%s0 + $0xd6] sm:$0xff]
  %s2550 = scalar_lea.vmem %s1, 32
  %v2551 = vld [vmem:[%s2550] sm:$0x7]
  %v2553 = vsel %vm67, %v2525, 0
  %v2556 = vsel %vm67, %v2526, 0
  %v2559 = vsel %vm67, %v2527, 0
  %v2562 = vsel %vm67, %v2528, 0
  %v2565 = vsel %vm67, %v2529, 0
  %v2568 = vsel %vm67, %v2530, 0
  %v2571 = vsel %vm67, %v2531, 0
  %v2574 = vsel %vm67, %v2532, 0
  %v2577 = vsel %vm67, %v2533, 0
  %v2580 = vsel %vm67, %v2534, 0
  %v2583 = vsel %vm67, %v2535, 0
  %v2586 = vsel %vm67, %v2536, 0
  %v2589 = vsel %vm67, %v2537, 0
  %v2592 = vsel %vm67, %v2538, 0
  %v2595 = vsel %vm67, %v2539, 0
  %v2598 = vsel %vm67, %v2540, 0
  %v2601 = vsel %vm67, %v2541, 0
  %v2604 = vsel %vm67, %v2542, 0
  %v2607 = vsel %vm67, %v2543, 0
  %v2610 = vsel %vm67, %v2544, 0
  %v2613 = vsel %vm67, %v2545, 0
  %v2616 = vsel %vm67, %v2546, 0
  %v2619 = vsel %vm67, %v2547, 0
  %v2622 = vsel %vm67, %v2548, 0
  %v2625 = vsel %vm67, %v2549, 0
  %v2628 = vsel %vm143, %v2551, 0
  %2630 = vmatprep.subr.mxu0 0.0
  %2631 = vmatpush1.msra.mxu0 %v2628
  %2632 = vmatprep.subr.mxu0 0.0
  %2633 = vmatpush1.msra.mxu0 0.0
  %2634 = vmatprep.subr.mxu0 0.0
  %2635 = vmatpush1.msra.mxu0 0.0
  %2636 = vmatprep.subr.mxu0 0.0
  %2637 = vmatpush1.msra.mxu0 0.0
  %2638 = vmatprep.subr.mxu0 0.0
  %2639 = vmatpush1.msra.mxu0 0.0
  %2640 = vmatprep.subr.mxu0 0.0
  %2641 = vmatpush1.msra.mxu0 0.0
  %2642 = vmatprep.subr.mxu0 0.0
  %2643 = vmatpush1.msra.mxu0 0.0
  %2644 = vmatprep.subr.mxu0 0.0
  %2645 = vmatpush1.msra.mxu0 0.0
  %2646 = vmatprep.subr.mxu0 0.0
  %2647 = vmatpush1.msra.mxu0 0.0
  %2648 = vmatprep.subr.mxu0 0.0
  %2649 = vmatpush1.msra.mxu0 0.0
  %2650 = vmatprep.subr.mxu0 0.0
  %2651 = vmatpush1.msra.mxu0 0.0
  %2652 = vmatprep.subr.mxu0 0.0
  %2653 = vmatpush1.msra.mxu0 0.0
  %2654 = vmatprep.subr.mxu0 0.0
  %2655 = vmatpush1.msra.mxu0 0.0
  %2656 = vmatprep.subr.mxu0 0.0
  %2657 = vmatpush1.msra.mxu0 0.0
  %2658 = vmatprep.subr.mxu0 0.0
  %2659 = vmatpush1.msra.mxu0 0.0
  %2660 = vmatprep.subr.mxu0 0.0
  %2661 = vmatpush1.msra.mxu0 0.0
  %2662 = vmatprep.subr.mxu0 0.0
  %2663 = vmatpush1.msra.mxu0 0.0
  %2664 = vmatprep.subr.mxu0 0.0
  %2665 = vmatpush1.msra.mxu0 0.0
  %2666 = vmatprep.subr.mxu0 0.0
  %2667 = vmatpush1.msra.mxu0 0.0
  %2668 = vmatprep.subr.mxu0 0.0
  %2669 = vmatpush1.msra.mxu0 0.0
  %2670 = vmatprep.subr.mxu0 0.0
  %2671 = vmatpush1.msra.mxu0 0.0
  %2672 = vmatprep.subr.mxu0 0.0
  %2673 = vmatpush1.msra.mxu0 0.0
  %2674 = vmatprep.subr.mxu0 0.0
  %2675 = vmatpush1.msra.mxu0 0.0
  %2676 = vmatprep.subr.mxu0 0.0
  %2677 = vmatpush1.msra.mxu0 0.0
  %2678 = vmatprep.subr.mxu0 0.0
  %2679 = vmatpush1.msra.mxu0 0.0
  %2680 = vmatprep.subr.mxu0 0.0
  %2681 = vmatpush1.msra.mxu0 0.0
  %2682 = vmatprep.subr.mxu0 0.0
  %2683 = vmatpush1.msra.mxu0 0.0
  %2684 = vmatprep.subr.mxu0 0.0
  %2685 = vmatpush1.msra.mxu0 0.0
  %2686 = vmatprep.subr.mxu0 0.0
  %2687 = vmatpush1.msra.mxu0 0.0
  %2688 = vmatprep.subr.mxu0 0.0
  %2689 = vmatpush1.msra.mxu0 0.0
  %2690 = vmatprep.subr.mxu0 0.0
  %2691 = vmatpush1.msra.mxu0 0.0
  %2692 = vmatprep.subr.mxu0 0.0
  %2693 = vmatpush1.msra.mxu0 0.0
  %2694 = vmatprep.mubr.f32.mxu0 0.0
  %2695 = vmatmul.mubr.f32.gmra.mrb[0].mxu0 %v2553
  %v2696 = vpop.f32.mrb[0].mxu0
  %v2697 = vadd.f32 0.0, %v2696
  %v2698 = vpop.f32.mrb[0].mxu0
  %2699 = vmatprep.mubr.f32.mxu0 0.0
  %2700 = vmatmul.mubr.f32.gmra.mrb[0].mxu0 %v2556
  %v2701 = vpop.f32.mrb[0].mxu0
  %v2702 = vadd.f32 0.0, %v2701
  %v2703 = vpop.f32.mrb[0].mxu0
  %2704 = vmatprep.mubr.f32.mxu0 0.0
  %2705 = vmatmul.mubr.f32.gmra.mrb[0].mxu0 %v2559
  %v2706 = vpop.f32.mrb[0].mxu0
  %v2707 = vadd.f32 0.0, %v2706
  %v2708 = vpop.f32.mrb[0].mxu0
  %2709 = vmatprep.mubr.f32.mxu0 0.0
  %2710 = vmatmul.mubr.f32.gmra.mrb[0].mxu0 %v2562
  %v2711 = vpop.f32.mrb[0].mxu0
  %v2712 = vadd.f32 0.0, %v2711
  %v2713 = vpop.f32.mrb[0].mxu0
  %2714 = vmatprep.mubr.f32.mxu0 0.0
  %2715 = vmatmul.mubr.f32.gmra.mrb[0].mxu0 %v2565
  %v2716 = vpop.f32.mrb[0].mxu0
  %v2717 = vadd.f32 0.0, %v2716
  %v2718 = vpop.f32.mrb[0].mxu0
  %2719 = vmatprep.mubr.f32.mxu0 0.0
  %2720 = vmatmul.mubr.f32.gmra.mrb[0].mxu0 %v2568
  %v2721 = vpop.f32.mrb[0].mxu0
  %v2722 = vadd.f32 0.0, %v2721
  %v2723 = vpop.f32.mrb[0].mxu0
  %2724 = vmatprep.mubr.f32.mxu0 0.0
  %2725 = vmatmul.mubr.f32.gmra.mrb[0].mxu0 %v2571
  %v2726 = vpop.f32.mrb[0].mxu0
  %v2727 = vadd.f32 0.0, %v2726
  %v2728 = vpop.f32.mrb[0].mxu0
  %2729 = vmatprep.mubr.f32.mxu0 0.0
  %2730 = vmatmul.mubr.f32.gmra.mrb[0].mxu0 %v2574
  %v2731 = vpop.f32.mrb[0].mxu0
  %v2732 = vadd.f32 0.0, %v2731
  %v2733 = vpop.f32.mrb[0].mxu0
  %2734 = vmatprep.mubr.f32.mxu0 0.0
  %2735 = vmatmul.mubr.f32.gmra.mrb[0].mxu0 %v2577
  %v2736 = vpop.f32.mrb[0].mxu0
  %v2737 = vadd.f32 0.0, %v2736
  %v2738 = vpop.f32.mrb[0].mxu0
  %2739 = vmatprep.mubr.f32.mxu0 0.0
  %2740 = vmatmul.mubr.f32.gmra.mrb[0].mxu0 %v2580
  %v2741 = vpop.f32.mrb[0].mxu0
  %v2742 = vadd.f32 0.0, %v2741
  %v2743 = vpop.f32.mrb[0].mxu0
  %2744 = vmatprep.mubr.f32.mxu0 0.0
  %2745 = vmatmul.mubr.f32.gmra.mrb[0].mxu0 %v2583
  %v2746 = vpop.f32.mrb[0].mxu0
  %v2747 = vadd.f32 0.0, %v2746
  %v2748 = vpop.f32.mrb[0].mxu0
  %2749 = vmatprep.mubr.f32.mxu0 0.0
  %2750 = vmatmul.mubr.f32.gmra.mrb[0].mxu0 %v2586
  %v2751 = vpop.f32.mrb[0].mxu0
  %v2752 = vadd.f32 0.0, %v2751
  %v2753 = vpop.f32.mrb[0].mxu0
  %2754 = vmatprep.mubr.f32.mxu0 0.0
  %2755 = vmatmul.mubr.f32.gmra.mrb[0].mxu0 %v2589
  %v2756 = vpop.f32.mrb[0].mxu0
  %v2757 = vadd.f32 0.0, %v2756
  %v2758 = vpop.f32.mrb[0].mxu0
  %2759 = vmatprep.mubr.f32.mxu0 0.0
  %2760 = vmatmul.mubr.f32.gmra.mrb[0].mxu0 %v2592
  %v2761 = vpop.f32.mrb[0].mxu0
  %v2762 = vadd.f32 0.0, %v2761
  %v2763 = vpop.f32.mrb[0].mxu0
  %2764 = vmatprep.mubr.f32.mxu0 0.0
  %2765 = vmatmul.mubr.f32.gmra.mrb[0].mxu0 %v2595
  %v2766 = vpop.f32.mrb[0].mxu0
  %v2767 = vadd.f32 0.0, %v2766
  %v2768 = vpop.f32.mrb[0].mxu0
  %2769 = vmatprep.mubr.f32.mxu0 0.0
  %2770 = vmatmul.mubr.f32.gmra.mrb[0].mxu0 %v2598
  %v2771 = vpop.f32.mrb[0].mxu0
  %v2772 = vadd.f32 0.0, %v2771
  %v2773 = vpop.f32.mrb[0].mxu0
  %2774 = vmatprep.mubr.f32.mxu0 0.0
  %2775 = vmatmul.mubr.f32.gmra.mrb[0].mxu0 %v2601
  %v2776 = vpop.f32.mrb[0].mxu0
  %v2777 = vadd.f32 0.0, %v2776
  %v2778 = vpop.f32.mrb[0].mxu0
  %2779 = vmatprep.mubr.f32.mxu0 0.0
  %2780 = vmatmul.mubr.f32.gmra.mrb[0].mxu0 %v2604
  %v2781 = vpop.f32.mrb[0].mxu0
  %v2782 = vadd.f32 0.0, %v2781
  %v2783 = vpop.f32.mrb[0].mxu0
  %2784 = vmatprep.mubr.f32.mxu0 0.0
  %2785 = vmatmul.mubr.f32.gmra.mrb[0].mxu0 %v2607
  %v2786 = vpop.f32.mrb[0].mxu0
  %v2787 = vadd.f32 0.0, %v2786
  %v2788 = vpop.f32.mrb[0].mxu0
  %2789 = vmatprep.mubr.f32.mxu0 0.0
  %2790 = vmatmul.mubr.f32.gmra.mrb[0].mxu0 %v2610
  %v2791 = vpop.f32.mrb[0].mxu0
  %v2792 = vadd.f32 0.0, %v2791
  %v2793 = vpop.f32.mrb[0].mxu0
  %2794 = vmatprep.mubr.f32.mxu0 0.0
  %2795 = vmatmul.mubr.f32.gmra.mrb[0].mxu0 %v2613
  %v2796 = vpop.f32.mrb[0].mxu0
  %v2797 = vadd.f32 0.0, %v2796
  %v2798 = vpop.f32.mrb[0].mxu0
  %2799 = vmatprep.mubr.f32.mxu0 0.0
  %2800 = vmatmul.mubr.f32.gmra.mrb[0].mxu0 %v2616
  %v2801 = vpop.f32.mrb[0].mxu0
  %v2802 = vadd.f32 0.0, %v2801
  %v2803 = vpop.f32.mrb[0].mxu0
  %2804 = vmatprep.mubr.f32.mxu0 0.0
  %2805 = vmatmul.mubr.f32.gmra.mrb[0].mxu0 %v2619
  %v2806 = vpop.f32.mrb[0].mxu0
  %v2807 = vadd.f32 0.0, %v2806
  %v2808 = vpop.f32.mrb[0].mxu0
  %2809 = vmatprep.mubr.f32.mxu0 0.0
  %2810 = vmatmul.mubr.f32.gmra.mrb[0].mxu0 %v2622
  %v2811 = vpop.f32.mrb[0].mxu0
  %v2812 = vadd.f32 0.0, %v2811
  %v2813 = vpop.f32.mrb[0].mxu0
  %2814 = vmatprep.mubr.f32.mxu0 0.0
  %2815 = vmatmul.mubr.f32.gmra.mrb[0].mxu0 %v2625
  %v2816 = vpop.f32.mrb[0].mxu0
  %v2817 = vadd.f32 0.0, %v2816
  %v2818 = vpop.f32.mrb[0].mxu0
  %2819 = vdwg.mxu0
  %v2820 = vadd.f32 %v2500, %v2697
  %v2821 = vadd.f32 %v2501, %v2702
  %v2822 = vadd.f32 %v2502, %v2707
  %v2823 = vadd.f32 %v2503, %v2712
  %v2824 = vadd.f32 %v2504, %v2717
  %v2825 = vadd.f32 %v2505, %v2722
  %v2826 = vadd.f32 %v2506, %v2727
  %v2827 = vadd.f32 %v2507, %v2732
  %v2828 = vadd.f32 %v2508, %v2737
  %v2829 = vadd.f32 %v2509, %v2742
  %v2830 = vadd.f32 %v2510, %v2747
  %v2831 = vadd.f32 %v2511, %v2752
  %v2832 = vadd.f32 %v2512, %v2757
  %v2833 = vadd.f32 %v2513, %v2762
  %v2834 = vadd.f32 %v2514, %v2767
  %v2835 = vadd.f32 %v2515, %v2772
  %v2836 = vadd.f32 %v2516, %v2777
  %v2837 = vadd.f32 %v2517, %v2782
  %v2838 = vadd.f32 %v2518, %v2787
  %v2839 = vadd.f32 %v2519, %v2792
  %v2840 = vadd.f32 %v2520, %v2797
  %v2841 = vadd.f32 %v2521, %v2802
  %v2842 = vadd.f32 %v2522, %v2807
  %v2843 = vadd.f32 %v2523, %v2812
  %v2844 = vadd.f32 %v2524, %v2817
  %v2845 = vld [vmem:[%s2] sm:$0x1]
  %v2847 = vlaneseq
  %v2848 = vshrl.u32 %v2847, 7
  %v2849 = vsub.s32 0, %v2848
  %v2850 = vrot.slane %v2845, %v2849
  %v2852 = vadd.f32 %v2820, %v2850
  %v2853 = vadd.f32 %v2821, %v2850
  %v2854 = vadd.f32 %v2822, %v2850
  %v2855 = vadd.f32 %v2823, %v2850
  %v2856 = vadd.f32 %v2824, %v2850
  %v2857 = vadd.f32 %v2825, %v2850
  %v2858 = vadd.f32 %v2826, %v2850
  %v2859 = vadd.f32 %v2827, %v2850
  %v2860 = vadd.f32 %v2828, %v2850
  %v2861 = vadd.f32 %v2829, %v2850
  %v2862 = vadd.f32 %v2830, %v2850
  %v2863 = vadd.f32 %v2831, %v2850
  %v2864 = vadd.f32 %v2832, %v2850
  %v2865 = vadd.f32 %v2833, %v2850
  %v2866 = vadd.f32 %v2834, %v2850
  %v2867 = vadd.f32 %v2835, %v2850
  %v2868 = vadd.f32 %v2836, %v2850
  %v2869 = vadd.f32 %v2837, %v2850
  %v2870 = vadd.f32 %v2838, %v2850
  %v2871 = vadd.f32 %v2839, %v2850
  %v2872 = vadd.f32 %v2840, %v2850
  %v2873 = vadd.f32 %v2841, %v2850
  %v2874 = vadd.f32 %v2842, %v2850
  %v2875 = vadd.f32 %v2843, %v2850
  %v2876 = vadd.f32 %v2844, %v2850
  %v2877 = vmax.f32 %v2852, 0.0
  %v2878 = vmax.f32 %v2853, 0.0
  %v2879 = vmax.f32 %v2854, 0.0
  %v2880 = vmax.f32 %v2855, 0.0
  %v2881 = vmax.f32 %v2856, 0.0
  %v2882 = vmax.f32 %v2857, 0.0
  %v2883 = vmax.f32 %v2858, 0.0
  %v2884 = vmax.f32 %v2859, 0.0
  %v2885 = vmax.f32 %v2860, 0.0
  %v2886 = vmax.f32 %v2861, 0.0
  %v2887 = vmax.f32 %v2862, 0.0
  %v2888 = vmax.f32 %v2863, 0.0
  %v2889 = vmax.f32 %v2864, 0.0
  %v2890 = vmax.f32 %v2865, 0.0
  %v2891 = vmax.f32 %v2866, 0.0
  %v2892 = vmax.f32 %v2867, 0.0
  %v2893 = vmax.f32 %v2868, 0.0
  %v2894 = vmax.f32 %v2869, 0.0
  %v2895 = vmax.f32 %v2870, 0.0
  %v2896 = vmax.f32 %v2871, 0.0
  %v2897 = vmax.f32 %v2872, 0.0
  %v2898 = vmax.f32 %v2873, 0.0
  %v2899 = vmax.f32 %v2874, 0.0
  %v2900 = vmax.f32 %v2875, 0.0
  %v2901 = vmax.f32 %v2876, 0.0
  %vm2902 = vcmask 261120
  %2903 = vst.msk [vmem:[%s3] sm:$0xff] %vm2902, %v2877
  %2904 = vst.msk [vmem:[%s3 + $0x8] sm:$0xff] %vm2902, %v2878
  %2905 = vst.msk [vmem:[%s3 + $0x10] sm:$0xff] %vm2902, %v2879
  %2906 = vst.msk [vmem:[%s3 + $0x18] sm:$0xff] %vm2902, %v2880
  %2907 = vst.msk [vmem:[%s3 + $0x20] sm:$0xff] %vm2902, %v2881
  %2908 = vst.msk [vmem:[%s3 + $0x28] sm:$0xff] %vm2902, %v2882
  %2909 = vst.msk [vmem:[%s3 + $0x30] sm:$0xff] %vm2902, %v2883
  %2910 = vst.msk [vmem:[%s3 + $0x38] sm:$0xff] %vm2902, %v2884
  %2911 = vst.msk [vmem:[%s3 + $0x40] sm:$0xff] %vm2902, %v2885
  %2912 = vst.msk [vmem:[%s3 + $0x48] sm:$0xff] %vm2902, %v2886
  %2913 = vst.msk [vmem:[%s3 + $0x50] sm:$0xff] %vm2902, %v2887
  %2914 = vst.msk [vmem:[%s3 + $0x58] sm:$0xff] %vm2902, %v2888
  %2915 = vst.msk [vmem:[%s3 + $0x60] sm:$0xff] %vm2902, %v2889
  %2916 = vst.msk [vmem:[%s3 + $0x68] sm:$0xff] %vm2902, %v2890
  %2917 = vst.msk [vmem:[%s3 + $0x70] sm:$0xff] %vm2902, %v2891
  %2918 = vst.msk [vmem:[%s3 + $0x78] sm:$0xff] %vm2902, %v2892
  %2919 = vst.msk [vmem:[%s3 + $0x80] sm:$0xff] %vm2902, %v2893
  %2920 = vst.msk [vmem:[%s3 + $0x88] sm:$0xff] %vm2902, %v2894
  %2921 = vst.msk [vmem:[%s3 + $0x90] sm:$0xff] %vm2902, %v2895
  %2922 = vst.msk [vmem:[%s3 + $0x98] sm:$0xff] %vm2902, %v2896
  %2923 = vst.msk [vmem:[%s3 + $0xa0] sm:$0xff] %vm2902, %v2897
  %2924 = vst.msk [vmem:[%s3 + $0xa8] sm:$0xff] %vm2902, %v2898
  %2925 = vst.msk [vmem:[%s3 + $0xb0] sm:$0xff] %vm2902, %v2899
  %2926 = vst.msk [vmem:[%s3 + $0xb8] sm:$0xff] %vm2902, %v2900
  %2927 = vst.msk [vmem:[%s3 + $0xc0] sm:$0xff] %vm2902, %v2901
  // Predicated region
  $region14: #{network_forward.6} parent=0 // pred_check
    _
  $region15: #{network_forward.6} parent=0 // pred_check_branch
    %2929 = sbr.rel (0) target = $region17
  $region16: #{network_forward.6} parent=0 // pred_region
    _
  $region17: #{network_forward.6} parent=0 // pred_fallthru
    _
  // Predicated region
  $region18: #{network_forward.6} parent=0 // pred_check
    _
  $region19: #{network_forward.6} parent=0 // pred_check_branch
    %2931 = sbr.rel (0) target = $region21
  $region20: #{network_forward.6} parent=0 // pred_region
    _
  $region21: #{network_forward.6} parent=0 // pred_fallthru
    _

// kernel: network_forward.7
$region0: #{network_forward.7}
  #allocation0 [shape = 'u32[]', space=smem, size = 0x4, offset = 0x4, fixed_abs, tag = 'smem constant byte address 0x4 - core index']
  #allocation1 [shape = 'u32[144,128]{1,0:T(1,128)}', space=vmem, size = 0x12000, scoped, tag = 'internal scratch']
  %s0 = inlined_call_operand.vmem [shape: f32[224,32], index: 0, kind: input, shape index: {}]
  %s1 = inlined_call_operand.vmem [shape: f32[9,32,64], index: 1, kind: input, shape index: {}]
  %s2 = inlined_call_operand.vmem [shape: f32[1,64], index: 2, kind: input, shape index: {}]
  %s3 = inlined_call_operand.vmem [shape: f32[200,64], index: 3, kind: output, shape index: {}]
  %s4 = sld [smem:[#allocation0]]
  $region22: #{network_forward.7} parent=0
    _
  %s6 = ssub.s32 1, %s4
  %s7 = scalar_select 0, %s6, %s4
  // Predicated region
  $region2: #{network_forward.7} parent=0 // pred_check
    _
  $region3: #{network_forward.7} parent=0 // pred_check_branch
    %9 = sbr.rel (0) target = $region5
  $region4: #{network_forward.7} parent=0 // pred_region
    _
  $region5: #{network_forward.7} parent=0 // pred_fallthru
    _
  // Predicated region
  $region6: #{network_forward.7} parent=0 // pred_check
    _
  $region7: #{network_forward.7} parent=0 // pred_check_branch
    %11 = sbr.rel (0) target = $region9
  $region8: #{network_forward.7} parent=0 // pred_region
    _
  $region9: #{network_forward.7} parent=0 // pred_fallthru
    _
  // Predicated region
  $region10: #{network_forward.7} parent=0 // pred_check
    _
  $region11: #{network_forward.7} parent=0 // pred_check_branch
    %13 = sbr.rel (0) target = $region13
  $region12: #{network_forward.7} parent=0 // pred_region
    _
  $region13: #{network_forward.7} parent=0 // pred_fallthru
    _
  %v14 = vld [vmem:[%s0] sm:$0xff]
  %v15 = vld [vmem:[%s0 + $0x8] sm:$0xff]
  %v16 = vld [vmem:[%s0 + $0x10] sm:$0xff]
  %v17 = vld [vmem:[%s0 + $0x18] sm:$0xff]
  %v18 = vld [vmem:[%s0 + $0x20] sm:$0xff]
  %v19 = vld [vmem:[%s0 + $0x28] sm:$0xff]
  %v20 = vld [vmem:[%s0 + $0x30] sm:$0xff]
  %v21 = vld [vmem:[%s0 + $0x38] sm:$0xff]
  %v22 = vld [vmem:[%s0 + $0x40] sm:$0xff]
  %v23 = vld [vmem:[%s0 + $0x48] sm:$0xff]
  %v24 = vld [vmem:[%s0 + $0x50] sm:$0xff]
  %v25 = vld [vmem:[%s0 + $0x58] sm:$0xff]
  %v26 = vld [vmem:[%s0 + $0x60] sm:$0xff]
  %v27 = vld [vmem:[%s0 + $0x68] sm:$0xff]
  %v28 = vld [vmem:[%s0 + $0x70] sm:$0xff]
  %v29 = vld [vmem:[%s0 + $0x78] sm:$0xff]
  %v30 = vld [vmem:[%s0 + $0x80] sm:$0xff]
  %v31 = vld [vmem:[%s0 + $0x88] sm:$0xff]
  %v32 = vld [vmem:[%s0 + $0x90] sm:$0xff]
  %v33 = vld [vmem:[%s0 + $0x98] sm:$0xff]
  %v34 = vld [vmem:[%s0 + $0xa0] sm:$0xff]
  %v35 = vld [vmem:[%s0 + $0xa8] sm:$0xff]
  %v36 = vld [vmem:[%s0 + $0xb0] sm:$0xff]
  %v37 = vld [vmem:[%s0 + $0xb8] sm:$0xff]
  %v38 = vld [vmem:[%s0 + $0xc0] sm:$0xff]
  %v39 = vld [vmem:[%s1] sm:$0xff]
  %v40 = vld [vmem:[%s1 + $0x8] sm:$0xff]
  %v41 = vld [vmem:[%s1 + $0x10] sm:$0xff]
  %v42 = vld [vmem:[%s1 + $0x18] sm:$0xff]
  %v43 = vld [vmem:[%s0 + $0x1] sm:$0xff]
  %v44 = vld [vmem:[%s0 + $0x9] sm:$0xff]
  %v45 = vld [vmem:[%s0 + $0x11] sm:$0xff]
  %v46 = vld [vmem:[%s0 + $0x19] sm:$0xff]
  %v47 = vld [vmem:[%s0 + $0x21] sm:$0xff]
  %v48 = vld [vmem:[%s0 + $0x29] sm:$0xff]
  %v49 = vld [vmem:[%s0 + $0x31] sm:$0xff]
  %v50 = vld [vmem:[%s0 + $0x39] sm:$0xff]
  %v51 = vld [vmem:[%s0 + $0x41] sm:$0xff]
  %v52 = vld [vmem:[%s0 + $0x49] sm:$0xff]
  %v53 = vld [vmem:[%s0 + $0x51] sm:$0xff]
  %v54 = vld [vmem:[%s0 + $0x59] sm:$0xff]
  %v55 = vld [vmem:[%s0 + $0x61] sm:$0xff]
  %v56 = vld [vmem:[%s0 + $0x69] sm:$0xff]
  %v57 = vld [vmem:[%s0 + $0x71] sm:$0xff]
  %v58 = vld [vmem:[%s0 + $0x79] sm:$0xff]
  %v59 = vld [vmem:[%s0 + $0x81] sm:$0xff]
  %v60 = vld [vmem:[%s0 + $0x89] sm:$0xff]
  %v61 = vld [vmem:[%s0 + $0x91] sm:$0xff]
  %v62 = vld [vmem:[%s0 + $0x99] sm:$0xff]
  %v63 = vld [vmem:[%s0 + $0xa1] sm:$0xff]
  %v64 = vld [vmem:[%s0 + $0xa9] sm:$0xff]
  %v65 = vld [vmem:[%s0 + $0xb1] sm:$0xff]
  %v66 = vld [vmem:[%s0 + $0xb9] sm:$0xff]
  %v67 = vld [vmem:[%s0 + $0xc1] sm:$0xff]
  %s68 = scalar_lea.vmem %s1, 32
  %v69 = vld [vmem:[%s68] sm:$0xff]
  %v70 = vld [vmem:[%s68 + $0x8] sm:$0xff]
  %v71 = vld [vmem:[%s68 + $0x10] sm:$0xff]
  %v72 = vld [vmem:[%s68 + $0x18] sm:$0xff]
  %vm73 = vcmask 261120
  %v75 = vsel %vm73, %v43, 0
  %v78 = vsel %vm73, %v44, 0
  %v81 = vsel %vm73, %v45, 0
  %v84 = vsel %vm73, %v46, 0
  %v87 = vsel %vm73, %v47, 0
  %v90 = vsel %vm73, %v48, 0
  %v93 = vsel %vm73, %v49, 0
  %v96 = vsel %vm73, %v50, 0
  %v99 = vsel %vm73, %v51, 0
  %v102 = vsel %vm73, %v52, 0
  %v105 = vsel %vm73, %v53, 0
  %v108 = vsel %vm73, %v54, 0
  %v111 = vsel %vm73, %v55, 0
  %v114 = vsel %vm73, %v56, 0
  %v117 = vsel %vm73, %v57, 0
  %v120 = vsel %vm73, %v58, 0
  %v123 = vsel %vm73, %v59, 0
  %v126 = vsel %vm73, %v60, 0
  %v129 = vsel %vm73, %v61, 0
  %v132 = vsel %vm73, %v62, 0
  %v135 = vsel %vm73, %v63, 0
  %v138 = vsel %vm73, %v64, 0
  %v141 = vsel %vm73, %v65, 0
  %v144 = vsel %vm73, %v66, 0
  %v147 = vsel %vm73, %v67, 0
  %149 = vmatprep.subr.mxu0 0.0
  %150 = vmatpush1.msra.mxu0 %v69
  %151 = vmatprep.subr.mxu0 0.0
  %152 = vmatpush1.msra.mxu0 %v70
  %153 = vmatprep.subr.mxu0 0.0
  %154 = vmatpush1.msra.mxu0 %v71
  %155 = vmatprep.subr.mxu0 0.0
  %156 = vmatpush1.msra.mxu0 %v72
  %157 = vmatprep.subr.mxu0 0.0
  %158 = vmatpush1.msra.mxu0 0.0
  %159 = vmatprep.subr.mxu0 0.0
  %160 = vmatpush1.msra.mxu0 0.0
  %161 = vmatprep.subr.mxu0 0.0
  %162 = vmatpush1.msra.mxu0 0.0
  %163 = vmatprep.subr.mxu0 0.0
  %164 = vmatpush1.msra.mxu0 0.0
  %165 = vmatprep.subr.mxu0 0.0
  %166 = vmatpush1.msra.mxu0 0.0
  %167 = vmatprep.subr.mxu0 0.0
  %168 = vmatpush1.msra.mxu0 0.0
  %169 = vmatprep.subr.mxu0 0.0
  %170 = vmatpush1.msra.mxu0 0.0
  %171 = vmatprep.subr.mxu0 0.0
  %172 = vmatpush1.msra.mxu0 0.0
  %173 = vmatprep.subr.mxu0 0.0
  %174 = vmatpush1.msra.mxu0 0.0
  %175 = vmatprep.subr.mxu0 0.0
  %176 = vmatpush1.msra.mxu0 0.0
  %177 = vmatprep.subr.mxu0 0.0
  %178 = vmatpush1.msra.mxu0 0.0
  %179 = vmatprep.subr.mxu0 0.0
  %180 = vmatpush1.msra.mxu0 0.0
  %181 = vmatprep.subr.mxu0 0.0
  %182 = vmatpush1.msra.mxu0 0.0
  %183 = vmatprep.subr.mxu0 0.0
  %184 = vmatpush1.msra.mxu0 0.0
  %185 = vmatprep.subr.mxu0 0.0
  %186 = vmatpush1.msra.mxu0 0.0
  %187 = vmatprep.subr.mxu0 0.0
  %188 = vmatpush1.msra.mxu0 0.0
  %189 = vmatprep.subr.mxu0 0.0
  %190 = vmatpush1.msra.mxu0 0.0
  %191 = vmatprep.subr.mxu0 0.0
  %192 = vmatpush1.msra.mxu0 0.0
  %193 = vmatprep.subr.mxu0 0.0
  %194 = vmatpush1.msra.mxu0 0.0
  %195 = vmatprep.subr.mxu0 0.0
  %196 = vmatpush1.msra.mxu0 0.0
  %197 = vmatprep.subr.mxu0 0.0
  %198 = vmatpush1.msra.mxu0 0.0
  %199 = vmatprep.subr.mxu0 0.0
  %200 = vmatpush1.msra.mxu0 0.0
  %201 = vmatprep.subr.mxu0 0.0
  %202 = vmatpush1.msra.mxu0 0.0
  %203 = vmatprep.subr.mxu0 0.0
  %204 = vmatpush1.msra.mxu0 0.0
  %205 = vmatprep.subr.mxu0 0.0
  %206 = vmatpush1.msra.mxu0 0.0
  %207 = vmatprep.subr.mxu0 0.0
  %208 = vmatpush1.msra.mxu0 0.0
  %209 = vmatprep.subr.mxu0 0.0
  %210 = vmatpush1.msra.mxu0 0.0
  %211 = vmatprep.subr.mxu0 0.0
  %212 = vmatpush1.msra.mxu0 0.0
  %213 = vmatprep.mubr.f32.mxu0 0.0
  %214 = vmatmul.mubr.f32.gmra.mrb[0].mxu0 %v75
  %v215 = vpop.f32.mrb[0].mxu0
  %v216 = vadd.f32 0.0, %v215
  %v217 = vpop.f32.mrb[0].mxu0
  %218 = vmatprep.mubr.f32.mxu0 0.0
  %219 = vmatmul.mubr.f32.gmra.mrb[0].mxu0 %v78
  %v220 = vpop.f32.mrb[0].mxu0
  %v221 = vadd.f32 0.0, %v220
  %v222 = vpop.f32.mrb[0].mxu0
  %223 = vmatprep.mubr.f32.mxu0 0.0
  %224 = vmatmul.mubr.f32.gmra.mrb[0].mxu0 %v81
  %v225 = vpop.f32.mrb[0].mxu0
  %v226 = vadd.f32 0.0, %v225
  %v227 = vpop.f32.mrb[0].mxu0
  %228 = vmatprep.mubr.f32.mxu0 0.0
  %229 = vmatmul.mubr.f32.gmra.mrb[0].mxu0 %v84
  %v230 = vpop.f32.mrb[0].mxu0
  %v231 = vadd.f32 0.0, %v230
  %v232 = vpop.f32.mrb[0].mxu0
  %233 = vmatprep.mubr.f32.mxu0 0.0
  %234 = vmatmul.mubr.f32.gmra.mrb[0].mxu0 %v87
  %v235 = vpop.f32.mrb[0].mxu0
  %v236 = vadd.f32 0.0, %v235
  %v237 = vpop.f32.mrb[0].mxu0
  %238 = vmatprep.mubr.f32.mxu0 0.0
  %239 = vmatmul.mubr.f32.gmra.mrb[0].mxu0 %v90
  %v240 = vpop.f32.mrb[0].mxu0
  %v241 = vadd.f32 0.0, %v240
  %v242 = vpop.f32.mrb[0].mxu0
  %243 = vmatprep.mubr.f32.mxu0 0.0
  %244 = vmatmul.mubr.f32.gmra.mrb[0].mxu0 %v93
  %v245 = vpop.f32.mrb[0].mxu0
  %v246 = vadd.f32 0.0, %v245
  %v247 = vpop.f32.mrb[0].mxu0
  %248 = vmatprep.mubr.f32.mxu0 0.0
  %249 = vmatmul.mubr.f32.gmra.mrb[0].mxu0 %v96
  %v250 = vpop.f32.mrb[0].mxu0
  %v251 = vadd.f32 0.0, %v250
  %v252 = vpop.f32.mrb[0].mxu0
  %253 = vmatprep.mubr.f32.mxu0 0.0
  %254 = vmatmul.mubr.f32.gmra.mrb[0].mxu0 %v99
  %v255 = vpop.f32.mrb[0].mxu0
  %v256 = vadd.f32 0.0, %v255
  %v257 = vpop.f32.mrb[0].mxu0
  %258 = vmatprep.mubr.f32.mxu0 0.0
  %259 = vmatmul.mubr.f32.gmra.mrb[0].mxu0 %v102
  %v260 = vpop.f32.mrb[0].mxu0
  %v261 = vadd.f32 0.0, %v260
  %v262 = vpop.f32.mrb[0].mxu0
  %263 = vmatprep.mubr.f32.mxu0 0.0
  %264 = vmatmul.mubr.f32.gmra.mrb[0].mxu0 %v105
  %v265 = vpop.f32.mrb[0].mxu0
  %v266 = vadd.f32 0.0, %v265
  %v267 = vpop.f32.mrb[0].mxu0
  %268 = vmatprep.mubr.f32.mxu0 0.0
  %269 = vmatmul.mubr.f32.gmra.mrb[0].mxu0 %v108
  %v270 = vpop.f32.mrb[0].mxu0
  %v271 = vadd.f32 0.0, %v270
  %v272 = vpop.f32.mrb[0].mxu0
  %273 = vmatprep.mubr.f32.mxu0 0.0
  %274 = vmatmul.mubr.f32.gmra.mrb[0].mxu0 %v111
  %v275 = vpop.f32.mrb[0].mxu0
  %v276 = vadd.f32 0.0, %v275
  %v277 = vpop.f32.mrb[0].mxu0
  %278 = vmatprep.mubr.f32.mxu0 0.0
  %279 = vmatmul.mubr.f32.gmra.mrb[0].mxu0 %v114
  %v280 = vpop.f32.mrb[0].mxu0
  %v281 = vadd.f32 0.0, %v280
  %v282 = vpop.f32.mrb[0].mxu0
  %283 = vmatprep.mubr.f32.mxu0 0.0
  %284 = vmatmul.mubr.f32.gmra.mrb[0].mxu0 %v117
  %v285 = vpop.f32.mrb[0].mxu0
  %v286 = vadd.f32 0.0, %v285
  %v287 = vpop.f32.mrb[0].mxu0
  %288 = vmatprep.mubr.f32.mxu0 0.0
  %289 = vmatmul.mubr.f32.gmra.mrb[0].mxu0 %v120
  %v290 = vpop.f32.mrb[0].mxu0
  %v291 = vadd.f32 0.0, %v290
  %v292 = vpop.f32.mrb[0].mxu0
  %293 = vmatprep.mubr.f32.mxu0 0.0
  %294 = vmatmul.mubr.f32.gmra.mrb[0].mxu0 %v123
  %v295 = vpop.f32.mrb[0].mxu0
  %v296 = vadd.f32 0.0, %v295
  %v297 = vpop.f32.mrb[0].mxu0
  %298 = vmatprep.mubr.f32.mxu0 0.0
  %299 = vmatmul.mubr.f32.gmra.mrb[0].mxu0 %v126
  %v300 = vpop.f32.mrb[0].mxu0
  %v301 = vadd.f32 0.0, %v300
  %v302 = vpop.f32.mrb[0].mxu0
  %303 = vmatprep.mubr.f32.mxu0 0.0
  %304 = vmatmul.mubr.f32.gmra.mrb[0].mxu0 %v129
  %v305 = vpop.f32.mrb[0].mxu0
  %v306 = vadd.f32 0.0, %v305
  %v307 = vpop.f32.mrb[0].mxu0
  %308 = vmatprep.mubr.f32.mxu0 0.0
  %309 = vmatmul.mubr.f32.gmra.mrb[0].mxu0 %v132
  %v310 = vpop.f32.mrb[0].mxu0
  %v311 = vadd.f32 0.0, %v310
  %v312 = vpop.f32.mrb[0].mxu0
  %313 = vmatprep.mubr.f32.mxu0 0.0
  %314 = vmatmul.mubr.f32.gmra.mrb[0].mxu0 %v135
  %v315 = vpop.f32.mrb[0].mxu0
  %v316 = vadd.f32 0.0, %v315
  %v317 = vpop.f32.mrb[0].mxu0
  %318 = vmatprep.mubr.f32.mxu0 0.0
  %319 = vmatmul.mubr.f32.gmra.mrb[0].mxu0 %v138
  %v320 = vpop.f32.mrb[0].mxu0
  %v321 = vadd.f32 0.0, %v320
  %v322 = vpop.f32.mrb[0].mxu0
  %323 = vmatprep.mubr.f32.mxu0 0.0
  %324 = vmatmul.mubr.f32.gmra.mrb[0].mxu0 %v141
  %v325 = vpop.f32.mrb[0].mxu0
  %v326 = vadd.f32 0.0, %v325
  %v327 = vpop.f32.mrb[0].mxu0
  %328 = vmatprep.mubr.f32.mxu0 0.0
  %329 = vmatmul.mubr.f32.gmra.mrb[0].mxu0 %v144
  %v330 = vpop.f32.mrb[0].mxu0
  %v331 = vadd.f32 0.0, %v330
  %v332 = vpop.f32.mrb[0].mxu0
  %333 = vmatprep.mubr.f32.mxu0 0.0
  %334 = vmatmul.mubr.f32.gmra.mrb[0].mxu0 %v147
  %v335 = vpop.f32.mrb[0].mxu0
  %v336 = vadd.f32 0.0, %v335
  %v337 = vpop.f32.mrb[0].mxu0
  %338 = vdwg.mxu0
  %v340 = vsel %vm73, %v14, 0
  %v343 = vsel %vm73, %v15, 0
  %v346 = vsel %vm73, %v16, 0
  %v349 = vsel %vm73, %v17, 0
  %v352 = vsel %vm73, %v18, 0
  %v355 = vsel %vm73, %v19, 0
  %v358 = vsel %vm73, %v20, 0
  %v361 = vsel %vm73, %v21, 0
  %v364 = vsel %vm73, %v22, 0
  %v367 = vsel %vm73, %v23, 0
  %v370 = vsel %vm73, %v24, 0
  %v373 = vsel %vm73, %v25, 0
  %v376 = vsel %vm73, %v26, 0
  %v379 = vsel %vm73, %v27, 0
  %v382 = vsel %vm73, %v28, 0
  %v385 = vsel %vm73, %v29, 0
  %v388 = vsel %vm73, %v30, 0
  %v391 = vsel %vm73, %v31, 0
  %v394 = vsel %vm73, %v32, 0
  %v397 = vsel %vm73, %v33, 0
  %v400 = vsel %vm73, %v34, 0
  %v403 = vsel %vm73, %v35, 0
  %v406 = vsel %vm73, %v36, 0
  %v409 = vsel %vm73, %v37, 0
  %v412 = vsel %vm73, %v38, 0
  %414 = vmatprep.subr.mxu0 0.0
  %415 = vmatpush1.msra.mxu0 %v39
  %416 = vmatprep.subr.mxu0 0.0
  %417 = vmatpush1.msra.mxu0 %v40
  %418 = vmatprep.subr.mxu0 0.0
  %419 = vmatpush1.msra.mxu0 %v41
  %420 = vmatprep.subr.mxu0 0.0
  %421 = vmatpush1.msra.mxu0 %v42
  %422 = vmatprep.subr.mxu0 0.0
  %423 = vmatpush1.msra.mxu0 0.0
  %424 = vmatprep.subr.mxu0 0.0
  %425 = vmatpush1.msra.mxu0 0.0
  %426 = vmatprep.subr.mxu0 0.0
  %427 = vmatpush1.msra.mxu0 0.0
  %428 = vmatprep.subr.mxu0 0.0
  %429 = vmatpush1.msra.mxu0 0.0
  %430 = vmatprep.subr.mxu0 0.0
  %431 = vmatpush1.msra.mxu0 0.0
  %432 = vmatprep.subr.mxu0 0.0
  %433 = vmatpush1.msra.mxu0 0.0
  %434 = vmatprep.subr.mxu0 0.0
  %435 = vmatpush1.msra.mxu0 0.0
  %436 = vmatprep.subr.mxu0 0.0
  %437 = vmatpush1.msra.mxu0 0.0
  %438 = vmatprep.subr.mxu0 0.0
  %439 = vmatpush1.msra.mxu0 0.0
  %440 = vmatprep.subr.mxu0 0.0
  %441 = vmatpush1.msra.mxu0 0.0
  %442 = vmatprep.subr.mxu0 0.0
  %443 = vmatpush1.msra.mxu0 0.0
  %444 = vmatprep.subr.mxu0 0.0
  %445 = vmatpush1.msra.mxu0 0.0
  %446 = vmatprep.subr.mxu0 0.0
  %447 = vmatpush1.msra.mxu0 0.0
  %448 = vmatprep.subr.mxu0 0.0
  %449 = vmatpush1.msra.mxu0 0.0
  %450 = vmatprep.subr.mxu0 0.0
  %451 = vmatpush1.msra.mxu0 0.0
  %452 = vmatprep.subr.mxu0 0.0
  %453 = vmatpush1.msra.mxu0 0.0
  %454 = vmatprep.subr.mxu0 0.0
  %455 = vmatpush1.msra.mxu0 0.0
  %456 = vmatprep.subr.mxu0 0.0
  %457 = vmatpush1.msra.mxu0 0.0
  %458 = vmatprep.subr.mxu0 0.0
  %459 = vmatpush1.msra.mxu0 0.0
  %460 = vmatprep.subr.mxu0 0.0
  %461 = vmatpush1.msra.mxu0 0.0
  %462 = vmatprep.subr.mxu0 0.0
  %463 = vmatpush1.msra.mxu0 0.0
  %464 = vmatprep.subr.mxu0 0.0
  %465 = vmatpush1.msra.mxu0 0.0
  %466 = vmatprep.subr.mxu0 0.0
  %467 = vmatpush1.msra.mxu0 0.0
  %468 = vmatprep.subr.mxu0 0.0
  %469 = vmatpush1.msra.mxu0 0.0
  %470 = vmatprep.subr.mxu0 0.0
  %471 = vmatpush1.msra.mxu0 0.0
  %472 = vmatprep.subr.mxu0 0.0
  %473 = vmatpush1.msra.mxu0 0.0
  %474 = vmatprep.subr.mxu0 0.0
  %475 = vmatpush1.msra.mxu0 0.0
  %476 = vmatprep.subr.mxu0 0.0
  %477 = vmatpush1.msra.mxu0 0.0
  %478 = vmatprep.mubr.f32.mxu0 0.0
  %479 = vmatmul.mubr.f32.gmra.mrb[0].mxu0 %v340
  %v480 = vpop.f32.mrb[0].mxu0
  %v481 = vadd.f32 %v216, %v480
  %v482 = vpop.f32.mrb[0].mxu0
  %483 = vmatprep.mubr.f32.mxu0 0.0
  %484 = vmatmul.mubr.f32.gmra.mrb[0].mxu0 %v343
  %v485 = vpop.f32.mrb[0].mxu0
  %v486 = vadd.f32 %v221, %v485
  %v487 = vpop.f32.mrb[0].mxu0
  %488 = vmatprep.mubr.f32.mxu0 0.0
  %489 = vmatmul.mubr.f32.gmra.mrb[0].mxu0 %v346
  %v490 = vpop.f32.mrb[0].mxu0
  %v491 = vadd.f32 %v226, %v490
  %v492 = vpop.f32.mrb[0].mxu0
  %493 = vmatprep.mubr.f32.mxu0 0.0
  %494 = vmatmul.mubr.f32.gmra.mrb[0].mxu0 %v349
  %v495 = vpop.f32.mrb[0].mxu0
  %v496 = vadd.f32 %v231, %v495
  %v497 = vpop.f32.mrb[0].mxu0
  %498 = vmatprep.mubr.f32.mxu0 0.0
  %499 = vmatmul.mubr.f32.gmra.mrb[0].mxu0 %v352
  %v500 = vpop.f32.mrb[0].mxu0
  %v501 = vadd.f32 %v236, %v500
  %v502 = vpop.f32.mrb[0].mxu0
  %503 = vmatprep.mubr.f32.mxu0 0.0
  %504 = vmatmul.mubr.f32.gmra.mrb[0].mxu0 %v355
  %v505 = vpop.f32.mrb[0].mxu0
  %v506 = vadd.f32 %v241, %v505
  %v507 = vpop.f32.mrb[0].mxu0
  %508 = vmatprep.mubr.f32.mxu0 0.0
  %509 = vmatmul.mubr.f32.gmra.mrb[0].mxu0 %v358
  %v510 = vpop.f32.mrb[0].mxu0
  %v511 = vadd.f32 %v246, %v510
  %v512 = vpop.f32.mrb[0].mxu0
  %513 = vmatprep.mubr.f32.mxu0 0.0
  %514 = vmatmul.mubr.f32.gmra.mrb[0].mxu0 %v361
  %v515 = vpop.f32.mrb[0].mxu0
  %v516 = vadd.f32 %v251, %v515
  %v517 = vpop.f32.mrb[0].mxu0
  %518 = vmatprep.mubr.f32.mxu0 0.0
  %519 = vmatmul.mubr.f32.gmra.mrb[0].mxu0 %v364
  %v520 = vpop.f32.mrb[0].mxu0
  %v521 = vadd.f32 %v256, %v520
  %v522 = vpop.f32.mrb[0].mxu0
  %523 = vmatprep.mubr.f32.mxu0 0.0
  %524 = vmatmul.mubr.f32.gmra.mrb[0].mxu0 %v367
  %v525 = vpop.f32.mrb[0].mxu0
  %v526 = vadd.f32 %v261, %v525
  %v527 = vpop.f32.mrb[0].mxu0
  %528 = vmatprep.mubr.f32.mxu0 0.0
  %529 = vmatmul.mubr.f32.gmra.mrb[0].mxu0 %v370
  %v530 = vpop.f32.mrb[0].mxu0
  %v531 = vadd.f32 %v266, %v530
  %v532 = vpop.f32.mrb[0].mxu0
  %533 = vmatprep.mubr.f32.mxu0 0.0
  %534 = vmatmul.mubr.f32.gmra.mrb[0].mxu0 %v373
  %v535 = vpop.f32.mrb[0].mxu0
  %v536 = vadd.f32 %v271, %v535
  %v537 = vpop.f32.mrb[0].mxu0
  %538 = vmatprep.mubr.f32.mxu0 0.0
  %539 = vmatmul.mubr.f32.gmra.mrb[0].mxu0 %v376
  %v540 = vpop.f32.mrb[0].mxu0
  %v541 = vadd.f32 %v276, %v540
  %v542 = vpop.f32.mrb[0].mxu0
  %543 = vmatprep.mubr.f32.mxu0 0.0
  %544 = vmatmul.mubr.f32.gmra.mrb[0].mxu0 %v379
  %v545 = vpop.f32.mrb[0].mxu0
  %v546 = vadd.f32 %v281, %v545
  %v547 = vpop.f32.mrb[0].mxu0
  %548 = vmatprep.mubr.f32.mxu0 0.0
  %549 = vmatmul.mubr.f32.gmra.mrb[0].mxu0 %v382
  %v550 = vpop.f32.mrb[0].mxu0
  %v551 = vadd.f32 %v286, %v550
  %v552 = vpop.f32.mrb[0].mxu0
  %553 = vmatprep.mubr.f32.mxu0 0.0
  %554 = vmatmul.mubr.f32.gmra.mrb[0].mxu0 %v385
  %v555 = vpop.f32.mrb[0].mxu0
  %v556 = vadd.f32 %v291, %v555
  %v557 = vpop.f32.mrb[0].mxu0
  %558 = vmatprep.mubr.f32.mxu0 0.0
  %559 = vmatmul.mubr.f32.gmra.mrb[0].mxu0 %v388
  %v560 = vpop.f32.mrb[0].mxu0
  %v561 = vadd.f32 %v296, %v560
  %v562 = vpop.f32.mrb[0].mxu0
  %563 = vmatprep.mubr.f32.mxu0 0.0
  %564 = vmatmul.mubr.f32.gmra.mrb[0].mxu0 %v391
  %v565 = vpop.f32.mrb[0].mxu0
  %v566 = vadd.f32 %v301, %v565
  %v567 = vpop.f32.mrb[0].mxu0
  %568 = vmatprep.mubr.f32.mxu0 0.0
  %569 = vmatmul.mubr.f32.gmra.mrb[0].mxu0 %v394
  %v570 = vpop.f32.mrb[0].mxu0
  %v571 = vadd.f32 %v306, %v570
  %v572 = vpop.f32.mrb[0].mxu0
  %573 = vmatprep.mubr.f32.mxu0 0.0
  %574 = vmatmul.mubr.f32.gmra.mrb[0].mxu0 %v397
  %v575 = vpop.f32.mrb[0].mxu0
  %v576 = vadd.f32 %v311, %v575
  %v577 = vpop.f32.mrb[0].mxu0
  %578 = vmatprep.mubr.f32.mxu0 0.0
  %579 = vmatmul.mubr.f32.gmra.mrb[0].mxu0 %v400
  %v580 = vpop.f32.mrb[0].mxu0
  %v581 = vadd.f32 %v316, %v580
  %v582 = vpop.f32.mrb[0].mxu0
  %583 = vmatprep.mubr.f32.mxu0 0.0
  %584 = vmatmul.mubr.f32.gmra.mrb[0].mxu0 %v403
  %v585 = vpop.f32.mrb[0].mxu0
  %v586 = vadd.f32 %v321, %v585
  %v587 = vpop.f32.mrb[0].mxu0
  %588 = vmatprep.mubr.f32.mxu0 0.0
  %589 = vmatmul.mubr.f32.gmra.mrb[0].mxu0 %v406
  %v590 = vpop.f32.mrb[0].mxu0
  %v591 = vadd.f32 %v326, %v590
  %v592 = vpop.f32.mrb[0].mxu0
  %593 = vmatprep.mubr.f32.mxu0 0.0
  %594 = vmatmul.mubr.f32.gmra.mrb[0].mxu0 %v409
  %v595 = vpop.f32.mrb[0].mxu0
  %v596 = vadd.f32 %v331, %v595
  %v597 = vpop.f32.mrb[0].mxu0
  %598 = vmatprep.mubr.f32.mxu0 0.0
  %599 = vmatmul.mubr.f32.gmra.mrb[0].mxu0 %v412
  %v600 = vpop.f32.mrb[0].mxu0
  %v601 = vadd.f32 %v336, %v600
  %v602 = vpop.f32.mrb[0].mxu0
  %603 = vdwg.mxu0
  %v604 = vld [vmem:[%s0 + $0x2] sm:$0xff]
  %v605 = vld [vmem:[%s0 + $0xa] sm:$0xff]
  %v606 = vld [vmem:[%s0 + $0x12] sm:$0xff]
  %v607 = vld [vmem:[%s0 + $0x1a] sm:$0xff]
  %v608 = vld [vmem:[%s0 + $0x22] sm:$0xff]
  %v609 = vld [vmem:[%s0 + $0x2a] sm:$0xff]
  %v610 = vld [vmem:[%s0 + $0x32] sm:$0xff]
  %v611 = vld [vmem:[%s0 + $0x3a] sm:$0xff]
  %v612 = vld [vmem:[%s0 + $0x42] sm:$0xff]
  %v613 = vld [vmem:[%s0 + $0x4a] sm:$0xff]
  %v614 = vld [vmem:[%s0 + $0x52] sm:$0xff]
  %v615 = vld [vmem:[%s0 + $0x5a] sm:$0xff]
  %v616 = vld [vmem:[%s0 + $0x62] sm:$0xff]
  %v617 = vld [vmem:[%s0 + $0x6a] sm:$0xff]
  %v618 = vld [vmem:[%s0 + $0x72] sm:$0xff]
  %v619 = vld [vmem:[%s0 + $0x7a] sm:$0xff]
  %v620 = vld [vmem:[%s0 + $0x82] sm:$0xff]
  %v621 = vld [vmem:[%s0 + $0x8a] sm:$0xff]
  %v622 = vld [vmem:[%s0 + $0x92] sm:$0xff]
  %v623 = vld [vmem:[%s0 + $0x9a] sm:$0xff]
  %v624 = vld [vmem:[%s0 + $0xa2] sm:$0xff]
  %v625 = vld [vmem:[%s0 + $0xaa] sm:$0xff]
  %v626 = vld [vmem:[%s0 + $0xb2] sm:$0xff]
  %v627 = vld [vmem:[%s0 + $0xba] sm:$0xff]
  %v628 = vld [vmem:[%s0 + $0xc2] sm:$0xff]
  %s629 = scalar_lea.vmem %s1, 64
  %v630 = vld [vmem:[%s629] sm:$0xff]
  %v631 = vld [vmem:[%s629 + $0x8] sm:$0xff]
  %v632 = vld [vmem:[%s629 + $0x10] sm:$0xff]
  %v633 = vld [vmem:[%s629 + $0x18] sm:$0xff]
  %v635 = vsel %vm73, %v604, 0
  %v638 = vsel %vm73, %v605, 0
  %v641 = vsel %vm73, %v606, 0
  %v644 = vsel %vm73, %v607, 0
  %v647 = vsel %vm73, %v608, 0
  %v650 = vsel %vm73, %v609, 0
  %v653 = vsel %vm73, %v610, 0
  %v656 = vsel %vm73, %v611, 0
  %v659 = vsel %vm73, %v612, 0
  %v662 = vsel %vm73, %v613, 0
  %v665 = vsel %vm73, %v614, 0
  %v668 = vsel %vm73, %v615, 0
  %v671 = vsel %vm73, %v616, 0
  %v674 = vsel %vm73, %v617, 0
  %v677 = vsel %vm73, %v618, 0
  %v680 = vsel %vm73, %v619, 0
  %v683 = vsel %vm73, %v620, 0
  %v686 = vsel %vm73, %v621, 0
  %v689 = vsel %vm73, %v622, 0
  %v692 = vsel %vm73, %v623, 0
  %v695 = vsel %vm73, %v624, 0
  %v698 = vsel %vm73, %v625, 0
  %v701 = vsel %vm73, %v626, 0
  %v704 = vsel %vm73, %v627, 0
  %v707 = vsel %vm73, %v628, 0
  %709 = vmatprep.subr.mxu0 0.0
  %710 = vmatpush1.msra.mxu0 %v630
  %711 = vmatprep.subr.mxu0 0.0
  %712 = vmatpush1.msra.mxu0 %v631
  %713 = vmatprep.subr.mxu0 0.0
  %714 = vmatpush1.msra.mxu0 %v632
  %715 = vmatprep.subr.mxu0 0.0
  %716 = vmatpush1.msra.mxu0 %v633
  %717 = vmatprep.subr.mxu0 0.0
  %718 = vmatpush1.msra.mxu0 0.0
  %719 = vmatprep.subr.mxu0 0.0
  %720 = vmatpush1.msra.mxu0 0.0
  %721 = vmatprep.subr.mxu0 0.0
  %722 = vmatpush1.msra.mxu0 0.0
  %723 = vmatprep.subr.mxu0 0.0
  %724 = vmatpush1.msra.mxu0 0.0
  %725 = vmatprep.subr.mxu0 0.0
  %726 = vmatpush1.msra.mxu0 0.0
  %727 = vmatprep.subr.mxu0 0.0
  %728 = vmatpush1.msra.mxu0 0.0
  %729 = vmatprep.subr.mxu0 0.0
  %730 = vmatpush1.msra.mxu0 0.0
  %731 = vmatprep.subr.mxu0 0.0
  %732 = vmatpush1.msra.mxu0 0.0
  %733 = vmatprep.subr.mxu0 0.0
  %734 = vmatpush1.msra.mxu0 0.0
  %735 = vmatprep.subr.mxu0 0.0
  %736 = vmatpush1.msra.mxu0 0.0
  %737 = vmatprep.subr.mxu0 0.0
  %738 = vmatpush1.msra.mxu0 0.0
  %739 = vmatprep.subr.mxu0 0.0
  %740 = vmatpush1.msra.mxu0 0.0
  %741 = vmatprep.subr.mxu0 0.0
  %742 = vmatpush1.msra.mxu0 0.0
  %743 = vmatprep.subr.mxu0 0.0
  %744 = vmatpush1.msra.mxu0 0.0
  %745 = vmatprep.subr.mxu0 0.0
  %746 = vmatpush1.msra.mxu0 0.0
  %747 = vmatprep.subr.mxu0 0.0
  %748 = vmatpush1.msra.mxu0 0.0
  %749 = vmatprep.subr.mxu0 0.0
  %750 = vmatpush1.msra.mxu0 0.0
  %751 = vmatprep.subr.mxu0 0.0
  %752 = vmatpush1.msra.mxu0 0.0
  %753 = vmatprep.subr.mxu0 0.0
  %754 = vmatpush1.msra.mxu0 0.0
  %755 = vmatprep.subr.mxu0 0.0
  %756 = vmatpush1.msra.mxu0 0.0
  %757 = vmatprep.subr.mxu0 0.0
  %758 = vmatpush1.msra.mxu0 0.0
  %759 = vmatprep.subr.mxu0 0.0
  %760 = vmatpush1.msra.mxu0 0.0
  %761 = vmatprep.subr.mxu0 0.0
  %762 = vmatpush1.msra.mxu0 0.0
  %763 = vmatprep.subr.mxu0 0.0
  %764 = vmatpush1.msra.mxu0 0.0
  %765 = vmatprep.subr.mxu0 0.0
  %766 = vmatpush1.msra.mxu0 0.0
  %767 = vmatprep.subr.mxu0 0.0
  %768 = vmatpush1.msra.mxu0 0.0
  %769 = vmatprep.subr.mxu0 0.0
  %770 = vmatpush1.msra.mxu0 0.0
  %771 = vmatprep.subr.mxu0 0.0
  %772 = vmatpush1.msra.mxu0 0.0
  %773 = vmatprep.mubr.f32.mxu0 0.0
  %774 = vmatmul.mubr.f32.gmra.mrb[0].mxu0 %v635
  %v775 = vpop.f32.mrb[0].mxu0
  %v776 = vadd.f32 0.0, %v775
  %v777 = vpop.f32.mrb[0].mxu0
  %778 = vmatprep.mubr.f32.mxu0 0.0
  %779 = vmatmul.mubr.f32.gmra.mrb[0].mxu0 %v638
  %v780 = vpop.f32.mrb[0].mxu0
  %v781 = vadd.f32 0.0, %v780
  %v782 = vpop.f32.mrb[0].mxu0
  %783 = vmatprep.mubr.f32.mxu0 0.0
  %784 = vmatmul.mubr.f32.gmra.mrb[0].mxu0 %v641
  %v785 = vpop.f32.mrb[0].mxu0
  %v786 = vadd.f32 0.0, %v785
  %v787 = vpop.f32.mrb[0].mxu0
  %788 = vmatprep.mubr.f32.mxu0 0.0
  %789 = vmatmul.mubr.f32.gmra.mrb[0].mxu0 %v644
  %v790 = vpop.f32.mrb[0].mxu0
  %v791 = vadd.f32 0.0, %v790
  %v792 = vpop.f32.mrb[0].mxu0
  %793 = vmatprep.mubr.f32.mxu0 0.0
  %794 = vmatmul.mubr.f32.gmra.mrb[0].mxu0 %v647
  %v795 = vpop.f32.mrb[0].mxu0
  %v796 = vadd.f32 0.0, %v795
  %v797 = vpop.f32.mrb[0].mxu0
  %798 = vmatprep.mubr.f32.mxu0 0.0
  %799 = vmatmul.mubr.f32.gmra.mrb[0].mxu0 %v650
  %v800 = vpop.f32.mrb[0].mxu0
  %v801 = vadd.f32 0.0, %v800
  %v802 = vpop.f32.mrb[0].mxu0
  %803 = vmatprep.mubr.f32.mxu0 0.0
  %804 = vmatmul.mubr.f32.gmra.mrb[0].mxu0 %v653
  %v805 = vpop.f32.mrb[0].mxu0
  %v806 = vadd.f32 0.0, %v805
  %v807 = vpop.f32.mrb[0].mxu0
  %808 = vmatprep.mubr.f32.mxu0 0.0
  %809 = vmatmul.mubr.f32.gmra.mrb[0].mxu0 %v656
  %v810 = vpop.f32.mrb[0].mxu0
  %v811 = vadd.f32 0.0, %v810
  %v812 = vpop.f32.mrb[0].mxu0
  %813 = vmatprep.mubr.f32.mxu0 0.0
  %814 = vmatmul.mubr.f32.gmra.mrb[0].mxu0 %v659
  %v815 = vpop.f32.mrb[0].mxu0
  %v816 = vadd.f32 0.0, %v815
  %v817 = vpop.f32.mrb[0].mxu0
  %818 = vmatprep.mubr.f32.mxu0 0.0
  %819 = vmatmul.mubr.f32.gmra.mrb[0].mxu0 %v662
  %v820 = vpop.f32.mrb[0].mxu0
  %v821 = vadd.f32 0.0, %v820
  %v822 = vpop.f32.mrb[0].mxu0
  %823 = vmatprep.mubr.f32.mxu0 0.0
  %824 = vmatmul.mubr.f32.gmra.mrb[0].mxu0 %v665
  %v825 = vpop.f32.mrb[0].mxu0
  %v826 = vadd.f32 0.0, %v825
  %v827 = vpop.f32.mrb[0].mxu0
  %828 = vmatprep.mubr.f32.mxu0 0.0
  %829 = vmatmul.mubr.f32.gmra.mrb[0].mxu0 %v668
  %v830 = vpop.f32.mrb[0].mxu0
  %v831 = vadd.f32 0.0, %v830
  %v832 = vpop.f32.mrb[0].mxu0
  %833 = vmatprep.mubr.f32.mxu0 0.0
  %834 = vmatmul.mubr.f32.gmra.mrb[0].mxu0 %v671
  %v835 = vpop.f32.mrb[0].mxu0
  %v836 = vadd.f32 0.0, %v835
  %v837 = vpop.f32.mrb[0].mxu0
  %838 = vmatprep.mubr.f32.mxu0 0.0
  %839 = vmatmul.mubr.f32.gmra.mrb[0].mxu0 %v674
  %v840 = vpop.f32.mrb[0].mxu0
  %v841 = vadd.f32 0.0, %v840
  %v842 = vpop.f32.mrb[0].mxu0
  %843 = vmatprep.mubr.f32.mxu0 0.0
  %844 = vmatmul.mubr.f32.gmra.mrb[0].mxu0 %v677
  %v845 = vpop.f32.mrb[0].mxu0
  %v846 = vadd.f32 0.0, %v845
  %v847 = vpop.f32.mrb[0].mxu0
  %848 = vmatprep.mubr.f32.mxu0 0.0
  %849 = vmatmul.mubr.f32.gmra.mrb[0].mxu0 %v680
  %v850 = vpop.f32.mrb[0].mxu0
  %v851 = vadd.f32 0.0, %v850
  %v852 = vpop.f32.mrb[0].mxu0
  %853 = vmatprep.mubr.f32.mxu0 0.0
  %854 = vmatmul.mubr.f32.gmra.mrb[0].mxu0 %v683
  %v855 = vpop.f32.mrb[0].mxu0
  %v856 = vadd.f32 0.0, %v855
  %v857 = vpop.f32.mrb[0].mxu0
  %858 = vmatprep.mubr.f32.mxu0 0.0
  %859 = vmatmul.mubr.f32.gmra.mrb[0].mxu0 %v686
  %v860 = vpop.f32.mrb[0].mxu0
  %v861 = vadd.f32 0.0, %v860
  %v862 = vpop.f32.mrb[0].mxu0
  %863 = vmatprep.mubr.f32.mxu0 0.0
  %864 = vmatmul.mubr.f32.gmra.mrb[0].mxu0 %v689
  %v865 = vpop.f32.mrb[0].mxu0
  %v866 = vadd.f32 0.0, %v865
  %v867 = vpop.f32.mrb[0].mxu0
  %868 = vmatprep.mubr.f32.mxu0 0.0
  %869 = vmatmul.mubr.f32.gmra.mrb[0].mxu0 %v692
  %v870 = vpop.f32.mrb[0].mxu0
  %v871 = vadd.f32 0.0, %v870
  %v872 = vpop.f32.mrb[0].mxu0
  %873 = vmatprep.mubr.f32.mxu0 0.0
  %874 = vmatmul.mubr.f32.gmra.mrb[0].mxu0 %v695
  %v875 = vpop.f32.mrb[0].mxu0
  %v876 = vadd.f32 0.0, %v875
  %v877 = vpop.f32.mrb[0].mxu0
  %878 = vmatprep.mubr.f32.mxu0 0.0
  %879 = vmatmul.mubr.f32.gmra.mrb[0].mxu0 %v698
  %v880 = vpop.f32.mrb[0].mxu0
  %v881 = vadd.f32 0.0, %v880
  %v882 = vpop.f32.mrb[0].mxu0
  %883 = vmatprep.mubr.f32.mxu0 0.0
  %884 = vmatmul.mubr.f32.gmra.mrb[0].mxu0 %v701
  %v885 = vpop.f32.mrb[0].mxu0
  %v886 = vadd.f32 0.0, %v885
  %v887 = vpop.f32.mrb[0].mxu0
  %888 = vmatprep.mubr.f32.mxu0 0.0
  %889 = vmatmul.mubr.f32.gmra.mrb[0].mxu0 %v704
  %v890 = vpop.f32.mrb[0].mxu0
  %v891 = vadd.f32 0.0, %v890
  %v892 = vpop.f32.mrb[0].mxu0
  %893 = vmatprep.mubr.f32.mxu0 0.0
  %894 = vmatmul.mubr.f32.gmra.mrb[0].mxu0 %v707
  %v895 = vpop.f32.mrb[0].mxu0
  %v896 = vadd.f32 0.0, %v895
  %v897 = vpop.f32.mrb[0].mxu0
  %898 = vdwg.mxu0
  %v899 = vadd.f32 %v481, %v776
  %v900 = vadd.f32 %v486, %v781
  %v901 = vadd.f32 %v491, %v786
  %v902 = vadd.f32 %v496, %v791
  %v903 = vadd.f32 %v501, %v796
  %v904 = vadd.f32 %v506, %v801
  %v905 = vadd.f32 %v511, %v806
  %v906 = vadd.f32 %v516, %v811
  %v907 = vadd.f32 %v521, %v816
  %v908 = vadd.f32 %v526, %v821
  %v909 = vadd.f32 %v531, %v826
  %v910 = vadd.f32 %v536, %v831
  %v911 = vadd.f32 %v541, %v836
  %v912 = vadd.f32 %v546, %v841
  %v913 = vadd.f32 %v551, %v846
  %v914 = vadd.f32 %v556, %v851
  %v915 = vadd.f32 %v561, %v856
  %v916 = vadd.f32 %v566, %v861
  %v917 = vadd.f32 %v571, %v866
  %v918 = vadd.f32 %v576, %v871
  %v919 = vadd.f32 %v581, %v876
  %v920 = vadd.f32 %v586, %v881
  %v921 = vadd.f32 %v591, %v886
  %v922 = vadd.f32 %v596, %v891
  %v923 = vadd.f32 %v601, %v896
  %v924 = vld [vmem:[%s0 + $0xa] sm:$0xff]
  %v925 = vld [vmem:[%s0 + $0x12] sm:$0xff]
  %v926 = vld [vmem:[%s0 + $0x1a] sm:$0xff]
  %v927 = vld [vmem:[%s0 + $0x22] sm:$0xff]
  %v928 = vld [vmem:[%s0 + $0x2a] sm:$0xff]
  %v929 = vld [vmem:[%s0 + $0x32] sm:$0xff]
  %v930 = vld [vmem:[%s0 + $0x3a] sm:$0xff]
  %v931 = vld [vmem:[%s0 + $0x42] sm:$0xff]
  %v932 = vld [vmem:[%s0 + $0x4a] sm:$0xff]
  %v933 = vld [vmem:[%s0 + $0x52] sm:$0xff]
  %v934 = vld [vmem:[%s0 + $0x5a] sm:$0xff]
  %v935 = vld [vmem:[%s0 + $0x62] sm:$0xff]
  %v936 = vld [vmem:[%s0 + $0x6a] sm:$0xff]
  %v937 = vld [vmem:[%s0 + $0x72] sm:$0xff]
  %v938 = vld [vmem:[%s0 + $0x7a] sm:$0xff]
  %v939 = vld [vmem:[%s0 + $0x82] sm:$0xff]
  %v940 = vld [vmem:[%s0 + $0x8a] sm:$0xff]
  %v941 = vld [vmem:[%s0 + $0x92] sm:$0xff]
  %v942 = vld [vmem:[%s0 + $0x9a] sm:$0xff]
  %v943 = vld [vmem:[%s0 + $0xa2] sm:$0xff]
  %v944 = vld [vmem:[%s0 + $0xaa] sm:$0xff]
  %v945 = vld [vmem:[%s0 + $0xb2] sm:$0xff]
  %v946 = vld [vmem:[%s0 + $0xba] sm:$0xff]
  %v947 = vld [vmem:[%s0 + $0xc2] sm:$0xff]
  %v948 = vld [vmem:[%s0 + $0xca] sm:$0xff]
  %s949 = scalar_lea.vmem %s1, 96
  %v950 = vld [vmem:[%s949] sm:$0xff]
  %v951 = vld [vmem:[%s949 + $0x8] sm:$0xff]
  %v952 = vld [vmem:[%s949 + $0x10] sm:$0xff]
  %v953 = vld [vmem:[%s949 + $0x18] sm:$0xff]
  %v955 = vsel %vm73, %v924, 0
  %v958 = vsel %vm73, %v925, 0
  %v961 = vsel %vm73, %v926, 0
  %v964 = vsel %vm73, %v927, 0
  %v967 = vsel %vm73, %v928, 0
  %v970 = vsel %vm73, %v929, 0
  %v973 = vsel %vm73, %v930, 0
  %v976 = vsel %vm73, %v931, 0
  %v979 = vsel %vm73, %v932, 0
  %v982 = vsel %vm73, %v933, 0
  %v985 = vsel %vm73, %v934, 0
  %v988 = vsel %vm73, %v935, 0
  %v991 = vsel %vm73, %v936, 0
  %v994 = vsel %vm73, %v937, 0
  %v997 = vsel %vm73, %v938, 0
  %v1000 = vsel %vm73, %v939, 0
  %v1003 = vsel %vm73, %v940, 0
  %v1006 = vsel %vm73, %v941, 0
  %v1009 = vsel %vm73, %v942, 0
  %v1012 = vsel %vm73, %v943, 0
  %v1015 = vsel %vm73, %v944, 0
  %v1018 = vsel %vm73, %v945, 0
  %v1021 = vsel %vm73, %v946, 0
  %v1024 = vsel %vm73, %v947, 0
  %v1027 = vsel %vm73, %v948, 0
  %1029 = vmatprep.subr.mxu0 0.0
  %1030 = vmatpush1.msra.mxu0 %v950
  %1031 = vmatprep.subr.mxu0 0.0
  %1032 = vmatpush1.msra.mxu0 %v951
  %1033 = vmatprep.subr.mxu0 0.0
  %1034 = vmatpush1.msra.mxu0 %v952
  %1035 = vmatprep.subr.mxu0 0.0
  %1036 = vmatpush1.msra.mxu0 %v953
  %1037 = vmatprep.subr.mxu0 0.0
  %1038 = vmatpush1.msra.mxu0 0.0
  %1039 = vmatprep.subr.mxu0 0.0
  %1040 = vmatpush1.msra.mxu0 0.0
  %1041 = vmatprep.subr.mxu0 0.0
  %1042 = vmatpush1.msra.mxu0 0.0
  %1043 = vmatprep.subr.mxu0 0.0
  %1044 = vmatpush1.msra.mxu0 0.0
  %1045 = vmatprep.subr.mxu0 0.0
  %1046 = vmatpush1.msra.mxu0 0.0
  %1047 = vmatprep.subr.mxu0 0.0
  %1048 = vmatpush1.msra.mxu0 0.0
  %1049 = vmatprep.subr.mxu0 0.0
  %1050 = vmatpush1.msra.mxu0 0.0
  %1051 = vmatprep.subr.mxu0 0.0
  %1052 = vmatpush1.msra.mxu0 0.0
  %1053 = vmatprep.subr.mxu0 0.0
  %1054 = vmatpush1.msra.mxu0 0.0
  %1055 = vmatprep.subr.mxu0 0.0
  %1056 = vmatpush1.msra.mxu0 0.0
  %1057 = vmatprep.subr.mxu0 0.0
  %1058 = vmatpush1.msra.mxu0 0.0
  %1059 = vmatprep.subr.mxu0 0.0
  %1060 = vmatpush1.msra.mxu0 0.0
  %1061 = vmatprep.subr.mxu0 0.0
  %1062 = vmatpush1.msra.mxu0 0.0
  %1063 = vmatprep.subr.mxu0 0.0
  %1064 = vmatpush1.msra.mxu0 0.0
  %1065 = vmatprep.subr.mxu0 0.0
  %1066 = vmatpush1.msra.mxu0 0.0
  %1067 = vmatprep.subr.mxu0 0.0
  %1068 = vmatpush1.msra.mxu0 0.0
  %1069 = vmatprep.subr.mxu0 0.0
  %1070 = vmatpush1.msra.mxu0 0.0
  %1071 = vmatprep.subr.mxu0 0.0
  %1072 = vmatpush1.msra.mxu0 0.0
  %1073 = vmatprep.subr.mxu0 0.0
  %1074 = vmatpush1.msra.mxu0 0.0
  %1075 = vmatprep.subr.mxu0 0.0
  %1076 = vmatpush1.msra.mxu0 0.0
  %1077 = vmatprep.subr.mxu0 0.0
  %1078 = vmatpush1.msra.mxu0 0.0
  %1079 = vmatprep.subr.mxu0 0.0
  %1080 = vmatpush1.msra.mxu0 0.0
  %1081 = vmatprep.subr.mxu0 0.0
  %1082 = vmatpush1.msra.mxu0 0.0
  %1083 = vmatprep.subr.mxu0 0.0
  %1084 = vmatpush1.msra.mxu0 0.0
  %1085 = vmatprep.subr.mxu0 0.0
  %1086 = vmatpush1.msra.mxu0 0.0
  %1087 = vmatprep.subr.mxu0 0.0
  %1088 = vmatpush1.msra.mxu0 0.0
  %1089 = vmatprep.subr.mxu0 0.0
  %1090 = vmatpush1.msra.mxu0 0.0
  %1091 = vmatprep.subr.mxu0 0.0
  %1092 = vmatpush1.msra.mxu0 0.0
  %1093 = vmatprep.mubr.f32.mxu0 0.0
  %1094 = vmatmul.mubr.f32.gmra.mrb[0].mxu0 %v955
  %v1095 = vpop.f32.mrb[0].mxu0
  %v1096 = vadd.f32 0.0, %v1095
  %v1097 = vpop.f32.mrb[0].mxu0
  %1098 = vmatprep.mubr.f32.mxu0 0.0
  %1099 = vmatmul.mubr.f32.gmra.mrb[0].mxu0 %v958
  %v1100 = vpop.f32.mrb[0].mxu0
  %v1101 = vadd.f32 0.0, %v1100
  %v1102 = vpop.f32.mrb[0].mxu0
  %1103 = vmatprep.mubr.f32.mxu0 0.0
  %1104 = vmatmul.mubr.f32.gmra.mrb[0].mxu0 %v961
  %v1105 = vpop.f32.mrb[0].mxu0
  %v1106 = vadd.f32 0.0, %v1105
  %v1107 = vpop.f32.mrb[0].mxu0
  %1108 = vmatprep.mubr.f32.mxu0 0.0
  %1109 = vmatmul.mubr.f32.gmra.mrb[0].mxu0 %v964
  %v1110 = vpop.f32.mrb[0].mxu0
  %v1111 = vadd.f32 0.0, %v1110
  %v1112 = vpop.f32.mrb[0].mxu0
  %1113 = vmatprep.mubr.f32.mxu0 0.0
  %1114 = vmatmul.mubr.f32.gmra.mrb[0].mxu0 %v967
  %v1115 = vpop.f32.mrb[0].mxu0
  %v1116 = vadd.f32 0.0, %v1115
  %v1117 = vpop.f32.mrb[0].mxu0
  %1118 = vmatprep.mubr.f32.mxu0 0.0
  %1119 = vmatmul.mubr.f32.gmra.mrb[0].mxu0 %v970
  %v1120 = vpop.f32.mrb[0].mxu0
  %v1121 = vadd.f32 0.0, %v1120
  %v1122 = vpop.f32.mrb[0].mxu0
  %1123 = vmatprep.mubr.f32.mxu0 0.0
  %1124 = vmatmul.mubr.f32.gmra.mrb[0].mxu0 %v973
  %v1125 = vpop.f32.mrb[0].mxu0
  %v1126 = vadd.f32 0.0, %v1125
  %v1127 = vpop.f32.mrb[0].mxu0
  %1128 = vmatprep.mubr.f32.mxu0 0.0
  %1129 = vmatmul.mubr.f32.gmra.mrb[0].mxu0 %v976
  %v1130 = vpop.f32.mrb[0].mxu0
  %v1131 = vadd.f32 0.0, %v1130
  %v1132 = vpop.f32.mrb[0].mxu0
  %1133 = vmatprep.mubr.f32.mxu0 0.0
  %1134 = vmatmul.mubr.f32.gmra.mrb[0].mxu0 %v979
  %v1135 = vpop.f32.mrb[0].mxu0
  %v1136 = vadd.f32 0.0, %v1135
  %v1137 = vpop.f32.mrb[0].mxu0
  %1138 = vmatprep.mubr.f32.mxu0 0.0
  %1139 = vmatmul.mubr.f32.gmra.mrb[0].mxu0 %v982
  %v1140 = vpop.f32.mrb[0].mxu0
  %v1141 = vadd.f32 0.0, %v1140
  %v1142 = vpop.f32.mrb[0].mxu0
  %1143 = vmatprep.mubr.f32.mxu0 0.0
  %1144 = vmatmul.mubr.f32.gmra.mrb[0].mxu0 %v985
  %v1145 = vpop.f32.mrb[0].mxu0
  %v1146 = vadd.f32 0.0, %v1145
  %v1147 = vpop.f32.mrb[0].mxu0
  %1148 = vmatprep.mubr.f32.mxu0 0.0
  %1149 = vmatmul.mubr.f32.gmra.mrb[0].mxu0 %v988
  %v1150 = vpop.f32.mrb[0].mxu0
  %v1151 = vadd.f32 0.0, %v1150
  %v1152 = vpop.f32.mrb[0].mxu0
  %1153 = vmatprep.mubr.f32.mxu0 0.0
  %1154 = vmatmul.mubr.f32.gmra.mrb[0].mxu0 %v991
  %v1155 = vpop.f32.mrb[0].mxu0
  %v1156 = vadd.f32 0.0, %v1155
  %v1157 = vpop.f32.mrb[0].mxu0
  %1158 = vmatprep.mubr.f32.mxu0 0.0
  %1159 = vmatmul.mubr.f32.gmra.mrb[0].mxu0 %v994
  %v1160 = vpop.f32.mrb[0].mxu0
  %v1161 = vadd.f32 0.0, %v1160
  %v1162 = vpop.f32.mrb[0].mxu0
  %1163 = vmatprep.mubr.f32.mxu0 0.0
  %1164 = vmatmul.mubr.f32.gmra.mrb[0].mxu0 %v997
  %v1165 = vpop.f32.mrb[0].mxu0
  %v1166 = vadd.f32 0.0, %v1165
  %v1167 = vpop.f32.mrb[0].mxu0
  %1168 = vmatprep.mubr.f32.mxu0 0.0
  %1169 = vmatmul.mubr.f32.gmra.mrb[0].mxu0 %v1000
  %v1170 = vpop.f32.mrb[0].mxu0
  %v1171 = vadd.f32 0.0, %v1170
  %v1172 = vpop.f32.mrb[0].mxu0
  %1173 = vmatprep.mubr.f32.mxu0 0.0
  %1174 = vmatmul.mubr.f32.gmra.mrb[0].mxu0 %v1003
  %v1175 = vpop.f32.mrb[0].mxu0
  %v1176 = vadd.f32 0.0, %v1175
  %v1177 = vpop.f32.mrb[0].mxu0
  %1178 = vmatprep.mubr.f32.mxu0 0.0
  %1179 = vmatmul.mubr.f32.gmra.mrb[0].mxu0 %v1006
  %v1180 = vpop.f32.mrb[0].mxu0
  %v1181 = vadd.f32 0.0, %v1180
  %v1182 = vpop.f32.mrb[0].mxu0
  %1183 = vmatprep.mubr.f32.mxu0 0.0
  %1184 = vmatmul.mubr.f32.gmra.mrb[0].mxu0 %v1009
  %v1185 = vpop.f32.mrb[0].mxu0
  %v1186 = vadd.f32 0.0, %v1185
  %v1187 = vpop.f32.mrb[0].mxu0
  %1188 = vmatprep.mubr.f32.mxu0 0.0
  %1189 = vmatmul.mubr.f32.gmra.mrb[0].mxu0 %v1012
  %v1190 = vpop.f32.mrb[0].mxu0
  %v1191 = vadd.f32 0.0, %v1190
  %v1192 = vpop.f32.mrb[0].mxu0
  %1193 = vmatprep.mubr.f32.mxu0 0.0
  %1194 = vmatmul.mubr.f32.gmra.mrb[0].mxu0 %v1015
  %v1195 = vpop.f32.mrb[0].mxu0
  %v1196 = vadd.f32 0.0, %v1195
  %v1197 = vpop.f32.mrb[0].mxu0
  %1198 = vmatprep.mubr.f32.mxu0 0.0
  %1199 = vmatmul.mubr.f32.gmra.mrb[0].mxu0 %v1018
  %v1200 = vpop.f32.mrb[0].mxu0
  %v1201 = vadd.f32 0.0, %v1200
  %v1202 = vpop.f32.mrb[0].mxu0
  %1203 = vmatprep.mubr.f32.mxu0 0.0
  %1204 = vmatmul.mubr.f32.gmra.mrb[0].mxu0 %v1021
  %v1205 = vpop.f32.mrb[0].mxu0
  %v1206 = vadd.f32 0.0, %v1205
  %v1207 = vpop.f32.mrb[0].mxu0
  %1208 = vmatprep.mubr.f32.mxu0 0.0
  %1209 = vmatmul.mubr.f32.gmra.mrb[0].mxu0 %v1024
  %v1210 = vpop.f32.mrb[0].mxu0
  %v1211 = vadd.f32 0.0, %v1210
  %v1212 = vpop.f32.mrb[0].mxu0
  %1213 = vmatprep.mubr.f32.mxu0 0.0
  %1214 = vmatmul.mubr.f32.gmra.mrb[0].mxu0 %v1027
  %v1215 = vpop.f32.mrb[0].mxu0
  %v1216 = vadd.f32 0.0, %v1215
  %v1217 = vpop.f32.mrb[0].mxu0
  %1218 = vdwg.mxu0
  %v1219 = vadd.f32 %v899, %v1096
  %v1220 = vadd.f32 %v900, %v1101
  %v1221 = vadd.f32 %v901, %v1106
  %v1222 = vadd.f32 %v902, %v1111
  %v1223 = vadd.f32 %v903, %v1116
  %v1224 = vadd.f32 %v904, %v1121
  %v1225 = vadd.f32 %v905, %v1126
  %v1226 = vadd.f32 %v906, %v1131
  %v1227 = vadd.f32 %v907, %v1136
  %v1228 = vadd.f32 %v908, %v1141
  %v1229 = vadd.f32 %v909, %v1146
  %v1230 = vadd.f32 %v910, %v1151
  %v1231 = vadd.f32 %v911, %v1156
  %v1232 = vadd.f32 %v912, %v1161
  %v1233 = vadd.f32 %v913, %v1166
  %v1234 = vadd.f32 %v914, %v1171
  %v1235 = vadd.f32 %v915, %v1176
  %v1236 = vadd.f32 %v916, %v1181
  %v1237 = vadd.f32 %v917, %v1186
  %v1238 = vadd.f32 %v918, %v1191
  %v1239 = vadd.f32 %v919, %v1196
  %v1240 = vadd.f32 %v920, %v1201
  %v1241 = vadd.f32 %v921, %v1206
  %v1242 = vadd.f32 %v922, %v1211
  %v1243 = vadd.f32 %v923, %v1216
  %v1244 = vld [vmem:[%s0 + $0xb] sm:$0xff]
  %v1245 = vld [vmem:[%s0 + $0x13] sm:$0xff]
  %v1246 = vld [vmem:[%s0 + $0x1b] sm:$0xff]
  %v1247 = vld [vmem:[%s0 + $0x23] sm:$0xff]
  %v1248 = vld [vmem:[%s0 + $0x2b] sm:$0xff]
  %v1249 = vld [vmem:[%s0 + $0x33] sm:$0xff]
  %v1250 = vld [vmem:[%s0 + $0x3b] sm:$0xff]
  %v1251 = vld [vmem:[%s0 + $0x43] sm:$0xff]
  %v1252 = vld [vmem:[%s0 + $0x4b] sm:$0xff]
  %v1253 = vld [vmem:[%s0 + $0x53] sm:$0xff]
  %v1254 = vld [vmem:[%s0 + $0x5b] sm:$0xff]
  %v1255 = vld [vmem:[%s0 + $0x63] sm:$0xff]
  %v1256 = vld [vmem:[%s0 + $0x6b] sm:$0xff]
  %v1257 = vld [vmem:[%s0 + $0x73] sm:$0xff]
  %v1258 = vld [vmem:[%s0 + $0x7b] sm:$0xff]
  %v1259 = vld [vmem:[%s0 + $0x83] sm:$0xff]
  %v1260 = vld [vmem:[%s0 + $0x8b] sm:$0xff]
  %v1261 = vld [vmem:[%s0 + $0x93] sm:$0xff]
  %v1262 = vld [vmem:[%s0 + $0x9b] sm:$0xff]
  %v1263 = vld [vmem:[%s0 + $0xa3] sm:$0xff]
  %v1264 = vld [vmem:[%s0 + $0xab] sm:$0xff]
  %v1265 = vld [vmem:[%s0 + $0xb3] sm:$0xff]
  %v1266 = vld [vmem:[%s0 + $0xbb] sm:$0xff]
  %v1267 = vld [vmem:[%s0 + $0xc3] sm:$0xff]
  %v1268 = vld [vmem:[%s0 + $0xcb] sm:$0xff]
  %s1269 = scalar_lea.vmem %s1, 128
  %v1270 = vld [vmem:[%s1269] sm:$0xff]
  %v1271 = vld [vmem:[%s1269 + $0x8] sm:$0xff]
  %v1272 = vld [vmem:[%s1269 + $0x10] sm:$0xff]
  %v1273 = vld [vmem:[%s1269 + $0x18] sm:$0xff]
  %v1275 = vsel %vm73, %v1244, 0
  %v1278 = vsel %vm73, %v1245, 0
  %v1281 = vsel %vm73, %v1246, 0
  %v1284 = vsel %vm73, %v1247, 0
  %v1287 = vsel %vm73, %v1248, 0
  %v1290 = vsel %vm73, %v1249, 0
  %v1293 = vsel %vm73, %v1250, 0
  %v1296 = vsel %vm73, %v1251, 0
  %v1299 = vsel %vm73, %v1252, 0
  %v1302 = vsel %vm73, %v1253, 0
  %v1305 = vsel %vm73, %v1254, 0
  %v1308 = vsel %vm73, %v1255, 0
  %v1311 = vsel %vm73, %v1256, 0
  %v1314 = vsel %vm73, %v1257, 0
  %v1317 = vsel %vm73, %v1258, 0
  %v1320 = vsel %vm73, %v1259, 0
  %v1323 = vsel %vm73, %v1260, 0
  %v1326 = vsel %vm73, %v1261, 0
  %v1329 = vsel %vm73, %v1262, 0
  %v1332 = vsel %vm73, %v1263, 0
  %v1335 = vsel %vm73, %v1264, 0
  %v1338 = vsel %vm73, %v1265, 0
  %v1341 = vsel %vm73, %v1266, 0
  %v1344 = vsel %vm73, %v1267, 0
  %v1347 = vsel %vm73, %v1268, 0
  %1349 = vmatprep.subr.mxu0 0.0
  %1350 = vmatpush1.msra.mxu0 %v1270
  %1351 = vmatprep.subr.mxu0 0.0
  %1352 = vmatpush1.msra.mxu0 %v1271
  %1353 = vmatprep.subr.mxu0 0.0
  %1354 = vmatpush1.msra.mxu0 %v1272
  %1355 = vmatprep.subr.mxu0 0.0
  %1356 = vmatpush1.msra.mxu0 %v1273
  %1357 = vmatprep.subr.mxu0 0.0
  %1358 = vmatpush1.msra.mxu0 0.0
  %1359 = vmatprep.subr.mxu0 0.0
  %1360 = vmatpush1.msra.mxu0 0.0
  %1361 = vmatprep.subr.mxu0 0.0
  %1362 = vmatpush1.msra.mxu0 0.0
  %1363 = vmatprep.subr.mxu0 0.0
  %1364 = vmatpush1.msra.mxu0 0.0
  %1365 = vmatprep.subr.mxu0 0.0
  %1366 = vmatpush1.msra.mxu0 0.0
  %1367 = vmatprep.subr.mxu0 0.0
  %1368 = vmatpush1.msra.mxu0 0.0
  %1369 = vmatprep.subr.mxu0 0.0
  %1370 = vmatpush1.msra.mxu0 0.0
  %1371 = vmatprep.subr.mxu0 0.0
  %1372 = vmatpush1.msra.mxu0 0.0
  %1373 = vmatprep.subr.mxu0 0.0
  %1374 = vmatpush1.msra.mxu0 0.0
  %1375 = vmatprep.subr.mxu0 0.0
  %1376 = vmatpush1.msra.mxu0 0.0
  %1377 = vmatprep.subr.mxu0 0.0
  %1378 = vmatpush1.msra.mxu0 0.0
  %1379 = vmatprep.subr.mxu0 0.0
  %1380 = vmatpush1.msra.mxu0 0.0
  %1381 = vmatprep.subr.mxu0 0.0
  %1382 = vmatpush1.msra.mxu0 0.0
  %1383 = vmatprep.subr.mxu0 0.0
  %1384 = vmatpush1.msra.mxu0 0.0
  %1385 = vmatprep.subr.mxu0 0.0
  %1386 = vmatpush1.msra.mxu0 0.0
  %1387 = vmatprep.subr.mxu0 0.0
  %1388 = vmatpush1.msra.mxu0 0.0
  %1389 = vmatprep.subr.mxu0 0.0
  %1390 = vmatpush1.msra.mxu0 0.0
  %1391 = vmatprep.subr.mxu0 0.0
  %1392 = vmatpush1.msra.mxu0 0.0
  %1393 = vmatprep.subr.mxu0 0.0
  %1394 = vmatpush1.msra.mxu0 0.0
  %1395 = vmatprep.subr.mxu0 0.0
  %1396 = vmatpush1.msra.mxu0 0.0
  %1397 = vmatprep.subr.mxu0 0.0
  %1398 = vmatpush1.msra.mxu0 0.0
  %1399 = vmatprep.subr.mxu0 0.0
  %1400 = vmatpush1.msra.mxu0 0.0
  %1401 = vmatprep.subr.mxu0 0.0
  %1402 = vmatpush1.msra.mxu0 0.0
  %1403 = vmatprep.subr.mxu0 0.0
  %1404 = vmatpush1.msra.mxu0 0.0
  %1405 = vmatprep.subr.mxu0 0.0
  %1406 = vmatpush1.msra.mxu0 0.0
  %1407 = vmatprep.subr.mxu0 0.0
  %1408 = vmatpush1.msra.mxu0 0.0
  %1409 = vmatprep.subr.mxu0 0.0
  %1410 = vmatpush1.msra.mxu0 0.0
  %1411 = vmatprep.subr.mxu0 0.0
  %1412 = vmatpush1.msra.mxu0 0.0
  %1413 = vmatprep.mubr.f32.mxu0 0.0
  %1414 = vmatmul.mubr.f32.gmra.mrb[0].mxu0 %v1275
  %v1415 = vpop.f32.mrb[0].mxu0
  %v1416 = vadd.f32 0.0, %v1415
  %v1417 = vpop.f32.mrb[0].mxu0
  %1418 = vmatprep.mubr.f32.mxu0 0.0
  %1419 = vmatmul.mubr.f32.gmra.mrb[0].mxu0 %v1278
  %v1420 = vpop.f32.mrb[0].mxu0
  %v1421 = vadd.f32 0.0, %v1420
  %v1422 = vpop.f32.mrb[0].mxu0
  %1423 = vmatprep.mubr.f32.mxu0 0.0
  %1424 = vmatmul.mubr.f32.gmra.mrb[0].mxu0 %v1281
  %v1425 = vpop.f32.mrb[0].mxu0
  %v1426 = vadd.f32 0.0, %v1425
  %v1427 = vpop.f32.mrb[0].mxu0
  %1428 = vmatprep.mubr.f32.mxu0 0.0
  %1429 = vmatmul.mubr.f32.gmra.mrb[0].mxu0 %v1284
  %v1430 = vpop.f32.mrb[0].mxu0
  %v1431 = vadd.f32 0.0, %v1430
  %v1432 = vpop.f32.mrb[0].mxu0
  %1433 = vmatprep.mubr.f32.mxu0 0.0
  %1434 = vmatmul.mubr.f32.gmra.mrb[0].mxu0 %v1287
  %v1435 = vpop.f32.mrb[0].mxu0
  %v1436 = vadd.f32 0.0, %v1435
  %v1437 = vpop.f32.mrb[0].mxu0
  %1438 = vmatprep.mubr.f32.mxu0 0.0
  %1439 = vmatmul.mubr.f32.gmra.mrb[0].mxu0 %v1290
  %v1440 = vpop.f32.mrb[0].mxu0
  %v1441 = vadd.f32 0.0, %v1440
  %v1442 = vpop.f32.mrb[0].mxu0
  %1443 = vmatprep.mubr.f32.mxu0 0.0
  %1444 = vmatmul.mubr.f32.gmra.mrb[0].mxu0 %v1293
  %v1445 = vpop.f32.mrb[0].mxu0
  %v1446 = vadd.f32 0.0, %v1445
  %v1447 = vpop.f32.mrb[0].mxu0
  %1448 = vmatprep.mubr.f32.mxu0 0.0
  %1449 = vmatmul.mubr.f32.gmra.mrb[0].mxu0 %v1296
  %v1450 = vpop.f32.mrb[0].mxu0
  %v1451 = vadd.f32 0.0, %v1450
  %v1452 = vpop.f32.mrb[0].mxu0
  %1453 = vmatprep.mubr.f32.mxu0 0.0
  %1454 = vmatmul.mubr.f32.gmra.mrb[0].mxu0 %v1299
  %v1455 = vpop.f32.mrb[0].mxu0
  %v1456 = vadd.f32 0.0, %v1455
  %v1457 = vpop.f32.mrb[0].mxu0
  %1458 = vmatprep.mubr.f32.mxu0 0.0
  %1459 = vmatmul.mubr.f32.gmra.mrb[0].mxu0 %v1302
  %v1460 = vpop.f32.mrb[0].mxu0
  %v1461 = vadd.f32 0.0, %v1460
  %v1462 = vpop.f32.mrb[0].mxu0
  %1463 = vmatprep.mubr.f32.mxu0 0.0
  %1464 = vmatmul.mubr.f32.gmra.mrb[0].mxu0 %v1305
  %v1465 = vpop.f32.mrb[0].mxu0
  %v1466 = vadd.f32 0.0, %v1465
  %v1467 = vpop.f32.mrb[0].mxu0
  %1468 = vmatprep.mubr.f32.mxu0 0.0
  %1469 = vmatmul.mubr.f32.gmra.mrb[0].mxu0 %v1308
  %v1470 = vpop.f32.mrb[0].mxu0
  %v1471 = vadd.f32 0.0, %v1470
  %v1472 = vpop.f32.mrb[0].mxu0
  %1473 = vmatprep.mubr.f32.mxu0 0.0
  %1474 = vmatmul.mubr.f32.gmra.mrb[0].mxu0 %v1311
  %v1475 = vpop.f32.mrb[0].mxu0
  %v1476 = vadd.f32 0.0, %v1475
  %v1477 = vpop.f32.mrb[0].mxu0
  %1478 = vmatprep.mubr.f32.mxu0 0.0
  %1479 = vmatmul.mubr.f32.gmra.mrb[0].mxu0 %v1314
  %v1480 = vpop.f32.mrb[0].mxu0
  %v1481 = vadd.f32 0.0, %v1480
  %v1482 = vpop.f32.mrb[0].mxu0
  %1483 = vmatprep.mubr.f32.mxu0 0.0
  %1484 = vmatmul.mubr.f32.gmra.mrb[0].mxu0 %v1317
  %v1485 = vpop.f32.mrb[0].mxu0
  %v1486 = vadd.f32 0.0, %v1485
  %v1487 = vpop.f32.mrb[0].mxu0
  %1488 = vmatprep.mubr.f32.mxu0 0.0
  %1489 = vmatmul.mubr.f32.gmra.mrb[0].mxu0 %v1320
  %v1490 = vpop.f32.mrb[0].mxu0
  %v1491 = vadd.f32 0.0, %v1490
  %v1492 = vpop.f32.mrb[0].mxu0
  %1493 = vmatprep.mubr.f32.mxu0 0.0
  %1494 = vmatmul.mubr.f32.gmra.mrb[0].mxu0 %v1323
  %v1495 = vpop.f32.mrb[0].mxu0
  %v1496 = vadd.f32 0.0, %v1495
  %v1497 = vpop.f32.mrb[0].mxu0
  %1498 = vmatprep.mubr.f32.mxu0 0.0
  %1499 = vmatmul.mubr.f32.gmra.mrb[0].mxu0 %v1326
  %v1500 = vpop.f32.mrb[0].mxu0
  %v1501 = vadd.f32 0.0, %v1500
  %v1502 = vpop.f32.mrb[0].mxu0
  %1503 = vmatprep.mubr.f32.mxu0 0.0
  %1504 = vmatmul.mubr.f32.gmra.mrb[0].mxu0 %v1329
  %v1505 = vpop.f32.mrb[0].mxu0
  %v1506 = vadd.f32 0.0, %v1505
  %v1507 = vpop.f32.mrb[0].mxu0
  %1508 = vmatprep.mubr.f32.mxu0 0.0
  %1509 = vmatmul.mubr.f32.gmra.mrb[0].mxu0 %v1332
  %v1510 = vpop.f32.mrb[0].mxu0
  %v1511 = vadd.f32 0.0, %v1510
  %v1512 = vpop.f32.mrb[0].mxu0
  %1513 = vmatprep.mubr.f32.mxu0 0.0
  %1514 = vmatmul.mubr.f32.gmra.mrb[0].mxu0 %v1335
  %v1515 = vpop.f32.mrb[0].mxu0
  %v1516 = vadd.f32 0.0, %v1515
  %v1517 = vpop.f32.mrb[0].mxu0
  %1518 = vmatprep.mubr.f32.mxu0 0.0
  %1519 = vmatmul.mubr.f32.gmra.mrb[0].mxu0 %v1338
  %v1520 = vpop.f32.mrb[0].mxu0
  %v1521 = vadd.f32 0.0, %v1520
  %v1522 = vpop.f32.mrb[0].mxu0
  %1523 = vmatprep.mubr.f32.mxu0 0.0
  %1524 = vmatmul.mubr.f32.gmra.mrb[0].mxu0 %v1341
  %v1525 = vpop.f32.mrb[0].mxu0
  %v1526 = vadd.f32 0.0, %v1525
  %v1527 = vpop.f32.mrb[0].mxu0
  %1528 = vmatprep.mubr.f32.mxu0 0.0
  %1529 = vmatmul.mubr.f32.gmra.mrb[0].mxu0 %v1344
  %v1530 = vpop.f32.mrb[0].mxu0
  %v1531 = vadd.f32 0.0, %v1530
  %v1532 = vpop.f32.mrb[0].mxu0
  %1533 = vmatprep.mubr.f32.mxu0 0.0
  %1534 = vmatmul.mubr.f32.gmra.mrb[0].mxu0 %v1347
  %v1535 = vpop.f32.mrb[0].mxu0
  %v1536 = vadd.f32 0.0, %v1535
  %v1537 = vpop.f32.mrb[0].mxu0
  %1538 = vdwg.mxu0
  %v1539 = vadd.f32 %v1219, %v1416
  %v1540 = vadd.f32 %v1220, %v1421
  %v1541 = vadd.f32 %v1221, %v1426
  %v1542 = vadd.f32 %v1222, %v1431
  %v1543 = vadd.f32 %v1223, %v1436
  %v1544 = vadd.f32 %v1224, %v1441
  %v1545 = vadd.f32 %v1225, %v1446
  %v1546 = vadd.f32 %v1226, %v1451
  %v1547 = vadd.f32 %v1227, %v1456
  %v1548 = vadd.f32 %v1228, %v1461
  %v1549 = vadd.f32 %v1229, %v1466
  %v1550 = vadd.f32 %v1230, %v1471
  %v1551 = vadd.f32 %v1231, %v1476
  %v1552 = vadd.f32 %v1232, %v1481
  %v1553 = vadd.f32 %v1233, %v1486
  %v1554 = vadd.f32 %v1234, %v1491
  %v1555 = vadd.f32 %v1235, %v1496
  %v1556 = vadd.f32 %v1236, %v1501
  %v1557 = vadd.f32 %v1237, %v1506
  %v1558 = vadd.f32 %v1238, %v1511
  %v1559 = vadd.f32 %v1239, %v1516
  %v1560 = vadd.f32 %v1240, %v1521
  %v1561 = vadd.f32 %v1241, %v1526
  %v1562 = vadd.f32 %v1242, %v1531
  %v1563 = vadd.f32 %v1243, %v1536
  %v1564 = vld [vmem:[%s0 + $0xc] sm:$0xff]
  %v1565 = vld [vmem:[%s0 + $0x14] sm:$0xff]
  %v1566 = vld [vmem:[%s0 + $0x1c] sm:$0xff]
  %v1567 = vld [vmem:[%s0 + $0x24] sm:$0xff]
  %v1568 = vld [vmem:[%s0 + $0x2c] sm:$0xff]
  %v1569 = vld [vmem:[%s0 + $0x34] sm:$0xff]
  %v1570 = vld [vmem:[%s0 + $0x3c] sm:$0xff]
  %v1571 = vld [vmem:[%s0 + $0x44] sm:$0xff]
  %v1572 = vld [vmem:[%s0 + $0x4c] sm:$0xff]
  %v1573 = vld [vmem:[%s0 + $0x54] sm:$0xff]
  %v1574 = vld [vmem:[%s0 + $0x5c] sm:$0xff]
  %v1575 = vld [vmem:[%s0 + $0x64] sm:$0xff]
  %v1576 = vld [vmem:[%s0 + $0x6c] sm:$0xff]
  %v1577 = vld [vmem:[%s0 + $0x74] sm:$0xff]
  %v1578 = vld [vmem:[%s0 + $0x7c] sm:$0xff]
  %v1579 = vld [vmem:[%s0 + $0x84] sm:$0xff]
  %v1580 = vld [vmem:[%s0 + $0x8c] sm:$0xff]
  %v1581 = vld [vmem:[%s0 + $0x94] sm:$0xff]
  %v1582 = vld [vmem:[%s0 + $0x9c] sm:$0xff]
  %v1583 = vld [vmem:[%s0 + $0xa4] sm:$0xff]
  %v1584 = vld [vmem:[%s0 + $0xac] sm:$0xff]
  %v1585 = vld [vmem:[%s0 + $0xb4] sm:$0xff]
  %v1586 = vld [vmem:[%s0 + $0xbc] sm:$0xff]
  %v1587 = vld [vmem:[%s0 + $0xc4] sm:$0xff]
  %v1588 = vld [vmem:[%s0 + $0xcc] sm:$0xff]
  %s1589 = scalar_lea.vmem %s1, 160
  %v1590 = vld [vmem:[%s1589] sm:$0xff]
  %v1591 = vld [vmem:[%s1589 + $0x8] sm:$0xff]
  %v1592 = vld [vmem:[%s1589 + $0x10] sm:$0xff]
  %v1593 = vld [vmem:[%s1589 + $0x18] sm:$0xff]
  %v1595 = vsel %vm73, %v1564, 0
  %v1598 = vsel %vm73, %v1565, 0
  %v1601 = vsel %vm73, %v1566, 0
  %v1604 = vsel %vm73, %v1567, 0
  %v1607 = vsel %vm73, %v1568, 0
  %v1610 = vsel %vm73, %v1569, 0
  %v1613 = vsel %vm73, %v1570, 0
  %v1616 = vsel %vm73, %v1571, 0
  %v1619 = vsel %vm73, %v1572, 0
  %v1622 = vsel %vm73, %v1573, 0
  %v1625 = vsel %vm73, %v1574, 0
  %v1628 = vsel %vm73, %v1575, 0
  %v1631 = vsel %vm73, %v1576, 0
  %v1634 = vsel %vm73, %v1577, 0
  %v1637 = vsel %vm73, %v1578, 0
  %v1640 = vsel %vm73, %v1579, 0
  %v1643 = vsel %vm73, %v1580, 0
  %v1646 = vsel %vm73, %v1581, 0
  %v1649 = vsel %vm73, %v1582, 0
  %v1652 = vsel %vm73, %v1583, 0
  %v1655 = vsel %vm73, %v1584, 0
  %v1658 = vsel %vm73, %v1585, 0
  %v1661 = vsel %vm73, %v1586, 0
  %v1664 = vsel %vm73, %v1587, 0
  %v1667 = vsel %vm73, %v1588, 0
  %1669 = vmatprep.subr.mxu0 0.0
  %1670 = vmatpush1.msra.mxu0 %v1590
  %1671 = vmatprep.subr.mxu0 0.0
  %1672 = vmatpush1.msra.mxu0 %v1591
  %1673 = vmatprep.subr.mxu0 0.0
  %1674 = vmatpush1.msra.mxu0 %v1592
  %1675 = vmatprep.subr.mxu0 0.0
  %1676 = vmatpush1.msra.mxu0 %v1593
  %1677 = vmatprep.subr.mxu0 0.0
  %1678 = vmatpush1.msra.mxu0 0.0
  %1679 = vmatprep.subr.mxu0 0.0
  %1680 = vmatpush1.msra.mxu0 0.0
  %1681 = vmatprep.subr.mxu0 0.0
  %1682 = vmatpush1.msra.mxu0 0.0
  %1683 = vmatprep.subr.mxu0 0.0
  %1684 = vmatpush1.msra.mxu0 0.0
  %1685 = vmatprep.subr.mxu0 0.0
  %1686 = vmatpush1.msra.mxu0 0.0
  %1687 = vmatprep.subr.mxu0 0.0
  %1688 = vmatpush1.msra.mxu0 0.0
  %1689 = vmatprep.subr.mxu0 0.0
  %1690 = vmatpush1.msra.mxu0 0.0
  %1691 = vmatprep.subr.mxu0 0.0
  %1692 = vmatpush1.msra.mxu0 0.0
  %1693 = vmatprep.subr.mxu0 0.0
  %1694 = vmatpush1.msra.mxu0 0.0
  %1695 = vmatprep.subr.mxu0 0.0
  %1696 = vmatpush1.msra.mxu0 0.0
  %1697 = vmatprep.subr.mxu0 0.0
  %1698 = vmatpush1.msra.mxu0 0.0
  %1699 = vmatprep.subr.mxu0 0.0
  %1700 = vmatpush1.msra.mxu0 0.0
  %1701 = vmatprep.subr.mxu0 0.0
  %1702 = vmatpush1.msra.mxu0 0.0
  %1703 = vmatprep.subr.mxu0 0.0
  %1704 = vmatpush1.msra.mxu0 0.0
  %1705 = vmatprep.subr.mxu0 0.0
  %1706 = vmatpush1.msra.mxu0 0.0
  %1707 = vmatprep.subr.mxu0 0.0
  %1708 = vmatpush1.msra.mxu0 0.0
  %1709 = vmatprep.subr.mxu0 0.0
  %1710 = vmatpush1.msra.mxu0 0.0
  %1711 = vmatprep.subr.mxu0 0.0
  %1712 = vmatpush1.msra.mxu0 0.0
  %1713 = vmatprep.subr.mxu0 0.0
  %1714 = vmatpush1.msra.mxu0 0.0
  %1715 = vmatprep.subr.mxu0 0.0
  %1716 = vmatpush1.msra.mxu0 0.0
  %1717 = vmatprep.subr.mxu0 0.0
  %1718 = vmatpush1.msra.mxu0 0.0
  %1719 = vmatprep.subr.mxu0 0.0
  %1720 = vmatpush1.msra.mxu0 0.0
  %1721 = vmatprep.subr.mxu0 0.0
  %1722 = vmatpush1.msra.mxu0 0.0
  %1723 = vmatprep.subr.mxu0 0.0
  %1724 = vmatpush1.msra.mxu0 0.0
  %1725 = vmatprep.subr.mxu0 0.0
  %1726 = vmatpush1.msra.mxu0 0.0
  %1727 = vmatprep.subr.mxu0 0.0
  %1728 = vmatpush1.msra.mxu0 0.0
  %1729 = vmatprep.subr.mxu0 0.0
  %1730 = vmatpush1.msra.mxu0 0.0
  %1731 = vmatprep.subr.mxu0 0.0
  %1732 = vmatpush1.msra.mxu0 0.0
  %1733 = vmatprep.mubr.f32.mxu0 0.0
  %1734 = vmatmul.mubr.f32.gmra.mrb[0].mxu0 %v1595
  %v1735 = vpop.f32.mrb[0].mxu0
  %v1736 = vadd.f32 0.0, %v1735
  %v1737 = vpop.f32.mrb[0].mxu0
  %1738 = vmatprep.mubr.f32.mxu0 0.0
  %1739 = vmatmul.mubr.f32.gmra.mrb[0].mxu0 %v1598
  %v1740 = vpop.f32.mrb[0].mxu0
  %v1741 = vadd.f32 0.0, %v1740
  %v1742 = vpop.f32.mrb[0].mxu0
  %1743 = vmatprep.mubr.f32.mxu0 0.0
  %1744 = vmatmul.mubr.f32.gmra.mrb[0].mxu0 %v1601
  %v1745 = vpop.f32.mrb[0].mxu0
  %v1746 = vadd.f32 0.0, %v1745
  %v1747 = vpop.f32.mrb[0].mxu0
  %1748 = vmatprep.mubr.f32.mxu0 0.0
  %1749 = vmatmul.mubr.f32.gmra.mrb[0].mxu0 %v1604
  %v1750 = vpop.f32.mrb[0].mxu0
  %v1751 = vadd.f32 0.0, %v1750
  %v1752 = vpop.f32.mrb[0].mxu0
  %1753 = vmatprep.mubr.f32.mxu0 0.0
  %1754 = vmatmul.mubr.f32.gmra.mrb[0].mxu0 %v1607
  %v1755 = vpop.f32.mrb[0].mxu0
  %v1756 = vadd.f32 0.0, %v1755
  %v1757 = vpop.f32.mrb[0].mxu0
  %1758 = vmatprep.mubr.f32.mxu0 0.0
  %1759 = vmatmul.mubr.f32.gmra.mrb[0].mxu0 %v1610
  %v1760 = vpop.f32.mrb[0].mxu0
  %v1761 = vadd.f32 0.0, %v1760
  %v1762 = vpop.f32.mrb[0].mxu0
  %1763 = vmatprep.mubr.f32.mxu0 0.0
  %1764 = vmatmul.mubr.f32.gmra.mrb[0].mxu0 %v1613
  %v1765 = vpop.f32.mrb[0].mxu0
  %v1766 = vadd.f32 0.0, %v1765
  %v1767 = vpop.f32.mrb[0].mxu0
  %1768 = vmatprep.mubr.f32.mxu0 0.0
  %1769 = vmatmul.mubr.f32.gmra.mrb[0].mxu0 %v1616
  %v1770 = vpop.f32.mrb[0].mxu0
  %v1771 = vadd.f32 0.0, %v1770
  %v1772 = vpop.f32.mrb[0].mxu0
  %1773 = vmatprep.mubr.f32.mxu0 0.0
  %1774 = vmatmul.mubr.f32.gmra.mrb[0].mxu0 %v1619
  %v1775 = vpop.f32.mrb[0].mxu0
  %v1776 = vadd.f32 0.0, %v1775
  %v1777 = vpop.f32.mrb[0].mxu0
  %1778 = vmatprep.mubr.f32.mxu0 0.0
  %1779 = vmatmul.mubr.f32.gmra.mrb[0].mxu0 %v1622
  %v1780 = vpop.f32.mrb[0].mxu0
  %v1781 = vadd.f32 0.0, %v1780
  %v1782 = vpop.f32.mrb[0].mxu0
  %1783 = vmatprep.mubr.f32.mxu0 0.0
  %1784 = vmatmul.mubr.f32.gmra.mrb[0].mxu0 %v1625
  %v1785 = vpop.f32.mrb[0].mxu0
  %v1786 = vadd.f32 0.0, %v1785
  %v1787 = vpop.f32.mrb[0].mxu0
  %1788 = vmatprep.mubr.f32.mxu0 0.0
  %1789 = vmatmul.mubr.f32.gmra.mrb[0].mxu0 %v1628
  %v1790 = vpop.f32.mrb[0].mxu0
  %v1791 = vadd.f32 0.0, %v1790
  %v1792 = vpop.f32.mrb[0].mxu0
  %1793 = vmatprep.mubr.f32.mxu0 0.0
  %1794 = vmatmul.mubr.f32.gmra.mrb[0].mxu0 %v1631
  %v1795 = vpop.f32.mrb[0].mxu0
  %v1796 = vadd.f32 0.0, %v1795
  %v1797 = vpop.f32.mrb[0].mxu0
  %1798 = vmatprep.mubr.f32.mxu0 0.0
  %1799 = vmatmul.mubr.f32.gmra.mrb[0].mxu0 %v1634
  %v1800 = vpop.f32.mrb[0].mxu0
  %v1801 = vadd.f32 0.0, %v1800
  %v1802 = vpop.f32.mrb[0].mxu0
  %1803 = vmatprep.mubr.f32.mxu0 0.0
  %1804 = vmatmul.mubr.f32.gmra.mrb[0].mxu0 %v1637
  %v1805 = vpop.f32.mrb[0].mxu0
  %v1806 = vadd.f32 0.0, %v1805
  %v1807 = vpop.f32.mrb[0].mxu0
  %1808 = vmatprep.mubr.f32.mxu0 0.0
  %1809 = vmatmul.mubr.f32.gmra.mrb[0].mxu0 %v1640
  %v1810 = vpop.f32.mrb[0].mxu0
  %v1811 = vadd.f32 0.0, %v1810
  %v1812 = vpop.f32.mrb[0].mxu0
  %1813 = vmatprep.mubr.f32.mxu0 0.0
  %1814 = vmatmul.mubr.f32.gmra.mrb[0].mxu0 %v1643
  %v1815 = vpop.f32.mrb[0].mxu0
  %v1816 = vadd.f32 0.0, %v1815
  %v1817 = vpop.f32.mrb[0].mxu0
  %1818 = vmatprep.mubr.f32.mxu0 0.0
  %1819 = vmatmul.mubr.f32.gmra.mrb[0].mxu0 %v1646
  %v1820 = vpop.f32.mrb[0].mxu0
  %v1821 = vadd.f32 0.0, %v1820
  %v1822 = vpop.f32.mrb[0].mxu0
  %1823 = vmatprep.mubr.f32.mxu0 0.0
  %1824 = vmatmul.mubr.f32.gmra.mrb[0].mxu0 %v1649
  %v1825 = vpop.f32.mrb[0].mxu0
  %v1826 = vadd.f32 0.0, %v1825
  %v1827 = vpop.f32.mrb[0].mxu0
  %1828 = vmatprep.mubr.f32.mxu0 0.0
  %1829 = vmatmul.mubr.f32.gmra.mrb[0].mxu0 %v1652
  %v1830 = vpop.f32.mrb[0].mxu0
  %v1831 = vadd.f32 0.0, %v1830
  %v1832 = vpop.f32.mrb[0].mxu0
  %1833 = vmatprep.mubr.f32.mxu0 0.0
  %1834 = vmatmul.mubr.f32.gmra.mrb[0].mxu0 %v1655
  %v1835 = vpop.f32.mrb[0].mxu0
  %v1836 = vadd.f32 0.0, %v1835
  %v1837 = vpop.f32.mrb[0].mxu0
  %1838 = vmatprep.mubr.f32.mxu0 0.0
  %1839 = vmatmul.mubr.f32.gmra.mrb[0].mxu0 %v1658
  %v1840 = vpop.f32.mrb[0].mxu0
  %v1841 = vadd.f32 0.0, %v1840
  %v1842 = vpop.f32.mrb[0].mxu0
  %1843 = vmatprep.mubr.f32.mxu0 0.0
  %1844 = vmatmul.mubr.f32.gmra.mrb[0].mxu0 %v1661
  %v1845 = vpop.f32.mrb[0].mxu0
  %v1846 = vadd.f32 0.0, %v1845
  %v1847 = vpop.f32.mrb[0].mxu0
  %1848 = vmatprep.mubr.f32.mxu0 0.0
  %1849 = vmatmul.mubr.f32.gmra.mrb[0].mxu0 %v1664
  %v1850 = vpop.f32.mrb[0].mxu0
  %v1851 = vadd.f32 0.0, %v1850
  %v1852 = vpop.f32.mrb[0].mxu0
  %1853 = vmatprep.mubr.f32.mxu0 0.0
  %1854 = vmatmul.mubr.f32.gmra.mrb[0].mxu0 %v1667
  %v1855 = vpop.f32.mrb[0].mxu0
  %v1856 = vadd.f32 0.0, %v1855
  %v1857 = vpop.f32.mrb[0].mxu0
  %1858 = vdwg.mxu0
  %v1859 = vadd.f32 %v1539, %v1736
  %v1860 = vadd.f32 %v1540, %v1741
  %v1861 = vadd.f32 %v1541, %v1746
  %v1862 = vadd.f32 %v1542, %v1751
  %v1863 = vadd.f32 %v1543, %v1756
  %v1864 = vadd.f32 %v1544, %v1761
  %v1865 = vadd.f32 %v1545, %v1766
  %v1866 = vadd.f32 %v1546, %v1771
  %v1867 = vadd.f32 %v1547, %v1776
  %v1868 = vadd.f32 %v1548, %v1781
  %v1869 = vadd.f32 %v1549, %v1786
  %v1870 = vadd.f32 %v1550, %v1791
  %v1871 = vadd.f32 %v1551, %v1796
  %v1872 = vadd.f32 %v1552, %v1801
  %v1873 = vadd.f32 %v1553, %v1806
  %v1874 = vadd.f32 %v1554, %v1811
  %v1875 = vadd.f32 %v1555, %v1816
  %v1876 = vadd.f32 %v1556, %v1821
  %v1877 = vadd.f32 %v1557, %v1826
  %v1878 = vadd.f32 %v1558, %v1831
  %v1879 = vadd.f32 %v1559, %v1836
  %v1880 = vadd.f32 %v1560, %v1841
  %v1881 = vadd.f32 %v1561, %v1846
  %v1882 = vadd.f32 %v1562, %v1851
  %v1883 = vadd.f32 %v1563, %v1856
  %v1884 = vld [vmem:[%s0 + $0x14] sm:$0xff]
  %v1885 = vld [vmem:[%s0 + $0x1c] sm:$0xff]
  %v1886 = vld [vmem:[%s0 + $0x24] sm:$0xff]
  %v1887 = vld [vmem:[%s0 + $0x2c] sm:$0xff]
  %v1888 = vld [vmem:[%s0 + $0x34] sm:$0xff]
  %v1889 = vld [vmem:[%s0 + $0x3c] sm:$0xff]
  %v1890 = vld [vmem:[%s0 + $0x44] sm:$0xff]
  %v1891 = vld [vmem:[%s0 + $0x4c] sm:$0xff]
  %v1892 = vld [vmem:[%s0 + $0x54] sm:$0xff]
  %v1893 = vld [vmem:[%s0 + $0x5c] sm:$0xff]
  %v1894 = vld [vmem:[%s0 + $0x64] sm:$0xff]
  %v1895 = vld [vmem:[%s0 + $0x6c] sm:$0xff]
  %v1896 = vld [vmem:[%s0 + $0x74] sm:$0xff]
  %v1897 = vld [vmem:[%s0 + $0x7c] sm:$0xff]
  %v1898 = vld [vmem:[%s0 + $0x84] sm:$0xff]
  %v1899 = vld [vmem:[%s0 + $0x8c] sm:$0xff]
  %v1900 = vld [vmem:[%s0 + $0x94] sm:$0xff]
  %v1901 = vld [vmem:[%s0 + $0x9c] sm:$0xff]
  %v1902 = vld [vmem:[%s0 + $0xa4] sm:$0xff]
  %v1903 = vld [vmem:[%s0 + $0xac] sm:$0xff]
  %v1904 = vld [vmem:[%s0 + $0xb4] sm:$0xff]
  %v1905 = vld [vmem:[%s0 + $0xbc] sm:$0xff]
  %v1906 = vld [vmem:[%s0 + $0xc4] sm:$0xff]
  %v1907 = vld [vmem:[%s0 + $0xcc] sm:$0xff]
  %v1908 = vld [vmem:[%s0 + $0xd4] sm:$0xff]
  %s1909 = scalar_lea.vmem %s1, 192
  %v1910 = vld [vmem:[%s1909] sm:$0xff]
  %v1911 = vld [vmem:[%s1909 + $0x8] sm:$0xff]
  %v1912 = vld [vmem:[%s1909 + $0x10] sm:$0xff]
  %v1913 = vld [vmem:[%s1909 + $0x18] sm:$0xff]
  %v1915 = vsel %vm73, %v1884, 0
  %v1918 = vsel %vm73, %v1885, 0
  %v1921 = vsel %vm73, %v1886, 0
  %v1924 = vsel %vm73, %v1887, 0
  %v1927 = vsel %vm73, %v1888, 0
  %v1930 = vsel %vm73, %v1889, 0
  %v1933 = vsel %vm73, %v1890, 0
  %v1936 = vsel %vm73, %v1891, 0
  %v1939 = vsel %vm73, %v1892, 0
  %v1942 = vsel %vm73, %v1893, 0
  %v1945 = vsel %vm73, %v1894, 0
  %v1948 = vsel %vm73, %v1895, 0
  %v1951 = vsel %vm73, %v1896, 0
  %v1954 = vsel %vm73, %v1897, 0
  %v1957 = vsel %vm73, %v1898, 0
  %v1960 = vsel %vm73, %v1899, 0
  %v1963 = vsel %vm73, %v1900, 0
  %v1966 = vsel %vm73, %v1901, 0
  %v1969 = vsel %vm73, %v1902, 0
  %v1972 = vsel %vm73, %v1903, 0
  %v1975 = vsel %vm73, %v1904, 0
  %v1978 = vsel %vm73, %v1905, 0
  %v1981 = vsel %vm73, %v1906, 0
  %v1984 = vsel %vm73, %v1907, 0
  %v1987 = vsel %vm73, %v1908, 0
  %1989 = vmatprep.subr.mxu0 0.0
  %1990 = vmatpush1.msra.mxu0 %v1910
  %1991 = vmatprep.subr.mxu0 0.0
  %1992 = vmatpush1.msra.mxu0 %v1911
  %1993 = vmatprep.subr.mxu0 0.0
  %1994 = vmatpush1.msra.mxu0 %v1912
  %1995 = vmatprep.subr.mxu0 0.0
  %1996 = vmatpush1.msra.mxu0 %v1913
  %1997 = vmatprep.subr.mxu0 0.0
  %1998 = vmatpush1.msra.mxu0 0.0
  %1999 = vmatprep.subr.mxu0 0.0
  %2000 = vmatpush1.msra.mxu0 0.0
  %2001 = vmatprep.subr.mxu0 0.0
  %2002 = vmatpush1.msra.mxu0 0.0
  %2003 = vmatprep.subr.mxu0 0.0
  %2004 = vmatpush1.msra.mxu0 0.0
  %2005 = vmatprep.subr.mxu0 0.0
  %2006 = vmatpush1.msra.mxu0 0.0
  %2007 = vmatprep.subr.mxu0 0.0
  %2008 = vmatpush1.msra.mxu0 0.0
  %2009 = vmatprep.subr.mxu0 0.0
  %2010 = vmatpush1.msra.mxu0 0.0
  %2011 = vmatprep.subr.mxu0 0.0
  %2012 = vmatpush1.msra.mxu0 0.0
  %2013 = vmatprep.subr.mxu0 0.0
  %2014 = vmatpush1.msra.mxu0 0.0
  %2015 = vmatprep.subr.mxu0 0.0
  %2016 = vmatpush1.msra.mxu0 0.0
  %2017 = vmatprep.subr.mxu0 0.0
  %2018 = vmatpush1.msra.mxu0 0.0
  %2019 = vmatprep.subr.mxu0 0.0
  %2020 = vmatpush1.msra.mxu0 0.0
  %2021 = vmatprep.subr.mxu0 0.0
  %2022 = vmatpush1.msra.mxu0 0.0
  %2023 = vmatprep.subr.mxu0 0.0
  %2024 = vmatpush1.msra.mxu0 0.0
  %2025 = vmatprep.subr.mxu0 0.0
  %2026 = vmatpush1.msra.mxu0 0.0
  %2027 = vmatprep.subr.mxu0 0.0
  %2028 = vmatpush1.msra.mxu0 0.0
  %2029 = vmatprep.subr.mxu0 0.0
  %2030 = vmatpush1.msra.mxu0 0.0
  %2031 = vmatprep.subr.mxu0 0.0
  %2032 = vmatpush1.msra.mxu0 0.0
  %2033 = vmatprep.subr.mxu0 0.0
  %2034 = vmatpush1.msra.mxu0 0.0
  %2035 = vmatprep.subr.mxu0 0.0
  %2036 = vmatpush1.msra.mxu0 0.0
  %2037 = vmatprep.subr.mxu0 0.0
  %2038 = vmatpush1.msra.mxu0 0.0
  %2039 = vmatprep.subr.mxu0 0.0
  %2040 = vmatpush1.msra.mxu0 0.0
  %2041 = vmatprep.subr.mxu0 0.0
  %2042 = vmatpush1.msra.mxu0 0.0
  %2043 = vmatprep.subr.mxu0 0.0
  %2044 = vmatpush1.msra.mxu0 0.0
  %2045 = vmatprep.subr.mxu0 0.0
  %2046 = vmatpush1.msra.mxu0 0.0
  %2047 = vmatprep.subr.mxu0 0.0
  %2048 = vmatpush1.msra.mxu0 0.0
  %2049 = vmatprep.subr.mxu0 0.0
  %2050 = vmatpush1.msra.mxu0 0.0
  %2051 = vmatprep.subr.mxu0 0.0
  %2052 = vmatpush1.msra.mxu0 0.0
  %2053 = vmatprep.mubr.f32.mxu0 0.0
  %2054 = vmatmul.mubr.f32.gmra.mrb[0].mxu0 %v1915
  %v2055 = vpop.f32.mrb[0].mxu0
  %v2056 = vadd.f32 0.0, %v2055
  %v2057 = vpop.f32.mrb[0].mxu0
  %2058 = vmatprep.mubr.f32.mxu0 0.0
  %2059 = vmatmul.mubr.f32.gmra.mrb[0].mxu0 %v1918
  %v2060 = vpop.f32.mrb[0].mxu0
  %v2061 = vadd.f32 0.0, %v2060
  %v2062 = vpop.f32.mrb[0].mxu0
  %2063 = vmatprep.mubr.f32.mxu0 0.0
  %2064 = vmatmul.mubr.f32.gmra.mrb[0].mxu0 %v1921
  %v2065 = vpop.f32.mrb[0].mxu0
  %v2066 = vadd.f32 0.0, %v2065
  %v2067 = vpop.f32.mrb[0].mxu0
  %2068 = vmatprep.mubr.f32.mxu0 0.0
  %2069 = vmatmul.mubr.f32.gmra.mrb[0].mxu0 %v1924
  %v2070 = vpop.f32.mrb[0].mxu0
  %v2071 = vadd.f32 0.0, %v2070
  %v2072 = vpop.f32.mrb[0].mxu0
  %2073 = vmatprep.mubr.f32.mxu0 0.0
  %2074 = vmatmul.mubr.f32.gmra.mrb[0].mxu0 %v1927
  %v2075 = vpop.f32.mrb[0].mxu0
  %v2076 = vadd.f32 0.0, %v2075
  %v2077 = vpop.f32.mrb[0].mxu0
  %2078 = vmatprep.mubr.f32.mxu0 0.0
  %2079 = vmatmul.mubr.f32.gmra.mrb[0].mxu0 %v1930
  %v2080 = vpop.f32.mrb[0].mxu0
  %v2081 = vadd.f32 0.0, %v2080
  %v2082 = vpop.f32.mrb[0].mxu0
  %2083 = vmatprep.mubr.f32.mxu0 0.0
  %2084 = vmatmul.mubr.f32.gmra.mrb[0].mxu0 %v1933
  %v2085 = vpop.f32.mrb[0].mxu0
  %v2086 = vadd.f32 0.0, %v2085
  %v2087 = vpop.f32.mrb[0].mxu0
  %2088 = vmatprep.mubr.f32.mxu0 0.0
  %2089 = vmatmul.mubr.f32.gmra.mrb[0].mxu0 %v1936
  %v2090 = vpop.f32.mrb[0].mxu0
  %v2091 = vadd.f32 0.0, %v2090
  %v2092 = vpop.f32.mrb[0].mxu0
  %2093 = vmatprep.mubr.f32.mxu0 0.0
  %2094 = vmatmul.mubr.f32.gmra.mrb[0].mxu0 %v1939
  %v2095 = vpop.f32.mrb[0].mxu0
  %v2096 = vadd.f32 0.0, %v2095
  %v2097 = vpop.f32.mrb[0].mxu0
  %2098 = vmatprep.mubr.f32.mxu0 0.0
  %2099 = vmatmul.mubr.f32.gmra.mrb[0].mxu0 %v1942
  %v2100 = vpop.f32.mrb[0].mxu0
  %v2101 = vadd.f32 0.0, %v2100
  %v2102 = vpop.f32.mrb[0].mxu0
  %2103 = vmatprep.mubr.f32.mxu0 0.0
  %2104 = vmatmul.mubr.f32.gmra.mrb[0].mxu0 %v1945
  %v2105 = vpop.f32.mrb[0].mxu0
  %v2106 = vadd.f32 0.0, %v2105
  %v2107 = vpop.f32.mrb[0].mxu0
  %2108 = vmatprep.mubr.f32.mxu0 0.0
  %2109 = vmatmul.mubr.f32.gmra.mrb[0].mxu0 %v1948
  %v2110 = vpop.f32.mrb[0].mxu0
  %v2111 = vadd.f32 0.0, %v2110
  %v2112 = vpop.f32.mrb[0].mxu0
  %2113 = vmatprep.mubr.f32.mxu0 0.0
  %2114 = vmatmul.mubr.f32.gmra.mrb[0].mxu0 %v1951
  %v2115 = vpop.f32.mrb[0].mxu0
  %v2116 = vadd.f32 0.0, %v2115
  %v2117 = vpop.f32.mrb[0].mxu0
  %2118 = vmatprep.mubr.f32.mxu0 0.0
  %2119 = vmatmul.mubr.f32.gmra.mrb[0].mxu0 %v1954
  %v2120 = vpop.f32.mrb[0].mxu0
  %v2121 = vadd.f32 0.0, %v2120
  %v2122 = vpop.f32.mrb[0].mxu0
  %2123 = vmatprep.mubr.f32.mxu0 0.0
  %2124 = vmatmul.mubr.f32.gmra.mrb[0].mxu0 %v1957
  %v2125 = vpop.f32.mrb[0].mxu0
  %v2126 = vadd.f32 0.0, %v2125
  %v2127 = vpop.f32.mrb[0].mxu0
  %2128 = vmatprep.mubr.f32.mxu0 0.0
  %2129 = vmatmul.mubr.f32.gmra.mrb[0].mxu0 %v1960
  %v2130 = vpop.f32.mrb[0].mxu0
  %v2131 = vadd.f32 0.0, %v2130
  %v2132 = vpop.f32.mrb[0].mxu0
  %2133 = vmatprep.mubr.f32.mxu0 0.0
  %2134 = vmatmul.mubr.f32.gmra.mrb[0].mxu0 %v1963
  %v2135 = vpop.f32.mrb[0].mxu0
  %v2136 = vadd.f32 0.0, %v2135
  %v2137 = vpop.f32.mrb[0].mxu0
  %2138 = vmatprep.mubr.f32.mxu0 0.0
  %2139 = vmatmul.mubr.f32.gmra.mrb[0].mxu0 %v1966
  %v2140 = vpop.f32.mrb[0].mxu0
  %v2141 = vadd.f32 0.0, %v2140
  %v2142 = vpop.f32.mrb[0].mxu0
  %2143 = vmatprep.mubr.f32.mxu0 0.0
  %2144 = vmatmul.mubr.f32.gmra.mrb[0].mxu0 %v1969
  %v2145 = vpop.f32.mrb[0].mxu0
  %v2146 = vadd.f32 0.0, %v2145
  %v2147 = vpop.f32.mrb[0].mxu0
  %2148 = vmatprep.mubr.f32.mxu0 0.0
  %2149 = vmatmul.mubr.f32.gmra.mrb[0].mxu0 %v1972
  %v2150 = vpop.f32.mrb[0].mxu0
  %v2151 = vadd.f32 0.0, %v2150
  %v2152 = vpop.f32.mrb[0].mxu0
  %2153 = vmatprep.mubr.f32.mxu0 0.0
  %2154 = vmatmul.mubr.f32.gmra.mrb[0].mxu0 %v1975
  %v2155 = vpop.f32.mrb[0].mxu0
  %v2156 = vadd.f32 0.0, %v2155
  %v2157 = vpop.f32.mrb[0].mxu0
  %2158 = vmatprep.mubr.f32.mxu0 0.0
  %2159 = vmatmul.mubr.f32.gmra.mrb[0].mxu0 %v1978
  %v2160 = vpop.f32.mrb[0].mxu0
  %v2161 = vadd.f32 0.0, %v2160
  %v2162 = vpop.f32.mrb[0].mxu0
  %2163 = vmatprep.mubr.f32.mxu0 0.0
  %2164 = vmatmul.mubr.f32.gmra.mrb[0].mxu0 %v1981
  %v2165 = vpop.f32.mrb[0].mxu0
  %v2166 = vadd.f32 0.0, %v2165
  %v2167 = vpop.f32.mrb[0].mxu0
  %2168 = vmatprep.mubr.f32.mxu0 0.0
  %2169 = vmatmul.mubr.f32.gmra.mrb[0].mxu0 %v1984
  %v2170 = vpop.f32.mrb[0].mxu0
  %v2171 = vadd.f32 0.0, %v2170
  %v2172 = vpop.f32.mrb[0].mxu0
  %2173 = vmatprep.mubr.f32.mxu0 0.0
  %2174 = vmatmul.mubr.f32.gmra.mrb[0].mxu0 %v1987
  %v2175 = vpop.f32.mrb[0].mxu0
  %v2176 = vadd.f32 0.0, %v2175
  %v2177 = vpop.f32.mrb[0].mxu0
  %2178 = vdwg.mxu0
  %v2179 = vadd.f32 %v1859, %v2056
  %v2180 = vadd.f32 %v1860, %v2061
  %v2181 = vadd.f32 %v1861, %v2066
  %v2182 = vadd.f32 %v1862, %v2071
  %v2183 = vadd.f32 %v1863, %v2076
  %v2184 = vadd.f32 %v1864, %v2081
  %v2185 = vadd.f32 %v1865, %v2086
  %v2186 = vadd.f32 %v1866, %v2091
  %v2187 = vadd.f32 %v1867, %v2096
  %v2188 = vadd.f32 %v1868, %v2101
  %v2189 = vadd.f32 %v1869, %v2106
  %v2190 = vadd.f32 %v1870, %v2111
  %v2191 = vadd.f32 %v1871, %v2116
  %v2192 = vadd.f32 %v1872, %v2121
  %v2193 = vadd.f32 %v1873, %v2126
  %v2194 = vadd.f32 %v1874, %v2131
  %v2195 = vadd.f32 %v1875, %v2136
  %v2196 = vadd.f32 %v1876, %v2141
  %v2197 = vadd.f32 %v1877, %v2146
  %v2198 = vadd.f32 %v1878, %v2151
  %v2199 = vadd.f32 %v1879, %v2156
  %v2200 = vadd.f32 %v1880, %v2161
  %v2201 = vadd.f32 %v1881, %v2166
  %v2202 = vadd.f32 %v1882, %v2171
  %v2203 = vadd.f32 %v1883, %v2176
  %v2204 = vld [vmem:[%s0 + $0x15] sm:$0xff]
  %v2205 = vld [vmem:[%s0 + $0x1d] sm:$0xff]
  %v2206 = vld [vmem:[%s0 + $0x25] sm:$0xff]
  %v2207 = vld [vmem:[%s0 + $0x2d] sm:$0xff]
  %v2208 = vld [vmem:[%s0 + $0x35] sm:$0xff]
  %v2209 = vld [vmem:[%s0 + $0x3d] sm:$0xff]
  %v2210 = vld [vmem:[%s0 + $0x45] sm:$0xff]
  %v2211 = vld [vmem:[%s0 + $0x4d] sm:$0xff]
  %v2212 = vld [vmem:[%s0 + $0x55] sm:$0xff]
  %v2213 = vld [vmem:[%s0 + $0x5d] sm:$0xff]
  %v2214 = vld [vmem:[%s0 + $0x65] sm:$0xff]
  %v2215 = vld [vmem:[%s0 + $0x6d] sm:$0xff]
  %v2216 = vld [vmem:[%s0 + $0x75] sm:$0xff]
  %v2217 = vld [vmem:[%s0 + $0x7d] sm:$0xff]
  %v2218 = vld [vmem:[%s0 + $0x85] sm:$0xff]
  %v2219 = vld [vmem:[%s0 + $0x8d] sm:$0xff]
  %v2220 = vld [vmem:[%s0 + $0x95] sm:$0xff]
  %v2221 = vld [vmem:[%s0 + $0x9d] sm:$0xff]
  %v2222 = vld [vmem:[%s0 + $0xa5] sm:$0xff]
  %v2223 = vld [vmem:[%s0 + $0xad] sm:$0xff]
  %v2224 = vld [vmem:[%s0 + $0xb5] sm:$0xff]
  %v2225 = vld [vmem:[%s0 + $0xbd] sm:$0xff]
  %v2226 = vld [vmem:[%s0 + $0xc5] sm:$0xff]
  %v2227 = vld [vmem:[%s0 + $0xcd] sm:$0xff]
  %v2228 = vld [vmem:[%s0 + $0xd5] sm:$0xff]
  %s2229 = scalar_lea.vmem %s1, 224
  %v2230 = vld [vmem:[%s2229] sm:$0xff]
  %v2231 = vld [vmem:[%s2229 + $0x8] sm:$0xff]
  %v2232 = vld [vmem:[%s2229 + $0x10] sm:$0xff]
  %v2233 = vld [vmem:[%s2229 + $0x18] sm:$0xff]
  %v2235 = vsel %vm73, %v2204, 0
  %v2238 = vsel %vm73, %v2205, 0
  %v2241 = vsel %vm73, %v2206, 0
  %v2244 = vsel %vm73, %v2207, 0
  %v2247 = vsel %vm73, %v2208, 0
  %v2250 = vsel %vm73, %v2209, 0
  %v2253 = vsel %vm73, %v2210, 0
  %v2256 = vsel %vm73, %v2211, 0
  %v2259 = vsel %vm73, %v2212, 0
  %v2262 = vsel %vm73, %v2213, 0
  %v2265 = vsel %vm73, %v2214, 0
  %v2268 = vsel %vm73, %v2215, 0
  %v2271 = vsel %vm73, %v2216, 0
  %v2274 = vsel %vm73, %v2217, 0
  %v2277 = vsel %vm73, %v2218, 0
  %v2280 = vsel %vm73, %v2219, 0
  %v2283 = vsel %vm73, %v2220, 0
  %v2286 = vsel %vm73, %v2221, 0
  %v2289 = vsel %vm73, %v2222, 0
  %v2292 = vsel %vm73, %v2223, 0
  %v2295 = vsel %vm73, %v2224, 0
  %v2298 = vsel %vm73, %v2225, 0
  %v2301 = vsel %vm73, %v2226, 0
  %v2304 = vsel %vm73, %v2227, 0
  %v2307 = vsel %vm73, %v2228, 0
  %2309 = vmatprep.subr.mxu0 0.0
  %2310 = vmatpush1.msra.mxu0 %v2230
  %2311 = vmatprep.subr.mxu0 0.0
  %2312 = vmatpush1.msra.mxu0 %v2231
  %2313 = vmatprep.subr.mxu0 0.0
  %2314 = vmatpush1.msra.mxu0 %v2232
  %2315 = vmatprep.subr.mxu0 0.0
  %2316 = vmatpush1.msra.mxu0 %v2233
  %2317 = vmatprep.subr.mxu0 0.0
  %2318 = vmatpush1.msra.mxu0 0.0
  %2319 = vmatprep.subr.mxu0 0.0
  %2320 = vmatpush1.msra.mxu0 0.0
  %2321 = vmatprep.subr.mxu0 0.0
  %2322 = vmatpush1.msra.mxu0 0.0
  %2323 = vmatprep.subr.mxu0 0.0
  %2324 = vmatpush1.msra.mxu0 0.0
  %2325 = vmatprep.subr.mxu0 0.0
  %2326 = vmatpush1.msra.mxu0 0.0
  %2327 = vmatprep.subr.mxu0 0.0
  %2328 = vmatpush1.msra.mxu0 0.0
  %2329 = vmatprep.subr.mxu0 0.0
  %2330 = vmatpush1.msra.mxu0 0.0
  %2331 = vmatprep.subr.mxu0 0.0
  %2332 = vmatpush1.msra.mxu0 0.0
  %2333 = vmatprep.subr.mxu0 0.0
  %2334 = vmatpush1.msra.mxu0 0.0
  %2335 = vmatprep.subr.mxu0 0.0
  %2336 = vmatpush1.msra.mxu0 0.0
  %2337 = vmatprep.subr.mxu0 0.0
  %2338 = vmatpush1.msra.mxu0 0.0
  %2339 = vmatprep.subr.mxu0 0.0
  %2340 = vmatpush1.msra.mxu0 0.0
  %2341 = vmatprep.subr.mxu0 0.0
  %2342 = vmatpush1.msra.mxu0 0.0
  %2343 = vmatprep.subr.mxu0 0.0
  %2344 = vmatpush1.msra.mxu0 0.0
  %2345 = vmatprep.subr.mxu0 0.0
  %2346 = vmatpush1.msra.mxu0 0.0
  %2347 = vmatprep.subr.mxu0 0.0
  %2348 = vmatpush1.msra.mxu0 0.0
  %2349 = vmatprep.subr.mxu0 0.0
  %2350 = vmatpush1.msra.mxu0 0.0
  %2351 = vmatprep.subr.mxu0 0.0
  %2352 = vmatpush1.msra.mxu0 0.0
  %2353 = vmatprep.subr.mxu0 0.0
  %2354 = vmatpush1.msra.mxu0 0.0
  %2355 = vmatprep.subr.mxu0 0.0
  %2356 = vmatpush1.msra.mxu0 0.0
  %2357 = vmatprep.subr.mxu0 0.0
  %2358 = vmatpush1.msra.mxu0 0.0
  %2359 = vmatprep.subr.mxu0 0.0
  %2360 = vmatpush1.msra.mxu0 0.0
  %2361 = vmatprep.subr.mxu0 0.0
  %2362 = vmatpush1.msra.mxu0 0.0
  %2363 = vmatprep.subr.mxu0 0.0
  %2364 = vmatpush1.msra.mxu0 0.0
  %2365 = vmatprep.subr.mxu0 0.0
  %2366 = vmatpush1.msra.mxu0 0.0
  %2367 = vmatprep.subr.mxu0 0.0
  %2368 = vmatpush1.msra.mxu0 0.0
  %2369 = vmatprep.subr.mxu0 0.0
  %2370 = vmatpush1.msra.mxu0 0.0
  %2371 = vmatprep.subr.mxu0 0.0
  %2372 = vmatpush1.msra.mxu0 0.0
  %2373 = vmatprep.mubr.f32.mxu0 0.0
  %2374 = vmatmul.mubr.f32.gmra.mrb[0].mxu0 %v2235
  %v2375 = vpop.f32.mrb[0].mxu0
  %v2376 = vadd.f32 0.0, %v2375
  %v2377 = vpop.f32.mrb[0].mxu0
  %2378 = vmatprep.mubr.f32.mxu0 0.0
  %2379 = vmatmul.mubr.f32.gmra.mrb[0].mxu0 %v2238
  %v2380 = vpop.f32.mrb[0].mxu0
  %v2381 = vadd.f32 0.0, %v2380
  %v2382 = vpop.f32.mrb[0].mxu0
  %2383 = vmatprep.mubr.f32.mxu0 0.0
  %2384 = vmatmul.mubr.f32.gmra.mrb[0].mxu0 %v2241
  %v2385 = vpop.f32.mrb[0].mxu0
  %v2386 = vadd.f32 0.0, %v2385
  %v2387 = vpop.f32.mrb[0].mxu0
  %2388 = vmatprep.mubr.f32.mxu0 0.0
  %2389 = vmatmul.mubr.f32.gmra.mrb[0].mxu0 %v2244
  %v2390 = vpop.f32.mrb[0].mxu0
  %v2391 = vadd.f32 0.0, %v2390
  %v2392 = vpop.f32.mrb[0].mxu0
  %2393 = vmatprep.mubr.f32.mxu0 0.0
  %2394 = vmatmul.mubr.f32.gmra.mrb[0].mxu0 %v2247
  %v2395 = vpop.f32.mrb[0].mxu0
  %v2396 = vadd.f32 0.0, %v2395
  %v2397 = vpop.f32.mrb[0].mxu0
  %2398 = vmatprep.mubr.f32.mxu0 0.0
  %2399 = vmatmul.mubr.f32.gmra.mrb[0].mxu0 %v2250
  %v2400 = vpop.f32.mrb[0].mxu0
  %v2401 = vadd.f32 0.0, %v2400
  %v2402 = vpop.f32.mrb[0].mxu0
  %2403 = vmatprep.mubr.f32.mxu0 0.0
  %2404 = vmatmul.mubr.f32.gmra.mrb[0].mxu0 %v2253
  %v2405 = vpop.f32.mrb[0].mxu0
  %v2406 = vadd.f32 0.0, %v2405
  %v2407 = vpop.f32.mrb[0].mxu0
  %2408 = vmatprep.mubr.f32.mxu0 0.0
  %2409 = vmatmul.mubr.f32.gmra.mrb[0].mxu0 %v2256
  %v2410 = vpop.f32.mrb[0].mxu0
  %v2411 = vadd.f32 0.0, %v2410
  %v2412 = vpop.f32.mrb[0].mxu0
  %2413 = vmatprep.mubr.f32.mxu0 0.0
  %2414 = vmatmul.mubr.f32.gmra.mrb[0].mxu0 %v2259
  %v2415 = vpop.f32.mrb[0].mxu0
  %v2416 = vadd.f32 0.0, %v2415
  %v2417 = vpop.f32.mrb[0].mxu0
  %2418 = vmatprep.mubr.f32.mxu0 0.0
  %2419 = vmatmul.mubr.f32.gmra.mrb[0].mxu0 %v2262
  %v2420 = vpop.f32.mrb[0].mxu0
  %v2421 = vadd.f32 0.0, %v2420
  %v2422 = vpop.f32.mrb[0].mxu0
  %2423 = vmatprep.mubr.f32.mxu0 0.0
  %2424 = vmatmul.mubr.f32.gmra.mrb[0].mxu0 %v2265
  %v2425 = vpop.f32.mrb[0].mxu0
  %v2426 = vadd.f32 0.0, %v2425
  %v2427 = vpop.f32.mrb[0].mxu0
  %2428 = vmatprep.mubr.f32.mxu0 0.0
  %2429 = vmatmul.mubr.f32.gmra.mrb[0].mxu0 %v2268
  %v2430 = vpop.f32.mrb[0].mxu0
  %v2431 = vadd.f32 0.0, %v2430
  %v2432 = vpop.f32.mrb[0].mxu0
  %2433 = vmatprep.mubr.f32.mxu0 0.0
  %2434 = vmatmul.mubr.f32.gmra.mrb[0].mxu0 %v2271
  %v2435 = vpop.f32.mrb[0].mxu0
  %v2436 = vadd.f32 0.0, %v2435
  %v2437 = vpop.f32.mrb[0].mxu0
  %2438 = vmatprep.mubr.f32.mxu0 0.0
  %2439 = vmatmul.mubr.f32.gmra.mrb[0].mxu0 %v2274
  %v2440 = vpop.f32.mrb[0].mxu0
  %v2441 = vadd.f32 0.0, %v2440
  %v2442 = vpop.f32.mrb[0].mxu0
  %2443 = vmatprep.mubr.f32.mxu0 0.0
  %2444 = vmatmul.mubr.f32.gmra.mrb[0].mxu0 %v2277
  %v2445 = vpop.f32.mrb[0].mxu0
  %v2446 = vadd.f32 0.0, %v2445
  %v2447 = vpop.f32.mrb[0].mxu0
  %2448 = vmatprep.mubr.f32.mxu0 0.0
  %2449 = vmatmul.mubr.f32.gmra.mrb[0].mxu0 %v2280
  %v2450 = vpop.f32.mrb[0].mxu0
  %v2451 = vadd.f32 0.0, %v2450
  %v2452 = vpop.f32.mrb[0].mxu0
  %2453 = vmatprep.mubr.f32.mxu0 0.0
  %2454 = vmatmul.mubr.f32.gmra.mrb[0].mxu0 %v2283
  %v2455 = vpop.f32.mrb[0].mxu0
  %v2456 = vadd.f32 0.0, %v2455
  %v2457 = vpop.f32.mrb[0].mxu0
  %2458 = vmatprep.mubr.f32.mxu0 0.0
  %2459 = vmatmul.mubr.f32.gmra.mrb[0].mxu0 %v2286
  %v2460 = vpop.f32.mrb[0].mxu0
  %v2461 = vadd.f32 0.0, %v2460
  %v2462 = vpop.f32.mrb[0].mxu0
  %2463 = vmatprep.mubr.f32.mxu0 0.0
  %2464 = vmatmul.mubr.f32.gmra.mrb[0].mxu0 %v2289
  %v2465 = vpop.f32.mrb[0].mxu0
  %v2466 = vadd.f32 0.0, %v2465
  %v2467 = vpop.f32.mrb[0].mxu0
  %2468 = vmatprep.mubr.f32.mxu0 0.0
  %2469 = vmatmul.mubr.f32.gmra.mrb[0].mxu0 %v2292
  %v2470 = vpop.f32.mrb[0].mxu0
  %v2471 = vadd.f32 0.0, %v2470
  %v2472 = vpop.f32.mrb[0].mxu0
  %2473 = vmatprep.mubr.f32.mxu0 0.0
  %2474 = vmatmul.mubr.f32.gmra.mrb[0].mxu0 %v2295
  %v2475 = vpop.f32.mrb[0].mxu0
  %v2476 = vadd.f32 0.0, %v2475
  %v2477 = vpop.f32.mrb[0].mxu0
  %2478 = vmatprep.mubr.f32.mxu0 0.0
  %2479 = vmatmul.mubr.f32.gmra.mrb[0].mxu0 %v2298
  %v2480 = vpop.f32.mrb[0].mxu0
  %v2481 = vadd.f32 0.0, %v2480
  %v2482 = vpop.f32.mrb[0].mxu0
  %2483 = vmatprep.mubr.f32.mxu0 0.0
  %2484 = vmatmul.mubr.f32.gmra.mrb[0].mxu0 %v2301
  %v2485 = vpop.f32.mrb[0].mxu0
  %v2486 = vadd.f32 0.0, %v2485
  %v2487 = vpop.f32.mrb[0].mxu0
  %2488 = vmatprep.mubr.f32.mxu0 0.0
  %2489 = vmatmul.mubr.f32.gmra.mrb[0].mxu0 %v2304
  %v2490 = vpop.f32.mrb[0].mxu0
  %v2491 = vadd.f32 0.0, %v2490
  %v2492 = vpop.f32.mrb[0].mxu0
  %2493 = vmatprep.mubr.f32.mxu0 0.0
  %2494 = vmatmul.mubr.f32.gmra.mrb[0].mxu0 %v2307
  %v2495 = vpop.f32.mrb[0].mxu0
  %v2496 = vadd.f32 0.0, %v2495
  %v2497 = vpop.f32.mrb[0].mxu0
  %2498 = vdwg.mxu0
  %v2499 = vadd.f32 %v2179, %v2376
  %v2500 = vadd.f32 %v2180, %v2381
  %v2501 = vadd.f32 %v2181, %v2386
  %v2502 = vadd.f32 %v2182, %v2391
  %v2503 = vadd.f32 %v2183, %v2396
  %v2504 = vadd.f32 %v2184, %v2401
  %v2505 = vadd.f32 %v2185, %v2406
  %v2506 = vadd.f32 %v2186, %v2411
  %v2507 = vadd.f32 %v2187, %v2416
  %v2508 = vadd.f32 %v2188, %v2421
  %v2509 = vadd.f32 %v2189, %v2426
  %v2510 = vadd.f32 %v2190, %v2431
  %v2511 = vadd.f32 %v2191, %v2436
  %v2512 = vadd.f32 %v2192, %v2441
  %v2513 = vadd.f32 %v2193, %v2446
  %v2514 = vadd.f32 %v2194, %v2451
  %v2515 = vadd.f32 %v2195, %v2456
  %v2516 = vadd.f32 %v2196, %v2461
  %v2517 = vadd.f32 %v2197, %v2466
  %v2518 = vadd.f32 %v2198, %v2471
  %v2519 = vadd.f32 %v2199, %v2476
  %v2520 = vadd.f32 %v2200, %v2481
  %v2521 = vadd.f32 %v2201, %v2486
  %v2522 = vadd.f32 %v2202, %v2491
  %v2523 = vadd.f32 %v2203, %v2496
  %v2524 = vld [vmem:[%s0 + $0x16] sm:$0xff]
  %v2525 = vld [vmem:[%s0 + $0x1e] sm:$0xff]
  %v2526 = vld [vmem:[%s0 + $0x26] sm:$0xff]
  %v2527 = vld [vmem:[%s0 + $0x2e] sm:$0xff]
  %v2528 = vld [vmem:[%s0 + $0x36] sm:$0xff]
  %v2529 = vld [vmem:[%s0 + $0x3e] sm:$0xff]
  %v2530 = vld [vmem:[%s0 + $0x46] sm:$0xff]
  %v2531 = vld [vmem:[%s0 + $0x4e] sm:$0xff]
  %v2532 = vld [vmem:[%s0 + $0x56] sm:$0xff]
  %v2533 = vld [vmem:[%s0 + $0x5e] sm:$0xff]
  %v2534 = vld [vmem:[%s0 + $0x66] sm:$0xff]
  %v2535 = vld [vmem:[%s0 + $0x6e] sm:$0xff]
  %v2536 = vld [vmem:[%s0 + $0x76] sm:$0xff]
  %v2537 = vld [vmem:[%s0 + $0x7e] sm:$0xff]
  %v2538 = vld [vmem:[%s0 + $0x86] sm:$0xff]
  %v2539 = vld [vmem:[%s0 + $0x8e] sm:$0xff]
  %v2540 = vld [vmem:[%s0 + $0x96] sm:$0xff]
  %v2541 = vld [vmem:[%s0 + $0x9e] sm:$0xff]
  %v2542 = vld [vmem:[%s0 + $0xa6] sm:$0xff]
  %v2543 = vld [vmem:[%s0 + $0xae] sm:$0xff]
  %v2544 = vld [vmem:[%s0 + $0xb6] sm:$0xff]
  %v2545 = vld [vmem:[%s0 + $0xbe] sm:$0xff]
  %v2546 = vld [vmem:[%s0 + $0xc6] sm:$0xff]
  %v2547 = vld [vmem:[%s0 + $0xce] sm:$0xff]
  %v2548 = vld [vmem:[%s0 + $0xd6] sm:$0xff]
  %s2549 = scalar_lea.vmem %s1, 256
  %v2550 = vld [vmem:[%s2549] sm:$0xff]
  %v2551 = vld [vmem:[%s2549 + $0x8] sm:$0xff]
  %v2552 = vld [vmem:[%s2549 + $0x10] sm:$0xff]
  %v2553 = vld [vmem:[%s2549 + $0x18] sm:$0xff]
  %v2555 = vsel %vm73, %v2524, 0
  %v2558 = vsel %vm73, %v2525, 0
  %v2561 = vsel %vm73, %v2526, 0
  %v2564 = vsel %vm73, %v2527, 0
  %v2567 = vsel %vm73, %v2528, 0
  %v2570 = vsel %vm73, %v2529, 0
  %v2573 = vsel %vm73, %v2530, 0
  %v2576 = vsel %vm73, %v2531, 0
  %v2579 = vsel %vm73, %v2532, 0
  %v2582 = vsel %vm73, %v2533, 0
  %v2585 = vsel %vm73, %v2534, 0
  %v2588 = vsel %vm73, %v2535, 0
  %v2591 = vsel %vm73, %v2536, 0
  %v2594 = vsel %vm73, %v2537, 0
  %v2597 = vsel %vm73, %v2538, 0
  %v2600 = vsel %vm73, %v2539, 0
  %v2603 = vsel %vm73, %v2540, 0
  %v2606 = vsel %vm73, %v2541, 0
  %v2609 = vsel %vm73, %v2542, 0
  %v2612 = vsel %vm73, %v2543, 0
  %v2615 = vsel %vm73, %v2544, 0
  %v2618 = vsel %vm73, %v2545, 0
  %v2621 = vsel %vm73, %v2546, 0
  %v2624 = vsel %vm73, %v2547, 0
  %v2627 = vsel %vm73, %v2548, 0
  %2629 = vmatprep.subr.mxu0 0.0
  %2630 = vmatpush1.msra.mxu0 %v2550
  %2631 = vmatprep.subr.mxu0 0.0
  %2632 = vmatpush1.msra.mxu0 %v2551
  %2633 = vmatprep.subr.mxu0 0.0
  %2634 = vmatpush1.msra.mxu0 %v2552
  %2635 = vmatprep.subr.mxu0 0.0
  %2636 = vmatpush1.msra.mxu0 %v2553
  %2637 = vmatprep.subr.mxu0 0.0
  %2638 = vmatpush1.msra.mxu0 0.0
  %2639 = vmatprep.subr.mxu0 0.0
  %2640 = vmatpush1.msra.mxu0 0.0
  %2641 = vmatprep.subr.mxu0 0.0
  %2642 = vmatpush1.msra.mxu0 0.0
  %2643 = vmatprep.subr.mxu0 0.0
  %2644 = vmatpush1.msra.mxu0 0.0
  %2645 = vmatprep.subr.mxu0 0.0
  %2646 = vmatpush1.msra.mxu0 0.0
  %2647 = vmatprep.subr.mxu0 0.0
  %2648 = vmatpush1.msra.mxu0 0.0
  %2649 = vmatprep.subr.mxu0 0.0
  %2650 = vmatpush1.msra.mxu0 0.0
  %2651 = vmatprep.subr.mxu0 0.0
  %2652 = vmatpush1.msra.mxu0 0.0
  %2653 = vmatprep.subr.mxu0 0.0
  %2654 = vmatpush1.msra.mxu0 0.0
  %2655 = vmatprep.subr.mxu0 0.0
  %2656 = vmatpush1.msra.mxu0 0.0
  %2657 = vmatprep.subr.mxu0 0.0
  %2658 = vmatpush1.msra.mxu0 0.0
  %2659 = vmatprep.subr.mxu0 0.0
  %2660 = vmatpush1.msra.mxu0 0.0
  %2661 = vmatprep.subr.mxu0 0.0
  %2662 = vmatpush1.msra.mxu0 0.0
  %2663 = vmatprep.subr.mxu0 0.0
  %2664 = vmatpush1.msra.mxu0 0.0
  %2665 = vmatprep.subr.mxu0 0.0
  %2666 = vmatpush1.msra.mxu0 0.0
  %2667 = vmatprep.subr.mxu0 0.0
  %2668 = vmatpush1.msra.mxu0 0.0
  %2669 = vmatprep.subr.mxu0 0.0
  %2670 = vmatpush1.msra.mxu0 0.0
  %2671 = vmatprep.subr.mxu0 0.0
  %2672 = vmatpush1.msra.mxu0 0.0
  %2673 = vmatprep.subr.mxu0 0.0
  %2674 = vmatpush1.msra.mxu0 0.0
  %2675 = vmatprep.subr.mxu0 0.0
  %2676 = vmatpush1.msra.mxu0 0.0
  %2677 = vmatprep.subr.mxu0 0.0
  %2678 = vmatpush1.msra.mxu0 0.0
  %2679 = vmatprep.subr.mxu0 0.0
  %2680 = vmatpush1.msra.mxu0 0.0
  %2681 = vmatprep.subr.mxu0 0.0
  %2682 = vmatpush1.msra.mxu0 0.0
  %2683 = vmatprep.subr.mxu0 0.0
  %2684 = vmatpush1.msra.mxu0 0.0
  %2685 = vmatprep.subr.mxu0 0.0
  %2686 = vmatpush1.msra.mxu0 0.0
  %2687 = vmatprep.subr.mxu0 0.0
  %2688 = vmatpush1.msra.mxu0 0.0
  %2689 = vmatprep.subr.mxu0 0.0
  %2690 = vmatpush1.msra.mxu0 0.0
  %2691 = vmatprep.subr.mxu0 0.0
  %2692 = vmatpush1.msra.mxu0 0.0
  %2693 = vmatprep.mubr.f32.mxu0 0.0
  %2694 = vmatmul.mubr.f32.gmra.mrb[0].mxu0 %v2555
  %v2695 = vpop.f32.mrb[0].mxu0
  %v2696 = vadd.f32 0.0, %v2695
  %v2697 = vpop.f32.mrb[0].mxu0
  %2698 = vmatprep.mubr.f32.mxu0 0.0
  %2699 = vmatmul.mubr.f32.gmra.mrb[0].mxu0 %v2558
  %v2700 = vpop.f32.mrb[0].mxu0
  %v2701 = vadd.f32 0.0, %v2700
  %v2702 = vpop.f32.mrb[0].mxu0
  %2703 = vmatprep.mubr.f32.mxu0 0.0
  %2704 = vmatmul.mubr.f32.gmra.mrb[0].mxu0 %v2561
  %v2705 = vpop.f32.mrb[0].mxu0
  %v2706 = vadd.f32 0.0, %v2705
  %v2707 = vpop.f32.mrb[0].mxu0
  %2708 = vmatprep.mubr.f32.mxu0 0.0
  %2709 = vmatmul.mubr.f32.gmra.mrb[0].mxu0 %v2564
  %v2710 = vpop.f32.mrb[0].mxu0
  %v2711 = vadd.f32 0.0, %v2710
  %v2712 = vpop.f32.mrb[0].mxu0
  %2713 = vmatprep.mubr.f32.mxu0 0.0
  %2714 = vmatmul.mubr.f32.gmra.mrb[0].mxu0 %v2567
  %v2715 = vpop.f32.mrb[0].mxu0
  %v2716 = vadd.f32 0.0, %v2715
  %v2717 = vpop.f32.mrb[0].mxu0
  %2718 = vmatprep.mubr.f32.mxu0 0.0
  %2719 = vmatmul.mubr.f32.gmra.mrb[0].mxu0 %v2570
  %v2720 = vpop.f32.mrb[0].mxu0
  %v2721 = vadd.f32 0.0, %v2720
  %v2722 = vpop.f32.mrb[0].mxu0
  %2723 = vmatprep.mubr.f32.mxu0 0.0
  %2724 = vmatmul.mubr.f32.gmra.mrb[0].mxu0 %v2573
  %v2725 = vpop.f32.mrb[0].mxu0
  %v2726 = vadd.f32 0.0, %v2725
  %v2727 = vpop.f32.mrb[0].mxu0
  %2728 = vmatprep.mubr.f32.mxu0 0.0
  %2729 = vmatmul.mubr.f32.gmra.mrb[0].mxu0 %v2576
  %v2730 = vpop.f32.mrb[0].mxu0
  %v2731 = vadd.f32 0.0, %v2730
  %v2732 = vpop.f32.mrb[0].mxu0
  %2733 = vmatprep.mubr.f32.mxu0 0.0
  %2734 = vmatmul.mubr.f32.gmra.mrb[0].mxu0 %v2579
  %v2735 = vpop.f32.mrb[0].mxu0
  %v2736 = vadd.f32 0.0, %v2735
  %v2737 = vpop.f32.mrb[0].mxu0
  %2738 = vmatprep.mubr.f32.mxu0 0.0
  %2739 = vmatmul.mubr.f32.gmra.mrb[0].mxu0 %v2582
  %v2740 = vpop.f32.mrb[0].mxu0
  %v2741 = vadd.f32 0.0, %v2740
  %v2742 = vpop.f32.mrb[0].mxu0
  %2743 = vmatprep.mubr.f32.mxu0 0.0
  %2744 = vmatmul.mubr.f32.gmra.mrb[0].mxu0 %v2585
  %v2745 = vpop.f32.mrb[0].mxu0
  %v2746 = vadd.f32 0.0, %v2745
  %v2747 = vpop.f32.mrb[0].mxu0
  %2748 = vmatprep.mubr.f32.mxu0 0.0
  %2749 = vmatmul.mubr.f32.gmra.mrb[0].mxu0 %v2588
  %v2750 = vpop.f32.mrb[0].mxu0
  %v2751 = vadd.f32 0.0, %v2750
  %v2752 = vpop.f32.mrb[0].mxu0
  %2753 = vmatprep.mubr.f32.mxu0 0.0
  %2754 = vmatmul.mubr.f32.gmra.mrb[0].mxu0 %v2591
  %v2755 = vpop.f32.mrb[0].mxu0
  %v2756 = vadd.f32 0.0, %v2755
  %v2757 = vpop.f32.mrb[0].mxu0
  %2758 = vmatprep.mubr.f32.mxu0 0.0
  %2759 = vmatmul.mubr.f32.gmra.mrb[0].mxu0 %v2594
  %v2760 = vpop.f32.mrb[0].mxu0
  %v2761 = vadd.f32 0.0, %v2760
  %v2762 = vpop.f32.mrb[0].mxu0
  %2763 = vmatprep.mubr.f32.mxu0 0.0
  %2764 = vmatmul.mubr.f32.gmra.mrb[0].mxu0 %v2597
  %v2765 = vpop.f32.mrb[0].mxu0
  %v2766 = vadd.f32 0.0, %v2765
  %v2767 = vpop.f32.mrb[0].mxu0
  %2768 = vmatprep.mubr.f32.mxu0 0.0
  %2769 = vmatmul.mubr.f32.gmra.mrb[0].mxu0 %v2600
  %v2770 = vpop.f32.mrb[0].mxu0
  %v2771 = vadd.f32 0.0, %v2770
  %v2772 = vpop.f32.mrb[0].mxu0
  %2773 = vmatprep.mubr.f32.mxu0 0.0
  %2774 = vmatmul.mubr.f32.gmra.mrb[0].mxu0 %v2603
  %v2775 = vpop.f32.mrb[0].mxu0
  %v2776 = vadd.f32 0.0, %v2775
  %v2777 = vpop.f32.mrb[0].mxu0
  %2778 = vmatprep.mubr.f32.mxu0 0.0
  %2779 = vmatmul.mubr.f32.gmra.mrb[0].mxu0 %v2606
  %v2780 = vpop.f32.mrb[0].mxu0
  %v2781 = vadd.f32 0.0, %v2780
  %v2782 = vpop.f32.mrb[0].mxu0
  %2783 = vmatprep.mubr.f32.mxu0 0.0
  %2784 = vmatmul.mubr.f32.gmra.mrb[0].mxu0 %v2609
  %v2785 = vpop.f32.mrb[0].mxu0
  %v2786 = vadd.f32 0.0, %v2785
  %v2787 = vpop.f32.mrb[0].mxu0
  %2788 = vmatprep.mubr.f32.mxu0 0.0
  %2789 = vmatmul.mubr.f32.gmra.mrb[0].mxu0 %v2612
  %v2790 = vpop.f32.mrb[0].mxu0
  %v2791 = vadd.f32 0.0, %v2790
  %v2792 = vpop.f32.mrb[0].mxu0
  %2793 = vmatprep.mubr.f32.mxu0 0.0
  %2794 = vmatmul.mubr.f32.gmra.mrb[0].mxu0 %v2615
  %v2795 = vpop.f32.mrb[0].mxu0
  %v2796 = vadd.f32 0.0, %v2795
  %v2797 = vpop.f32.mrb[0].mxu0
  %2798 = vmatprep.mubr.f32.mxu0 0.0
  %2799 = vmatmul.mubr.f32.gmra.mrb[0].mxu0 %v2618
  %v2800 = vpop.f32.mrb[0].mxu0
  %v2801 = vadd.f32 0.0, %v2800
  %v2802 = vpop.f32.mrb[0].mxu0
  %2803 = vmatprep.mubr.f32.mxu0 0.0
  %2804 = vmatmul.mubr.f32.gmra.mrb[0].mxu0 %v2621
  %v2805 = vpop.f32.mrb[0].mxu0
  %v2806 = vadd.f32 0.0, %v2805
  %v2807 = vpop.f32.mrb[0].mxu0
  %2808 = vmatprep.mubr.f32.mxu0 0.0
  %2809 = vmatmul.mubr.f32.gmra.mrb[0].mxu0 %v2624
  %v2810 = vpop.f32.mrb[0].mxu0
  %v2811 = vadd.f32 0.0, %v2810
  %v2812 = vpop.f32.mrb[0].mxu0
  %2813 = vmatprep.mubr.f32.mxu0 0.0
  %2814 = vmatmul.mubr.f32.gmra.mrb[0].mxu0 %v2627
  %v2815 = vpop.f32.mrb[0].mxu0
  %v2816 = vadd.f32 0.0, %v2815
  %v2817 = vpop.f32.mrb[0].mxu0
  %2818 = vdwg.mxu0
  %v2819 = vadd.f32 %v2499, %v2696
  %v2820 = vadd.f32 %v2500, %v2701
  %v2821 = vadd.f32 %v2501, %v2706
  %v2822 = vadd.f32 %v2502, %v2711
  %v2823 = vadd.f32 %v2503, %v2716
  %v2824 = vadd.f32 %v2504, %v2721
  %v2825 = vadd.f32 %v2505, %v2726
  %v2826 = vadd.f32 %v2506, %v2731
  %v2827 = vadd.f32 %v2507, %v2736
  %v2828 = vadd.f32 %v2508, %v2741
  %v2829 = vadd.f32 %v2509, %v2746
  %v2830 = vadd.f32 %v2510, %v2751
  %v2831 = vadd.f32 %v2511, %v2756
  %v2832 = vadd.f32 %v2512, %v2761
  %v2833 = vadd.f32 %v2513, %v2766
  %v2834 = vadd.f32 %v2514, %v2771
  %v2835 = vadd.f32 %v2515, %v2776
  %v2836 = vadd.f32 %v2516, %v2781
  %v2837 = vadd.f32 %v2517, %v2786
  %v2838 = vadd.f32 %v2518, %v2791
  %v2839 = vadd.f32 %v2519, %v2796
  %v2840 = vadd.f32 %v2520, %v2801
  %v2841 = vadd.f32 %v2521, %v2806
  %v2842 = vadd.f32 %v2522, %v2811
  %v2843 = vadd.f32 %v2523, %v2816
  %v2844 = vld [vmem:[%s2] sm:$0x1]
  %v2846 = vlaneseq
  %v2847 = vshrl.u32 %v2846, 7
  %v2848 = vsub.s32 0, %v2847
  %v2849 = vrot.slane %v2844, %v2848
  %v2851 = vadd.f32 %v2819, %v2849
  %v2852 = vadd.f32 %v2820, %v2849
  %v2853 = vadd.f32 %v2821, %v2849
  %v2854 = vadd.f32 %v2822, %v2849
  %v2855 = vadd.f32 %v2823, %v2849
  %v2856 = vadd.f32 %v2824, %v2849
  %v2857 = vadd.f32 %v2825, %v2849
  %v2858 = vadd.f32 %v2826, %v2849
  %v2859 = vadd.f32 %v2827, %v2849
  %v2860 = vadd.f32 %v2828, %v2849
  %v2861 = vadd.f32 %v2829, %v2849
  %v2862 = vadd.f32 %v2830, %v2849
  %v2863 = vadd.f32 %v2831, %v2849
  %v2864 = vadd.f32 %v2832, %v2849
  %v2865 = vadd.f32 %v2833, %v2849
  %v2866 = vadd.f32 %v2834, %v2849
  %v2867 = vadd.f32 %v2835, %v2849
  %v2868 = vadd.f32 %v2836, %v2849
  %v2869 = vadd.f32 %v2837, %v2849
  %v2870 = vadd.f32 %v2838, %v2849
  %v2871 = vadd.f32 %v2839, %v2849
  %v2872 = vadd.f32 %v2840, %v2849
  %v2873 = vadd.f32 %v2841, %v2849
  %v2874 = vadd.f32 %v2842, %v2849
  %v2875 = vadd.f32 %v2843, %v2849
  %v2876 = vmax.f32 %v2851, 0.0
  %v2877 = vmax.f32 %v2852, 0.0
  %v2878 = vmax.f32 %v2853, 0.0
  %v2879 = vmax.f32 %v2854, 0.0
  %v2880 = vmax.f32 %v2855, 0.0
  %v2881 = vmax.f32 %v2856, 0.0
  %v2882 = vmax.f32 %v2857, 0.0
  %v2883 = vmax.f32 %v2858, 0.0
  %v2884 = vmax.f32 %v2859, 0.0
  %v2885 = vmax.f32 %v2860, 0.0
  %v2886 = vmax.f32 %v2861, 0.0
  %v2887 = vmax.f32 %v2862, 0.0
  %v2888 = vmax.f32 %v2863, 0.0
  %v2889 = vmax.f32 %v2864, 0.0
  %v2890 = vmax.f32 %v2865, 0.0
  %v2891 = vmax.f32 %v2866, 0.0
  %v2892 = vmax.f32 %v2867, 0.0
  %v2893 = vmax.f32 %v2868, 0.0
  %v2894 = vmax.f32 %v2869, 0.0
  %v2895 = vmax.f32 %v2870, 0.0
  %v2896 = vmax.f32 %v2871, 0.0
  %v2897 = vmax.f32 %v2872, 0.0
  %v2898 = vmax.f32 %v2873, 0.0
  %v2899 = vmax.f32 %v2874, 0.0
  %v2900 = vmax.f32 %v2875, 0.0
  %vm2901 = vcmask 523264
  %2902 = vst.msk [vmem:[%s3] sm:$0xff] %vm2901, %v2876
  %2903 = vst.msk [vmem:[%s3 + $0x8] sm:$0xff] %vm2901, %v2877
  %2904 = vst.msk [vmem:[%s3 + $0x10] sm:$0xff] %vm2901, %v2878
  %2905 = vst.msk [vmem:[%s3 + $0x18] sm:$0xff] %vm2901, %v2879
  %2906 = vst.msk [vmem:[%s3 + $0x20] sm:$0xff] %vm2901, %v2880
  %2907 = vst.msk [vmem:[%s3 + $0x28] sm:$0xff] %vm2901, %v2881
  %2908 = vst.msk [vmem:[%s3 + $0x30] sm:$0xff] %vm2901, %v2882
  %2909 = vst.msk [vmem:[%s3 + $0x38] sm:$0xff] %vm2901, %v2883
  %2910 = vst.msk [vmem:[%s3 + $0x40] sm:$0xff] %vm2901, %v2884
  %2911 = vst.msk [vmem:[%s3 + $0x48] sm:$0xff] %vm2901, %v2885
  %2912 = vst.msk [vmem:[%s3 + $0x50] sm:$0xff] %vm2901, %v2886
  %2913 = vst.msk [vmem:[%s3 + $0x58] sm:$0xff] %vm2901, %v2887
  %2914 = vst.msk [vmem:[%s3 + $0x60] sm:$0xff] %vm2901, %v2888
  %2915 = vst.msk [vmem:[%s3 + $0x68] sm:$0xff] %vm2901, %v2889
  %2916 = vst.msk [vmem:[%s3 + $0x70] sm:$0xff] %vm2901, %v2890
  %2917 = vst.msk [vmem:[%s3 + $0x78] sm:$0xff] %vm2901, %v2891
  %2918 = vst.msk [vmem:[%s3 + $0x80] sm:$0xff] %vm2901, %v2892
  %2919 = vst.msk [vmem:[%s3 + $0x88] sm:$0xff] %vm2901, %v2893
  %2920 = vst.msk [vmem:[%s3 + $0x90] sm:$0xff] %vm2901, %v2894
  %2921 = vst.msk [vmem:[%s3 + $0x98] sm:$0xff] %vm2901, %v2895
  %2922 = vst.msk [vmem:[%s3 + $0xa0] sm:$0xff] %vm2901, %v2896
  %2923 = vst.msk [vmem:[%s3 + $0xa8] sm:$0xff] %vm2901, %v2897
  %2924 = vst.msk [vmem:[%s3 + $0xb0] sm:$0xff] %vm2901, %v2898
  %2925 = vst.msk [vmem:[%s3 + $0xb8] sm:$0xff] %vm2901, %v2899
  %2926 = vst.msk [vmem:[%s3 + $0xc0] sm:$0xff] %vm2901, %v2900
  // Predicated region
  $region14: #{network_forward.7} parent=0 // pred_check
    _
  $region15: #{network_forward.7} parent=0 // pred_check_branch
    %2928 = sbr.rel (0) target = $region17
  $region16: #{network_forward.7} parent=0 // pred_region
    _
  $region17: #{network_forward.7} parent=0 // pred_fallthru
    _
  // Predicated region
  $region18: #{network_forward.7} parent=0 // pred_check
    _
  $region19: #{network_forward.7} parent=0 // pred_check_branch
    %2930 = sbr.rel (0) target = $region21
  $region20: #{network_forward.7} parent=0 // pred_region
    _
  $region21: #{network_forward.7} parent=0 // pred_fallthru
    _

// kernel: network_forward.8
$region0: #{network_forward.8}
  #allocation0 [shape = 'u32[]', space=smem, size = 0x4, offset = 0x4, fixed_abs, tag = 'smem constant byte address 0x4 - core index']
  #allocation1 [shape = 'u32[144,128]{1,0:T(1,128)}', space=vmem, size = 0x12000, scoped, tag = 'internal scratch']
  %s0 = inlined_call_operand.vmem [shape: f32[128,64], index: 0, kind: input, shape index: {}]
  %s1 = inlined_call_operand.vmem [shape: f32[64,64], index: 1, kind: input, shape index: {}]
  %s2 = inlined_call_operand.vmem [shape: f32[1,64], index: 2, kind: input, shape index: {}]
  %s3 = inlined_call_operand.vmem [shape: f32[64,128], index: 3, kind: input, shape index: {}]
  %s4 = inlined_call_operand.vmem [shape: f32[1,128], index: 4, kind: input, shape index: {}]
  %s5 = inlined_call_operand.vmem [shape: f32[128,128], index: 5, kind: output, shape index: {0}]
  %s6 = inlined_call_operand.vmem [shape: f32[128,128], index: 6, kind: output, shape index: {1}]
  %7 = xla_tuple %s5, %s6
  %s8 = sld [smem:[#allocation0]]
  $region38: #{network_forward.8} parent=0
    _
  %s10 = ssub.s32 1, %s8
  %s11 = scalar_select 0, %s10, %s8
  // Predicated region
  $region2: #{network_forward.8} parent=0 // pred_check
    _
  $region3: #{network_forward.8} parent=0 // pred_check_branch
    %13 = sbr.rel (0) target = $region5
  $region4: #{network_forward.8} parent=0 // pred_region
    _
  $region5: #{network_forward.8} parent=0 // pred_fallthru
    _
  // Predicated region
  $region6: #{network_forward.8} parent=0 // pred_check
    _
  $region7: #{network_forward.8} parent=0 // pred_check_branch
    %15 = sbr.rel (0) target = $region9
  $region8: #{network_forward.8} parent=0 // pred_region
    _
  $region9: #{network_forward.8} parent=0 // pred_fallthru
    _
  // Predicated region
  $region10: #{network_forward.8} parent=0 // pred_check
    _
  $region11: #{network_forward.8} parent=0 // pred_check_branch
    %17 = sbr.rel (0) target = $region13
  $region12: #{network_forward.8} parent=0 // pred_region
    _
  $region13: #{network_forward.8} parent=0 // pred_fallthru
    _
  // Predicated region
  $region14: #{network_forward.8} parent=0 // pred_check
    _
  $region15: #{network_forward.8} parent=0 // pred_check_branch
    %19 = sbr.rel (0) target = $region17
  $region16: #{network_forward.8} parent=0 // pred_region
    _
  $region17: #{network_forward.8} parent=0 // pred_fallthru
    _
  // Predicated region
  $region18: #{network_forward.8} parent=0 // pred_check
    _
  $region19: #{network_forward.8} parent=0 // pred_check_branch
    %21 = sbr.rel (0) target = $region21
  $region20: #{network_forward.8} parent=0 // pred_region
    _
  $region21: #{network_forward.8} parent=0 // pred_fallthru
    _
  %v22 = vld [vmem:[%s0] sm:$0xff]
  %v23 = vld [vmem:[%s0 + $0x8] sm:$0xff]
  %v24 = vld [vmem:[%s0 + $0x10] sm:$0xff]
  %v25 = vld [vmem:[%s0 + $0x18] sm:$0xff]
  %v26 = vld [vmem:[%s0 + $0x20] sm:$0xff]
  %v27 = vld [vmem:[%s0 + $0x28] sm:$0xff]
  %v28 = vld [vmem:[%s0 + $0x30] sm:$0xff]
  %v29 = vld [vmem:[%s0 + $0x38] sm:$0xff]
  %v30 = vld [vmem:[%s0 + $0x40] sm:$0xff]
  %v31 = vld [vmem:[%s0 + $0x48] sm:$0xff]
  %v32 = vld [vmem:[%s0 + $0x50] sm:$0xff]
  %v33 = vld [vmem:[%s0 + $0x58] sm:$0xff]
  %v34 = vld [vmem:[%s0 + $0x60] sm:$0xff]
  %v35 = vld [vmem:[%s0 + $0x68] sm:$0xff]
  %v36 = vld [vmem:[%s0 + $0x70] sm:$0xff]
  %v37 = vld [vmem:[%s0 + $0x78] sm:$0xff]
  %v38 = vld [vmem:[%s1] sm:$0xff]
  %v39 = vld [vmem:[%s1 + $0x8] sm:$0xff]
  %v40 = vld [vmem:[%s1 + $0x10] sm:$0xff]
  %v41 = vld [vmem:[%s1 + $0x18] sm:$0xff]
  %v42 = vld [vmem:[%s1 + $0x20] sm:$0xff]
  %v43 = vld [vmem:[%s1 + $0x28] sm:$0xff]
  %v44 = vld [vmem:[%s1 + $0x30] sm:$0xff]
  %v45 = vld [vmem:[%s1 + $0x38] sm:$0xff]
  %v46 = vld [vmem:[%s2] sm:$0x1]
  %v48 = vlaneseq
  %v49 = vshrl.u32 %v48, 7
  %v50 = vsub.s32 0, %v49
  %v51 = vrot.slane %v46, %v50
  %vm53 = vcmask 523264
  %v55 = vsel %vm53, %v22, 0
  %v58 = vsel %vm53, %v23, 0
  %v61 = vsel %vm53, %v24, 0
  %v64 = vsel %vm53, %v25, 0
  %v67 = vsel %vm53, %v26, 0
  %v70 = vsel %vm53, %v27, 0
  %v73 = vsel %vm53, %v28, 0
  %v76 = vsel %vm53, %v29, 0
  %v79 = vsel %vm53, %v30, 0
  %v82 = vsel %vm53, %v31, 0
  %v85 = vsel %vm53, %v32, 0
  %v88 = vsel %vm53, %v33, 0
  %v91 = vsel %vm53, %v34, 0
  %v94 = vsel %vm53, %v35, 0
  %v97 = vsel %vm53, %v36, 0
  %v100 = vsel %vm53, %v37, 0
  %102 = vmatprep.subr.mxu0 0.0
  %103 = vmatpush1.msra.mxu0 %v38
  %104 = vmatprep.subr.mxu0 0.0
  %105 = vmatpush1.msra.mxu0 %v39
  %106 = vmatprep.subr.mxu0 0.0
  %107 = vmatpush1.msra.mxu0 %v40
  %108 = vmatprep.subr.mxu0 0.0
  %109 = vmatpush1.msra.mxu0 %v41
  %110 = vmatprep.subr.mxu0 0.0
  %111 = vmatpush1.msra.mxu0 %v42
  %112 = vmatprep.subr.mxu0 0.0
  %113 = vmatpush1.msra.mxu0 %v43
  %114 = vmatprep.subr.mxu0 0.0
  %115 = vmatpush1.msra.mxu0 %v44
  %116 = vmatprep.subr.mxu0 0.0
  %117 = vmatpush1.msra.mxu0 %v45
  %118 = vmatprep.subr.mxu0 0.0
  %119 = vmatpush1.msra.mxu0 0.0
  %120 = vmatprep.subr.mxu0 0.0
  %121 = vmatpush1.msra.mxu0 0.0
  %122 = vmatprep.subr.mxu0 0.0
  %123 = vmatpush1.msra.mxu0 0.0
  %124 = vmatprep.subr.mxu0 0.0
  %125 = vmatpush1.msra.mxu0 0.0
  %126 = vmatprep.subr.mxu0 0.0
  %127 = vmatpush1.msra.mxu0 0.0
  %128 = vmatprep.subr.mxu0 0.0
  %129 = vmatpush1.msra.mxu0 0.0
  %130 = vmatprep.subr.mxu0 0.0
  %131 = vmatpush1.msra.mxu0 0.0
  %132 = vmatprep.subr.mxu0 0.0
  %133 = vmatpush1.msra.mxu0 0.0
  %134 = vmatprep.subr.mxu0 0.0
  %135 = vmatpush1.msra.mxu0 0.0
  %136 = vmatprep.subr.mxu0 0.0
  %137 = vmatpush1.msra.mxu0 0.0
  %138 = vmatprep.subr.mxu0 0.0
  %139 = vmatpush1.msra.mxu0 0.0
  %140 = vmatprep.subr.mxu0 0.0
  %141 = vmatpush1.msra.mxu0 0.0
  %142 = vmatprep.subr.mxu0 0.0
  %143 = vmatpush1.msra.mxu0 0.0
  %144 = vmatprep.subr.mxu0 0.0
  %145 = vmatpush1.msra.mxu0 0.0
  %146 = vmatprep.subr.mxu0 0.0
  %147 = vmatpush1.msra.mxu0 0.0
  %148 = vmatprep.subr.mxu0 0.0
  %149 = vmatpush1.msra.mxu0 0.0
  %150 = vmatprep.subr.mxu0 0.0
  %151 = vmatpush1.msra.mxu0 0.0
  %152 = vmatprep.subr.mxu0 0.0
  %153 = vmatpush1.msra.mxu0 0.0
  %154 = vmatprep.subr.mxu0 0.0
  %155 = vmatpush1.msra.mxu0 0.0
  %156 = vmatprep.subr.mxu0 0.0
  %157 = vmatpush1.msra.mxu0 0.0
  %158 = vmatprep.subr.mxu0 0.0
  %159 = vmatpush1.msra.mxu0 0.0
  %160 = vmatprep.subr.mxu0 0.0
  %161 = vmatpush1.msra.mxu0 0.0
  %162 = vmatprep.subr.mxu0 0.0
  %163 = vmatpush1.msra.mxu0 0.0
  %164 = vmatprep.subr.mxu0 0.0
  %165 = vmatpush1.msra.mxu0 0.0
  %166 = vmatprep.mubr.f32.mxu0 0.0
  %167 = vmatmul.mubr.f32.gmra.mrb[0].mxu0 %v55
  %v168 = vpop.f32.mrb[0].mxu0
  %v169 = vadd.f32 %v51, %v168
  %v170 = vpop.f32.mrb[0].mxu0
  %171 = vmatprep.mubr.f32.mxu0 0.0
  %172 = vmatmul.mubr.f32.gmra.mrb[0].mxu0 %v58
  %v173 = vpop.f32.mrb[0].mxu0
  %v174 = vadd.f32 %v51, %v173
  %v175 = vpop.f32.mrb[0].mxu0
  %176 = vmatprep.mubr.f32.mxu0 0.0
  %177 = vmatmul.mubr.f32.gmra.mrb[0].mxu0 %v61
  %v178 = vpop.f32.mrb[0].mxu0
  %v179 = vadd.f32 %v51, %v178
  %v180 = vpop.f32.mrb[0].mxu0
  %181 = vmatprep.mubr.f32.mxu0 0.0
  %182 = vmatmul.mubr.f32.gmra.mrb[0].mxu0 %v64
  %v183 = vpop.f32.mrb[0].mxu0
  %v184 = vadd.f32 %v51, %v183
  %v185 = vpop.f32.mrb[0].mxu0
  %186 = vmatprep.mubr.f32.mxu0 0.0
  %187 = vmatmul.mubr.f32.gmra.mrb[0].mxu0 %v67
  %v188 = vpop.f32.mrb[0].mxu0
  %v189 = vadd.f32 %v51, %v188
  %v190 = vpop.f32.mrb[0].mxu0
  %191 = vmatprep.mubr.f32.mxu0 0.0
  %192 = vmatmul.mubr.f32.gmra.mrb[0].mxu0 %v70
  %v193 = vpop.f32.mrb[0].mxu0
  %v194 = vadd.f32 %v51, %v193
  %v195 = vpop.f32.mrb[0].mxu0
  %196 = vmatprep.mubr.f32.mxu0 0.0
  %197 = vmatmul.mubr.f32.gmra.mrb[0].mxu0 %v73
  %v198 = vpop.f32.mrb[0].mxu0
  %v199 = vadd.f32 %v51, %v198
  %v200 = vpop.f32.mrb[0].mxu0
  %201 = vmatprep.mubr.f32.mxu0 0.0
  %202 = vmatmul.mubr.f32.gmra.mrb[0].mxu0 %v76
  %v203 = vpop.f32.mrb[0].mxu0
  %v204 = vadd.f32 %v51, %v203
  %v205 = vpop.f32.mrb[0].mxu0
  %206 = vmatprep.mubr.f32.mxu0 0.0
  %207 = vmatmul.mubr.f32.gmra.mrb[0].mxu0 %v79
  %v208 = vpop.f32.mrb[0].mxu0
  %v209 = vadd.f32 %v51, %v208
  %v210 = vpop.f32.mrb[0].mxu0
  %211 = vmatprep.mubr.f32.mxu0 0.0
  %212 = vmatmul.mubr.f32.gmra.mrb[0].mxu0 %v82
  %v213 = vpop.f32.mrb[0].mxu0
  %v214 = vadd.f32 %v51, %v213
  %v215 = vpop.f32.mrb[0].mxu0
  %216 = vmatprep.mubr.f32.mxu0 0.0
  %217 = vmatmul.mubr.f32.gmra.mrb[0].mxu0 %v85
  %v218 = vpop.f32.mrb[0].mxu0
  %v219 = vadd.f32 %v51, %v218
  %v220 = vpop.f32.mrb[0].mxu0
  %221 = vmatprep.mubr.f32.mxu0 0.0
  %222 = vmatmul.mubr.f32.gmra.mrb[0].mxu0 %v88
  %v223 = vpop.f32.mrb[0].mxu0
  %v224 = vadd.f32 %v51, %v223
  %v225 = vpop.f32.mrb[0].mxu0
  %226 = vmatprep.mubr.f32.mxu0 0.0
  %227 = vmatmul.mubr.f32.gmra.mrb[0].mxu0 %v91
  %v228 = vpop.f32.mrb[0].mxu0
  %v229 = vadd.f32 %v51, %v228
  %v230 = vpop.f32.mrb[0].mxu0
  %231 = vmatprep.mubr.f32.mxu0 0.0
  %232 = vmatmul.mubr.f32.gmra.mrb[0].mxu0 %v94
  %v233 = vpop.f32.mrb[0].mxu0
  %v234 = vadd.f32 %v51, %v233
  %v235 = vpop.f32.mrb[0].mxu0
  %236 = vmatprep.mubr.f32.mxu0 0.0
  %237 = vmatmul.mubr.f32.gmra.mrb[0].mxu0 %v97
  %v238 = vpop.f32.mrb[0].mxu0
  %v239 = vadd.f32 %v51, %v238
  %v240 = vpop.f32.mrb[0].mxu0
  %241 = vmatprep.mubr.f32.mxu0 0.0
  %242 = vmatmul.mubr.f32.gmra.mrb[0].mxu0 %v100
  %v243 = vpop.f32.mrb[0].mxu0
  %v244 = vadd.f32 %v51, %v243
  %v245 = vpop.f32.mrb[0].mxu0
  %246 = vdwg.mxu0
  %v247 = vmax.f32 %v169, 0.0
  %v248 = vmax.f32 %v174, 0.0
  %v249 = vmax.f32 %v179, 0.0
  %v250 = vmax.f32 %v184, 0.0
  %v251 = vmax.f32 %v189, 0.0
  %v252 = vmax.f32 %v194, 0.0
  %v253 = vmax.f32 %v199, 0.0
  %v254 = vmax.f32 %v204, 0.0
  %v255 = vmax.f32 %v209, 0.0
  %v256 = vmax.f32 %v214, 0.0
  %v257 = vmax.f32 %v219, 0.0
  %v258 = vmax.f32 %v224, 0.0
  %v259 = vmax.f32 %v229, 0.0
  %v260 = vmax.f32 %v234, 0.0
  %v261 = vmax.f32 %v239, 0.0
  %v262 = vmax.f32 %v244, 0.0
  %v263 = vld [vmem:[%s3] sm:$0xff]
  %v264 = vld [vmem:[%s3 + $0x8] sm:$0xff]
  %v265 = vld [vmem:[%s3 + $0x10] sm:$0xff]
  %v266 = vld [vmem:[%s3 + $0x18] sm:$0xff]
  %v267 = vld [vmem:[%s3 + $0x20] sm:$0xff]
  %v268 = vld [vmem:[%s3 + $0x28] sm:$0xff]
  %v269 = vld [vmem:[%s3 + $0x30] sm:$0xff]
  %v270 = vld [vmem:[%s3 + $0x38] sm:$0xff]
  %v271 = vld [vmem:[%s4] sm:$0x1]
  %v273 = vlaneseq
  %v274 = vshrl.u32 %v273, 7
  %v275 = vsub.s32 0, %v274
  %v276 = vrot.slane %v271, %v275
  %v279 = vsel %vm53, %v247, 0
  %v282 = vsel %vm53, %v248, 0
  %v285 = vsel %vm53, %v249, 0
  %v288 = vsel %vm53, %v250, 0
  %v291 = vsel %vm53, %v251, 0
  %v294 = vsel %vm53, %v252, 0
  %v297 = vsel %vm53, %v253, 0
  %v300 = vsel %vm53, %v254, 0
  %v303 = vsel %vm53, %v255, 0
  %v306 = vsel %vm53, %v256, 0
  %v309 = vsel %vm53, %v257, 0
  %v312 = vsel %vm53, %v258, 0
  %v315 = vsel %vm53, %v259, 0
  %v318 = vsel %vm53, %v260, 0
  %v321 = vsel %vm53, %v261, 0
  %v324 = vsel %vm53, %v262, 0
  %326 = vmatprep.subr.mxu0 0.0
  %327 = vmatpush1.msra.mxu0 %v263
  %328 = vmatprep.subr.mxu0 0.0
  %329 = vmatpush1.msra.mxu0 %v264
  %330 = vmatprep.subr.mxu0 0.0
  %331 = vmatpush1.msra.mxu0 %v265
  %332 = vmatprep.subr.mxu0 0.0
  %333 = vmatpush1.msra.mxu0 %v266
  %334 = vmatprep.subr.mxu0 0.0
  %335 = vmatpush1.msra.mxu0 %v267
  %336 = vmatprep.subr.mxu0 0.0
  %337 = vmatpush1.msra.mxu0 %v268
  %338 = vmatprep.subr.mxu0 0.0
  %339 = vmatpush1.msra.mxu0 %v269
  %340 = vmatprep.subr.mxu0 0.0
  %341 = vmatpush1.msra.mxu0 %v270
  %342 = vmatprep.subr.mxu0 0.0
  %343 = vmatpush1.msra.mxu0 0.0
  %344 = vmatprep.subr.mxu0 0.0
  %345 = vmatpush1.msra.mxu0 0.0
  %346 = vmatprep.subr.mxu0 0.0
  %347 = vmatpush1.msra.mxu0 0.0
  %348 = vmatprep.subr.mxu0 0.0
  %349 = vmatpush1.msra.mxu0 0.0
  %350 = vmatprep.subr.mxu0 0.0
  %351 = vmatpush1.msra.mxu0 0.0
  %352 = vmatprep.subr.mxu0 0.0
  %353 = vmatpush1.msra.mxu0 0.0
  %354 = vmatprep.subr.mxu0 0.0
  %355 = vmatpush1.msra.mxu0 0.0
  %356 = vmatprep.subr.mxu0 0.0
  %357 = vmatpush1.msra.mxu0 0.0
  %358 = vmatprep.subr.mxu0 0.0
  %359 = vmatpush1.msra.mxu0 0.0
  %360 = vmatprep.subr.mxu0 0.0
  %361 = vmatpush1.msra.mxu0 0.0
  %362 = vmatprep.subr.mxu0 0.0
  %363 = vmatpush1.msra.mxu0 0.0
  %364 = vmatprep.subr.mxu0 0.0
  %365 = vmatpush1.msra.mxu0 0.0
  %366 = vmatprep.subr.mxu0 0.0
  %367 = vmatpush1.msra.mxu0 0.0
  %368 = vmatprep.subr.mxu0 0.0
  %369 = vmatpush1.msra.mxu0 0.0
  %370 = vmatprep.subr.mxu0 0.0
  %371 = vmatpush1.msra.mxu0 0.0
  %372 = vmatprep.subr.mxu0 0.0
  %373 = vmatpush1.msra.mxu0 0.0
  %374 = vmatprep.subr.mxu0 0.0
  %375 = vmatpush1.msra.mxu0 0.0
  %376 = vmatprep.subr.mxu0 0.0
  %377 = vmatpush1.msra.mxu0 0.0
  %378 = vmatprep.subr.mxu0 0.0
  %379 = vmatpush1.msra.mxu0 0.0
  %380 = vmatprep.subr.mxu0 0.0
  %381 = vmatpush1.msra.mxu0 0.0
  %382 = vmatprep.subr.mxu0 0.0
  %383 = vmatpush1.msra.mxu0 0.0
  %384 = vmatprep.subr.mxu0 0.0
  %385 = vmatpush1.msra.mxu0 0.0
  %386 = vmatprep.subr.mxu0 0.0
  %387 = vmatpush1.msra.mxu0 0.0
  %388 = vmatprep.subr.mxu0 0.0
  %389 = vmatpush1.msra.mxu0 0.0
  %390 = vmatprep.mubr.f32.mxu0 0.0
  %391 = vmatmul.mubr.f32.gmra.mrb[0].mxu0 %v279
  %v392 = vpop.f32.mrb[0].mxu0
  %v393 = vadd.f32 %v276, %v392
  %v394 = vpop.f32.mrb[0].mxu0
  %395 = vmatprep.mubr.f32.mxu0 0.0
  %396 = vmatmul.mubr.f32.gmra.mrb[0].mxu0 %v282
  %v397 = vpop.f32.mrb[0].mxu0
  %v398 = vadd.f32 %v276, %v397
  %v399 = vpop.f32.mrb[0].mxu0
  %400 = vmatprep.mubr.f32.mxu0 0.0
  %401 = vmatmul.mubr.f32.gmra.mrb[0].mxu0 %v285
  %v402 = vpop.f32.mrb[0].mxu0
  %v403 = vadd.f32 %v276, %v402
  %v404 = vpop.f32.mrb[0].mxu0
  %405 = vmatprep.mubr.f32.mxu0 0.0
  %406 = vmatmul.mubr.f32.gmra.mrb[0].mxu0 %v288
  %v407 = vpop.f32.mrb[0].mxu0
  %v408 = vadd.f32 %v276, %v407
  %v409 = vpop.f32.mrb[0].mxu0
  %410 = vmatprep.mubr.f32.mxu0 0.0
  %411 = vmatmul.mubr.f32.gmra.mrb[0].mxu0 %v291
  %v412 = vpop.f32.mrb[0].mxu0
  %v413 = vadd.f32 %v276, %v412
  %v414 = vpop.f32.mrb[0].mxu0
  %415 = vmatprep.mubr.f32.mxu0 0.0
  %416 = vmatmul.mubr.f32.gmra.mrb[0].mxu0 %v294
  %v417 = vpop.f32.mrb[0].mxu0
  %v418 = vadd.f32 %v276, %v417
  %v419 = vpop.f32.mrb[0].mxu0
  %420 = vmatprep.mubr.f32.mxu0 0.0
  %421 = vmatmul.mubr.f32.gmra.mrb[0].mxu0 %v297
  %v422 = vpop.f32.mrb[0].mxu0
  %v423 = vadd.f32 %v276, %v422
  %v424 = vpop.f32.mrb[0].mxu0
  %425 = vmatprep.mubr.f32.mxu0 0.0
  %426 = vmatmul.mubr.f32.gmra.mrb[0].mxu0 %v300
  %v427 = vpop.f32.mrb[0].mxu0
  %v428 = vadd.f32 %v276, %v427
  %v429 = vpop.f32.mrb[0].mxu0
  %430 = vmatprep.mubr.f32.mxu0 0.0
  %431 = vmatmul.mubr.f32.gmra.mrb[0].mxu0 %v303
  %v432 = vpop.f32.mrb[0].mxu0
  %v433 = vadd.f32 %v276, %v432
  %v434 = vpop.f32.mrb[0].mxu0
  %435 = vmatprep.mubr.f32.mxu0 0.0
  %436 = vmatmul.mubr.f32.gmra.mrb[0].mxu0 %v306
  %v437 = vpop.f32.mrb[0].mxu0
  %v438 = vadd.f32 %v276, %v437
  %v439 = vpop.f32.mrb[0].mxu0
  %440 = vmatprep.mubr.f32.mxu0 0.0
  %441 = vmatmul.mubr.f32.gmra.mrb[0].mxu0 %v309
  %v442 = vpop.f32.mrb[0].mxu0
  %v443 = vadd.f32 %v276, %v442
  %v444 = vpop.f32.mrb[0].mxu0
  %445 = vmatprep.mubr.f32.mxu0 0.0
  %446 = vmatmul.mubr.f32.gmra.mrb[0].mxu0 %v312
  %v447 = vpop.f32.mrb[0].mxu0
  %v448 = vadd.f32 %v276, %v447
  %v449 = vpop.f32.mrb[0].mxu0
  %450 = vmatprep.mubr.f32.mxu0 0.0
  %451 = vmatmul.mubr.f32.gmra.mrb[0].mxu0 %v315
  %v452 = vpop.f32.mrb[0].mxu0
  %v453 = vadd.f32 %v276, %v452
  %v454 = vpop.f32.mrb[0].mxu0
  %455 = vmatprep.mubr.f32.mxu0 0.0
  %456 = vmatmul.mubr.f32.gmra.mrb[0].mxu0 %v318
  %v457 = vpop.f32.mrb[0].mxu0
  %v458 = vadd.f32 %v276, %v457
  %v459 = vpop.f32.mrb[0].mxu0
  %460 = vmatprep.mubr.f32.mxu0 0.0
  %461 = vmatmul.mubr.f32.gmra.mrb[0].mxu0 %v321
  %v462 = vpop.f32.mrb[0].mxu0
  %v463 = vadd.f32 %v276, %v462
  %v464 = vpop.f32.mrb[0].mxu0
  %465 = vmatprep.mubr.f32.mxu0 0.0
  %466 = vmatmul.mubr.f32.gmra.mrb[0].mxu0 %v324
  %v467 = vpop.f32.mrb[0].mxu0
  %v468 = vadd.f32 %v276, %v467
  %v469 = vpop.f32.mrb[0].mxu0
  %470 = vdwg.mxu0
  %471 = vst [vmem:[%s5] sm:$0xff] %v393
  %472 = vst [vmem:[%s5 + $0x8] sm:$0xff] %v398
  %473 = vst [vmem:[%s5 + $0x10] sm:$0xff] %v403
  %474 = vst [vmem:[%s5 + $0x18] sm:$0xff] %v408
  %475 = vst [vmem:[%s5 + $0x20] sm:$0xff] %v413
  %476 = vst [vmem:[%s5 + $0x28] sm:$0xff] %v418
  %477 = vst [vmem:[%s5 + $0x30] sm:$0xff] %v423
  %478 = vst [vmem:[%s5 + $0x38] sm:$0xff] %v428
  %479 = vst [vmem:[%s5 + $0x40] sm:$0xff] %v433
  %480 = vst [vmem:[%s5 + $0x48] sm:$0xff] %v438
  %481 = vst [vmem:[%s5 + $0x50] sm:$0xff] %v443
  %482 = vst [vmem:[%s5 + $0x58] sm:$0xff] %v448
  %483 = vst [vmem:[%s5 + $0x60] sm:$0xff] %v453
  %484 = vst [vmem:[%s5 + $0x68] sm:$0xff] %v458
  %485 = vst [vmem:[%s5 + $0x70] sm:$0xff] %v463
  %486 = vst [vmem:[%s5 + $0x78] sm:$0xff] %v468
  %v487 = vxor.u32 %v393, 2147483648
  %v488 = vxor.u32 %v398, 2147483648
  %v489 = vxor.u32 %v403, 2147483648
  %v490 = vxor.u32 %v408, 2147483648
  %v491 = vxor.u32 %v413, 2147483648
  %v492 = vxor.u32 %v418, 2147483648
  %v493 = vxor.u32 %v423, 2147483648
  %v494 = vxor.u32 %v428, 2147483648
  %v495 = vxor.u32 %v433, 2147483648
  %v496 = vxor.u32 %v438, 2147483648
  %v497 = vxor.u32 %v443, 2147483648
  %v498 = vxor.u32 %v448, 2147483648
  %v499 = vxor.u32 %v453, 2147483648
  %v500 = vxor.u32 %v458, 2147483648
  %v501 = vxor.u32 %v463, 2147483648
  %v502 = vxor.u32 %v468, 2147483648
  %v503 = vmul.f32 %v487, 1.442695
  %v504 = vpow.pop %v503
  %v505 = vmul.f32 %v488, 1.442695
  %v506 = vpow.pop %v505
  %v507 = vmul.f32 %v489, 1.442695
  %v508 = vpow.pop %v507
  %v509 = vmul.f32 %v490, 1.442695
  %v510 = vpow.pop %v509
  %v511 = vmul.f32 %v491, 1.442695
  %v512 = vpow.pop %v511
  %v513 = vmul.f32 %v492, 1.442695
  %v514 = vpow.pop %v513
  %v515 = vmul.f32 %v493, 1.442695
  %v516 = vpow.pop %v515
  %v517 = vmul.f32 %v494, 1.442695
  %v518 = vpow.pop %v517
  %v519 = vmul.f32 %v495, 1.442695
  %v520 = vpow.pop %v519
  %v521 = vmul.f32 %v496, 1.442695
  %v522 = vpow.pop %v521
  %v523 = vmul.f32 %v497, 1.442695
  %v524 = vpow.pop %v523
  %v525 = vmul.f32 %v498, 1.442695
  %v526 = vpow.pop %v525
  %v527 = vmul.f32 %v499, 1.442695
  %v528 = vpow.pop %v527
  %v529 = vmul.f32 %v500, 1.442695
  %v530 = vpow.pop %v529
  %v531 = vmul.f32 %v501, 1.442695
  %v532 = vpow.pop %v531
  %v533 = vmul.f32 %v502, 1.442695
  %v534 = vpow.pop %v533
  %v535 = vadd.f32 %v504, 1.0
  %v536 = vadd.f32 %v506, 1.0
  %v537 = vadd.f32 %v508, 1.0
  %v538 = vadd.f32 %v510, 1.0
  %v539 = vadd.f32 %v512, 1.0
  %v540 = vadd.f32 %v514, 1.0
  %v541 = vadd.f32 %v516, 1.0
  %v542 = vadd.f32 %v518, 1.0
  %v543 = vadd.f32 %v520, 1.0
  %v544 = vadd.f32 %v522, 1.0
  %v545 = vadd.f32 %v524, 1.0
  %v546 = vadd.f32 %v526, 1.0
  %v547 = vadd.f32 %v528, 1.0
  %v548 = vadd.f32 %v530, 1.0
  %v549 = vadd.f32 %v532, 1.0
  %v550 = vadd.f32 %v534, 1.0
  %v551 = vrcp.pop %v535
  %v552 = vmul.f32 1.0, %v551
  %v553 = vrcp.pop %v536
  %v554 = vmul.f32 1.0, %v553
  %v555 = vrcp.pop %v537
  %v556 = vmul.f32 1.0, %v555
  %v557 = vrcp.pop %v538
  %v558 = vmul.f32 1.0, %v557
  %v559 = vrcp.pop %v539
  %v560 = vmul.f32 1.0, %v559
  %v561 = vrcp.pop %v540
  %v562 = vmul.f32 1.0, %v561
  %v563 = vrcp.pop %v541
  %v564 = vmul.f32 1.0, %v563
  %v565 = vrcp.pop %v542
  %v566 = vmul.f32 1.0, %v565
  %v567 = vrcp.pop %v543
  %v568 = vmul.f32 1.0, %v567
  %v569 = vrcp.pop %v544
  %v570 = vmul.f32 1.0, %v569
  %v571 = vrcp.pop %v545
  %v572 = vmul.f32 1.0, %v571
  %v573 = vrcp.pop %v546
  %v574 = vmul.f32 1.0, %v573
  %v575 = vrcp.pop %v547
  %v576 = vmul.f32 1.0, %v575
  %v577 = vrcp.pop %v548
  %v578 = vmul.f32 1.0, %v577
  %v579 = vrcp.pop %v549
  %v580 = vmul.f32 1.0, %v579
  %v581 = vrcp.pop %v550
  %v582 = vmul.f32 1.0, %v581
  %583 = vst [vmem:[%s6] sm:$0xff] %v552
  %584 = vst [vmem:[%s6 + $0x8] sm:$0xff] %v554
  %585 = vst [vmem:[%s6 + $0x10] sm:$0xff] %v556
  %586 = vst [vmem:[%s6 + $0x18] sm:$0xff] %v558
  %587 = vst [vmem:[%s6 + $0x20] sm:$0xff] %v560
  %588 = vst [vmem:[%s6 + $0x28] sm:$0xff] %v562
  %589 = vst [vmem:[%s6 + $0x30] sm:$0xff] %v564
  %590 = vst [vmem:[%s6 + $0x38] sm:$0xff] %v566
  %591 = vst [vmem:[%s6 + $0x40] sm:$0xff] %v568
  %592 = vst [vmem:[%s6 + $0x48] sm:$0xff] %v570
  %593 = vst [vmem:[%s6 + $0x50] sm:$0xff] %v572
  %594 = vst [vmem:[%s6 + $0x58] sm:$0xff] %v574
  %595 = vst [vmem:[%s6 + $0x60] sm:$0xff] %v576
  %596 = vst [vmem:[%s6 + $0x68] sm:$0xff] %v578
  %597 = vst [vmem:[%s6 + $0x70] sm:$0xff] %v580
  %598 = vst [vmem:[%s6 + $0x78] sm:$0xff] %v582
  // Predicated region
  $region22: #{network_forward.8} parent=0 // pred_check
    _
  $region23: #{network_forward.8} parent=0 // pred_check_branch
    %600 = sbr.rel (0) target = $region25
  $region24: #{network_forward.8} parent=0 // pred_region
    _
  $region25: #{network_forward.8} parent=0 // pred_fallthru
    _
  // Predicated region
  $region26: #{network_forward.8} parent=0 // pred_check
    _
  $region27: #{network_forward.8} parent=0 // pred_check_branch
    %602 = sbr.rel (0) target = $region29
  $region28: #{network_forward.8} parent=0 // pred_region
    _
  $region29: #{network_forward.8} parent=0 // pred_fallthru
    _
  // Predicated region
  $region30: #{network_forward.8} parent=0 // pred_check
    _
  $region31: #{network_forward.8} parent=0 // pred_check_branch
    %604 = sbr.rel (0) target = $region33
  $region32: #{network_forward.8} parent=0 // pred_region
    _
  $region33: #{network_forward.8} parent=0 // pred_fallthru
    _
  // Predicated region
  $region34: #{network_forward.8} parent=0 // pred_check
    _
  $region35: #{network_forward.8} parent=0 // pred_check_branch
    %606 = sbr.rel (0) target = $region37
  $region36: #{network_forward.8} parent=0 // pred_region
    _
  $region37: #{network_forward.8} parent=0 // pred_fallthru
    _

</llo_original>
